<compile_context>
chip_gen: v5e
topology: v5e:2x2
jax: 0.10.0
libtpu: 0.0.40
codegen_flags: <defaults>
</compile_context>

<pallas_src>
import functools

import jax
import jax.numpy as jnp
import numpy as np
from jax.experimental import pallas as pl
from jax.experimental.pallas import tpu as pltpu

BN_EPS = 1e-5
LANE = 128


# --------------------------------------------------------------------------
# Parameters (PyTorch layout + init) and inference-time folding
# --------------------------------------------------------------------------
def _kaiming_conv(key, cout, cin, kh, kw):
    fan_out = cout * kh * kw
    std = (2.0 / fan_out) ** 0.5
    return std * jax.random.normal(key, (cout, cin, kh, kw), jnp.float32)


def _bn_params(c):
    # Fresh BatchNorm, eval mode: gamma=1, beta=0, running_mean=0, running_var=1.
    return {"gamma": jnp.ones((c,), jnp.float32),
            "beta": jnp.zeros((c,), jnp.float32),
            "mean": jnp.zeros((c,), jnp.float32),
            "var": jnp.ones((c,), jnp.float32)}


def make_params(key, num_classes=10, gray_scale=False):
    in_ch = 1 if gray_scale else 3
    keys = iter(jax.random.split(key, 16))
    params = {"conv1_w": _kaiming_conv(next(keys), 64, in_ch, 7, 7),
              "bn1": _bn_params(64)}

    def block(inplanes, planes, downsample):
        blk = {"c1_w": _kaiming_conv(next(keys), planes, inplanes, 3, 3),
               "c1_bn": _bn_params(planes),
               "c2_w": _kaiming_conv(next(keys), planes, planes, 3, 3),
               "c2_bn": _bn_params(planes)}
        if downsample:
            blk["ds_w"] = _kaiming_conv(next(keys), planes, inplanes, 1, 1)
            blk["ds_bn"] = _bn_params(planes)
        return blk

    # layers=[2, 2]: layer1 = 2x BasicBlock(64), layer2 = 2x BasicBlock(128),
    # first layer2 block has stride 2 + 1x1 downsample.
    params["blocks"] = [block(64, 64, False), block(64, 64, False),
                        block(64, 128, True), block(128, 128, False)]

    lim = 1.0 / (128 ** 0.5)
    kw_, kb_ = jax.random.split(next(keys))
    params["fc_w"] = jax.random.uniform(kw_, (num_classes, 128), jnp.float32,
                                        -lim, lim)
    params["fc_b"] = jax.random.uniform(kb_, (num_classes,), jnp.float32,
                                        -lim, lim)
    return params


def _fold_bn(bn):
    scale = bn["gamma"] / jnp.sqrt(bn["var"] + BN_EPS)
    bias = bn["beta"] - bn["mean"] * scale
    return scale, bias


def fold_params(params):
    """Inference-time folding: BN scale into bf16 GEMM weights, BN bias as an
    f32 epilogue bias, conv1 K padded to a multiple of 16, FC padded to 128."""
    folded = {}

    s, b = _fold_bn(params["bn1"])
    w = jnp.transpose(params["conv1_w"], (2, 3, 1, 0)) * s        # (7,7,Cin,64)
    k = w.shape[0] * w.shape[1] * w.shape[2]
    kp = -(-k // 16) * 16                                         # bf16 packing
    w = jnp.pad(w.reshape(k, -1), ((0, kp - k), (0, 0)))
    folded["conv1_w"] = w.astype(jnp.bfloat16)                    # (kp, 64)
    folded["conv1_b"] = b.reshape(1, -1).astype(jnp.float32)

    def fold3x3(w, bn):
        s, b = _fold_bn(bn)
        wt = jnp.transpose(w, (2, 3, 1, 0)) * s                   # (3,3,Cin,Cout)
        return (wt.reshape(9, w.shape[1], w.shape[0]).astype(jnp.bfloat16),
                b.reshape(1, -1).astype(jnp.float32))

    fblocks = []
    for blk in params["blocks"]:
        fb = {}
        fb["c1_w"], fb["c1_b"] = fold3x3(blk["c1_w"], blk["c1_bn"])
        fb["c2_w"], fb["c2_b"] = fold3x3(blk["c2_w"], blk["c2_bn"])
        if "ds_w" in blk:
            s, b = _fold_bn(blk["ds_bn"])
            fb["ds_w"] = (blk["ds_w"][:, :, 0, 0].T * s).astype(jnp.bfloat16)
            fb["ds_b"] = b.reshape(1, -1).astype(jnp.float32)
        fblocks.append(fb)
    folded["blocks"] = fblocks

    fcw = params["fc_w"].T                                        # (128, ncls)
    pad = LANE - fcw.shape[1]
    folded["fc_w"] = jnp.pad(fcw, ((0, 0), (0, pad))).astype(jnp.bfloat16)
    folded["fc_b"] = (jnp.pad(params["fc_b"], (0, pad))
                      .reshape(1, -1).astype(jnp.float32))
    return folded


# --------------------------------------------------------------------------
# Fused forward pass (single pallas_call)
# --------------------------------------------------------------------------
@functools.partial(jax.jit, static_argnames=("num_classes",))
def resnet_forward(folded, x_nchw, num_classes=10):
    B, Cin, H, W = x_nchw.shape
    assert H == W, "square inputs only"

    # Stage geometry (mirrors the PyTorch module).
    H1 = (H + 2 * 3 - 7) // 2 + 1          # conv1: k7 s2 p3
    Hp = (H1 + 2 - 3) // 2 + 1             # maxpool: k3 s2 p1
    Hq = (Hp + 2 - 3) // 2 + 1             # layer2 first block: s2
    assert H1 >= 1 and Hp >= 1 and Hq >= 1

    C1 = folded["conv1_w"].shape[1]        # 64
    Cf = folded["fc_w"].shape[0]           # 128
    NCLS = folded["fc_w"].shape[1]         # 128 (lane-padded classes)
    K1 = folded["conv1_w"].shape[0]        # padded 7*7*Cin (multiple of 16)

    # Padded-flat activation buffers: row = b*PS + py*Sp + px over the
    # zero-padded (S+2)x(S+2) grid, channels on the 128-lane axis.
    Sp1, PS1 = H1 + 2, (H1 + 2) ** 2       # conv1-out / maxpool-in  (C1 ch)
    Sp2, PS2 = Hp + 2, (Hp + 2) ** 2       # layer1 buffers          (C1 ch)
    Sp3, PS3 = Hq + 2, (Hq + 2) ** 2       # layer2 buffers          (Cf ch)

    def slab_len(PS, Sp, s_out, stride):
        # Slab rows so that row r = b*PS + stride*(y*Sp + x) is valid for every
        # output pixel (b, y, x); rows in between are don't-care ("garbage").
        return (B - 1) * PS + stride * (s_out - 1) * (Sp + 1) + 1

    L_mp = slab_len(PS1, Sp1, Hp, 2)       # maxpool slab
    L1 = slab_len(PS2, Sp2, Hp, 1)         # layer1 stride-1 conv slab
    L2s = slab_len(PS2, Sp2, Hq, 2)        # layer2 block-1 stride-2 slab
    L3 = slab_len(PS3, Sp3, Hq, 1)         # layer2 stride-1 conv slab

    # Bounds for the tap-shifted slab reads (max tap offset = 2*Sp + 2).
    assert 2 * Sp1 + 2 + L_mp <= B * PS1
    assert 2 * Sp2 + 2 + L1 <= B * PS2
    assert 2 * Sp2 + 2 + L2s <= B * PS2
    assert 2 * Sp3 + 2 + L3 <= B * PS3

    # ---- precomputed bf16 scatter / pooling matrices (trace-time constants) ----
    def scatter_matrix(n_dst, n_src, pairs, value=1.0):
        m = np.zeros((n_dst, n_src), np.float32)
        for d, r in pairs:
            m[d, r] = value
        return jnp.asarray(m, jnp.bfloat16)

    # stem: conv1-GEMM row (b*H1^2 + y*H1 + x) -> s_p interior row.
    m_stem = scatter_matrix(
        B * PS1, B * H1 * H1,
        [(b * PS1 + (y + 1) * Sp1 + (x + 1), b * H1 * H1 + y * H1 + x)
         for b in range(B) for y in range(H1) for x in range(H1)])
    # maxpool: stride-2 slab row -> s_a interior row.
    m_pool = scatter_matrix(
        B * PS2, L_mp,
        [(b * PS2 + (y + 1) * Sp2 + (x + 1), b * PS1 + 2 * (y * Sp1 + x))
         for b in range(B) for y in range(Hp) for x in range(Hp)])
    # layer1 (stride-1) conv slab -> stage-2 buffer interior.
    m_l1 = scatter_matrix(
        B * PS2, L1,
        [(b * PS2 + (y + 1) * Sp2 + (x + 1), b * PS2 + y * Sp2 + x)
         for b in range(B) for y in range(Hp) for x in range(Hp)])
    # layer2 block-1 (stride-2) conv / downsample slab -> stage-3 interior.
    m_s2 = scatter_matrix(
        B * PS3, L2s,
        [(b * PS3 + (y + 1) * Sp3 + (x + 1), b * PS2 + 2 * (y * Sp2 + x))
         for b in range(B) for y in range(Hq) for x in range(Hq)])
    # layer2 (stride-1) conv slab -> stage-3 buffer interior.
    m_l2 = scatter_matrix(
        B * PS3, L3,
        [(b * PS3 + (y + 1) * Sp3 + (x + 1), b * PS3 + y * Sp3 + x)
         for b in range(B) for y in range(Hq) for x in range(Hq)])
    # GAP: averaging/selection matrix over the final conv slab.
    a_gap = scatter_matrix(
        B, L3,
        [(b, b * PS3 + y * Sp3 + x)
         for b in range(B) for y in range(Hq) for x in range(Hq)],
        value=1.0 / float(Hq * Hq))

    # ---- conv1 im2col (tiny one-time XLA op; K padded to match folded w) ----
    x = jnp.transpose(x_nchw, (0, 2, 3, 1)).astype(jnp.float32)   # NCHW -> NHWC
    xp = jnp.pad(x, ((0, 0), (3, 3), (3, 3), (0, 0)))
    cols = [xp[:, dy:dy + 2 * H1:2, dx:dx + 2 * H1:2, :]
            for dy in range(7) for dx in range(7)]
    patches = jnp.concatenate(cols, axis=-1).reshape(B * H1 * H1, 7 * 7 * Cin)
    patches = jnp.pad(patches, ((0, 0), (0, K1 - 7 * 7 * Cin)))
    patches = patches.astype(jnp.bfloat16)
    # TODO(synk): for much larger B/H, build conv1's 49x im2col in-kernel (or
    # tile it over a grid) instead of materializing it in HBM up front.

    blocks = folded["blocks"]
    assert [("ds_w" in blk) for blk in blocks] == [False, False, True, False]

    flat_inputs = [m_stem, m_pool, m_l1, m_s2, m_l2, a_gap,
                   patches, folded["conv1_w"], folded["conv1_b"]]
    for blk in blocks:
        flat_inputs += [blk["c1_w"], blk["c1_b"], blk["c2_w"], blk["c2_b"]]
        if "ds_w" in blk:
            flat_inputs += [blk["ds_w"], blk["ds_b"]]
    flat_inputs += [folded["fc_w"], folded["fc_b"]]
    n_in = len(flat_inputs)

    def kernel(*refs):
        ms_ref, mp_ref, ml1_ref, ms2_ref, ml2_ref, gap_ref = refs[:6]
        it = iter(refs[6:n_in])
        out_ref = refs[n_in]
        s_p, s_a, s_b, s_c, s_d = refs[n_in + 1:]

        def scatter_store(dst, scat_ref, slab):
            # Whole-buffer dense store: interior rows get the selected slab
            # row, padding-ring / inter-batch rows get exact zeros.  The
            # zero-padding invariant needed by the convs (pad=1) and by the
            # maxpool (zero pad == -inf pad because activations are post-ReLU)
            # is thus re-established by every store; no zero-init pass needed.
            dst[...] = jnp.dot(scat_ref[...], slab.astype(jnp.bfloat16),
                               preferred_element_type=jnp.float32
                               ).astype(dst.dtype)

        def conv3x3(src, w_ref, b_ref, Sp, L, resid_src=None):
            # 3x3 / pad-1 conv over a padded-flat bf16 buffer as 9 tap-shifted
            # slab GEMMs (bf16 MXU, f32 accumulation) with a fused BN-bias
            # (+ residual) + ReLU epilogue kept in f32 (v5e-friendly).
            # Returned slab row r = b*PS + stride*(y*Sp + x) = output (b,y,x).
            # TODO(synk): if B*PS ever grows enough to spill vregs, tile this
            # accumulation over L in ~256-row chunks.
            acc = None
            for dy in range(3):
                for dx in range(3):
                    lhs = src[pl.ds(dy * Sp + dx, L), :]           # bf16
                    part = jnp.dot(lhs, w_ref[dy * 3 + dx],
                                   preferred_element_type=jnp.float32)
                    acc = part if acc is None else acc + part
            acc = acc + b_ref[...]
            if resid_src is not None:      # identity slab, stride-1 geometry
                acc = acc + resid_src[pl.ds(Sp + 1, L), :].astype(jnp.float32)
            return jnp.maximum(acc, 0.0)

        # ---- stem: conv1 as one GEMM (BN folded into w) + bias + ReLU ----
        p_ref, w1_ref, b1_ref = next(it), next(it), next(it)
        x1 = jnp.dot(p_ref[...], w1_ref[...],
                     preferred_element_type=jnp.float32)
        x1 = jnp.maximum(x1 + b1_ref[...], 0.0)           # (B*H1*H1, C1) f32
        scatter_store(s_p, ms_ref, x1)

        # ---- maxpool 3x3 s2 p1: 9 shifted slab reads + VPU max ----
        # (zero padding == -inf padding because s_p is post-ReLU, >= 0)
        m = None
        for dy in range(3):
            for dx in range(3):
                v = s_p[pl.ds(dy * Sp1 + dx, L_mp), :]
                m = v if m is None else jnp.maximum(m, v)
        scatter_store(s_a, mp_ref, m)

        # ---- layer1: 2x BasicBlock(64), stride 1, buffers s_a <-> s_b ----
        for _ in range(2):
            c1w, c1b, c2w, c2b = next(it), next(it), next(it), next(it)
            h = conv3x3(s_a, c1w, c1b, Sp2, L1)
            scatter_store(s_b, ml1_ref, h)
            o = conv3x3(s_b, c2w, c2b, Sp2, L1, resid_src=s_a)
            scatter_store(s_a, ml1_ref, o)

        # ---- layer2 block 1: stride 2 + 1x1 downsample identity ----
        c1w, c1b, c2w, c2b = next(it), next(it), next(it), next(it)
        dsw, dsb = next(it), next(it)
        ident = jnp.dot(s_a[pl.ds(Sp2 + 1, L2s), :], dsw[...],
                        preferred_element_type=jnp.float32) + dsb[...]
        scatter_store(s_c, ms2_ref, ident)
        h = conv3x3(s_a, c1w, c1b, Sp2, L2s)
        scatter_store(s_d, ms2_ref, h)
        o = conv3x3(s_d, c2w, c2b, Sp3, L3, resid_src=s_c)
        scatter_store(s_c, ml2_ref, o)

        # ---- layer2 block 2: stride 1 ----
        c1w, c1b, c2w, c2b = next(it), next(it), next(it), next(it)
        h = conv3x3(s_c, c1w, c1b, Sp3, L3)
        scatter_store(s_d, ml2_ref, h)
        o = conv3x3(s_d, c2w, c2b, Sp3, L3, resid_src=s_c)    # (L3, Cf) f32

        # ---- GAP + FC as two GEMMs, one dense (B, NCLS) store ----
        fcw, fcb = next(it), next(it)
        pooled = jnp.dot(gap_ref[...], o.astype(jnp.bfloat16),
                         preferred_element_type=jnp.float32)      # (B, Cf)
        logits = jnp.dot(pooled.astype(jnp.bfloat16), fcw[...],
                         preferred_element_type=jnp.float32) + fcb[...]
        out_ref[...] = logits

    vmem = pl.BlockSpec(memory_space=pltpu.MemorySpace.VMEM)
    scratch_shapes = [
        pltpu.VMEM((B * PS1, C1), jnp.bfloat16),   # conv1-out / pool-in
        pltpu.VMEM((B * PS2, C1), jnp.bfloat16),   # layer1 ping
        pltpu.VMEM((B * PS2, C1), jnp.bfloat16),   # layer1 pong
        pltpu.VMEM((B * PS3, Cf), jnp.bfloat16),   # layer2 ping
        pltpu.VMEM((B * PS3, Cf), jnp.bfloat16),   # layer2 pong
    ]

    # Advisory cost estimate (GEMM flops dominate; no transcendentals).
    def gemm_flops(m, k, n):
        return 2 * m * k * n

    flops = (gemm_flops(B * H1 * H1, K1, C1)
             + gemm_flops(B * PS1, B * H1 * H1, C1)
             + gemm_flops(B * PS2, L_mp, C1)
             + 4 * (9 * gemm_flops(L1, C1, C1) + gemm_flops(B * PS2, L1, C1))
             + 10 * gemm_flops(L2s, C1, Cf) + 2 * gemm_flops(B * PS3, L2s, Cf)
             + 27 * gemm_flops(L3, Cf, Cf) + 2 * gemm_flops(B * PS3, L3, Cf)
             + gemm_flops(B, L3, Cf) + gemm_flops(B, Cf, NCLS))
    bytes_accessed = (sum(int(a.size) * a.dtype.itemsize for a in flat_inputs)
                      + B * NCLS * 4)

    out = pl.pallas_call(
        kernel,
        out_shape=jax.ShapeDtypeStruct((B, NCLS), jnp.float32),
        in_specs=[vmem] * n_in,
        out_specs=vmem,
        scratch_shapes=scratch_shapes,
        compiler_params=pltpu.CompilerParams(
            vmem_limit_bytes=32 * 1024 * 1024),
        cost_estimate=pl.CostEstimate(flops=int(flops), transcendentals=0,
                                      bytes_accessed=int(bytes_accessed)),
    )(*flat_inputs)
    # TODO(synk): on v7x (2 TensorCores/chip) add a leading parallel grid axis
    # over batch halves so both cores are used; single-core is already the
    # right choice on v5e/v6e.
    return out[:, :num_classes]


# --------------------------------------------------------------------------
# Pure-JAX/XLA reference (f32) of the same forward pass, for validation
# --------------------------------------------------------------------------
def _ref_conv(x, w, stride, pad):
    return jax.lax.conv_general_dilated(
        x, jnp.transpose(w, (2, 3, 1, 0)), (stride, stride),
        [(pad, pad), (pad, pad)],
        dimension_numbers=("NHWC", "HWIO", "NHWC"),
        precision=jax.lax.Precision.HIGHEST)


def _ref_bn(x, bn):
    scale = bn["gamma"] / jnp.sqrt(bn["var"] + BN_EPS)
    return x * scale + (bn["beta"] - bn["mean"] * scale)


def resnet_reference(params, x_nchw):
    x = jnp.transpose(x_nchw, (0, 2, 3, 1)).astype(jnp.float32)
    x = jax.nn.relu(_ref_bn(_ref_conv(x, params["conv1_w"], 2, 3),
                            params["bn1"]))
    x = jax.lax.reduce_window(x, -jnp.inf, jax.lax.max,
                              (1, 3, 3, 1), (1, 2, 2, 1),
                              [(0, 0), (1, 1), (1, 1), (0, 0)])
    for blk in params["blocks"]:
        stride = 2 if "ds_w" in blk else 1
        identity = x
        if "ds_w" in blk:
            identity = _ref_bn(_ref_conv(x, blk["ds_w"], stride, 0),
                               blk["ds_bn"])
        out = jax.nn.relu(_ref_bn(_ref_conv(x, blk["c1_w"], stride, 1),
                                  blk["c1_bn"]))
        out = _ref_bn(_ref_conv(out, blk["c2_w"], 1, 1), blk["c2_bn"])
        x = jax.nn.relu(out + identity)
    pooled = jnp.mean(x, axis=(1, 2))
    return pooled @ params["fc_w"].T + params["fc_b"]


# --------------------------------------------------------------------------
if __name__ == "__main__":
    key = jax.random.PRNGKey(0)
    k_params, k_input = jax.random.split(key)
    params = make_params(k_params, num_classes=10)
    folded = fold_params(params)

    # SVHN-like RGB input (NCHW, like the PyTorch module), small spatial size.
    x = jax.random.normal(k_input, (2, 3, 16, 16), jnp.float32)

    logits = jax.block_until_ready(resnet_forward(folded, x, num_classes=10))
    assert logits.shape == (2, 10), logits.shape
    assert bool(jnp.all(jnp.isfinite(logits)))

    # Numerical cross-check vs. a pure-XLA f32 reference (kernel uses bf16 MXU
    # operands and bf16 activation storage with f32 accumulation, hence the
    # loose tolerance).
    ref = resnet_reference(params, x)
    err = float(jnp.max(jnp.abs(logits - ref)))
    assert bool(jnp.allclose(logits, ref, atol=2e-1, rtol=1.5e-1)), (
        "max|diff|=" + str(err))

    print("KERNEL_OK")
</pallas_src>

<mosaic_0001>
module attributes {stable_mosaic.version = 11 : i64} {
  func.func @kernel(%arg0: memref<200x128xbf16, #tpu.memory_space<vmem>>, %arg1: memref<72x167xbf16, #tpu.memory_space<vmem>>, %arg2: memref<72x58xbf16, #tpu.memory_space<vmem>>, %arg3: memref<32x51xbf16, #tpu.memory_space<vmem>>, %arg4: memref<32x22xbf16, #tpu.memory_space<vmem>>, %arg5: memref<2x22xbf16, #tpu.memory_space<vmem>>, %arg6: memref<128x160xbf16, #tpu.memory_space<vmem>>, %arg7: memref<160x64xbf16, #tpu.memory_space<vmem>>, %arg8: memref<1x64xf32, #tpu.memory_space<vmem>>, %arg9: memref<9x64x64xbf16, #tpu.memory_space<vmem>>, %arg10: memref<1x64xf32, #tpu.memory_space<vmem>>, %arg11: memref<9x64x64xbf16, #tpu.memory_space<vmem>>, %arg12: memref<1x64xf32, #tpu.memory_space<vmem>>, %arg13: memref<9x64x64xbf16, #tpu.memory_space<vmem>>, %arg14: memref<1x64xf32, #tpu.memory_space<vmem>>, %arg15: memref<9x64x64xbf16, #tpu.memory_space<vmem>>, %arg16: memref<1x64xf32, #tpu.memory_space<vmem>>, %arg17: memref<9x64x128xbf16, #tpu.memory_space<vmem>>, %arg18: memref<1x128xf32, #tpu.memory_space<vmem>>, %arg19: memref<9x128x128xbf16, #tpu.memory_space<vmem>>, %arg20: memref<1x128xf32, #tpu.memory_space<vmem>>, %arg21: memref<64x128xbf16, #tpu.memory_space<vmem>>, %arg22: memref<1x128xf32, #tpu.memory_space<vmem>>, %arg23: memref<9x128x128xbf16, #tpu.memory_space<vmem>>, %arg24: memref<1x128xf32, #tpu.memory_space<vmem>>, %arg25: memref<9x128x128xbf16, #tpu.memory_space<vmem>>, %arg26: memref<1x128xf32, #tpu.memory_space<vmem>>, %arg27: memref<128x128xbf16, #tpu.memory_space<vmem>>, %arg28: memref<1x128xf32, #tpu.memory_space<vmem>>, %arg29: memref<2x128xf32, #tpu.memory_space<vmem>>, %arg30: memref<200x64xbf16, #tpu.memory_space<vmem>>, %arg31: memref<72x64xbf16, #tpu.memory_space<vmem>>, %arg32: memref<72x64xbf16, #tpu.memory_space<vmem>>, %arg33: memref<32x128xbf16, #tpu.memory_space<vmem>>, %arg34: memref<32x128xbf16, #tpu.memory_space<vmem>>) attributes {dimension_semantics = [], scalar_prefetch = 0 : i64, scratch_operands = 5 : i64, tpu.core_type = #tpu.core_type<tc>} {
    %c0 = arith.constant 0 : index
    %c0_0 = arith.constant 0 : index
    %0 = vector.load %arg6[%c0, %c0_0] : memref<128x160xbf16, #tpu.memory_space<vmem>>, vector<128x160xbf16>
    %c0_1 = arith.constant 0 : index
    %c0_2 = arith.constant 0 : index
    %1 = vector.load %arg7[%c0_1, %c0_2] : memref<160x64xbf16, #tpu.memory_space<vmem>>, vector<160x64xbf16>
    %cst = arith.constant dense<0.000000e+00> : vector<128x64xf32>
    %2 = tpu.matmul %0, %1, %cst {dimension_numbers = #tpu.dot_dimension_numbers<[1], [0], [0], [1], [0, 0, 1, 1], [], []>} : vector<128x160xbf16>, vector<160x64xbf16>, vector<128x64xf32> -> vector<128x64xf32>
    %c0_3 = arith.constant 0 : index
    %c0_4 = arith.constant 0 : index
    %3 = vector.load %arg8[%c0_3, %c0_4] : memref<1x64xf32, #tpu.memory_space<vmem>>, vector<1x64xf32>
    %4 = vector.broadcast %3 : vector<1x64xf32> to vector<128x64xf32>
    %5 = arith.addf %2, %4 : vector<128x64xf32>
    %cst_5 = arith.constant 0.000000e+00 : f32
    %6 = vector.broadcast %cst_5 : f32 to vector<128x64xf32>
    %7 = arith.maximumf %5, %6 : vector<128x64xf32>
    %c0_6 = arith.constant 0 : index
    %c0_7 = arith.constant 0 : index
    %8 = vector.load %arg0[%c0_6, %c0_7] : memref<200x128xbf16, #tpu.memory_space<vmem>>, vector<200x128xbf16>
    %9 = arith.truncf %7 : vector<128x64xf32> to vector<128x64xbf16>
    %cst_8 = arith.constant dense<0.000000e+00> : vector<200x64xf32>
    %10 = tpu.matmul %8, %9, %cst_8 {dimension_numbers = #tpu.dot_dimension_numbers<[1], [0], [0], [1], [0, 0, 1, 1], [], []>} : vector<200x128xbf16>, vector<128x64xbf16>, vector<200x64xf32> -> vector<200x64xf32>
    %11 = arith.truncf %10 : vector<200x64xf32> to vector<200x64xbf16>
    %c0_9 = arith.constant 0 : index
    %c0_10 = arith.constant 0 : index
    %12 = vector.load %arg30[%c0_9, %c0_10] : memref<200x64xbf16, #tpu.memory_space<vmem>>, vector<200x64xbf16>
    tpu.vector_store %arg30[%c0_9, %c0_10], %11 {strides = array<i32>} : memref<200x64xbf16, #tpu.memory_space<vmem>>, vector<200x64xbf16>,
    %c0_11 = arith.constant 0 : index
    %c0_12 = arith.constant 0 : index
    %13 = vector.load %arg30[%c0_11, %c0_12] : memref<200x64xbf16, #tpu.memory_space<vmem>>, vector<167x64xbf16>
    %c1 = arith.constant 1 : index
    %c0_13 = arith.constant 0 : index
    %14 = vector.load %arg30[%c1, %c0_13] : memref<200x64xbf16, #tpu.memory_space<vmem>>, vector<167x64xbf16>
    %15 = arith.maximumf %13, %14 : vector<167x64xbf16>
    %c2 = arith.constant 2 : index
    %c0_14 = arith.constant 0 : index
    %16 = vector.load %arg30[%c2, %c0_14] : memref<200x64xbf16, #tpu.memory_space<vmem>>, vector<167x64xbf16>
    %17 = arith.maximumf %15, %16 : vector<167x64xbf16>
    %c10 = arith.constant 10 : index
    %c0_15 = arith.constant 0 : index
    %18 = vector.load %arg30[%c10, %c0_15] : memref<200x64xbf16, #tpu.memory_space<vmem>>, vector<167x64xbf16>
    %19 = arith.maximumf %17, %18 : vector<167x64xbf16>
    %c11 = arith.constant 11 : index
    %c0_16 = arith.constant 0 : index
    %20 = vector.load %arg30[%c11, %c0_16] : memref<200x64xbf16, #tpu.memory_space<vmem>>, vector<167x64xbf16>
    %21 = arith.maximumf %19, %20 : vector<167x64xbf16>
    %c12 = arith.constant 12 : index
    %c0_17 = arith.constant 0 : index
    %22 = vector.load %arg30[%c12, %c0_17] : memref<200x64xbf16, #tpu.memory_space<vmem>>, vector<167x64xbf16>
    %23 = arith.maximumf %21, %22 : vector<167x64xbf16>
    %c20 = arith.constant 20 : index
    %c0_18 = arith.constant 0 : index
    %24 = vector.load %arg30[%c20, %c0_18] : memref<200x64xbf16, #tpu.memory_space<vmem>>, vector<167x64xbf16>
    %25 = arith.maximumf %23, %24 : vector<167x64xbf16>
    %c21 = arith.constant 21 : index
    %c0_19 = arith.constant 0 : index
    %26 = vector.load %arg30[%c21, %c0_19] : memref<200x64xbf16, #tpu.memory_space<vmem>>, vector<167x64xbf16>
    %27 = arith.maximumf %25, %26 : vector<167x64xbf16>
    %c22 = arith.constant 22 : index
    %c0_20 = arith.constant 0 : index
    %28 = vector.load %arg30[%c22, %c0_20] : memref<200x64xbf16, #tpu.memory_space<vmem>>, vector<167x64xbf16>
    %29 = arith.maximumf %27, %28 : vector<167x64xbf16>
    %c0_21 = arith.constant 0 : index
    %c0_22 = arith.constant 0 : index
    %30 = vector.load %arg1[%c0_21, %c0_22] : memref<72x167xbf16, #tpu.memory_space<vmem>>, vector<72x167xbf16>
    %cst_23 = arith.constant dense<0.000000e+00> : vector<72x64xf32>
    %31 = tpu.matmul %30, %29, %cst_23 {dimension_numbers = #tpu.dot_dimension_numbers<[1], [0], [0], [1], [0, 0, 1, 1], [], []>} : vector<72x167xbf16>, vector<167x64xbf16>, vector<72x64xf32> -> vector<72x64xf32>
    %32 = arith.truncf %31 : vector<72x64xf32> to vector<72x64xbf16>
    %c0_24 = arith.constant 0 : index
    %c0_25 = arith.constant 0 : index
    %33 = vector.load %arg31[%c0_24, %c0_25] : memref<72x64xbf16, #tpu.memory_space<vmem>>, vector<72x64xbf16>
    tpu.vector_store %arg31[%c0_24, %c0_25], %32 {strides = array<i32>} : memref<72x64xbf16, #tpu.memory_space<vmem>>, vector<72x64xbf16>,
    %c0_26 = arith.constant 0 : index
    %c0_27 = arith.constant 0 : index
    %34 = vector.load %arg31[%c0_26, %c0_27] : memref<72x64xbf16, #tpu.memory_space<vmem>>, vector<58x64xbf16>
    %c0_28 = arith.constant 0 : index
    %c0_29 = arith.constant 0 : index
    %c0_30 = arith.constant 0 : index
    %35 = vector.load %arg9[%c0_28, %c0_29, %c0_30] : memref<9x64x64xbf16, #tpu.memory_space<vmem>>, vector<1x64x64xbf16>
    %36 = vector.shape_cast %35 : vector<1x64x64xbf16> to vector<64x64xbf16>
    %cst_31 = arith.constant dense<0.000000e+00> : vector<58x64xf32>
    %37 = tpu.matmul %34, %36, %cst_31 {dimension_numbers = #tpu.dot_dimension_numbers<[1], [0], [0], [1], [0, 0, 1, 1], [], []>} : vector<58x64xbf16>, vector<64x64xbf16>, vector<58x64xf32> -> vector<58x64xf32>
    %c1_32 = arith.constant 1 : index
    %c0_33 = arith.constant 0 : index
    %38 = vector.load %arg31[%c1_32, %c0_33] : memref<72x64xbf16, #tpu.memory_space<vmem>>, vector<58x64xbf16>
    %c1_34 = arith.constant 1 : index
    %c0_35 = arith.constant 0 : index
    %c0_36 = arith.constant 0 : index
    %39 = vector.load %arg9[%c1_34, %c0_35, %c0_36] : memref<9x64x64xbf16, #tpu.memory_space<vmem>>, vector<1x64x64xbf16>
    %40 = vector.shape_cast %39 : vector<1x64x64xbf16> to vector<64x64xbf16>
    %cst_37 = arith.constant dense<0.000000e+00> : vector<58x64xf32>
    %41 = tpu.matmul %38, %40, %cst_37 {dimension_numbers = #tpu.dot_dimension_numbers<[1], [0], [0], [1], [0, 0, 1, 1], [], []>} : vector<58x64xbf16>, vector<64x64xbf16>, vector<58x64xf32> -> vector<58x64xf32>
    %42 = arith.addf %37, %41 : vector<58x64xf32>
    %c2_38 = arith.constant 2 : index
    %c0_39 = arith.constant 0 : index
    %43 = vector.load %arg31[%c2_38, %c0_39] : memref<72x64xbf16, #tpu.memory_space<vmem>>, vector<58x64xbf16>
    %c2_40 = arith.constant 2 : index
    %c0_41 = arith.constant 0 : index
    %c0_42 = arith.constant 0 : index
    %44 = vector.load %arg9[%c2_40, %c0_41, %c0_42] : memref<9x64x64xbf16, #tpu.memory_space<vmem>>, vector<1x64x64xbf16>
    %45 = vector.shape_cast %44 : vector<1x64x64xbf16> to vector<64x64xbf16>
    %cst_43 = arith.constant dense<0.000000e+00> : vector<58x64xf32>
    %46 = tpu.matmul %43, %45, %cst_43 {dimension_numbers = #tpu.dot_dimension_numbers<[1], [0], [0], [1], [0, 0, 1, 1], [], []>} : vector<58x64xbf16>, vector<64x64xbf16>, vector<58x64xf32> -> vector<58x64xf32>
    %47 = arith.addf %42, %46 : vector<58x64xf32>
    %c6 = arith.constant 6 : index
    %c0_44 = arith.constant 0 : index
    %48 = vector.load %arg31[%c6, %c0_44] : memref<72x64xbf16, #tpu.memory_space<vmem>>, vector<58x64xbf16>
    %c3 = arith.constant 3 : index
    %c0_45 = arith.constant 0 : index
    %c0_46 = arith.constant 0 : index
    %49 = vector.load %arg9[%c3, %c0_45, %c0_46] : memref<9x64x64xbf16, #tpu.memory_space<vmem>>, vector<1x64x64xbf16>
    %50 = vector.shape_cast %49 : vector<1x64x64xbf16> to vector<64x64xbf16>
    %cst_47 = arith.constant dense<0.000000e+00> : vector<58x64xf32>
    %51 = tpu.matmul %48, %50, %cst_47 {dimension_numbers = #tpu.dot_dimension_numbers<[1], [0], [0], [1], [0, 0, 1, 1], [], []>} : vector<58x64xbf16>, vector<64x64xbf16>, vector<58x64xf32> -> vector<58x64xf32>
    %52 = arith.addf %47, %51 : vector<58x64xf32>
    %c7 = arith.constant 7 : index
    %c0_48 = arith.constant 0 : index
    %53 = vector.load %arg31[%c7, %c0_48] : memref<72x64xbf16, #tpu.memory_space<vmem>>, vector<58x64xbf16>
    %c4 = arith.constant 4 : index
    %c0_49 = arith.constant 0 : index
    %c0_50 = arith.constant 0 : index
    %54 = vector.load %arg9[%c4, %c0_49, %c0_50] : memref<9x64x64xbf16, #tpu.memory_space<vmem>>, vector<1x64x64xbf16>
    %55 = vector.shape_cast %54 : vector<1x64x64xbf16> to vector<64x64xbf16>
    %cst_51 = arith.constant dense<0.000000e+00> : vector<58x64xf32>
    %56 = tpu.matmul %53, %55, %cst_51 {dimension_numbers = #tpu.dot_dimension_numbers<[1], [0], [0], [1], [0, 0, 1, 1], [], []>} : vector<58x64xbf16>, vector<64x64xbf16>, vector<58x64xf32> -> vector<58x64xf32>
    %57 = arith.addf %52, %56 : vector<58x64xf32>
    %c8 = arith.constant 8 : index
    %c0_52 = arith.constant 0 : index
    %58 = vector.load %arg31[%c8, %c0_52] : memref<72x64xbf16, #tpu.memory_space<vmem>>, vector<58x64xbf16>
    %c5 = arith.constant 5 : index
    %c0_53 = arith.constant 0 : index
    %c0_54 = arith.constant 0 : index
    %59 = vector.load %arg9[%c5, %c0_53, %c0_54] : memref<9x64x64xbf16, #tpu.memory_space<vmem>>, vector<1x64x64xbf16>
    %60 = vector.shape_cast %59 : vector<1x64x64xbf16> to vector<64x64xbf16>
    %cst_55 = arith.constant dense<0.000000e+00> : vector<58x64xf32>
    %61 = tpu.matmul %58, %60, %cst_55 {dimension_numbers = #tpu.dot_dimension_numbers<[1], [0], [0], [1], [0, 0, 1, 1], [], []>} : vector<58x64xbf16>, vector<64x64xbf16>, vector<58x64xf32> -> vector<58x64xf32>
    %62 = arith.addf %57, %61 : vector<58x64xf32>
    %c12_56 = arith.constant 12 : index
    %c0_57 = arith.constant 0 : index
    %63 = vector.load %arg31[%c12_56, %c0_57] : memref<72x64xbf16, #tpu.memory_space<vmem>>, vector<58x64xbf16>
    %c6_58 = arith.constant 6 : index
    %c0_59 = arith.constant 0 : index
    %c0_60 = arith.constant 0 : index
    %64 = vector.load %arg9[%c6_58, %c0_59, %c0_60] : memref<9x64x64xbf16, #tpu.memory_space<vmem>>, vector<1x64x64xbf16>
    %65 = vector.shape_cast %64 : vector<1x64x64xbf16> to vector<64x64xbf16>
    %cst_61 = arith.constant dense<0.000000e+00> : vector<58x64xf32>
    %66 = tpu.matmul %63, %65, %cst_61 {dimension_numbers = #tpu.dot_dimension_numbers<[1], [0], [0], [1], [0, 0, 1, 1], [], []>} : vector<58x64xbf16>, vector<64x64xbf16>, vector<58x64xf32> -> vector<58x64xf32>
    %67 = arith.addf %62, %66 : vector<58x64xf32>
    %c13 = arith.constant 13 : index
    %c0_62 = arith.constant 0 : index
    %68 = vector.load %arg31[%c13, %c0_62] : memref<72x64xbf16, #tpu.memory_space<vmem>>, vector<58x64xbf16>
    %c7_63 = arith.constant 7 : index
    %c0_64 = arith.constant 0 : index
    %c0_65 = arith.constant 0 : index
    %69 = vector.load %arg9[%c7_63, %c0_64, %c0_65] : memref<9x64x64xbf16, #tpu.memory_space<vmem>>, vector<1x64x64xbf16>
    %70 = vector.shape_cast %69 : vector<1x64x64xbf16> to vector<64x64xbf16>
    %cst_66 = arith.constant dense<0.000000e+00> : vector<58x64xf32>
    %71 = tpu.matmul %68, %70, %cst_66 {dimension_numbers = #tpu.dot_dimension_numbers<[1], [0], [0], [1], [0, 0, 1, 1], [], []>} : vector<58x64xbf16>, vector<64x64xbf16>, vector<58x64xf32> -> vector<58x64xf32>
    %72 = arith.addf %67, %71 : vector<58x64xf32>
    %c14 = arith.constant 14 : index
    %c0_67 = arith.constant 0 : index
    %73 = vector.load %arg31[%c14, %c0_67] : memref<72x64xbf16, #tpu.memory_space<vmem>>, vector<58x64xbf16>
    %c8_68 = arith.constant 8 : index
    %c0_69 = arith.constant 0 : index
    %c0_70 = arith.constant 0 : index
    %74 = vector.load %arg9[%c8_68, %c0_69, %c0_70] : memref<9x64x64xbf16, #tpu.memory_space<vmem>>, vector<1x64x64xbf16>
    %75 = vector.shape_cast %74 : vector<1x64x64xbf16> to vector<64x64xbf16>
    %cst_71 = arith.constant dense<0.000000e+00> : vector<58x64xf32>
    %76 = tpu.matmul %73, %75, %cst_71 {dimension_numbers = #tpu.dot_dimension_numbers<[1], [0], [0], [1], [0, 0, 1, 1], [], []>} : vector<58x64xbf16>, vector<64x64xbf16>, vector<58x64xf32> -> vector<58x64xf32>
    %77 = arith.addf %72, %76 : vector<58x64xf32>
    %c0_72 = arith.constant 0 : index
    %c0_73 = arith.constant 0 : index
    %78 = vector.load %arg10[%c0_72, %c0_73] : memref<1x64xf32, #tpu.memory_space<vmem>>, vector<1x64xf32>
    %79 = vector.broadcast %78 : vector<1x64xf32> to vector<58x64xf32>
    %80 = arith.addf %77, %79 : vector<58x64xf32>
    %cst_74 = arith.constant 0.000000e+00 : f32
    %81 = vector.broadcast %cst_74 : f32 to vector<58x64xf32>
    %82 = arith.maximumf %80, %81 : vector<58x64xf32>
    %c0_75 = arith.constant 0 : index
    %c0_76 = arith.constant 0 : index
    %83 = vector.load %arg2[%c0_75, %c0_76] : memref<72x58xbf16, #tpu.memory_space<vmem>>, vector<72x58xbf16>
    %84 = arith.truncf %82 : vector<58x64xf32> to vector<58x64xbf16>
    %cst_77 = arith.constant dense<0.000000e+00> : vector<72x64xf32>
    %85 = tpu.matmul %83, %84, %cst_77 {dimension_numbers = #tpu.dot_dimension_numbers<[1], [0], [0], [1], [0, 0, 1, 1], [], []>} : vector<72x58xbf16>, vector<58x64xbf16>, vector<72x64xf32> -> vector<72x64xf32>
    %86 = arith.truncf %85 : vector<72x64xf32> to vector<72x64xbf16>
    %c0_78 = arith.constant 0 : index
    %c0_79 = arith.constant 0 : index
    %87 = vector.load %arg32[%c0_78, %c0_79] : memref<72x64xbf16, #tpu.memory_space<vmem>>, vector<72x64xbf16>
    tpu.vector_store %arg32[%c0_78, %c0_79], %86 {strides = array<i32>} : memref<72x64xbf16, #tpu.memory_space<vmem>>, vector<72x64xbf16>,
    %c0_80 = arith.constant 0 : index
    %c0_81 = arith.constant 0 : index
    %88 = vector.load %arg32[%c0_80, %c0_81] : memref<72x64xbf16, #tpu.memory_space<vmem>>, vector<58x64xbf16>
    %c0_82 = arith.constant 0 : index
    %c0_83 = arith.constant 0 : index
    %c0_84 = arith.constant 0 : index
    %89 = vector.load %arg11[%c0_82, %c0_83, %c0_84] : memref<9x64x64xbf16, #tpu.memory_space<vmem>>, vector<1x64x64xbf16>
    %90 = vector.shape_cast %89 : vector<1x64x64xbf16> to vector<64x64xbf16>
    %cst_85 = arith.constant dense<0.000000e+00> : vector<58x64xf32>
    %91 = tpu.matmul %88, %90, %cst_85 {dimension_numbers = #tpu.dot_dimension_numbers<[1], [0], [0], [1], [0, 0, 1, 1], [], []>} : vector<58x64xbf16>, vector<64x64xbf16>, vector<58x64xf32> -> vector<58x64xf32>
    %c1_86 = arith.constant 1 : index
    %c0_87 = arith.constant 0 : index
    %92 = vector.load %arg32[%c1_86, %c0_87] : memref<72x64xbf16, #tpu.memory_space<vmem>>, vector<58x64xbf16>
    %c1_88 = arith.constant 1 : index
    %c0_89 = arith.constant 0 : index
    %c0_90 = arith.constant 0 : index
    %93 = vector.load %arg11[%c1_88, %c0_89, %c0_90] : memref<9x64x64xbf16, #tpu.memory_space<vmem>>, vector<1x64x64xbf16>
    %94 = vector.shape_cast %93 : vector<1x64x64xbf16> to vector<64x64xbf16>
    %cst_91 = arith.constant dense<0.000000e+00> : vector<58x64xf32>
    %95 = tpu.matmul %92, %94, %cst_91 {dimension_numbers = #tpu.dot_dimension_numbers<[1], [0], [0], [1], [0, 0, 1, 1], [], []>} : vector<58x64xbf16>, vector<64x64xbf16>, vector<58x64xf32> -> vector<58x64xf32>
    %96 = arith.addf %91, %95 : vector<58x64xf32>
    %c2_92 = arith.constant 2 : index
    %c0_93 = arith.constant 0 : index
    %97 = vector.load %arg32[%c2_92, %c0_93] : memref<72x64xbf16, #tpu.memory_space<vmem>>, vector<58x64xbf16>
    %c2_94 = arith.constant 2 : index
    %c0_95 = arith.constant 0 : index
    %c0_96 = arith.constant 0 : index
    %98 = vector.load %arg11[%c2_94, %c0_95, %c0_96] : memref<9x64x64xbf16, #tpu.memory_space<vmem>>, vector<1x64x64xbf16>
    %99 = vector.shape_cast %98 : vector<1x64x64xbf16> to vector<64x64xbf16>
    %cst_97 = arith.constant dense<0.000000e+00> : vector<58x64xf32>
    %100 = tpu.matmul %97, %99, %cst_97 {dimension_numbers = #tpu.dot_dimension_numbers<[1], [0], [0], [1], [0, 0, 1, 1], [], []>} : vector<58x64xbf16>, vector<64x64xbf16>, vector<58x64xf32> -> vector<58x64xf32>
    %101 = arith.addf %96, %100 : vector<58x64xf32>
    %c6_98 = arith.constant 6 : index
    %c0_99 = arith.constant 0 : index
    %102 = vector.load %arg32[%c6_98, %c0_99] : memref<72x64xbf16, #tpu.memory_space<vmem>>, vector<58x64xbf16>
    %c3_100 = arith.constant 3 : index
    %c0_101 = arith.constant 0 : index
    %c0_102 = arith.constant 0 : index
    %103 = vector.load %arg11[%c3_100, %c0_101, %c0_102] : memref<9x64x64xbf16, #tpu.memory_space<vmem>>, vector<1x64x64xbf16>
    %104 = vector.shape_cast %103 : vector<1x64x64xbf16> to vector<64x64xbf16>
    %cst_103 = arith.constant dense<0.000000e+00> : vector<58x64xf32>
    %105 = tpu.matmul %102, %104, %cst_103 {dimension_numbers = #tpu.dot_dimension_numbers<[1], [0], [0], [1], [0, 0, 1, 1], [], []>} : vector<58x64xbf16>, vector<64x64xbf16>, vector<58x64xf32> -> vector<58x64xf32>
    %106 = arith.addf %101, %105 : vector<58x64xf32>
    %c7_104 = arith.constant 7 : index
    %c0_105 = arith.constant 0 : index
    %107 = vector.load %arg32[%c7_104, %c0_105] : memref<72x64xbf16, #tpu.memory_space<vmem>>, vector<58x64xbf16>
    %c4_106 = arith.constant 4 : index
    %c0_107 = arith.constant 0 : index
    %c0_108 = arith.constant 0 : index
    %108 = vector.load %arg11[%c4_106, %c0_107, %c0_108] : memref<9x64x64xbf16, #tpu.memory_space<vmem>>, vector<1x64x64xbf16>
    %109 = vector.shape_cast %108 : vector<1x64x64xbf16> to vector<64x64xbf16>
    %cst_109 = arith.constant dense<0.000000e+00> : vector<58x64xf32>
    %110 = tpu.matmul %107, %109, %cst_109 {dimension_numbers = #tpu.dot_dimension_numbers<[1], [0], [0], [1], [0, 0, 1, 1], [], []>} : vector<58x64xbf16>, vector<64x64xbf16>, vector<58x64xf32> -> vector<58x64xf32>
    %111 = arith.addf %106, %110 : vector<58x64xf32>
    %c8_110 = arith.constant 8 : index
    %c0_111 = arith.constant 0 : index
    %112 = vector.load %arg32[%c8_110, %c0_111] : memref<72x64xbf16, #tpu.memory_space<vmem>>, vector<58x64xbf16>
    %c5_112 = arith.constant 5 : index
    %c0_113 = arith.constant 0 : index
    %c0_114 = arith.constant 0 : index
    %113 = vector.load %arg11[%c5_112, %c0_113, %c0_114] : memref<9x64x64xbf16, #tpu.memory_space<vmem>>, vector<1x64x64xbf16>
    %114 = vector.shape_cast %113 : vector<1x64x64xbf16> to vector<64x64xbf16>
    %cst_115 = arith.constant dense<0.000000e+00> : vector<58x64xf32>
    %115 = tpu.matmul %112, %114, %cst_115 {dimension_numbers = #tpu.dot_dimension_numbers<[1], [0], [0], [1], [0, 0, 1, 1], [], []>} : vector<58x64xbf16>, vector<64x64xbf16>, vector<58x64xf32> -> vector<58x64xf32>
    %116 = arith.addf %111, %115 : vector<58x64xf32>
    %c12_116 = arith.constant 12 : index
    %c0_117 = arith.constant 0 : index
    %117 = vector.load %arg32[%c12_116, %c0_117] : memref<72x64xbf16, #tpu.memory_space<vmem>>, vector<58x64xbf16>
    %c6_118 = arith.constant 6 : index
    %c0_119 = arith.constant 0 : index
    %c0_120 = arith.constant 0 : index
    %118 = vector.load %arg11[%c6_118, %c0_119, %c0_120] : memref<9x64x64xbf16, #tpu.memory_space<vmem>>, vector<1x64x64xbf16>
    %119 = vector.shape_cast %118 : vector<1x64x64xbf16> to vector<64x64xbf16>
    %cst_121 = arith.constant dense<0.000000e+00> : vector<58x64xf32>
    %120 = tpu.matmul %117, %119, %cst_121 {dimension_numbers = #tpu.dot_dimension_numbers<[1], [0], [0], [1], [0, 0, 1, 1], [], []>} : vector<58x64xbf16>, vector<64x64xbf16>, vector<58x64xf32> -> vector<58x64xf32>
    %121 = arith.addf %116, %120 : vector<58x64xf32>
    %c13_122 = arith.constant 13 : index
    %c0_123 = arith.constant 0 : index
    %122 = vector.load %arg32[%c13_122, %c0_123] : memref<72x64xbf16, #tpu.memory_space<vmem>>, vector<58x64xbf16>
    %c7_124 = arith.constant 7 : index
    %c0_125 = arith.constant 0 : index
    %c0_126 = arith.constant 0 : index
    %123 = vector.load %arg11[%c7_124, %c0_125, %c0_126] : memref<9x64x64xbf16, #tpu.memory_space<vmem>>, vector<1x64x64xbf16>
    %124 = vector.shape_cast %123 : vector<1x64x64xbf16> to vector<64x64xbf16>
    %cst_127 = arith.constant dense<0.000000e+00> : vector<58x64xf32>
    %125 = tpu.matmul %122, %124, %cst_127 {dimension_numbers = #tpu.dot_dimension_numbers<[1], [0], [0], [1], [0, 0, 1, 1], [], []>} : vector<58x64xbf16>, vector<64x64xbf16>, vector<58x64xf32> -> vector<58x64xf32>
    %126 = arith.addf %121, %125 : vector<58x64xf32>
    %c14_128 = arith.constant 14 : index
    %c0_129 = arith.constant 0 : index
    %127 = vector.load %arg32[%c14_128, %c0_129] : memref<72x64xbf16, #tpu.memory_space<vmem>>, vector<58x64xbf16>
    %c8_130 = arith.constant 8 : index
    %c0_131 = arith.constant 0 : index
    %c0_132 = arith.constant 0 : index
    %128 = vector.load %arg11[%c8_130, %c0_131, %c0_132] : memref<9x64x64xbf16, #tpu.memory_space<vmem>>, vector<1x64x64xbf16>
    %129 = vector.shape_cast %128 : vector<1x64x64xbf16> to vector<64x64xbf16>
    %cst_133 = arith.constant dense<0.000000e+00> : vector<58x64xf32>
    %130 = tpu.matmul %127, %129, %cst_133 {dimension_numbers = #tpu.dot_dimension_numbers<[1], [0], [0], [1], [0, 0, 1, 1], [], []>} : vector<58x64xbf16>, vector<64x64xbf16>, vector<58x64xf32> -> vector<58x64xf32>
    %131 = arith.addf %126, %130 : vector<58x64xf32>
    %c0_134 = arith.constant 0 : index
    %c0_135 = arith.constant 0 : index
    %132 = vector.load %arg12[%c0_134, %c0_135] : memref<1x64xf32, #tpu.memory_space<vmem>>, vector<1x64xf32>
    %133 = vector.broadcast %132 : vector<1x64xf32> to vector<58x64xf32>
    %134 = arith.addf %131, %133 : vector<58x64xf32>
    %c7_136 = arith.constant 7 : index
    %c0_137 = arith.constant 0 : index
    %135 = vector.load %arg31[%c7_136, %c0_137] : memref<72x64xbf16, #tpu.memory_space<vmem>>, vector<58x64xbf16>
    %136 = arith.extf %135 : vector<58x64xbf16> to vector<58x64xf32>
    %137 = arith.addf %134, %136 : vector<58x64xf32>
    %cst_138 = arith.constant 0.000000e+00 : f32
    %138 = vector.broadcast %cst_138 : f32 to vector<58x64xf32>
    %139 = arith.maximumf %137, %138 : vector<58x64xf32>
    %c0_139 = arith.constant 0 : index
    %c0_140 = arith.constant 0 : index
    %140 = vector.load %arg2[%c0_139, %c0_140] : memref<72x58xbf16, #tpu.memory_space<vmem>>, vector<72x58xbf16>
    %141 = arith.truncf %139 : vector<58x64xf32> to vector<58x64xbf16>
    %cst_141 = arith.constant dense<0.000000e+00> : vector<72x64xf32>
    %142 = tpu.matmul %140, %141, %cst_141 {dimension_numbers = #tpu.dot_dimension_numbers<[1], [0], [0], [1], [0, 0, 1, 1], [], []>} : vector<72x58xbf16>, vector<58x64xbf16>, vector<72x64xf32> -> vector<72x64xf32>
    %143 = arith.truncf %142 : vector<72x64xf32> to vector<72x64xbf16>
    %c0_142 = arith.constant 0 : index
    %c0_143 = arith.constant 0 : index
    %144 = vector.load %arg31[%c0_142, %c0_143] : memref<72x64xbf16, #tpu.memory_space<vmem>>, vector<72x64xbf16>
    tpu.vector_store %arg31[%c0_142, %c0_143], %143 {strides = array<i32>} : memref<72x64xbf16, #tpu.memory_space<vmem>>, vector<72x64xbf16>,
    %c0_144 = arith.constant 0 : index
    %c0_145 = arith.constant 0 : index
    %145 = vector.load %arg31[%c0_144, %c0_145] : memref<72x64xbf16, #tpu.memory_space<vmem>>, vector<58x64xbf16>
    %c0_146 = arith.constant 0 : index
    %c0_147 = arith.constant 0 : index
    %c0_148 = arith.constant 0 : index
    %146 = vector.load %arg13[%c0_146, %c0_147, %c0_148] : memref<9x64x64xbf16, #tpu.memory_space<vmem>>, vector<1x64x64xbf16>
    %147 = vector.shape_cast %146 : vector<1x64x64xbf16> to vector<64x64xbf16>
    %cst_149 = arith.constant dense<0.000000e+00> : vector<58x64xf32>
    %148 = tpu.matmul %145, %147, %cst_149 {dimension_numbers = #tpu.dot_dimension_numbers<[1], [0], [0], [1], [0, 0, 1, 1], [], []>} : vector<58x64xbf16>, vector<64x64xbf16>, vector<58x64xf32> -> vector<58x64xf32>
    %c1_150 = arith.constant 1 : index
    %c0_151 = arith.constant 0 : index
    %149 = vector.load %arg31[%c1_150, %c0_151] : memref<72x64xbf16, #tpu.memory_space<vmem>>, vector<58x64xbf16>
    %c1_152 = arith.constant 1 : index
    %c0_153 = arith.constant 0 : index
    %c0_154 = arith.constant 0 : index
    %150 = vector.load %arg13[%c1_152, %c0_153, %c0_154] : memref<9x64x64xbf16, #tpu.memory_space<vmem>>, vector<1x64x64xbf16>
    %151 = vector.shape_cast %150 : vector<1x64x64xbf16> to vector<64x64xbf16>
    %cst_155 = arith.constant dense<0.000000e+00> : vector<58x64xf32>
    %152 = tpu.matmul %149, %151, %cst_155 {dimension_numbers = #tpu.dot_dimension_numbers<[1], [0], [0], [1], [0, 0, 1, 1], [], []>} : vector<58x64xbf16>, vector<64x64xbf16>, vector<58x64xf32> -> vector<58x64xf32>
    %153 = arith.addf %148, %152 : vector<58x64xf32>
    %c2_156 = arith.constant 2 : index
    %c0_157 = arith.constant 0 : index
    %154 = vector.load %arg31[%c2_156, %c0_157] : memref<72x64xbf16, #tpu.memory_space<vmem>>, vector<58x64xbf16>
    %c2_158 = arith.constant 2 : index
    %c0_159 = arith.constant 0 : index
    %c0_160 = arith.constant 0 : index
    %155 = vector.load %arg13[%c2_158, %c0_159, %c0_160] : memref<9x64x64xbf16, #tpu.memory_space<vmem>>, vector<1x64x64xbf16>
    %156 = vector.shape_cast %155 : vector<1x64x64xbf16> to vector<64x64xbf16>
    %cst_161 = arith.constant dense<0.000000e+00> : vector<58x64xf32>
    %157 = tpu.matmul %154, %156, %cst_161 {dimension_numbers = #tpu.dot_dimension_numbers<[1], [0], [0], [1], [0, 0, 1, 1], [], []>} : vector<58x64xbf16>, vector<64x64xbf16>, vector<58x64xf32> -> vector<58x64xf32>
    %158 = arith.addf %153, %157 : vector<58x64xf32>
    %c6_162 = arith.constant 6 : index
    %c0_163 = arith.constant 0 : index
    %159 = vector.load %arg31[%c6_162, %c0_163] : memref<72x64xbf16, #tpu.memory_space<vmem>>, vector<58x64xbf16>
    %c3_164 = arith.constant 3 : index
    %c0_165 = arith.constant 0 : index
    %c0_166 = arith.constant 0 : index
    %160 = vector.load %arg13[%c3_164, %c0_165, %c0_166] : memref<9x64x64xbf16, #tpu.memory_space<vmem>>, vector<1x64x64xbf16>
    %161 = vector.shape_cast %160 : vector<1x64x64xbf16> to vector<64x64xbf16>
    %cst_167 = arith.constant dense<0.000000e+00> : vector<58x64xf32>
    %162 = tpu.matmul %159, %161, %cst_167 {dimension_numbers = #tpu.dot_dimension_numbers<[1], [0], [0], [1], [0, 0, 1, 1], [], []>} : vector<58x64xbf16>, vector<64x64xbf16>, vector<58x64xf32> -> vector<58x64xf32>
    %163 = arith.addf %158, %162 : vector<58x64xf32>
    %c7_168 = arith.constant 7 : index
    %c0_169 = arith.constant 0 : index
    %164 = vector.load %arg31[%c7_168, %c0_169] : memref<72x64xbf16, #tpu.memory_space<vmem>>, vector<58x64xbf16>
    %c4_170 = arith.constant 4 : index
    %c0_171 = arith.constant 0 : index
    %c0_172 = arith.constant 0 : index
    %165 = vector.load %arg13[%c4_170, %c0_171, %c0_172] : memref<9x64x64xbf16, #tpu.memory_space<vmem>>, vector<1x64x64xbf16>
    %166 = vector.shape_cast %165 : vector<1x64x64xbf16> to vector<64x64xbf16>
    %cst_173 = arith.constant dense<0.000000e+00> : vector<58x64xf32>
    %167 = tpu.matmul %164, %166, %cst_173 {dimension_numbers = #tpu.dot_dimension_numbers<[1], [0], [0], [1], [0, 0, 1, 1], [], []>} : vector<58x64xbf16>, vector<64x64xbf16>, vector<58x64xf32> -> vector<58x64xf32>
    %168 = arith.addf %163, %167 : vector<58x64xf32>
    %c8_174 = arith.constant 8 : index
    %c0_175 = arith.constant 0 : index
    %169 = vector.load %arg31[%c8_174, %c0_175] : memref<72x64xbf16, #tpu.memory_space<vmem>>, vector<58x64xbf16>
    %c5_176 = arith.constant 5 : index
    %c0_177 = arith.constant 0 : index
    %c0_178 = arith.constant 0 : index
    %170 = vector.load %arg13[%c5_176, %c0_177, %c0_178] : memref<9x64x64xbf16, #tpu.memory_space<vmem>>, vector<1x64x64xbf16>
    %171 = vector.shape_cast %170 : vector<1x64x64xbf16> to vector<64x64xbf16>
    %cst_179 = arith.constant dense<0.000000e+00> : vector<58x64xf32>
    %172 = tpu.matmul %169, %171, %cst_179 {dimension_numbers = #tpu.dot_dimension_numbers<[1], [0], [0], [1], [0, 0, 1, 1], [], []>} : vector<58x64xbf16>, vector<64x64xbf16>, vector<58x64xf32> -> vector<58x64xf32>
    %173 = arith.addf %168, %172 : vector<58x64xf32>
    %c12_180 = arith.constant 12 : index
    %c0_181 = arith.constant 0 : index
    %174 = vector.load %arg31[%c12_180, %c0_181] : memref<72x64xbf16, #tpu.memory_space<vmem>>, vector<58x64xbf16>
    %c6_182 = arith.constant 6 : index
    %c0_183 = arith.constant 0 : index
    %c0_184 = arith.constant 0 : index
    %175 = vector.load %arg13[%c6_182, %c0_183, %c0_184] : memref<9x64x64xbf16, #tpu.memory_space<vmem>>, vector<1x64x64xbf16>
    %176 = vector.shape_cast %175 : vector<1x64x64xbf16> to vector<64x64xbf16>
    %cst_185 = arith.constant dense<0.000000e+00> : vector<58x64xf32>
    %177 = tpu.matmul %174, %176, %cst_185 {dimension_numbers = #tpu.dot_dimension_numbers<[1], [0], [0], [1], [0, 0, 1, 1], [], []>} : vector<58x64xbf16>, vector<64x64xbf16>, vector<58x64xf32> -> vector<58x64xf32>
    %178 = arith.addf %173, %177 : vector<58x64xf32>
    %c13_186 = arith.constant 13 : index
    %c0_187 = arith.constant 0 : index
    %179 = vector.load %arg31[%c13_186, %c0_187] : memref<72x64xbf16, #tpu.memory_space<vmem>>, vector<58x64xbf16>
    %c7_188 = arith.constant 7 : index
    %c0_189 = arith.constant 0 : index
    %c0_190 = arith.constant 0 : index
    %180 = vector.load %arg13[%c7_188, %c0_189, %c0_190] : memref<9x64x64xbf16, #tpu.memory_space<vmem>>, vector<1x64x64xbf16>
    %181 = vector.shape_cast %180 : vector<1x64x64xbf16> to vector<64x64xbf16>
    %cst_191 = arith.constant dense<0.000000e+00> : vector<58x64xf32>
    %182 = tpu.matmul %179, %181, %cst_191 {dimension_numbers = #tpu.dot_dimension_numbers<[1], [0], [0], [1], [0, 0, 1, 1], [], []>} : vector<58x64xbf16>, vector<64x64xbf16>, vector<58x64xf32> -> vector<58x64xf32>
    %183 = arith.addf %178, %182 : vector<58x64xf32>
    %c14_192 = arith.constant 14 : index
    %c0_193 = arith.constant 0 : index
    %184 = vector.load %arg31[%c14_192, %c0_193] : memref<72x64xbf16, #tpu.memory_space<vmem>>, vector<58x64xbf16>
    %c8_194 = arith.constant 8 : index
    %c0_195 = arith.constant 0 : index
    %c0_196 = arith.constant 0 : index
    %185 = vector.load %arg13[%c8_194, %c0_195, %c0_196] : memref<9x64x64xbf16, #tpu.memory_space<vmem>>, vector<1x64x64xbf16>
    %186 = vector.shape_cast %185 : vector<1x64x64xbf16> to vector<64x64xbf16>
    %cst_197 = arith.constant dense<0.000000e+00> : vector<58x64xf32>
    %187 = tpu.matmul %184, %186, %cst_197 {dimension_numbers = #tpu.dot_dimension_numbers<[1], [0], [0], [1], [0, 0, 1, 1], [], []>} : vector<58x64xbf16>, vector<64x64xbf16>, vector<58x64xf32> -> vector<58x64xf32>
    %188 = arith.addf %183, %187 : vector<58x64xf32>
    %c0_198 = arith.constant 0 : index
    %c0_199 = arith.constant 0 : index
    %189 = vector.load %arg14[%c0_198, %c0_199] : memref<1x64xf32, #tpu.memory_space<vmem>>, vector<1x64xf32>
    %190 = vector.broadcast %189 : vector<1x64xf32> to vector<58x64xf32>
    %191 = arith.addf %188, %190 : vector<58x64xf32>
    %cst_200 = arith.constant 0.000000e+00 : f32
    %192 = vector.broadcast %cst_200 : f32 to vector<58x64xf32>
    %193 = arith.maximumf %191, %192 : vector<58x64xf32>
    %c0_201 = arith.constant 0 : index
    %c0_202 = arith.constant 0 : index
    %194 = vector.load %arg2[%c0_201, %c0_202] : memref<72x58xbf16, #tpu.memory_space<vmem>>, vector<72x58xbf16>
    %195 = arith.truncf %193 : vector<58x64xf32> to vector<58x64xbf16>
    %cst_203 = arith.constant dense<0.000000e+00> : vector<72x64xf32>
    %196 = tpu.matmul %194, %195, %cst_203 {dimension_numbers = #tpu.dot_dimension_numbers<[1], [0], [0], [1], [0, 0, 1, 1], [], []>} : vector<72x58xbf16>, vector<58x64xbf16>, vector<72x64xf32> -> vector<72x64xf32>
    %197 = arith.truncf %196 : vector<72x64xf32> to vector<72x64xbf16>
    %c0_204 = arith.constant 0 : index
    %c0_205 = arith.constant 0 : index
    %198 = vector.load %arg32[%c0_204, %c0_205] : memref<72x64xbf16, #tpu.memory_space<vmem>>, vector<72x64xbf16>
    tpu.vector_store %arg32[%c0_204, %c0_205], %197 {strides = array<i32>} : memref<72x64xbf16, #tpu.memory_space<vmem>>, vector<72x64xbf16>,
    %c0_206 = arith.constant 0 : index
    %c0_207 = arith.constant 0 : index
    %199 = vector.load %arg32[%c0_206, %c0_207] : memref<72x64xbf16, #tpu.memory_space<vmem>>, vector<58x64xbf16>
    %c0_208 = arith.constant 0 : index
    %c0_209 = arith.constant 0 : index
    %c0_210 = arith.constant 0 : index
    %200 = vector.load %arg15[%c0_208, %c0_209, %c0_210] : memref<9x64x64xbf16, #tpu.memory_space<vmem>>, vector<1x64x64xbf16>
    %201 = vector.shape_cast %200 : vector<1x64x64xbf16> to vector<64x64xbf16>
    %cst_211 = arith.constant dense<0.000000e+00> : vector<58x64xf32>
    %202 = tpu.matmul %199, %201, %cst_211 {dimension_numbers = #tpu.dot_dimension_numbers<[1], [0], [0], [1], [0, 0, 1, 1], [], []>} : vector<58x64xbf16>, vector<64x64xbf16>, vector<58x64xf32> -> vector<58x64xf32>
    %c1_212 = arith.constant 1 : index
    %c0_213 = arith.constant 0 : index
    %203 = vector.load %arg32[%c1_212, %c0_213] : memref<72x64xbf16, #tpu.memory_space<vmem>>, vector<58x64xbf16>
    %c1_214 = arith.constant 1 : index
    %c0_215 = arith.constant 0 : index
    %c0_216 = arith.constant 0 : index
    %204 = vector.load %arg15[%c1_214, %c0_215, %c0_216] : memref<9x64x64xbf16, #tpu.memory_space<vmem>>, vector<1x64x64xbf16>
    %205 = vector.shape_cast %204 : vector<1x64x64xbf16> to vector<64x64xbf16>
    %cst_217 = arith.constant dense<0.000000e+00> : vector<58x64xf32>
    %206 = tpu.matmul %203, %205, %cst_217 {dimension_numbers = #tpu.dot_dimension_numbers<[1], [0], [0], [1], [0, 0, 1, 1], [], []>} : vector<58x64xbf16>, vector<64x64xbf16>, vector<58x64xf32> -> vector<58x64xf32>
    %207 = arith.addf %202, %206 : vector<58x64xf32>
    %c2_218 = arith.constant 2 : index
    %c0_219 = arith.constant 0 : index
    %208 = vector.load %arg32[%c2_218, %c0_219] : memref<72x64xbf16, #tpu.memory_space<vmem>>, vector<58x64xbf16>
    %c2_220 = arith.constant 2 : index
    %c0_221 = arith.constant 0 : index
    %c0_222 = arith.constant 0 : index
    %209 = vector.load %arg15[%c2_220, %c0_221, %c0_222] : memref<9x64x64xbf16, #tpu.memory_space<vmem>>, vector<1x64x64xbf16>
    %210 = vector.shape_cast %209 : vector<1x64x64xbf16> to vector<64x64xbf16>
    %cst_223 = arith.constant dense<0.000000e+00> : vector<58x64xf32>
    %211 = tpu.matmul %208, %210, %cst_223 {dimension_numbers = #tpu.dot_dimension_numbers<[1], [0], [0], [1], [0, 0, 1, 1], [], []>} : vector<58x64xbf16>, vector<64x64xbf16>, vector<58x64xf32> -> vector<58x64xf32>
    %212 = arith.addf %207, %211 : vector<58x64xf32>
    %c6_224 = arith.constant 6 : index
    %c0_225 = arith.constant 0 : index
    %213 = vector.load %arg32[%c6_224, %c0_225] : memref<72x64xbf16, #tpu.memory_space<vmem>>, vector<58x64xbf16>
    %c3_226 = arith.constant 3 : index
    %c0_227 = arith.constant 0 : index
    %c0_228 = arith.constant 0 : index
    %214 = vector.load %arg15[%c3_226, %c0_227, %c0_228] : memref<9x64x64xbf16, #tpu.memory_space<vmem>>, vector<1x64x64xbf16>
    %215 = vector.shape_cast %214 : vector<1x64x64xbf16> to vector<64x64xbf16>
    %cst_229 = arith.constant dense<0.000000e+00> : vector<58x64xf32>
    %216 = tpu.matmul %213, %215, %cst_229 {dimension_numbers = #tpu.dot_dimension_numbers<[1], [0], [0], [1], [0, 0, 1, 1], [], []>} : vector<58x64xbf16>, vector<64x64xbf16>, vector<58x64xf32> -> vector<58x64xf32>
    %217 = arith.addf %212, %216 : vector<58x64xf32>
    %c7_230 = arith.constant 7 : index
    %c0_231 = arith.constant 0 : index
    %218 = vector.load %arg32[%c7_230, %c0_231] : memref<72x64xbf16, #tpu.memory_space<vmem>>, vector<58x64xbf16>
    %c4_232 = arith.constant 4 : index
    %c0_233 = arith.constant 0 : index
    %c0_234 = arith.constant 0 : index
    %219 = vector.load %arg15[%c4_232, %c0_233, %c0_234] : memref<9x64x64xbf16, #tpu.memory_space<vmem>>, vector<1x64x64xbf16>
    %220 = vector.shape_cast %219 : vector<1x64x64xbf16> to vector<64x64xbf16>
    %cst_235 = arith.constant dense<0.000000e+00> : vector<58x64xf32>
    %221 = tpu.matmul %218, %220, %cst_235 {dimension_numbers = #tpu.dot_dimension_numbers<[1], [0], [0], [1], [0, 0, 1, 1], [], []>} : vector<58x64xbf16>, vector<64x64xbf16>, vector<58x64xf32> -> vector<58x64xf32>
    %222 = arith.addf %217, %221 : vector<58x64xf32>
    %c8_236 = arith.constant 8 : index
    %c0_237 = arith.constant 0 : index
    %223 = vector.load %arg32[%c8_236, %c0_237] : memref<72x64xbf16, #tpu.memory_space<vmem>>, vector<58x64xbf16>
    %c5_238 = arith.constant 5 : index
    %c0_239 = arith.constant 0 : index
    %c0_240 = arith.constant 0 : index
    %224 = vector.load %arg15[%c5_238, %c0_239, %c0_240] : memref<9x64x64xbf16, #tpu.memory_space<vmem>>, vector<1x64x64xbf16>
    %225 = vector.shape_cast %224 : vector<1x64x64xbf16> to vector<64x64xbf16>
    %cst_241 = arith.constant dense<0.000000e+00> : vector<58x64xf32>
    %226 = tpu.matmul %223, %225, %cst_241 {dimension_numbers = #tpu.dot_dimension_numbers<[1], [0], [0], [1], [0, 0, 1, 1], [], []>} : vector<58x64xbf16>, vector<64x64xbf16>, vector<58x64xf32> -> vector<58x64xf32>
    %227 = arith.addf %222, %226 : vector<58x64xf32>
    %c12_242 = arith.constant 12 : index
    %c0_243 = arith.constant 0 : index
    %228 = vector.load %arg32[%c12_242, %c0_243] : memref<72x64xbf16, #tpu.memory_space<vmem>>, vector<58x64xbf16>
    %c6_244 = arith.constant 6 : index
    %c0_245 = arith.constant 0 : index
    %c0_246 = arith.constant 0 : index
    %229 = vector.load %arg15[%c6_244, %c0_245, %c0_246] : memref<9x64x64xbf16, #tpu.memory_space<vmem>>, vector<1x64x64xbf16>
    %230 = vector.shape_cast %229 : vector<1x64x64xbf16> to vector<64x64xbf16>
    %cst_247 = arith.constant dense<0.000000e+00> : vector<58x64xf32>
    %231 = tpu.matmul %228, %230, %cst_247 {dimension_numbers = #tpu.dot_dimension_numbers<[1], [0], [0], [1], [0, 0, 1, 1], [], []>} : vector<58x64xbf16>, vector<64x64xbf16>, vector<58x64xf32> -> vector<58x64xf32>
    %232 = arith.addf %227, %231 : vector<58x64xf32>
    %c13_248 = arith.constant 13 : index
    %c0_249 = arith.constant 0 : index
    %233 = vector.load %arg32[%c13_248, %c0_249] : memref<72x64xbf16, #tpu.memory_space<vmem>>, vector<58x64xbf16>
    %c7_250 = arith.constant 7 : index
    %c0_251 = arith.constant 0 : index
    %c0_252 = arith.constant 0 : index
    %234 = vector.load %arg15[%c7_250, %c0_251, %c0_252] : memref<9x64x64xbf16, #tpu.memory_space<vmem>>, vector<1x64x64xbf16>
    %235 = vector.shape_cast %234 : vector<1x64x64xbf16> to vector<64x64xbf16>
    %cst_253 = arith.constant dense<0.000000e+00> : vector<58x64xf32>
    %236 = tpu.matmul %233, %235, %cst_253 {dimension_numbers = #tpu.dot_dimension_numbers<[1], [0], [0], [1], [0, 0, 1, 1], [], []>} : vector<58x64xbf16>, vector<64x64xbf16>, vector<58x64xf32> -> vector<58x64xf32>
    %237 = arith.addf %232, %236 : vector<58x64xf32>
    %c14_254 = arith.constant 14 : index
    %c0_255 = arith.constant 0 : index
    %238 = vector.load %arg32[%c14_254, %c0_255] : memref<72x64xbf16, #tpu.memory_space<vmem>>, vector<58x64xbf16>
    %c8_256 = arith.constant 8 : index
    %c0_257 = arith.constant 0 : index
    %c0_258 = arith.constant 0 : index
    %239 = vector.load %arg15[%c8_256, %c0_257, %c0_258] : memref<9x64x64xbf16, #tpu.memory_space<vmem>>, vector<1x64x64xbf16>
    %240 = vector.shape_cast %239 : vector<1x64x64xbf16> to vector<64x64xbf16>
    %cst_259 = arith.constant dense<0.000000e+00> : vector<58x64xf32>
    %241 = tpu.matmul %238, %240, %cst_259 {dimension_numbers = #tpu.dot_dimension_numbers<[1], [0], [0], [1], [0, 0, 1, 1], [], []>} : vector<58x64xbf16>, vector<64x64xbf16>, vector<58x64xf32> -> vector<58x64xf32>
    %242 = arith.addf %237, %241 : vector<58x64xf32>
    %c0_260 = arith.constant 0 : index
    %c0_261 = arith.constant 0 : index
    %243 = vector.load %arg16[%c0_260, %c0_261] : memref<1x64xf32, #tpu.memory_space<vmem>>, vector<1x64xf32>
    %244 = vector.broadcast %243 : vector<1x64xf32> to vector<58x64xf32>
    %245 = arith.addf %242, %244 : vector<58x64xf32>
    %c7_262 = arith.constant 7 : index
    %c0_263 = arith.constant 0 : index
    %246 = vector.load %arg31[%c7_262, %c0_263] : memref<72x64xbf16, #tpu.memory_space<vmem>>, vector<58x64xbf16>
    %247 = arith.extf %246 : vector<58x64xbf16> to vector<58x64xf32>
    %248 = arith.addf %245, %247 : vector<58x64xf32>
    %cst_264 = arith.constant 0.000000e+00 : f32
    %249 = vector.broadcast %cst_264 : f32 to vector<58x64xf32>
    %250 = arith.maximumf %248, %249 : vector<58x64xf32>
    %c0_265 = arith.constant 0 : index
    %c0_266 = arith.constant 0 : index
    %251 = vector.load %arg2[%c0_265, %c0_266] : memref<72x58xbf16, #tpu.memory_space<vmem>>, vector<72x58xbf16>
    %252 = arith.truncf %250 : vector<58x64xf32> to vector<58x64xbf16>
    %cst_267 = arith.constant dense<0.000000e+00> : vector<72x64xf32>
    %253 = tpu.matmul %251, %252, %cst_267 {dimension_numbers = #tpu.dot_dimension_numbers<[1], [0], [0], [1], [0, 0, 1, 1], [], []>} : vector<72x58xbf16>, vector<58x64xbf16>, vector<72x64xf32> -> vector<72x64xf32>
    %254 = arith.truncf %253 : vector<72x64xf32> to vector<72x64xbf16>
    %c0_268 = arith.constant 0 : index
    %c0_269 = arith.constant 0 : index
    %255 = vector.load %arg31[%c0_268, %c0_269] : memref<72x64xbf16, #tpu.memory_space<vmem>>, vector<72x64xbf16>
    tpu.vector_store %arg31[%c0_268, %c0_269], %254 {strides = array<i32>} : memref<72x64xbf16, #tpu.memory_space<vmem>>, vector<72x64xbf16>,
    %c7_270 = arith.constant 7 : index
    %c0_271 = arith.constant 0 : index
    %256 = vector.load %arg31[%c7_270, %c0_271] : memref<72x64xbf16, #tpu.memory_space<vmem>>, vector<51x64xbf16>
    %c0_272 = arith.constant 0 : index
    %c0_273 = arith.constant 0 : index
    %257 = vector.load %arg21[%c0_272, %c0_273] : memref<64x128xbf16, #tpu.memory_space<vmem>>, vector<64x128xbf16>
    %cst_274 = arith.constant dense<0.000000e+00> : vector<51x128xf32>
    %258 = tpu.matmul %256, %257, %cst_274 {dimension_numbers = #tpu.dot_dimension_numbers<[1], [0], [0], [1], [0, 0, 1, 1], [], []>} : vector<51x64xbf16>, vector<64x128xbf16>, vector<51x128xf32> -> vector<51x128xf32>
    %c0_275 = arith.constant 0 : index
    %c0_276 = arith.constant 0 : index
    %259 = vector.load %arg22[%c0_275, %c0_276] : memref<1x128xf32, #tpu.memory_space<vmem>>, vector<1x128xf32>
    %260 = vector.broadcast %259 : vector<1x128xf32> to vector<51x128xf32>
    %261 = arith.addf %258, %260 : vector<51x128xf32>
    %c0_277 = arith.constant 0 : index
    %c0_278 = arith.constant 0 : index
    %262 = vector.load %arg3[%c0_277, %c0_278] : memref<32x51xbf16, #tpu.memory_space<vmem>>, vector<32x51xbf16>
    %263 = arith.truncf %261 : vector<51x128xf32> to vector<51x128xbf16>
    %cst_279 = arith.constant dense<0.000000e+00> : vector<32x128xf32>
    %264 = tpu.matmul %262, %263, %cst_279 {dimension_numbers = #tpu.dot_dimension_numbers<[1], [0], [0], [1], [0, 0, 1, 1], [], []>} : vector<32x51xbf16>, vector<51x128xbf16>, vector<32x128xf32> -> vector<32x128xf32>
    %265 = arith.truncf %264 : vector<32x128xf32> to vector<32x128xbf16>
    %c0_280 = arith.constant 0 : index
    %c0_281 = arith.constant 0 : index
    %266 = vector.load %arg33[%c0_280, %c0_281] : memref<32x128xbf16, #tpu.memory_space<vmem>>, vector<32x128xbf16>
    tpu.vector_store %arg33[%c0_280, %c0_281], %265 {strides = array<i32>} : memref<32x128xbf16, #tpu.memory_space<vmem>>, vector<32x128xbf16>,
    %c0_282 = arith.constant 0 : index
    %c0_283 = arith.constant 0 : index
    %267 = vector.load %arg31[%c0_282, %c0_283] : memref<72x64xbf16, #tpu.memory_space<vmem>>, vector<51x64xbf16>
    %c0_284 = arith.constant 0 : index
    %c0_285 = arith.constant 0 : index
    %c0_286 = arith.constant 0 : index
    %268 = vector.load %arg17[%c0_284, %c0_285, %c0_286] : memref<9x64x128xbf16, #tpu.memory_space<vmem>>, vector<1x64x128xbf16>
    %269 = vector.shape_cast %268 : vector<1x64x128xbf16> to vector<64x128xbf16>
    %cst_287 = arith.constant dense<0.000000e+00> : vector<51x128xf32>
    %270 = tpu.matmul %267, %269, %cst_287 {dimension_numbers = #tpu.dot_dimension_numbers<[1], [0], [0], [1], [0, 0, 1, 1], [], []>} : vector<51x64xbf16>, vector<64x128xbf16>, vector<51x128xf32> -> vector<51x128xf32>
    %c1_288 = arith.constant 1 : index
    %c0_289 = arith.constant 0 : index
    %271 = vector.load %arg31[%c1_288, %c0_289] : memref<72x64xbf16, #tpu.memory_space<vmem>>, vector<51x64xbf16>
    %c1_290 = arith.constant 1 : index
    %c0_291 = arith.constant 0 : index
    %c0_292 = arith.constant 0 : index
    %272 = vector.load %arg17[%c1_290, %c0_291, %c0_292] : memref<9x64x128xbf16, #tpu.memory_space<vmem>>, vector<1x64x128xbf16>
    %273 = vector.shape_cast %272 : vector<1x64x128xbf16> to vector<64x128xbf16>
    %cst_293 = arith.constant dense<0.000000e+00> : vector<51x128xf32>
    %274 = tpu.matmul %271, %273, %cst_293 {dimension_numbers = #tpu.dot_dimension_numbers<[1], [0], [0], [1], [0, 0, 1, 1], [], []>} : vector<51x64xbf16>, vector<64x128xbf16>, vector<51x128xf32> -> vector<51x128xf32>
    %275 = arith.addf %270, %274 : vector<51x128xf32>
    %c2_294 = arith.constant 2 : index
    %c0_295 = arith.constant 0 : index
    %276 = vector.load %arg31[%c2_294, %c0_295] : memref<72x64xbf16, #tpu.memory_space<vmem>>, vector<51x64xbf16>
    %c2_296 = arith.constant 2 : index
    %c0_297 = arith.constant 0 : index
    %c0_298 = arith.constant 0 : index
    %277 = vector.load %arg17[%c2_296, %c0_297, %c0_298] : memref<9x64x128xbf16, #tpu.memory_space<vmem>>, vector<1x64x128xbf16>
    %278 = vector.shape_cast %277 : vector<1x64x128xbf16> to vector<64x128xbf16>
    %cst_299 = arith.constant dense<0.000000e+00> : vector<51x128xf32>
    %279 = tpu.matmul %276, %278, %cst_299 {dimension_numbers = #tpu.dot_dimension_numbers<[1], [0], [0], [1], [0, 0, 1, 1], [], []>} : vector<51x64xbf16>, vector<64x128xbf16>, vector<51x128xf32> -> vector<51x128xf32>
    %280 = arith.addf %275, %279 : vector<51x128xf32>
    %c6_300 = arith.constant 6 : index
    %c0_301 = arith.constant 0 : index
    %281 = vector.load %arg31[%c6_300, %c0_301] : memref<72x64xbf16, #tpu.memory_space<vmem>>, vector<51x64xbf16>
    %c3_302 = arith.constant 3 : index
    %c0_303 = arith.constant 0 : index
    %c0_304 = arith.constant 0 : index
    %282 = vector.load %arg17[%c3_302, %c0_303, %c0_304] : memref<9x64x128xbf16, #tpu.memory_space<vmem>>, vector<1x64x128xbf16>
    %283 = vector.shape_cast %282 : vector<1x64x128xbf16> to vector<64x128xbf16>
    %cst_305 = arith.constant dense<0.000000e+00> : vector<51x128xf32>
    %284 = tpu.matmul %281, %283, %cst_305 {dimension_numbers = #tpu.dot_dimension_numbers<[1], [0], [0], [1], [0, 0, 1, 1], [], []>} : vector<51x64xbf16>, vector<64x128xbf16>, vector<51x128xf32> -> vector<51x128xf32>
    %285 = arith.addf %280, %284 : vector<51x128xf32>
    %c7_306 = arith.constant 7 : index
    %c0_307 = arith.constant 0 : index
    %286 = vector.load %arg31[%c7_306, %c0_307] : memref<72x64xbf16, #tpu.memory_space<vmem>>, vector<51x64xbf16>
    %c4_308 = arith.constant 4 : index
    %c0_309 = arith.constant 0 : index
    %c0_310 = arith.constant 0 : index
    %287 = vector.load %arg17[%c4_308, %c0_309, %c0_310] : memref<9x64x128xbf16, #tpu.memory_space<vmem>>, vector<1x64x128xbf16>
    %288 = vector.shape_cast %287 : vector<1x64x128xbf16> to vector<64x128xbf16>
    %cst_311 = arith.constant dense<0.000000e+00> : vector<51x128xf32>
    %289 = tpu.matmul %286, %288, %cst_311 {dimension_numbers = #tpu.dot_dimension_numbers<[1], [0], [0], [1], [0, 0, 1, 1], [], []>} : vector<51x64xbf16>, vector<64x128xbf16>, vector<51x128xf32> -> vector<51x128xf32>
    %290 = arith.addf %285, %289 : vector<51x128xf32>
    %c8_312 = arith.constant 8 : index
    %c0_313 = arith.constant 0 : index
    %291 = vector.load %arg31[%c8_312, %c0_313] : memref<72x64xbf16, #tpu.memory_space<vmem>>, vector<51x64xbf16>
    %c5_314 = arith.constant 5 : index
    %c0_315 = arith.constant 0 : index
    %c0_316 = arith.constant 0 : index
    %292 = vector.load %arg17[%c5_314, %c0_315, %c0_316] : memref<9x64x128xbf16, #tpu.memory_space<vmem>>, vector<1x64x128xbf16>
    %293 = vector.shape_cast %292 : vector<1x64x128xbf16> to vector<64x128xbf16>
    %cst_317 = arith.constant dense<0.000000e+00> : vector<51x128xf32>
    %294 = tpu.matmul %291, %293, %cst_317 {dimension_numbers = #tpu.dot_dimension_numbers<[1], [0], [0], [1], [0, 0, 1, 1], [], []>} : vector<51x64xbf16>, vector<64x128xbf16>, vector<51x128xf32> -> vector<51x128xf32>
    %295 = arith.addf %290, %294 : vector<51x128xf32>
    %c12_318 = arith.constant 12 : index
    %c0_319 = arith.constant 0 : index
    %296 = vector.load %arg31[%c12_318, %c0_319] : memref<72x64xbf16, #tpu.memory_space<vmem>>, vector<51x64xbf16>
    %c6_320 = arith.constant 6 : index
    %c0_321 = arith.constant 0 : index
    %c0_322 = arith.constant 0 : index
    %297 = vector.load %arg17[%c6_320, %c0_321, %c0_322] : memref<9x64x128xbf16, #tpu.memory_space<vmem>>, vector<1x64x128xbf16>
    %298 = vector.shape_cast %297 : vector<1x64x128xbf16> to vector<64x128xbf16>
    %cst_323 = arith.constant dense<0.000000e+00> : vector<51x128xf32>
    %299 = tpu.matmul %296, %298, %cst_323 {dimension_numbers = #tpu.dot_dimension_numbers<[1], [0], [0], [1], [0, 0, 1, 1], [], []>} : vector<51x64xbf16>, vector<64x128xbf16>, vector<51x128xf32> -> vector<51x128xf32>
    %300 = arith.addf %295, %299 : vector<51x128xf32>
    %c13_324 = arith.constant 13 : index
    %c0_325 = arith.constant 0 : index
    %301 = vector.load %arg31[%c13_324, %c0_325] : memref<72x64xbf16, #tpu.memory_space<vmem>>, vector<51x64xbf16>
    %c7_326 = arith.constant 7 : index
    %c0_327 = arith.constant 0 : index
    %c0_328 = arith.constant 0 : index
    %302 = vector.load %arg17[%c7_326, %c0_327, %c0_328] : memref<9x64x128xbf16, #tpu.memory_space<vmem>>, vector<1x64x128xbf16>
    %303 = vector.shape_cast %302 : vector<1x64x128xbf16> to vector<64x128xbf16>
    %cst_329 = arith.constant dense<0.000000e+00> : vector<51x128xf32>
    %304 = tpu.matmul %301, %303, %cst_329 {dimension_numbers = #tpu.dot_dimension_numbers<[1], [0], [0], [1], [0, 0, 1, 1], [], []>} : vector<51x64xbf16>, vector<64x128xbf16>, vector<51x128xf32> -> vector<51x128xf32>
    %305 = arith.addf %300, %304 : vector<51x128xf32>
    %c14_330 = arith.constant 14 : index
    %c0_331 = arith.constant 0 : index
    %306 = vector.load %arg31[%c14_330, %c0_331] : memref<72x64xbf16, #tpu.memory_space<vmem>>, vector<51x64xbf16>
    %c8_332 = arith.constant 8 : index
    %c0_333 = arith.constant 0 : index
    %c0_334 = arith.constant 0 : index
    %307 = vector.load %arg17[%c8_332, %c0_333, %c0_334] : memref<9x64x128xbf16, #tpu.memory_space<vmem>>, vector<1x64x128xbf16>
    %308 = vector.shape_cast %307 : vector<1x64x128xbf16> to vector<64x128xbf16>
    %cst_335 = arith.constant dense<0.000000e+00> : vector<51x128xf32>
    %309 = tpu.matmul %306, %308, %cst_335 {dimension_numbers = #tpu.dot_dimension_numbers<[1], [0], [0], [1], [0, 0, 1, 1], [], []>} : vector<51x64xbf16>, vector<64x128xbf16>, vector<51x128xf32> -> vector<51x128xf32>
    %310 = arith.addf %305, %309 : vector<51x128xf32>
    %c0_336 = arith.constant 0 : index
    %c0_337 = arith.constant 0 : index
    %311 = vector.load %arg18[%c0_336, %c0_337] : memref<1x128xf32, #tpu.memory_space<vmem>>, vector<1x128xf32>
    %312 = vector.broadcast %311 : vector<1x128xf32> to vector<51x128xf32>
    %313 = arith.addf %310, %312 : vector<51x128xf32>
    %cst_338 = arith.constant 0.000000e+00 : f32
    %314 = vector.broadcast %cst_338 : f32 to vector<51x128xf32>
    %315 = arith.maximumf %313, %314 : vector<51x128xf32>
    %c0_339 = arith.constant 0 : index
    %c0_340 = arith.constant 0 : index
    %316 = vector.load %arg3[%c0_339, %c0_340] : memref<32x51xbf16, #tpu.memory_space<vmem>>, vector<32x51xbf16>
    %317 = arith.truncf %315 : vector<51x128xf32> to vector<51x128xbf16>
    %cst_341 = arith.constant dense<0.000000e+00> : vector<32x128xf32>
    %318 = tpu.matmul %316, %317, %cst_341 {dimension_numbers = #tpu.dot_dimension_numbers<[1], [0], [0], [1], [0, 0, 1, 1], [], []>} : vector<32x51xbf16>, vector<51x128xbf16>, vector<32x128xf32> -> vector<32x128xf32>
    %319 = arith.truncf %318 : vector<32x128xf32> to vector<32x128xbf16>
    %c0_342 = arith.constant 0 : index
    %c0_343 = arith.constant 0 : index
    %320 = vector.load %arg34[%c0_342, %c0_343] : memref<32x128xbf16, #tpu.memory_space<vmem>>, vector<32x128xbf16>
    tpu.vector_store %arg34[%c0_342, %c0_343], %319 {strides = array<i32>} : memref<32x128xbf16, #tpu.memory_space<vmem>>, vector<32x128xbf16>,
    %c0_344 = arith.constant 0 : index
    %c0_345 = arith.constant 0 : index
    %321 = vector.load %arg34[%c0_344, %c0_345] : memref<32x128xbf16, #tpu.memory_space<vmem>>, vector<22x128xbf16>
    %c0_346 = arith.constant 0 : index
    %c0_347 = arith.constant 0 : index
    %c0_348 = arith.constant 0 : index
    %322 = vector.load %arg19[%c0_346, %c0_347, %c0_348] : memref<9x128x128xbf16, #tpu.memory_space<vmem>>, vector<1x128x128xbf16>
    %323 = vector.shape_cast %322 : vector<1x128x128xbf16> to vector<128x128xbf16>
    %cst_349 = arith.constant dense<0.000000e+00> : vector<22x128xf32>
    %324 = tpu.matmul %321, %323, %cst_349 {dimension_numbers = #tpu.dot_dimension_numbers<[1], [0], [0], [1], [0, 0, 1, 1], [], []>} : vector<22x128xbf16>, vector<128x128xbf16>, vector<22x128xf32> -> vector<22x128xf32>
    %c1_350 = arith.constant 1 : index
    %c0_351 = arith.constant 0 : index
    %325 = vector.load %arg34[%c1_350, %c0_351] : memref<32x128xbf16, #tpu.memory_space<vmem>>, vector<22x128xbf16>
    %c1_352 = arith.constant 1 : index
    %c0_353 = arith.constant 0 : index
    %c0_354 = arith.constant 0 : index
    %326 = vector.load %arg19[%c1_352, %c0_353, %c0_354] : memref<9x128x128xbf16, #tpu.memory_space<vmem>>, vector<1x128x128xbf16>
    %327 = vector.shape_cast %326 : vector<1x128x128xbf16> to vector<128x128xbf16>
    %cst_355 = arith.constant dense<0.000000e+00> : vector<22x128xf32>
    %328 = tpu.matmul %325, %327, %cst_355 {dimension_numbers = #tpu.dot_dimension_numbers<[1], [0], [0], [1], [0, 0, 1, 1], [], []>} : vector<22x128xbf16>, vector<128x128xbf16>, vector<22x128xf32> -> vector<22x128xf32>
    %329 = arith.addf %324, %328 : vector<22x128xf32>
    %c2_356 = arith.constant 2 : index
    %c0_357 = arith.constant 0 : index
    %330 = vector.load %arg34[%c2_356, %c0_357] : memref<32x128xbf16, #tpu.memory_space<vmem>>, vector<22x128xbf16>
    %c2_358 = arith.constant 2 : index
    %c0_359 = arith.constant 0 : index
    %c0_360 = arith.constant 0 : index
    %331 = vector.load %arg19[%c2_358, %c0_359, %c0_360] : memref<9x128x128xbf16, #tpu.memory_space<vmem>>, vector<1x128x128xbf16>
    %332 = vector.shape_cast %331 : vector<1x128x128xbf16> to vector<128x128xbf16>
    %cst_361 = arith.constant dense<0.000000e+00> : vector<22x128xf32>
    %333 = tpu.matmul %330, %332, %cst_361 {dimension_numbers = #tpu.dot_dimension_numbers<[1], [0], [0], [1], [0, 0, 1, 1], [], []>} : vector<22x128xbf16>, vector<128x128xbf16>, vector<22x128xf32> -> vector<22x128xf32>
    %334 = arith.addf %329, %333 : vector<22x128xf32>
    %c4_362 = arith.constant 4 : index
    %c0_363 = arith.constant 0 : index
    %335 = vector.load %arg34[%c4_362, %c0_363] : memref<32x128xbf16, #tpu.memory_space<vmem>>, vector<22x128xbf16>
    %c3_364 = arith.constant 3 : index
    %c0_365 = arith.constant 0 : index
    %c0_366 = arith.constant 0 : index
    %336 = vector.load %arg19[%c3_364, %c0_365, %c0_366] : memref<9x128x128xbf16, #tpu.memory_space<vmem>>, vector<1x128x128xbf16>
    %337 = vector.shape_cast %336 : vector<1x128x128xbf16> to vector<128x128xbf16>
    %cst_367 = arith.constant dense<0.000000e+00> : vector<22x128xf32>
    %338 = tpu.matmul %335, %337, %cst_367 {dimension_numbers = #tpu.dot_dimension_numbers<[1], [0], [0], [1], [0, 0, 1, 1], [], []>} : vector<22x128xbf16>, vector<128x128xbf16>, vector<22x128xf32> -> vector<22x128xf32>
    %339 = arith.addf %334, %338 : vector<22x128xf32>
    %c5_368 = arith.constant 5 : index
    %c0_369 = arith.constant 0 : index
    %340 = vector.load %arg34[%c5_368, %c0_369] : memref<32x128xbf16, #tpu.memory_space<vmem>>, vector<22x128xbf16>
    %c4_370 = arith.constant 4 : index
    %c0_371 = arith.constant 0 : index
    %c0_372 = arith.constant 0 : index
    %341 = vector.load %arg19[%c4_370, %c0_371, %c0_372] : memref<9x128x128xbf16, #tpu.memory_space<vmem>>, vector<1x128x128xbf16>
    %342 = vector.shape_cast %341 : vector<1x128x128xbf16> to vector<128x128xbf16>
    %cst_373 = arith.constant dense<0.000000e+00> : vector<22x128xf32>
    %343 = tpu.matmul %340, %342, %cst_373 {dimension_numbers = #tpu.dot_dimension_numbers<[1], [0], [0], [1], [0, 0, 1, 1], [], []>} : vector<22x128xbf16>, vector<128x128xbf16>, vector<22x128xf32> -> vector<22x128xf32>
    %344 = arith.addf %339, %343 : vector<22x128xf32>
    %c6_374 = arith.constant 6 : index
    %c0_375 = arith.constant 0 : index
    %345 = vector.load %arg34[%c6_374, %c0_375] : memref<32x128xbf16, #tpu.memory_space<vmem>>, vector<22x128xbf16>
    %c5_376 = arith.constant 5 : index
    %c0_377 = arith.constant 0 : index
    %c0_378 = arith.constant 0 : index
    %346 = vector.load %arg19[%c5_376, %c0_377, %c0_378] : memref<9x128x128xbf16, #tpu.memory_space<vmem>>, vector<1x128x128xbf16>
    %347 = vector.shape_cast %346 : vector<1x128x128xbf16> to vector<128x128xbf16>
    %cst_379 = arith.constant dense<0.000000e+00> : vector<22x128xf32>
    %348 = tpu.matmul %345, %347, %cst_379 {dimension_numbers = #tpu.dot_dimension_numbers<[1], [0], [0], [1], [0, 0, 1, 1], [], []>} : vector<22x128xbf16>, vector<128x128xbf16>, vector<22x128xf32> -> vector<22x128xf32>
    %349 = arith.addf %344, %348 : vector<22x128xf32>
    %c8_380 = arith.constant 8 : index
    %c0_381 = arith.constant 0 : index
    %350 = vector.load %arg34[%c8_380, %c0_381] : memref<32x128xbf16, #tpu.memory_space<vmem>>, vector<22x128xbf16>
    %c6_382 = arith.constant 6 : index
    %c0_383 = arith.constant 0 : index
    %c0_384 = arith.constant 0 : index
    %351 = vector.load %arg19[%c6_382, %c0_383, %c0_384] : memref<9x128x128xbf16, #tpu.memory_space<vmem>>, vector<1x128x128xbf16>
    %352 = vector.shape_cast %351 : vector<1x128x128xbf16> to vector<128x128xbf16>
    %cst_385 = arith.constant dense<0.000000e+00> : vector<22x128xf32>
    %353 = tpu.matmul %350, %352, %cst_385 {dimension_numbers = #tpu.dot_dimension_numbers<[1], [0], [0], [1], [0, 0, 1, 1], [], []>} : vector<22x128xbf16>, vector<128x128xbf16>, vector<22x128xf32> -> vector<22x128xf32>
    %354 = arith.addf %349, %353 : vector<22x128xf32>
    %c9 = arith.constant 9 : index
    %c0_386 = arith.constant 0 : index
    %355 = vector.load %arg34[%c9, %c0_386] : memref<32x128xbf16, #tpu.memory_space<vmem>>, vector<22x128xbf16>
    %c7_387 = arith.constant 7 : index
    %c0_388 = arith.constant 0 : index
    %c0_389 = arith.constant 0 : index
    %356 = vector.load %arg19[%c7_387, %c0_388, %c0_389] : memref<9x128x128xbf16, #tpu.memory_space<vmem>>, vector<1x128x128xbf16>
    %357 = vector.shape_cast %356 : vector<1x128x128xbf16> to vector<128x128xbf16>
    %cst_390 = arith.constant dense<0.000000e+00> : vector<22x128xf32>
    %358 = tpu.matmul %355, %357, %cst_390 {dimension_numbers = #tpu.dot_dimension_numbers<[1], [0], [0], [1], [0, 0, 1, 1], [], []>} : vector<22x128xbf16>, vector<128x128xbf16>, vector<22x128xf32> -> vector<22x128xf32>
    %359 = arith.addf %354, %358 : vector<22x128xf32>
    %c10_391 = arith.constant 10 : index
    %c0_392 = arith.constant 0 : index
    %360 = vector.load %arg34[%c10_391, %c0_392] : memref<32x128xbf16, #tpu.memory_space<vmem>>, vector<22x128xbf16>
    %c8_393 = arith.constant 8 : index
    %c0_394 = arith.constant 0 : index
    %c0_395 = arith.constant 0 : index
    %361 = vector.load %arg19[%c8_393, %c0_394, %c0_395] : memref<9x128x128xbf16, #tpu.memory_space<vmem>>, vector<1x128x128xbf16>
    %362 = vector.shape_cast %361 : vector<1x128x128xbf16> to vector<128x128xbf16>
    %cst_396 = arith.constant dense<0.000000e+00> : vector<22x128xf32>
    %363 = tpu.matmul %360, %362, %cst_396 {dimension_numbers = #tpu.dot_dimension_numbers<[1], [0], [0], [1], [0, 0, 1, 1], [], []>} : vector<22x128xbf16>, vector<128x128xbf16>, vector<22x128xf32> -> vector<22x128xf32>
    %364 = arith.addf %359, %363 : vector<22x128xf32>
    %c0_397 = arith.constant 0 : index
    %c0_398 = arith.constant 0 : index
    %365 = vector.load %arg20[%c0_397, %c0_398] : memref<1x128xf32, #tpu.memory_space<vmem>>, vector<1x128xf32>
    %366 = vector.broadcast %365 : vector<1x128xf32> to vector<22x128xf32>
    %367 = arith.addf %364, %366 : vector<22x128xf32>
    %c5_399 = arith.constant 5 : index
    %c0_400 = arith.constant 0 : index
    %368 = vector.load %arg33[%c5_399, %c0_400] : memref<32x128xbf16, #tpu.memory_space<vmem>>, vector<22x128xbf16>
    %369 = arith.extf %368 : vector<22x128xbf16> to vector<22x128xf32>
    %370 = arith.addf %367, %369 : vector<22x128xf32>
    %cst_401 = arith.constant 0.000000e+00 : f32
    %371 = vector.broadcast %cst_401 : f32 to vector<22x128xf32>
    %372 = arith.maximumf %370, %371 : vector<22x128xf32>
    %c0_402 = arith.constant 0 : index
    %c0_403 = arith.constant 0 : index
    %373 = vector.load %arg4[%c0_402, %c0_403] : memref<32x22xbf16, #tpu.memory_space<vmem>>, vector<32x22xbf16>
    %374 = arith.truncf %372 : vector<22x128xf32> to vector<22x128xbf16>
    %cst_404 = arith.constant dense<0.000000e+00> : vector<32x128xf32>
    %375 = tpu.matmul %373, %374, %cst_404 {dimension_numbers = #tpu.dot_dimension_numbers<[1], [0], [0], [1], [0, 0, 1, 1], [], []>} : vector<32x22xbf16>, vector<22x128xbf16>, vector<32x128xf32> -> vector<32x128xf32>
    %376 = arith.truncf %375 : vector<32x128xf32> to vector<32x128xbf16>
    %c0_405 = arith.constant 0 : index
    %c0_406 = arith.constant 0 : index
    %377 = vector.load %arg33[%c0_405, %c0_406] : memref<32x128xbf16, #tpu.memory_space<vmem>>, vector<32x128xbf16>
    tpu.vector_store %arg33[%c0_405, %c0_406], %376 {strides = array<i32>} : memref<32x128xbf16, #tpu.memory_space<vmem>>, vector<32x128xbf16>,
    %c0_407 = arith.constant 0 : index
    %c0_408 = arith.constant 0 : index
    %378 = vector.load %arg33[%c0_407, %c0_408] : memref<32x128xbf16, #tpu.memory_space<vmem>>, vector<22x128xbf16>
    %c0_409 = arith.constant 0 : index
    %c0_410 = arith.constant 0 : index
    %c0_411 = arith.constant 0 : index
    %379 = vector.load %arg23[%c0_409, %c0_410, %c0_411] : memref<9x128x128xbf16, #tpu.memory_space<vmem>>, vector<1x128x128xbf16>
    %380 = vector.shape_cast %379 : vector<1x128x128xbf16> to vector<128x128xbf16>
    %cst_412 = arith.constant dense<0.000000e+00> : vector<22x128xf32>
    %381 = tpu.matmul %378, %380, %cst_412 {dimension_numbers = #tpu.dot_dimension_numbers<[1], [0], [0], [1], [0, 0, 1, 1], [], []>} : vector<22x128xbf16>, vector<128x128xbf16>, vector<22x128xf32> -> vector<22x128xf32>
    %c1_413 = arith.constant 1 : index
    %c0_414 = arith.constant 0 : index
    %382 = vector.load %arg33[%c1_413, %c0_414] : memref<32x128xbf16, #tpu.memory_space<vmem>>, vector<22x128xbf16>
    %c1_415 = arith.constant 1 : index
    %c0_416 = arith.constant 0 : index
    %c0_417 = arith.constant 0 : index
    %383 = vector.load %arg23[%c1_415, %c0_416, %c0_417] : memref<9x128x128xbf16, #tpu.memory_space<vmem>>, vector<1x128x128xbf16>
    %384 = vector.shape_cast %383 : vector<1x128x128xbf16> to vector<128x128xbf16>
    %cst_418 = arith.constant dense<0.000000e+00> : vector<22x128xf32>
    %385 = tpu.matmul %382, %384, %cst_418 {dimension_numbers = #tpu.dot_dimension_numbers<[1], [0], [0], [1], [0, 0, 1, 1], [], []>} : vector<22x128xbf16>, vector<128x128xbf16>, vector<22x128xf32> -> vector<22x128xf32>
    %386 = arith.addf %381, %385 : vector<22x128xf32>
    %c2_419 = arith.constant 2 : index
    %c0_420 = arith.constant 0 : index
    %387 = vector.load %arg33[%c2_419, %c0_420] : memref<32x128xbf16, #tpu.memory_space<vmem>>, vector<22x128xbf16>
    %c2_421 = arith.constant 2 : index
    %c0_422 = arith.constant 0 : index
    %c0_423 = arith.constant 0 : index
    %388 = vector.load %arg23[%c2_421, %c0_422, %c0_423] : memref<9x128x128xbf16, #tpu.memory_space<vmem>>, vector<1x128x128xbf16>
    %389 = vector.shape_cast %388 : vector<1x128x128xbf16> to vector<128x128xbf16>
    %cst_424 = arith.constant dense<0.000000e+00> : vector<22x128xf32>
    %390 = tpu.matmul %387, %389, %cst_424 {dimension_numbers = #tpu.dot_dimension_numbers<[1], [0], [0], [1], [0, 0, 1, 1], [], []>} : vector<22x128xbf16>, vector<128x128xbf16>, vector<22x128xf32> -> vector<22x128xf32>
    %391 = arith.addf %386, %390 : vector<22x128xf32>
    %c4_425 = arith.constant 4 : index
    %c0_426 = arith.constant 0 : index
    %392 = vector.load %arg33[%c4_425, %c0_426] : memref<32x128xbf16, #tpu.memory_space<vmem>>, vector<22x128xbf16>
    %c3_427 = arith.constant 3 : index
    %c0_428 = arith.constant 0 : index
    %c0_429 = arith.constant 0 : index
    %393 = vector.load %arg23[%c3_427, %c0_428, %c0_429] : memref<9x128x128xbf16, #tpu.memory_space<vmem>>, vector<1x128x128xbf16>
    %394 = vector.shape_cast %393 : vector<1x128x128xbf16> to vector<128x128xbf16>
    %cst_430 = arith.constant dense<0.000000e+00> : vector<22x128xf32>
    %395 = tpu.matmul %392, %394, %cst_430 {dimension_numbers = #tpu.dot_dimension_numbers<[1], [0], [0], [1], [0, 0, 1, 1], [], []>} : vector<22x128xbf16>, vector<128x128xbf16>, vector<22x128xf32> -> vector<22x128xf32>
    %396 = arith.addf %391, %395 : vector<22x128xf32>
    %c5_431 = arith.constant 5 : index
    %c0_432 = arith.constant 0 : index
    %397 = vector.load %arg33[%c5_431, %c0_432] : memref<32x128xbf16, #tpu.memory_space<vmem>>, vector<22x128xbf16>
    %c4_433 = arith.constant 4 : index
    %c0_434 = arith.constant 0 : index
    %c0_435 = arith.constant 0 : index
    %398 = vector.load %arg23[%c4_433, %c0_434, %c0_435] : memref<9x128x128xbf16, #tpu.memory_space<vmem>>, vector<1x128x128xbf16>
    %399 = vector.shape_cast %398 : vector<1x128x128xbf16> to vector<128x128xbf16>
    %cst_436 = arith.constant dense<0.000000e+00> : vector<22x128xf32>
    %400 = tpu.matmul %397, %399, %cst_436 {dimension_numbers = #tpu.dot_dimension_numbers<[1], [0], [0], [1], [0, 0, 1, 1], [], []>} : vector<22x128xbf16>, vector<128x128xbf16>, vector<22x128xf32> -> vector<22x128xf32>
    %401 = arith.addf %396, %400 : vector<22x128xf32>
    %c6_437 = arith.constant 6 : index
    %c0_438 = arith.constant 0 : index
    %402 = vector.load %arg33[%c6_437, %c0_438] : memref<32x128xbf16, #tpu.memory_space<vmem>>, vector<22x128xbf16>
    %c5_439 = arith.constant 5 : index
    %c0_440 = arith.constant 0 : index
    %c0_441 = arith.constant 0 : index
    %403 = vector.load %arg23[%c5_439, %c0_440, %c0_441] : memref<9x128x128xbf16, #tpu.memory_space<vmem>>, vector<1x128x128xbf16>
    %404 = vector.shape_cast %403 : vector<1x128x128xbf16> to vector<128x128xbf16>
    %cst_442 = arith.constant dense<0.000000e+00> : vector<22x128xf32>
    %405 = tpu.matmul %402, %404, %cst_442 {dimension_numbers = #tpu.dot_dimension_numbers<[1], [0], [0], [1], [0, 0, 1, 1], [], []>} : vector<22x128xbf16>, vector<128x128xbf16>, vector<22x128xf32> -> vector<22x128xf32>
    %406 = arith.addf %401, %405 : vector<22x128xf32>
    %c8_443 = arith.constant 8 : index
    %c0_444 = arith.constant 0 : index
    %407 = vector.load %arg33[%c8_443, %c0_444] : memref<32x128xbf16, #tpu.memory_space<vmem>>, vector<22x128xbf16>
    %c6_445 = arith.constant 6 : index
    %c0_446 = arith.constant 0 : index
    %c0_447 = arith.constant 0 : index
    %408 = vector.load %arg23[%c6_445, %c0_446, %c0_447] : memref<9x128x128xbf16, #tpu.memory_space<vmem>>, vector<1x128x128xbf16>
    %409 = vector.shape_cast %408 : vector<1x128x128xbf16> to vector<128x128xbf16>
    %cst_448 = arith.constant dense<0.000000e+00> : vector<22x128xf32>
    %410 = tpu.matmul %407, %409, %cst_448 {dimension_numbers = #tpu.dot_dimension_numbers<[1], [0], [0], [1], [0, 0, 1, 1], [], []>} : vector<22x128xbf16>, vector<128x128xbf16>, vector<22x128xf32> -> vector<22x128xf32>
    %411 = arith.addf %406, %410 : vector<22x128xf32>
    %c9_449 = arith.constant 9 : index
    %c0_450 = arith.constant 0 : index
    %412 = vector.load %arg33[%c9_449, %c0_450] : memref<32x128xbf16, #tpu.memory_space<vmem>>, vector<22x128xbf16>
    %c7_451 = arith.constant 7 : index
    %c0_452 = arith.constant 0 : index
    %c0_453 = arith.constant 0 : index
    %413 = vector.load %arg23[%c7_451, %c0_452, %c0_453] : memref<9x128x128xbf16, #tpu.memory_space<vmem>>, vector<1x128x128xbf16>
    %414 = vector.shape_cast %413 : vector<1x128x128xbf16> to vector<128x128xbf16>
    %cst_454 = arith.constant dense<0.000000e+00> : vector<22x128xf32>
    %415 = tpu.matmul %412, %414, %cst_454 {dimension_numbers = #tpu.dot_dimension_numbers<[1], [0], [0], [1], [0, 0, 1, 1], [], []>} : vector<22x128xbf16>, vector<128x128xbf16>, vector<22x128xf32> -> vector<22x128xf32>
    %416 = arith.addf %411, %415 : vector<22x128xf32>
    %c10_455 = arith.constant 10 : index
    %c0_456 = arith.constant 0 : index
    %417 = vector.load %arg33[%c10_455, %c0_456] : memref<32x128xbf16, #tpu.memory_space<vmem>>, vector<22x128xbf16>
    %c8_457 = arith.constant 8 : index
    %c0_458 = arith.constant 0 : index
    %c0_459 = arith.constant 0 : index
    %418 = vector.load %arg23[%c8_457, %c0_458, %c0_459] : memref<9x128x128xbf16, #tpu.memory_space<vmem>>, vector<1x128x128xbf16>
    %419 = vector.shape_cast %418 : vector<1x128x128xbf16> to vector<128x128xbf16>
    %cst_460 = arith.constant dense<0.000000e+00> : vector<22x128xf32>
    %420 = tpu.matmul %417, %419, %cst_460 {dimension_numbers = #tpu.dot_dimension_numbers<[1], [0], [0], [1], [0, 0, 1, 1], [], []>} : vector<22x128xbf16>, vector<128x128xbf16>, vector<22x128xf32> -> vector<22x128xf32>
    %421 = arith.addf %416, %420 : vector<22x128xf32>
    %c0_461 = arith.constant 0 : index
    %c0_462 = arith.constant 0 : index
    %422 = vector.load %arg24[%c0_461, %c0_462] : memref<1x128xf32, #tpu.memory_space<vmem>>, vector<1x128xf32>
    %423 = vector.broadcast %422 : vector<1x128xf32> to vector<22x128xf32>
    %424 = arith.addf %421, %423 : vector<22x128xf32>
    %cst_463 = arith.constant 0.000000e+00 : f32
    %425 = vector.broadcast %cst_463 : f32 to vector<22x128xf32>
    %426 = arith.maximumf %424, %425 : vector<22x128xf32>
    %c0_464 = arith.constant 0 : index
    %c0_465 = arith.constant 0 : index
    %427 = vector.load %arg4[%c0_464, %c0_465] : memref<32x22xbf16, #tpu.memory_space<vmem>>, vector<32x22xbf16>
    %428 = arith.truncf %426 : vector<22x128xf32> to vector<22x128xbf16>
    %cst_466 = arith.constant dense<0.000000e+00> : vector<32x128xf32>
    %429 = tpu.matmul %427, %428, %cst_466 {dimension_numbers = #tpu.dot_dimension_numbers<[1], [0], [0], [1], [0, 0, 1, 1], [], []>} : vector<32x22xbf16>, vector<22x128xbf16>, vector<32x128xf32> -> vector<32x128xf32>
    %430 = arith.truncf %429 : vector<32x128xf32> to vector<32x128xbf16>
    %c0_467 = arith.constant 0 : index
    %c0_468 = arith.constant 0 : index
    %431 = vector.load %arg34[%c0_467, %c0_468] : memref<32x128xbf16, #tpu.memory_space<vmem>>, vector<32x128xbf16>
    tpu.vector_store %arg34[%c0_467, %c0_468], %430 {strides = array<i32>} : memref<32x128xbf16, #tpu.memory_space<vmem>>, vector<32x128xbf16>,
    %c0_469 = arith.constant 0 : index
    %c0_470 = arith.constant 0 : index
    %432 = vector.load %arg34[%c0_469, %c0_470] : memref<32x128xbf16, #tpu.memory_space<vmem>>, vector<22x128xbf16>
    %c0_471 = arith.constant 0 : index
    %c0_472 = arith.constant 0 : index
    %c0_473 = arith.constant 0 : index
    %433 = vector.load %arg25[%c0_471, %c0_472, %c0_473] : memref<9x128x128xbf16, #tpu.memory_space<vmem>>, vector<1x128x128xbf16>
    %434 = vector.shape_cast %433 : vector<1x128x128xbf16> to vector<128x128xbf16>
    %cst_474 = arith.constant dense<0.000000e+00> : vector<22x128xf32>
    %435 = tpu.matmul %432, %434, %cst_474 {dimension_numbers = #tpu.dot_dimension_numbers<[1], [0], [0], [1], [0, 0, 1, 1], [], []>} : vector<22x128xbf16>, vector<128x128xbf16>, vector<22x128xf32> -> vector<22x128xf32>
    %c1_475 = arith.constant 1 : index
    %c0_476 = arith.constant 0 : index
    %436 = vector.load %arg34[%c1_475, %c0_476] : memref<32x128xbf16, #tpu.memory_space<vmem>>, vector<22x128xbf16>
    %c1_477 = arith.constant 1 : index
    %c0_478 = arith.constant 0 : index
    %c0_479 = arith.constant 0 : index
    %437 = vector.load %arg25[%c1_477, %c0_478, %c0_479] : memref<9x128x128xbf16, #tpu.memory_space<vmem>>, vector<1x128x128xbf16>
    %438 = vector.shape_cast %437 : vector<1x128x128xbf16> to vector<128x128xbf16>
    %cst_480 = arith.constant dense<0.000000e+00> : vector<22x128xf32>
    %439 = tpu.matmul %436, %438, %cst_480 {dimension_numbers = #tpu.dot_dimension_numbers<[1], [0], [0], [1], [0, 0, 1, 1], [], []>} : vector<22x128xbf16>, vector<128x128xbf16>, vector<22x128xf32> -> vector<22x128xf32>
    %440 = arith.addf %435, %439 : vector<22x128xf32>
    %c2_481 = arith.constant 2 : index
    %c0_482 = arith.constant 0 : index
    %441 = vector.load %arg34[%c2_481, %c0_482] : memref<32x128xbf16, #tpu.memory_space<vmem>>, vector<22x128xbf16>
    %c2_483 = arith.constant 2 : index
    %c0_484 = arith.constant 0 : index
    %c0_485 = arith.constant 0 : index
    %442 = vector.load %arg25[%c2_483, %c0_484, %c0_485] : memref<9x128x128xbf16, #tpu.memory_space<vmem>>, vector<1x128x128xbf16>
    %443 = vector.shape_cast %442 : vector<1x128x128xbf16> to vector<128x128xbf16>
    %cst_486 = arith.constant dense<0.000000e+00> : vector<22x128xf32>
    %444 = tpu.matmul %441, %443, %cst_486 {dimension_numbers = #tpu.dot_dimension_numbers<[1], [0], [0], [1], [0, 0, 1, 1], [], []>} : vector<22x128xbf16>, vector<128x128xbf16>, vector<22x128xf32> -> vector<22x128xf32>
    %445 = arith.addf %440, %444 : vector<22x128xf32>
    %c4_487 = arith.constant 4 : index
    %c0_488 = arith.constant 0 : index
    %446 = vector.load %arg34[%c4_487, %c0_488] : memref<32x128xbf16, #tpu.memory_space<vmem>>, vector<22x128xbf16>
    %c3_489 = arith.constant 3 : index
    %c0_490 = arith.constant 0 : index
    %c0_491 = arith.constant 0 : index
    %447 = vector.load %arg25[%c3_489, %c0_490, %c0_491] : memref<9x128x128xbf16, #tpu.memory_space<vmem>>, vector<1x128x128xbf16>
    %448 = vector.shape_cast %447 : vector<1x128x128xbf16> to vector<128x128xbf16>
    %cst_492 = arith.constant dense<0.000000e+00> : vector<22x128xf32>
    %449 = tpu.matmul %446, %448, %cst_492 {dimension_numbers = #tpu.dot_dimension_numbers<[1], [0], [0], [1], [0, 0, 1, 1], [], []>} : vector<22x128xbf16>, vector<128x128xbf16>, vector<22x128xf32> -> vector<22x128xf32>
    %450 = arith.addf %445, %449 : vector<22x128xf32>
    %c5_493 = arith.constant 5 : index
    %c0_494 = arith.constant 0 : index
    %451 = vector.load %arg34[%c5_493, %c0_494] : memref<32x128xbf16, #tpu.memory_space<vmem>>, vector<22x128xbf16>
    %c4_495 = arith.constant 4 : index
    %c0_496 = arith.constant 0 : index
    %c0_497 = arith.constant 0 : index
    %452 = vector.load %arg25[%c4_495, %c0_496, %c0_497] : memref<9x128x128xbf16, #tpu.memory_space<vmem>>, vector<1x128x128xbf16>
    %453 = vector.shape_cast %452 : vector<1x128x128xbf16> to vector<128x128xbf16>
    %cst_498 = arith.constant dense<0.000000e+00> : vector<22x128xf32>
    %454 = tpu.matmul %451, %453, %cst_498 {dimension_numbers = #tpu.dot_dimension_numbers<[1], [0], [0], [1], [0, 0, 1, 1], [], []>} : vector<22x128xbf16>, vector<128x128xbf16>, vector<22x128xf32> -> vector<22x128xf32>
    %455 = arith.addf %450, %454 : vector<22x128xf32>
    %c6_499 = arith.constant 6 : index
    %c0_500 = arith.constant 0 : index
    %456 = vector.load %arg34[%c6_499, %c0_500] : memref<32x128xbf16, #tpu.memory_space<vmem>>, vector<22x128xbf16>
    %c5_501 = arith.constant 5 : index
    %c0_502 = arith.constant 0 : index
    %c0_503 = arith.constant 0 : index
    %457 = vector.load %arg25[%c5_501, %c0_502, %c0_503] : memref<9x128x128xbf16, #tpu.memory_space<vmem>>, vector<1x128x128xbf16>
    %458 = vector.shape_cast %457 : vector<1x128x128xbf16> to vector<128x128xbf16>
    %cst_504 = arith.constant dense<0.000000e+00> : vector<22x128xf32>
    %459 = tpu.matmul %456, %458, %cst_504 {dimension_numbers = #tpu.dot_dimension_numbers<[1], [0], [0], [1], [0, 0, 1, 1], [], []>} : vector<22x128xbf16>, vector<128x128xbf16>, vector<22x128xf32> -> vector<22x128xf32>
    %460 = arith.addf %455, %459 : vector<22x128xf32>
    %c8_505 = arith.constant 8 : index
    %c0_506 = arith.constant 0 : index
    %461 = vector.load %arg34[%c8_505, %c0_506] : memref<32x128xbf16, #tpu.memory_space<vmem>>, vector<22x128xbf16>
    %c6_507 = arith.constant 6 : index
    %c0_508 = arith.constant 0 : index
    %c0_509 = arith.constant 0 : index
    %462 = vector.load %arg25[%c6_507, %c0_508, %c0_509] : memref<9x128x128xbf16, #tpu.memory_space<vmem>>, vector<1x128x128xbf16>
    %463 = vector.shape_cast %462 : vector<1x128x128xbf16> to vector<128x128xbf16>
    %cst_510 = arith.constant dense<0.000000e+00> : vector<22x128xf32>
    %464 = tpu.matmul %461, %463, %cst_510 {dimension_numbers = #tpu.dot_dimension_numbers<[1], [0], [0], [1], [0, 0, 1, 1], [], []>} : vector<22x128xbf16>, vector<128x128xbf16>, vector<22x128xf32> -> vector<22x128xf32>
    %465 = arith.addf %460, %464 : vector<22x128xf32>
    %c9_511 = arith.constant 9 : index
    %c0_512 = arith.constant 0 : index
    %466 = vector.load %arg34[%c9_511, %c0_512] : memref<32x128xbf16, #tpu.memory_space<vmem>>, vector<22x128xbf16>
    %c7_513 = arith.constant 7 : index
    %c0_514 = arith.constant 0 : index
    %c0_515 = arith.constant 0 : index
    %467 = vector.load %arg25[%c7_513, %c0_514, %c0_515] : memref<9x128x128xbf16, #tpu.memory_space<vmem>>, vector<1x128x128xbf16>
    %468 = vector.shape_cast %467 : vector<1x128x128xbf16> to vector<128x128xbf16>
    %cst_516 = arith.constant dense<0.000000e+00> : vector<22x128xf32>
    %469 = tpu.matmul %466, %468, %cst_516 {dimension_numbers = #tpu.dot_dimension_numbers<[1], [0], [0], [1], [0, 0, 1, 1], [], []>} : vector<22x128xbf16>, vector<128x128xbf16>, vector<22x128xf32> -> vector<22x128xf32>
    %470 = arith.addf %465, %469 : vector<22x128xf32>
    %c10_517 = arith.constant 10 : index
    %c0_518 = arith.constant 0 : index
    %471 = vector.load %arg34[%c10_517, %c0_518] : memref<32x128xbf16, #tpu.memory_space<vmem>>, vector<22x128xbf16>
    %c8_519 = arith.constant 8 : index
    %c0_520 = arith.constant 0 : index
    %c0_521 = arith.constant 0 : index
    %472 = vector.load %arg25[%c8_519, %c0_520, %c0_521] : memref<9x128x128xbf16, #tpu.memory_space<vmem>>, vector<1x128x128xbf16>
    %473 = vector.shape_cast %472 : vector<1x128x128xbf16> to vector<128x128xbf16>
    %cst_522 = arith.constant dense<0.000000e+00> : vector<22x128xf32>
    %474 = tpu.matmul %471, %473, %cst_522 {dimension_numbers = #tpu.dot_dimension_numbers<[1], [0], [0], [1], [0, 0, 1, 1], [], []>} : vector<22x128xbf16>, vector<128x128xbf16>, vector<22x128xf32> -> vector<22x128xf32>
    %475 = arith.addf %470, %474 : vector<22x128xf32>
    %c0_523 = arith.constant 0 : index
    %c0_524 = arith.constant 0 : index
    %476 = vector.load %arg26[%c0_523, %c0_524] : memref<1x128xf32, #tpu.memory_space<vmem>>, vector<1x128xf32>
    %477 = vector.broadcast %476 : vector<1x128xf32> to vector<22x128xf32>
    %478 = arith.addf %475, %477 : vector<22x128xf32>
    %c5_525 = arith.constant 5 : index
    %c0_526 = arith.constant 0 : index
    %479 = vector.load %arg33[%c5_525, %c0_526] : memref<32x128xbf16, #tpu.memory_space<vmem>>, vector<22x128xbf16>
    %480 = arith.extf %479 : vector<22x128xbf16> to vector<22x128xf32>
    %481 = arith.addf %478, %480 : vector<22x128xf32>
    %cst_527 = arith.constant 0.000000e+00 : f32
    %482 = vector.broadcast %cst_527 : f32 to vector<22x128xf32>
    %483 = arith.maximumf %481, %482 : vector<22x128xf32>
    %c0_528 = arith.constant 0 : index
    %c0_529 = arith.constant 0 : index
    %484 = vector.load %arg5[%c0_528, %c0_529] : memref<2x22xbf16, #tpu.memory_space<vmem>>, vector<2x22xbf16>
    %485 = arith.truncf %483 : vector<22x128xf32> to vector<22x128xbf16>
    %cst_530 = arith.constant dense<0.000000e+00> : vector<2x128xf32>
    %486 = tpu.matmul %484, %485, %cst_530 {dimension_numbers = #tpu.dot_dimension_numbers<[1], [0], [0], [1], [0, 0, 1, 1], [], []>} : vector<2x22xbf16>, vector<22x128xbf16>, vector<2x128xf32> -> vector<2x128xf32>
    %487 = arith.truncf %486 : vector<2x128xf32> to vector<2x128xbf16>
    %c0_531 = arith.constant 0 : index
    %c0_532 = arith.constant 0 : index
    %488 = vector.load %arg27[%c0_531, %c0_532] : memref<128x128xbf16, #tpu.memory_space<vmem>>, vector<128x128xbf16>
    %cst_533 = arith.constant dense<0.000000e+00> : vector<2x128xf32>
    %489 = tpu.matmul %487, %488, %cst_533 {dimension_numbers = #tpu.dot_dimension_numbers<[1], [0], [0], [1], [0, 0, 1, 1], [], []>} : vector<2x128xbf16>, vector<128x128xbf16>, vector<2x128xf32> -> vector<2x128xf32>
    %c0_534 = arith.constant 0 : index
    %c0_535 = arith.constant 0 : index
    %490 = vector.load %arg28[%c0_534, %c0_535] : memref<1x128xf32, #tpu.memory_space<vmem>>, vector<1x128xf32>
    %491 = vector.broadcast %490 : vector<1x128xf32> to vector<2x128xf32>
    %492 = arith.addf %489, %491 : vector<2x128xf32>
    %c0_536 = arith.constant 0 : index
    %c0_537 = arith.constant 0 : index
    %493 = vector.load %arg29[%c0_536, %c0_537] : memref<2x128xf32, #tpu.memory_space<vmem>>, vector<2x128xf32>
    tpu.vector_store %arg29[%c0_536, %c0_537], %492 {strides = array<i32>} : memref<2x128xf32, #tpu.memory_space<vmem>>, vector<2x128xf32>,
    return
  }
}

</mosaic_0001>

<llo_original>
// kernel: resnet_forward.1
$region0: #{resnet_forward.1}
  #allocation0 [shape = 'u32[]', space=smem, size = 0x4, offset = 0x4, fixed_abs, tag = 'smem constant byte address 0x4 - core index']
  #allocation1 [shape = 'u32[72,128]{1,0:T(1,128)}', space=vmem, size = 0x9000, scoped, tag = 'internal scratch']
  #allocation2 [shape = 'bf16[200,64]{1,0:T(8,128)(2,1)}', space=vmem, size = 0xc800, scoped, tag = 'scratch operand']
  #allocation3 [shape = 'bf16[72,64]{1,0:T(8,128)(2,1)}', space=vmem, size = 0x4800, scoped, tag = 'scratch operand']
  #allocation4 [shape = 'bf16[72,64]{1,0:T(8,128)(2,1)}', space=vmem, size = 0x4800, scoped, tag = 'scratch operand']
  #allocation5 [shape = 'bf16[32,128]{1,0:T(8,128)(2,1)}', space=vmem, size = 0x2000, scoped, tag = 'scratch operand']
  #allocation6 [shape = 'bf16[32,128]{1,0:T(8,128)(2,1)}', space=vmem, size = 0x2000, scoped, tag = 'scratch operand']
  %s0 = inlined_call_operand.smem [shape: u32[30], index: -1, kind: input, shape index: {}]
  %s1 = sld [smem:[%s0]]
  %s2 = scalar_lea.smem %s0, 1
  %s3 = sld [smem:[%s2]]
  %s4 = scalar_lea.smem %s0, 2
  %s5 = sld [smem:[%s4]]
  %s6 = scalar_lea.smem %s0, 3
  %s7 = sld [smem:[%s6]]
  %s8 = scalar_lea.smem %s0, 4
  %s9 = sld [smem:[%s8]]
  %s10 = scalar_lea.smem %s0, 5
  %s11 = sld [smem:[%s10]]
  %s12 = scalar_lea.smem %s0, 6
  %s13 = sld [smem:[%s12]]
  %s14 = scalar_lea.smem %s0, 7
  %s15 = sld [smem:[%s14]]
  %s16 = scalar_lea.smem %s0, 8
  %s17 = sld [smem:[%s16]]
  %s18 = scalar_lea.smem %s0, 9
  %s19 = sld [smem:[%s18]]
  %s20 = scalar_lea.smem %s0, 10
  %s21 = sld [smem:[%s20]]
  %s22 = scalar_lea.smem %s0, 11
  %s23 = sld [smem:[%s22]]
  %s24 = scalar_lea.smem %s0, 12
  %s25 = sld [smem:[%s24]]
  %s26 = scalar_lea.smem %s0, 13
  %s27 = sld [smem:[%s26]]
  %s28 = scalar_lea.smem %s0, 14
  %s29 = sld [smem:[%s28]]
  %s30 = scalar_lea.smem %s0, 15
  %s31 = sld [smem:[%s30]]
  %s32 = scalar_lea.smem %s0, 16
  %s33 = sld [smem:[%s32]]
  %s34 = scalar_lea.smem %s0, 17
  %s35 = sld [smem:[%s34]]
  %s36 = scalar_lea.smem %s0, 18
  %s37 = sld [smem:[%s36]]
  %s38 = scalar_lea.smem %s0, 19
  %s39 = sld [smem:[%s38]]
  %s40 = scalar_lea.smem %s0, 20
  %s41 = sld [smem:[%s40]]
  %s42 = scalar_lea.smem %s0, 21
  %s43 = sld [smem:[%s42]]
  %s44 = scalar_lea.smem %s0, 22
  %s45 = sld [smem:[%s44]]
  %s46 = scalar_lea.smem %s0, 23
  %s47 = sld [smem:[%s46]]
  %s48 = scalar_lea.smem %s0, 24
  %s49 = sld [smem:[%s48]]
  %s50 = scalar_lea.smem %s0, 25
  %s51 = sld [smem:[%s50]]
  %s52 = scalar_lea.smem %s0, 26
  %s53 = sld [smem:[%s52]]
  %s54 = scalar_lea.smem %s0, 27
  %s55 = sld [smem:[%s54]]
  %s56 = scalar_lea.smem %s0, 28
  %s57 = sld [smem:[%s56]]
  %s58 = scalar_lea.smem %s0, 29
  %s59 = sld [smem:[%s58]]
  %s60 = sld [smem:[#allocation0]]
  $region126: #{resnet_forward.1} parent=0
    _
  %s62 = ssub.s32 1, %s60
  %s63 = scalar_select 0, %s62, %s60
  $region1: #{resnet_forward.1} parent=0
    #allocation7 [shape = 'u8[1024]{0}', space=vmem, size = 0x400, scoped, tag = 'output window, operand 0, single buffered']
    #allocation8 [shape = 's32[1]{0}', space=sflag, size = 0x4, scoped, tag = 'scoped memory for resnet_forward.1']
    %64 = vsyncpa [#allocation8], 0
    // Predicated region
    $region2: #{resnet_forward.1} parent=1 // pred_check
      _
    $region3: #{resnet_forward.1} parent=1 // pred_check_branch
      %66 = sbr.rel (0) target = $region5
    $region4: #{resnet_forward.1} parent=1 // pred_region
      _
    $region5: #{resnet_forward.1} parent=1 // pred_fallthru
      _
    // Predicated region
    $region6: #{resnet_forward.1} parent=1 // pred_check
      _
    $region7: #{resnet_forward.1} parent=1 // pred_check_branch
      %68 = sbr.rel (0) target = $region9
    $region8: #{resnet_forward.1} parent=1 // pred_region
      _
    $region9: #{resnet_forward.1} parent=1 // pred_fallthru
      _
    // Predicated region
    $region10: #{resnet_forward.1} parent=1 // pred_check
      _
    $region11: #{resnet_forward.1} parent=1 // pred_check_branch
      %70 = sbr.rel (0) target = $region13
    $region12: #{resnet_forward.1} parent=1 // pred_region
      _
    $region13: #{resnet_forward.1} parent=1 // pred_fallthru
      _
    // Predicated region
    $region14: #{resnet_forward.1} parent=1 // pred_check
      _
    $region15: #{resnet_forward.1} parent=1 // pred_check_branch
      %72 = sbr.rel (0) target = $region17
    $region16: #{resnet_forward.1} parent=1 // pred_region
      _
    $region17: #{resnet_forward.1} parent=1 // pred_fallthru
      _
    // Predicated region
    $region18: #{resnet_forward.1} parent=1 // pred_check
      _
    $region19: #{resnet_forward.1} parent=1 // pred_check_branch
      %74 = sbr.rel (0) target = $region21
    $region20: #{resnet_forward.1} parent=1 // pred_region
      _
    $region21: #{resnet_forward.1} parent=1 // pred_fallthru
      _
    // Predicated region
    $region22: #{resnet_forward.1} parent=1 // pred_check
      _
    $region23: #{resnet_forward.1} parent=1 // pred_check_branch
      %76 = sbr.rel (0) target = $region25
    $region24: #{resnet_forward.1} parent=1 // pred_region
      _
    $region25: #{resnet_forward.1} parent=1 // pred_fallthru
      _
    // Predicated region
    $region26: #{resnet_forward.1} parent=1 // pred_check
      _
    $region27: #{resnet_forward.1} parent=1 // pred_check_branch
      %78 = sbr.rel (0) target = $region29
    $region28: #{resnet_forward.1} parent=1 // pred_region
      _
    $region29: #{resnet_forward.1} parent=1 // pred_fallthru
      _
    // Predicated region
    $region30: #{resnet_forward.1} parent=1 // pred_check
      _
    $region31: #{resnet_forward.1} parent=1 // pred_check_branch
      %80 = sbr.rel (0) target = $region33
    $region32: #{resnet_forward.1} parent=1 // pred_region
      _
    $region33: #{resnet_forward.1} parent=1 // pred_fallthru
      _
    // Predicated region
    $region34: #{resnet_forward.1} parent=1 // pred_check
      _
    $region35: #{resnet_forward.1} parent=1 // pred_check_branch
      %82 = sbr.rel (0) target = $region37
    $region36: #{resnet_forward.1} parent=1 // pred_region
      _
    $region37: #{resnet_forward.1} parent=1 // pred_fallthru
      _
    // Predicated region
    $region38: #{resnet_forward.1} parent=1 // pred_check
      _
    $region39: #{resnet_forward.1} parent=1 // pred_check_branch
      %84 = sbr.rel (0) target = $region41
    $region40: #{resnet_forward.1} parent=1 // pred_region
      _
    $region41: #{resnet_forward.1} parent=1 // pred_fallthru
      _
    // Predicated region
    $region42: #{resnet_forward.1} parent=1 // pred_check
      _
    $region43: #{resnet_forward.1} parent=1 // pred_check_branch
      %86 = sbr.rel (0) target = $region45
    $region44: #{resnet_forward.1} parent=1 // pred_region
      _
    $region45: #{resnet_forward.1} parent=1 // pred_fallthru
      _
    // Predicated region
    $region46: #{resnet_forward.1} parent=1 // pred_check
      _
    $region47: #{resnet_forward.1} parent=1 // pred_check_branch
      %88 = sbr.rel (0) target = $region49
    $region48: #{resnet_forward.1} parent=1 // pred_region
      _
    $region49: #{resnet_forward.1} parent=1 // pred_fallthru
      _
    // Predicated region
    $region50: #{resnet_forward.1} parent=1 // pred_check
      _
    $region51: #{resnet_forward.1} parent=1 // pred_check_branch
      %90 = sbr.rel (0) target = $region53
    $region52: #{resnet_forward.1} parent=1 // pred_region
      _
    $region53: #{resnet_forward.1} parent=1 // pred_fallthru
      _
    // Predicated region
    $region54: #{resnet_forward.1} parent=1 // pred_check
      _
    $region55: #{resnet_forward.1} parent=1 // pred_check_branch
      %92 = sbr.rel (0) target = $region57
    $region56: #{resnet_forward.1} parent=1 // pred_region
      _
    $region57: #{resnet_forward.1} parent=1 // pred_fallthru
      _
    // Predicated region
    $region58: #{resnet_forward.1} parent=1 // pred_check
      _
    $region59: #{resnet_forward.1} parent=1 // pred_check_branch
      %94 = sbr.rel (0) target = $region61
    $region60: #{resnet_forward.1} parent=1 // pred_region
      _
    $region61: #{resnet_forward.1} parent=1 // pred_fallthru
      _
    // Predicated region
    $region62: #{resnet_forward.1} parent=1 // pred_check
      _
    $region63: #{resnet_forward.1} parent=1 // pred_check_branch
      %96 = sbr.rel (0) target = $region65
    $region64: #{resnet_forward.1} parent=1 // pred_region
      _
    $region65: #{resnet_forward.1} parent=1 // pred_fallthru
      _
    // Predicated region
    $region66: #{resnet_forward.1} parent=1 // pred_check
      _
    $region67: #{resnet_forward.1} parent=1 // pred_check_branch
      %98 = sbr.rel (0) target = $region69
    $region68: #{resnet_forward.1} parent=1 // pred_region
      _
    $region69: #{resnet_forward.1} parent=1 // pred_fallthru
      _
    // Predicated region
    $region70: #{resnet_forward.1} parent=1 // pred_check
      _
    $region71: #{resnet_forward.1} parent=1 // pred_check_branch
      %100 = sbr.rel (0) target = $region73
    $region72: #{resnet_forward.1} parent=1 // pred_region
      _
    $region73: #{resnet_forward.1} parent=1 // pred_fallthru
      _
    // Predicated region
    $region74: #{resnet_forward.1} parent=1 // pred_check
      _
    $region75: #{resnet_forward.1} parent=1 // pred_check_branch
      %102 = sbr.rel (0) target = $region77
    $region76: #{resnet_forward.1} parent=1 // pred_region
      _
    $region77: #{resnet_forward.1} parent=1 // pred_fallthru
      _
    // Predicated region
    $region78: #{resnet_forward.1} parent=1 // pred_check
      _
    $region79: #{resnet_forward.1} parent=1 // pred_check_branch
      %104 = sbr.rel (0) target = $region81
    $region80: #{resnet_forward.1} parent=1 // pred_region
      _
    $region81: #{resnet_forward.1} parent=1 // pred_fallthru
      _
    // Predicated region
    $region82: #{resnet_forward.1} parent=1 // pred_check
      _
    $region83: #{resnet_forward.1} parent=1 // pred_check_branch
      %106 = sbr.rel (0) target = $region85
    $region84: #{resnet_forward.1} parent=1 // pred_region
      _
    $region85: #{resnet_forward.1} parent=1 // pred_fallthru
      _
    // Predicated region
    $region86: #{resnet_forward.1} parent=1 // pred_check
      _
    $region87: #{resnet_forward.1} parent=1 // pred_check_branch
      %108 = sbr.rel (0) target = $region89
    $region88: #{resnet_forward.1} parent=1 // pred_region
      _
    $region89: #{resnet_forward.1} parent=1 // pred_fallthru
      _
    // Predicated region
    $region90: #{resnet_forward.1} parent=1 // pred_check
      _
    $region91: #{resnet_forward.1} parent=1 // pred_check_branch
      %110 = sbr.rel (0) target = $region93
    $region92: #{resnet_forward.1} parent=1 // pred_region
      _
    $region93: #{resnet_forward.1} parent=1 // pred_fallthru
      _
    // Predicated region
    $region94: #{resnet_forward.1} parent=1 // pred_check
      _
    $region95: #{resnet_forward.1} parent=1 // pred_check_branch
      %112 = sbr.rel (0) target = $region97
    $region96: #{resnet_forward.1} parent=1 // pred_region
      _
    $region97: #{resnet_forward.1} parent=1 // pred_fallthru
      _
    // Predicated region
    $region98: #{resnet_forward.1} parent=1 // pred_check
      _
    $region99: #{resnet_forward.1} parent=1 // pred_check_branch
      %114 = sbr.rel (0) target = $region101
    $region100: #{resnet_forward.1} parent=1 // pred_region
      _
    $region101: #{resnet_forward.1} parent=1 // pred_fallthru
      _
    // Predicated region
    $region102: #{resnet_forward.1} parent=1 // pred_check
      _
    $region103: #{resnet_forward.1} parent=1 // pred_check_branch
      %116 = sbr.rel (0) target = $region105
    $region104: #{resnet_forward.1} parent=1 // pred_region
      _
    $region105: #{resnet_forward.1} parent=1 // pred_fallthru
      _
    // Predicated region
    $region106: #{resnet_forward.1} parent=1 // pred_check
      _
    $region107: #{resnet_forward.1} parent=1 // pred_check_branch
      %118 = sbr.rel (0) target = $region109
    $region108: #{resnet_forward.1} parent=1 // pred_region
      _
    $region109: #{resnet_forward.1} parent=1 // pred_fallthru
      _
    // Predicated region
    $region110: #{resnet_forward.1} parent=1 // pred_check
      _
    $region111: #{resnet_forward.1} parent=1 // pred_check_branch
      %120 = sbr.rel (0) target = $region113
    $region112: #{resnet_forward.1} parent=1 // pred_region
      _
    $region113: #{resnet_forward.1} parent=1 // pred_fallthru
      _
    // Predicated region
    $region114: #{resnet_forward.1} parent=1 // pred_check
      _
    $region115: #{resnet_forward.1} parent=1 // pred_check_branch
      %122 = sbr.rel (0) target = $region117
    $region116: #{resnet_forward.1} parent=1 // pred_region
      _
    $region117: #{resnet_forward.1} parent=1 // pred_fallthru
      _
    %v124 = vld [vmem:[%s13] sm:$0xff]
    %v125 = vld [vmem:[%s13 + $0x8] sm:$0xff]
    %v126 = vld [vmem:[%s13 + $0x10] sm:$0xff]
    %v127 = vld [vmem:[%s13 + $0x18] sm:$0xff]
    %v128 = vld [vmem:[%s13 + $0x20] sm:$0xff]
    %v129 = vld [vmem:[%s13 + $0x28] sm:$0xff]
    %v130 = vld [vmem:[%s13 + $0x30] sm:$0xff]
    %v131 = vld [vmem:[%s13 + $0x38] sm:$0xff]
    %v132 = vld [vmem:[%s13 + $0x40] sm:$0xff]
    %v133 = vld [vmem:[%s13 + $0x48] sm:$0xff]
    %v134 = vld [vmem:[%s13 + $0x50] sm:$0xff]
    %v135 = vld [vmem:[%s13 + $0x58] sm:$0xff]
    %v136 = vld [vmem:[%s13 + $0x60] sm:$0xff]
    %v137 = vld [vmem:[%s13 + $0x68] sm:$0xff]
    %v138 = vld [vmem:[%s13 + $0x70] sm:$0xff]
    %v139 = vld [vmem:[%s13 + $0x78] sm:$0xff]
    %v140 = vld [vmem:[%s15] sm:$0xf]
    %v141 = vld [vmem:[%s15 + $0x4] sm:$0xf]
    %v142 = vld [vmem:[%s15 + $0x8] sm:$0xf]
    %v143 = vld [vmem:[%s15 + $0xc] sm:$0xf]
    %v144 = vld [vmem:[%s15 + $0x10] sm:$0xf]
    %v145 = vld [vmem:[%s15 + $0x14] sm:$0xf]
    %v146 = vld [vmem:[%s15 + $0x18] sm:$0xf]
    %v147 = vld [vmem:[%s15 + $0x1c] sm:$0xf]
    %v148 = vld [vmem:[%s15 + $0x20] sm:$0xf]
    %v149 = vld [vmem:[%s15 + $0x24] sm:$0xf]
    %v150 = vld [vmem:[%s15 + $0x28] sm:$0xf]
    %v151 = vld [vmem:[%s15 + $0x2c] sm:$0xf]
    %v152 = vld [vmem:[%s15 + $0x30] sm:$0xf]
    %v153 = vld [vmem:[%s15 + $0x34] sm:$0xf]
    %v154 = vld [vmem:[%s15 + $0x38] sm:$0xf]
    %v155 = vld [vmem:[%s15 + $0x3c] sm:$0xf]
    %v156 = vld [vmem:[%s15 + $0x40] sm:$0xf]
    %v157 = vld [vmem:[%s15 + $0x44] sm:$0xf]
    %v158 = vld [vmem:[%s15 + $0x48] sm:$0xf]
    %v159 = vld [vmem:[%s15 + $0x4c] sm:$0xf]
    %v160 = vld [vmem:[%s17] sm:$0x1]
    %v162 = vperm.slane %v160, 0
    %v180 = vunpack.c.l.b16 %v124
    %v181 = vunpack.c.h.b16 %v124
    %v182 = vunpack.c.l.b16 %v125
    %v183 = vunpack.c.h.b16 %v125
    %v184 = vunpack.c.l.b16 %v126
    %v185 = vunpack.c.h.b16 %v126
    %v186 = vunpack.c.l.b16 %v127
    %v187 = vunpack.c.h.b16 %v127
    %v188 = vunpack.c.l.b16 %v128
    %v189 = vunpack.c.h.b16 %v128
    %v190 = vunpack.c.l.b16 %v129
    %v191 = vunpack.c.h.b16 %v129
    %v192 = vunpack.c.l.b16 %v130
    %v193 = vunpack.c.h.b16 %v130
    %v194 = vunpack.c.l.b16 %v131
    %v195 = vunpack.c.h.b16 %v131
    %v196 = vunpack.c.l.b16 %v132
    %v197 = vunpack.c.h.b16 %v132
    %v198 = vunpack.c.l.b16 %v133
    %v199 = vunpack.c.h.b16 %v133
    %v200 = vunpack.c.l.b16 %v134
    %v201 = vunpack.c.h.b16 %v134
    %v202 = vunpack.c.l.b16 %v135
    %v203 = vunpack.c.h.b16 %v135
    %v204 = vunpack.c.l.b16 %v136
    %v205 = vunpack.c.h.b16 %v136
    %v206 = vunpack.c.l.b16 %v137
    %v207 = vunpack.c.h.b16 %v137
    %v208 = vunpack.c.l.b16 %v138
    %v209 = vunpack.c.h.b16 %v138
    %v210 = vunpack.c.l.b16 %v139
    %v211 = vunpack.c.h.b16 %v139
    %v212 = vpack.c.b16 %v182, %v180
    %v213 = vpack.c.b16 %v183, %v181
    %v214 = vpack.c.b16 %v186, %v184
    %v215 = vpack.c.b16 %v187, %v185
    %v216 = vpack.c.b16 %v190, %v188
    %v217 = vpack.c.b16 %v191, %v189
    %v218 = vpack.c.b16 %v194, %v192
    %v219 = vpack.c.b16 %v195, %v193
    %v220 = vpack.c.b16 %v198, %v196
    %v221 = vpack.c.b16 %v199, %v197
    %v222 = vpack.c.b16 %v202, %v200
    %v223 = vpack.c.b16 %v203, %v201
    %v224 = vpack.c.b16 %v206, %v204
    %v225 = vpack.c.b16 %v207, %v205
    %v226 = vpack.c.b16 %v210, %v208
    %v227 = vpack.c.b16 %v211, %v209
    %v256 = vunpack.c.l.b16 %v140
    %v257 = vunpack.c.l.b16 %v141
    %v258 = vunpack.c.l.b16 %v142
    %v259 = vunpack.c.l.b16 %v143
    %v260 = vunpack.c.l.b16 %v144
    %v261 = vunpack.c.l.b16 %v145
    %v262 = vunpack.c.l.b16 %v146
    %v263 = vunpack.c.l.b16 %v147
    %v264 = vunpack.c.l.b16 %v148
    %v265 = vunpack.c.l.b16 %v149
    %v266 = vunpack.c.l.b16 %v150
    %v267 = vunpack.c.l.b16 %v151
    %v268 = vunpack.c.l.b16 %v152
    %v269 = vunpack.c.l.b16 %v153
    %v270 = vunpack.c.l.b16 %v154
    %v271 = vunpack.c.l.b16 %v155
    %v272 = vunpack.c.l.b16 %v156
    %v273 = vunpack.c.l.b16 %v157
    %v274 = vunpack.c.l.b16 %v158
    %v275 = vunpack.c.l.b16 %v159
    %v276 = vpack.c.b16 %v257, %v256
    %v277 = vpack.c.b16 %v259, %v258
    %v278 = vpack.c.b16 %v261, %v260
    %v279 = vpack.c.b16 %v263, %v262
    %v280 = vpack.c.b16 %v265, %v264
    %v281 = vpack.c.b16 %v267, %v266
    %v282 = vpack.c.b16 %v269, %v268
    %v283 = vpack.c.b16 %v271, %v270
    %v284 = vpack.c.b16 %v273, %v272
    %v285 = vpack.c.b16 %v275, %v274
    %vm296 = vcmask 261120
    %v298 = vsel %vm296, %v213, 0
    %v301 = vsel %vm296, %v215, 0
    %v304 = vsel %vm296, %v217, 0
    %v307 = vsel %vm296, %v219, 0
    %v310 = vsel %vm296, %v221, 0
    %v313 = vsel %vm296, %v223, 0
    %v316 = vsel %vm296, %v225, 0
    %v319 = vsel %vm296, %v227, 0
    %321 = vmatpush.bf16.msra.mxu0 %v283
    %322 = vmatpush.bf16.msra.mxu0 %v282
    %323 = vmatpush.bf16.msra.mxu0 %v281
    %324 = vmatpush.bf16.msra.mxu0 %v280
    %325 = vmatpush.bf16.msra.mxu0 %v279
    %326 = vmatpush.bf16.msra.mxu0 %v278
    %327 = vmatpush.bf16.msra.mxu0 %v277
    %328 = vmatpush.bf16.msra.mxu0 %v276
    %329 = vmatmul.bf16.gmra.mxu0 %v212
    %v330 = vpop.f32.mrf.mxu0
    %v331 = vadd.f32 %v162, %v330
    %v332 = vpop.f32.mrf.mxu0
    %v333 = vadd.f32 %v162, %v332
    %334 = vmatmul.bf16.gmra.mxu0 %v214
    %v335 = vpop.f32.mrf.mxu0
    %v336 = vadd.f32 %v162, %v335
    %v337 = vpop.f32.mrf.mxu0
    %v338 = vadd.f32 %v162, %v337
    %339 = vmatmul.bf16.gmra.mxu0 %v216
    %v340 = vpop.f32.mrf.mxu0
    %v341 = vadd.f32 %v162, %v340
    %v342 = vpop.f32.mrf.mxu0
    %v343 = vadd.f32 %v162, %v342
    %344 = vmatmul.bf16.gmra.mxu0 %v218
    %v345 = vpop.f32.mrf.mxu0
    %v346 = vadd.f32 %v162, %v345
    %v347 = vpop.f32.mrf.mxu0
    %v348 = vadd.f32 %v162, %v347
    %349 = vmatmul.bf16.gmra.mxu0 %v220
    %v350 = vpop.f32.mrf.mxu0
    %v351 = vadd.f32 %v162, %v350
    %v352 = vpop.f32.mrf.mxu0
    %v353 = vadd.f32 %v162, %v352
    %354 = vmatmul.bf16.gmra.mxu0 %v222
    %v355 = vpop.f32.mrf.mxu0
    %v356 = vadd.f32 %v162, %v355
    %v357 = vpop.f32.mrf.mxu0
    %v358 = vadd.f32 %v162, %v357
    %359 = vmatmul.bf16.gmra.mxu0 %v224
    %v360 = vpop.f32.mrf.mxu0
    %v361 = vadd.f32 %v162, %v360
    %v362 = vpop.f32.mrf.mxu0
    %v363 = vadd.f32 %v162, %v362
    %364 = vmatmul.bf16.gmra.mxu0 %v226
    %v365 = vpop.f32.mrf.mxu0
    %v366 = vadd.f32 %v162, %v365
    %v367 = vpop.f32.mrf.mxu0
    %v368 = vadd.f32 %v162, %v367
    %369 = vdwg.mxu0
    %370 = vmatpush.bf16.msra.mxu0 0
    %371 = vmatpush.bf16.msra.mxu0 0
    %372 = vmatpush.bf16.msra.mxu0 0
    %373 = vmatpush.bf16.msra.mxu0 0
    %374 = vmatpush.bf16.msra.mxu0 0
    %375 = vmatpush.bf16.msra.mxu0 0
    %376 = vmatpush.bf16.msra.mxu0 %v285
    %377 = vmatpush.bf16.msra.mxu0 %v284
    %378 = vmatmul.bf16.gmra.mxu0 %v298
    %v379 = vpop.f32.mrf.mxu0
    %v380 = vadd.f32 %v331, %v379
    %v381 = vpop.f32.mrf.mxu0
    %v382 = vadd.f32 %v333, %v381
    %383 = vmatmul.bf16.gmra.mxu0 %v301
    %v384 = vpop.f32.mrf.mxu0
    %v385 = vadd.f32 %v336, %v384
    %v386 = vpop.f32.mrf.mxu0
    %v387 = vadd.f32 %v338, %v386
    %388 = vmatmul.bf16.gmra.mxu0 %v304
    %v389 = vpop.f32.mrf.mxu0
    %v390 = vadd.f32 %v341, %v389
    %v391 = vpop.f32.mrf.mxu0
    %v392 = vadd.f32 %v343, %v391
    %393 = vmatmul.bf16.gmra.mxu0 %v307
    %v394 = vpop.f32.mrf.mxu0
    %v395 = vadd.f32 %v346, %v394
    %v396 = vpop.f32.mrf.mxu0
    %v397 = vadd.f32 %v348, %v396
    %398 = vmatmul.bf16.gmra.mxu0 %v310
    %v399 = vpop.f32.mrf.mxu0
    %v400 = vadd.f32 %v351, %v399
    %v401 = vpop.f32.mrf.mxu0
    %v402 = vadd.f32 %v353, %v401
    %403 = vmatmul.bf16.gmra.mxu0 %v313
    %v404 = vpop.f32.mrf.mxu0
    %v405 = vadd.f32 %v356, %v404
    %v406 = vpop.f32.mrf.mxu0
    %v407 = vadd.f32 %v358, %v406
    %408 = vmatmul.bf16.gmra.mxu0 %v316
    %v409 = vpop.f32.mrf.mxu0
    %v410 = vadd.f32 %v361, %v409
    %v411 = vpop.f32.mrf.mxu0
    %v412 = vadd.f32 %v363, %v411
    %413 = vmatmul.bf16.gmra.mxu0 %v319
    %v414 = vpop.f32.mrf.mxu0
    %v415 = vadd.f32 %v366, %v414
    %v416 = vpop.f32.mrf.mxu0
    %v417 = vadd.f32 %v368, %v416
    %418 = vdwg.mxu0
    %v419 = vmax.f32 %v380, 0.0
    %v420 = vmax.f32 %v382, 0.0
    %v421 = vmax.f32 %v385, 0.0
    %v422 = vmax.f32 %v387, 0.0
    %v423 = vmax.f32 %v390, 0.0
    %v424 = vmax.f32 %v392, 0.0
    %v425 = vmax.f32 %v395, 0.0
    %v426 = vmax.f32 %v397, 0.0
    %v427 = vmax.f32 %v400, 0.0
    %v428 = vmax.f32 %v402, 0.0
    %v429 = vmax.f32 %v405, 0.0
    %v430 = vmax.f32 %v407, 0.0
    %v431 = vmax.f32 %v410, 0.0
    %v432 = vmax.f32 %v412, 0.0
    %v433 = vmax.f32 %v415, 0.0
    %v434 = vmax.f32 %v417, 0.0
    %v435 = vld [vmem:[%s1] sm:$0xf]
    %v436 = vld [vmem:[%s1 + $0x4] sm:$0xf]
    %v437 = vld [vmem:[%s1 + $0x8] sm:$0xf]
    %v438 = vld [vmem:[%s1 + $0xc] sm:$0xf]
    %v439 = vld [vmem:[%s1 + $0x10] sm:$0xf]
    %v440 = vld [vmem:[%s1 + $0x14] sm:$0xf]
    %v441 = vld [vmem:[%s1 + $0x18] sm:$0xf]
    %v442 = vld [vmem:[%s1 + $0x1c] sm:$0xf]
    %v443 = vld [vmem:[%s1 + $0x20] sm:$0xf]
    %v444 = vld [vmem:[%s1 + $0x24] sm:$0xf]
    %v445 = vld [vmem:[%s1 + $0x28] sm:$0xf]
    %v446 = vld [vmem:[%s1 + $0x2c] sm:$0xf]
    %v447 = vld [vmem:[%s1 + $0x30] sm:$0xf]
    %v448 = vld [vmem:[%s1 + $0x34] sm:$0xf]
    %v449 = vld [vmem:[%s1 + $0x38] sm:$0xf]
    %v450 = vld [vmem:[%s1 + $0x3c] sm:$0xf]
    %v451 = vld [vmem:[%s1 + $0x40] sm:$0xf]
    %v452 = vld [vmem:[%s1 + $0x44] sm:$0xf]
    %v453 = vld [vmem:[%s1 + $0x48] sm:$0xf]
    %v454 = vld [vmem:[%s1 + $0x4c] sm:$0xf]
    %v455 = vld [vmem:[%s1 + $0x50] sm:$0xf]
    %v456 = vld [vmem:[%s1 + $0x54] sm:$0xf]
    %v457 = vld [vmem:[%s1 + $0x58] sm:$0xf]
    %v458 = vld [vmem:[%s1 + $0x5c] sm:$0xf]
    %v459 = vld [vmem:[%s1 + $0x60] sm:$0xf]
    %v460 = vpack.c.bf16 %v420, %v419
    %v461 = vpack.c.bf16 %v422, %v421
    %v462 = vpack.c.bf16 %v424, %v423
    %v463 = vpack.c.bf16 %v426, %v425
    %v464 = vpack.c.bf16 %v428, %v427
    %v465 = vpack.c.bf16 %v430, %v429
    %v466 = vpack.c.bf16 %v432, %v431
    %v467 = vpack.c.bf16 %v434, %v433
    %v493 = vunpack.c.l.b16 %v435
    %v494 = vunpack.c.l.b16 %v436
    %v495 = vunpack.c.l.b16 %v437
    %v496 = vunpack.c.l.b16 %v438
    %v497 = vunpack.c.l.b16 %v439
    %v498 = vunpack.c.l.b16 %v440
    %v499 = vunpack.c.l.b16 %v441
    %v500 = vunpack.c.l.b16 %v442
    %v501 = vunpack.c.l.b16 %v443
    %v502 = vunpack.c.l.b16 %v444
    %v503 = vunpack.c.l.b16 %v445
    %v504 = vunpack.c.l.b16 %v446
    %v505 = vunpack.c.l.b16 %v447
    %v506 = vunpack.c.l.b16 %v448
    %v507 = vunpack.c.l.b16 %v449
    %v508 = vunpack.c.l.b16 %v450
    %v509 = vunpack.c.l.b16 %v451
    %v510 = vunpack.c.l.b16 %v452
    %v511 = vunpack.c.l.b16 %v453
    %v512 = vunpack.c.l.b16 %v454
    %v513 = vunpack.c.l.b16 %v455
    %v514 = vunpack.c.l.b16 %v456
    %v515 = vunpack.c.l.b16 %v457
    %v516 = vunpack.c.l.b16 %v458
    %v517 = vunpack.c.l.b16 %v459
    %v518 = vpack.c.b16 %v494, %v493
    %v519 = vpack.c.b16 %v496, %v495
    %v520 = vpack.c.b16 %v498, %v497
    %v521 = vpack.c.b16 %v500, %v499
    %v522 = vpack.c.b16 %v502, %v501
    %v523 = vpack.c.b16 %v504, %v503
    %v524 = vpack.c.b16 %v506, %v505
    %v525 = vpack.c.b16 %v508, %v507
    %v526 = vpack.c.b16 %v510, %v509
    %v527 = vpack.c.b16 %v512, %v511
    %v528 = vpack.c.b16 %v514, %v513
    %v529 = vpack.c.b16 %v516, %v515
    %v530 = vpack.c.b16 %v517, %v517
    %544 = vmatpush.bf16.msra.mxu0 %v467
    %545 = vmatpush.bf16.msra.mxu0 %v466
    %546 = vmatpush.bf16.msra.mxu0 %v465
    %547 = vmatpush.bf16.msra.mxu0 %v464
    %548 = vmatpush.bf16.msra.mxu0 %v463
    %549 = vmatpush.bf16.msra.mxu0 %v462
    %550 = vmatpush.bf16.msra.mxu0 %v461
    %551 = vmatpush.bf16.msra.mxu0 %v460
    %552 = vmatmul.bf16.gmra.mxu0 %v518
    %v553 = vpop.f32.mrf.mxu0
    %v554 = vadd.f32 0.0, %v553
    %v555 = vpop.f32.mrf.mxu0
    %v556 = vadd.f32 0.0, %v555
    %557 = vmatmul.bf16.gmra.mxu0 %v519
    %v558 = vpop.f32.mrf.mxu0
    %v559 = vadd.f32 0.0, %v558
    %v560 = vpop.f32.mrf.mxu0
    %v561 = vadd.f32 0.0, %v560
    %562 = vmatmul.bf16.gmra.mxu0 %v520
    %v563 = vpop.f32.mrf.mxu0
    %v564 = vadd.f32 0.0, %v563
    %v565 = vpop.f32.mrf.mxu0
    %v566 = vadd.f32 0.0, %v565
    %567 = vmatmul.bf16.gmra.mxu0 %v521
    %v568 = vpop.f32.mrf.mxu0
    %v569 = vadd.f32 0.0, %v568
    %v570 = vpop.f32.mrf.mxu0
    %v571 = vadd.f32 0.0, %v570
    %572 = vmatmul.bf16.gmra.mxu0 %v522
    %v573 = vpop.f32.mrf.mxu0
    %v574 = vadd.f32 0.0, %v573
    %v575 = vpop.f32.mrf.mxu0
    %v576 = vadd.f32 0.0, %v575
    %577 = vmatmul.bf16.gmra.mxu0 %v523
    %v578 = vpop.f32.mrf.mxu0
    %v579 = vadd.f32 0.0, %v578
    %v580 = vpop.f32.mrf.mxu0
    %v581 = vadd.f32 0.0, %v580
    %582 = vmatmul.bf16.gmra.mxu0 %v524
    %v583 = vpop.f32.mrf.mxu0
    %v584 = vadd.f32 0.0, %v583
    %v585 = vpop.f32.mrf.mxu0
    %v586 = vadd.f32 0.0, %v585
    %587 = vmatmul.bf16.gmra.mxu0 %v525
    %v588 = vpop.f32.mrf.mxu0
    %v589 = vadd.f32 0.0, %v588
    %v590 = vpop.f32.mrf.mxu0
    %v591 = vadd.f32 0.0, %v590
    %592 = vmatmul.bf16.gmra.mxu0 %v526
    %v593 = vpop.f32.mrf.mxu0
    %v594 = vadd.f32 0.0, %v593
    %v595 = vpop.f32.mrf.mxu0
    %v596 = vadd.f32 0.0, %v595
    %597 = vmatmul.bf16.gmra.mxu0 %v527
    %v598 = vpop.f32.mrf.mxu0
    %v599 = vadd.f32 0.0, %v598
    %v600 = vpop.f32.mrf.mxu0
    %v601 = vadd.f32 0.0, %v600
    %602 = vmatmul.bf16.gmra.mxu0 %v528
    %v603 = vpop.f32.mrf.mxu0
    %v604 = vadd.f32 0.0, %v603
    %v605 = vpop.f32.mrf.mxu0
    %v606 = vadd.f32 0.0, %v605
    %607 = vmatmul.bf16.gmra.mxu0 %v529
    %v608 = vpop.f32.mrf.mxu0
    %v609 = vadd.f32 0.0, %v608
    %v610 = vpop.f32.mrf.mxu0
    %v611 = vadd.f32 0.0, %v610
    %612 = vmatmul.bf16.gmra.mxu0 %v530
    %v613 = vpop.f32.mrf.mxu0
    %v614 = vadd.f32 0.0, %v613
    %v615 = vpop.f32.mrf.mxu0
    %616 = vdwg.mxu0
    %v617 = vpack.c.bf16 %v554, %v554
    %v618 = vpack.c.bf16 %v556, %v556
    %v619 = vpack.c.bf16 %v559, %v559
    %v620 = vpack.c.bf16 %v561, %v561
    %v621 = vpack.c.bf16 %v564, %v564
    %v622 = vpack.c.bf16 %v566, %v566
    %v623 = vpack.c.bf16 %v569, %v569
    %v624 = vpack.c.bf16 %v571, %v571
    %v625 = vpack.c.bf16 %v574, %v574
    %v626 = vpack.c.bf16 %v576, %v576
    %v627 = vpack.c.bf16 %v579, %v579
    %v628 = vpack.c.bf16 %v581, %v581
    %v629 = vpack.c.bf16 %v584, %v584
    %v630 = vpack.c.bf16 %v586, %v586
    %v631 = vpack.c.bf16 %v589, %v589
    %v632 = vpack.c.bf16 %v591, %v591
    %v633 = vpack.c.bf16 %v594, %v594
    %v634 = vpack.c.bf16 %v596, %v596
    %v635 = vpack.c.bf16 %v599, %v599
    %v636 = vpack.c.bf16 %v601, %v601
    %v637 = vpack.c.bf16 %v604, %v604
    %v638 = vpack.c.bf16 %v606, %v606
    %v639 = vpack.c.bf16 %v609, %v609
    %v640 = vpack.c.bf16 %v611, %v611
    %v641 = vpack.c.bf16 %v614, %v614
    %vm642 = vcmask 519168
    %643 = vst.msk [vmem:[#allocation2] sm:$0xf] %vm642, %v617
    %644 = vst.msk [vmem:[#allocation2 + $0x4] sm:$0xf] %vm642, %v618
    %645 = vst.msk [vmem:[#allocation2 + $0x8] sm:$0xf] %vm642, %v619
    %646 = vst.msk [vmem:[#allocation2 + $0xc] sm:$0xf] %vm642, %v620
    %647 = vst.msk [vmem:[#allocation2 + $0x10] sm:$0xf] %vm642, %v621
    %648 = vst.msk [vmem:[#allocation2 + $0x14] sm:$0xf] %vm642, %v622
    %649 = vst.msk [vmem:[#allocation2 + $0x18] sm:$0xf] %vm642, %v623
    %650 = vst.msk [vmem:[#allocation2 + $0x1c] sm:$0xf] %vm642, %v624
    %651 = vst.msk [vmem:[#allocation2 + $0x20] sm:$0xf] %vm642, %v625
    %652 = vst.msk [vmem:[#allocation2 + $0x24] sm:$0xf] %vm642, %v626
    %653 = vst.msk [vmem:[#allocation2 + $0x28] sm:$0xf] %vm642, %v627
    %654 = vst.msk [vmem:[#allocation2 + $0x2c] sm:$0xf] %vm642, %v628
    %655 = vst.msk [vmem:[#allocation2 + $0x30] sm:$0xf] %vm642, %v629
    %656 = vst.msk [vmem:[#allocation2 + $0x34] sm:$0xf] %vm642, %v630
    %657 = vst.msk [vmem:[#allocation2 + $0x38] sm:$0xf] %vm642, %v631
    %658 = vst.msk [vmem:[#allocation2 + $0x3c] sm:$0xf] %vm642, %v632
    %659 = vst.msk [vmem:[#allocation2 + $0x40] sm:$0xf] %vm642, %v633
    %660 = vst.msk [vmem:[#allocation2 + $0x44] sm:$0xf] %vm642, %v634
    %661 = vst.msk [vmem:[#allocation2 + $0x48] sm:$0xf] %vm642, %v635
    %662 = vst.msk [vmem:[#allocation2 + $0x4c] sm:$0xf] %vm642, %v636
    %663 = vst.msk [vmem:[#allocation2 + $0x50] sm:$0xf] %vm642, %v637
    %664 = vst.msk [vmem:[#allocation2 + $0x54] sm:$0xf] %vm642, %v638
    %665 = vst.msk [vmem:[#allocation2 + $0x58] sm:$0xf] %vm642, %v639
    %666 = vst.msk [vmem:[#allocation2 + $0x5c] sm:$0xf] %vm642, %v640
    %667 = vst.msk [vmem:[#allocation2 + $0x60] sm:$0xf] %vm642, %v641
    %v668 = vld [vmem:[#allocation2] sm:$0xf]
    %v669 = vld [vmem:[#allocation2 + $0x4] sm:$0xf]
    %v670 = vld [vmem:[#allocation2 + $0x8] sm:$0xf]
    %v671 = vld [vmem:[#allocation2 + $0xc] sm:$0xf]
    %v672 = vld [vmem:[#allocation2 + $0x10] sm:$0xf]
    %v673 = vld [vmem:[#allocation2 + $0x14] sm:$0xf]
    %v674 = vld [vmem:[#allocation2 + $0x18] sm:$0xf]
    %v675 = vld [vmem:[#allocation2 + $0x1c] sm:$0xf]
    %v676 = vld [vmem:[#allocation2 + $0x20] sm:$0xf]
    %v677 = vld [vmem:[#allocation2 + $0x24] sm:$0xf]
    %v678 = vld [vmem:[#allocation2 + $0x28] sm:$0xf]
    %v679 = vld [vmem:[#allocation2 + $0x2c] sm:$0xf]
    %v680 = vld [vmem:[#allocation2 + $0x30] sm:$0xf]
    %v681 = vld [vmem:[#allocation2 + $0x34] sm:$0xf]
    %v682 = vld [vmem:[#allocation2 + $0x38] sm:$0xf]
    %v683 = vld [vmem:[#allocation2 + $0x3c] sm:$0xf]
    %v684 = vld [vmem:[#allocation2 + $0x40] sm:$0xf]
    %v685 = vld [vmem:[#allocation2 + $0x44] sm:$0xf]
    %v686 = vld [vmem:[#allocation2 + $0x48] sm:$0xf]
    %v687 = vld [vmem:[#allocation2 + $0x4c] sm:$0xf]
    %v688 = vld [vmem:[#allocation2 + $0x50] sm:$0xf]
    %v689 = vunpack.c.l.bf16 %v668
    %v690 = vunpack.c.l.bf16 %v669
    %v691 = vunpack.c.l.bf16 %v670
    %v692 = vunpack.c.l.bf16 %v671
    %v693 = vunpack.c.l.bf16 %v672
    %v694 = vunpack.c.l.bf16 %v673
    %v695 = vunpack.c.l.bf16 %v674
    %v696 = vunpack.c.l.bf16 %v675
    %v697 = vunpack.c.l.bf16 %v676
    %v698 = vunpack.c.l.bf16 %v677
    %v699 = vunpack.c.l.bf16 %v678
    %v700 = vunpack.c.l.bf16 %v679
    %v701 = vunpack.c.l.bf16 %v680
    %v702 = vunpack.c.l.bf16 %v681
    %v703 = vunpack.c.l.bf16 %v682
    %v704 = vunpack.c.l.bf16 %v683
    %v705 = vunpack.c.l.bf16 %v684
    %v706 = vunpack.c.l.bf16 %v685
    %v707 = vunpack.c.l.bf16 %v686
    %v708 = vunpack.c.l.bf16 %v687
    %v709 = vunpack.c.l.bf16 %v688
    %vm731 = vcmask 1046528
    %v732 = vrot.slane %v689, 1
    %v733 = vrot.slane %v690, 1
    %v734 = vsel %vm731, %v732, %v733
    %v735 = vrot.slane %v691, 1
    %v736 = vsel %vm731, %v733, %v735
    %v737 = vrot.slane %v692, 1
    %v738 = vsel %vm731, %v735, %v737
    %v739 = vrot.slane %v693, 1
    %v740 = vsel %vm731, %v737, %v739
    %v741 = vrot.slane %v694, 1
    %v742 = vsel %vm731, %v739, %v741
    %v743 = vrot.slane %v695, 1
    %v744 = vsel %vm731, %v741, %v743
    %v745 = vrot.slane %v696, 1
    %v746 = vsel %vm731, %v743, %v745
    %v747 = vrot.slane %v697, 1
    %v748 = vsel %vm731, %v745, %v747
    %v749 = vrot.slane %v698, 1
    %v750 = vsel %vm731, %v747, %v749
    %v751 = vrot.slane %v699, 1
    %v752 = vsel %vm731, %v749, %v751
    %v753 = vrot.slane %v700, 1
    %v754 = vsel %vm731, %v751, %v753
    %v755 = vrot.slane %v701, 1
    %v756 = vsel %vm731, %v753, %v755
    %v757 = vrot.slane %v702, 1
    %v758 = vsel %vm731, %v755, %v757
    %v759 = vrot.slane %v703, 1
    %v760 = vsel %vm731, %v757, %v759
    %v761 = vrot.slane %v704, 1
    %v762 = vsel %vm731, %v759, %v761
    %v763 = vrot.slane %v705, 1
    %v764 = vsel %vm731, %v761, %v763
    %v765 = vrot.slane %v706, 1
    %v766 = vsel %vm731, %v763, %v765
    %v767 = vrot.slane %v707, 1
    %v768 = vsel %vm731, %v765, %v767
    %v769 = vrot.slane %v708, 1
    %v770 = vsel %vm731, %v767, %v769
    %v771 = vrot.slane %v709, 1
    %v772 = vsel %vm731, %v769, %v771
    %v794 = vmax.f32 %v689, %v734
    %v795 = vmax.f32 %v690, %v736
    %v796 = vmax.f32 %v691, %v738
    %v797 = vmax.f32 %v692, %v740
    %v798 = vmax.f32 %v693, %v742
    %v799 = vmax.f32 %v694, %v744
    %v800 = vmax.f32 %v695, %v746
    %v801 = vmax.f32 %v696, %v748
    %v802 = vmax.f32 %v697, %v750
    %v803 = vmax.f32 %v698, %v752
    %v804 = vmax.f32 %v699, %v754
    %v805 = vmax.f32 %v700, %v756
    %v806 = vmax.f32 %v701, %v758
    %v807 = vmax.f32 %v702, %v760
    %v808 = vmax.f32 %v703, %v762
    %v809 = vmax.f32 %v704, %v764
    %v810 = vmax.f32 %v705, %v766
    %v811 = vmax.f32 %v706, %v768
    %v812 = vmax.f32 %v707, %v770
    %v813 = vmax.f32 %v708, %v772
    %v814 = vmax.f32 %v709, %v771
    %v815 = vpack.c.bf16 %v794, %v794
    %v816 = vpack.c.bf16 %v795, %v795
    %v817 = vpack.c.bf16 %v796, %v796
    %v818 = vpack.c.bf16 %v797, %v797
    %v819 = vpack.c.bf16 %v798, %v798
    %v820 = vpack.c.bf16 %v799, %v799
    %v821 = vpack.c.bf16 %v800, %v800
    %v822 = vpack.c.bf16 %v801, %v801
    %v823 = vpack.c.bf16 %v802, %v802
    %v824 = vpack.c.bf16 %v803, %v803
    %v825 = vpack.c.bf16 %v804, %v804
    %v826 = vpack.c.bf16 %v805, %v805
    %v827 = vpack.c.bf16 %v806, %v806
    %v828 = vpack.c.bf16 %v807, %v807
    %v829 = vpack.c.bf16 %v808, %v808
    %v830 = vpack.c.bf16 %v809, %v809
    %v831 = vpack.c.bf16 %v810, %v810
    %v832 = vpack.c.bf16 %v811, %v811
    %v833 = vpack.c.bf16 %v812, %v812
    %v834 = vpack.c.bf16 %v813, %v813
    %v835 = vpack.c.bf16 %v814, %v814
    %v836 = vld [vmem:[#allocation2] sm:$0xe]
    %v837 = vld [vmem:[#allocation2 + $0x54] sm:$0x1]
    %v838 = vunpack.c.l.bf16 %v815
    %v839 = vunpack.c.l.bf16 %v816
    %v840 = vunpack.c.l.bf16 %v817
    %v841 = vunpack.c.l.bf16 %v818
    %v842 = vunpack.c.l.bf16 %v819
    %v843 = vunpack.c.l.bf16 %v820
    %v844 = vunpack.c.l.bf16 %v821
    %v845 = vunpack.c.l.bf16 %v822
    %v846 = vunpack.c.l.bf16 %v823
    %v847 = vunpack.c.l.bf16 %v824
    %v848 = vunpack.c.l.bf16 %v825
    %v849 = vunpack.c.l.bf16 %v826
    %v850 = vunpack.c.l.bf16 %v827
    %v851 = vunpack.c.l.bf16 %v828
    %v852 = vunpack.c.l.bf16 %v829
    %v853 = vunpack.c.l.bf16 %v830
    %v854 = vunpack.c.l.bf16 %v831
    %v855 = vunpack.c.l.bf16 %v832
    %v856 = vunpack.c.l.bf16 %v833
    %v857 = vunpack.c.l.bf16 %v834
    %v858 = vunpack.c.l.bf16 %v835
    %v859 = vunpack.c.l.bf16 %v836
    %v860 = vunpack.c.l.bf16 %v837
    %vm863 = vcmask 1045504
    %v864 = vrot.slane %v859, 2
    %v865 = vrot.slane %v690, 2
    %v866 = vsel %vm863, %v864, %v865
    %v867 = vrot.slane %v691, 2
    %v868 = vsel %vm863, %v865, %v867
    %v869 = vrot.slane %v692, 2
    %v870 = vsel %vm863, %v867, %v869
    %v871 = vrot.slane %v693, 2
    %v872 = vsel %vm863, %v869, %v871
    %v873 = vrot.slane %v694, 2
    %v874 = vsel %vm863, %v871, %v873
    %v875 = vrot.slane %v695, 2
    %v876 = vsel %vm863, %v873, %v875
    %v877 = vrot.slane %v696, 2
    %v878 = vsel %vm863, %v875, %v877
    %v879 = vrot.slane %v697, 2
    %v880 = vsel %vm863, %v877, %v879
    %v881 = vrot.slane %v698, 2
    %v882 = vsel %vm863, %v879, %v881
    %v883 = vrot.slane %v699, 2
    %v884 = vsel %vm863, %v881, %v883
    %v885 = vrot.slane %v700, 2
    %v886 = vsel %vm863, %v883, %v885
    %v887 = vrot.slane %v701, 2
    %v888 = vsel %vm863, %v885, %v887
    %v889 = vrot.slane %v702, 2
    %v890 = vsel %vm863, %v887, %v889
    %v891 = vrot.slane %v703, 2
    %v892 = vsel %vm863, %v889, %v891
    %v893 = vrot.slane %v704, 2
    %v894 = vsel %vm863, %v891, %v893
    %v895 = vrot.slane %v705, 2
    %v896 = vsel %vm863, %v893, %v895
    %v897 = vrot.slane %v706, 2
    %v898 = vsel %vm863, %v895, %v897
    %v899 = vrot.slane %v707, 2
    %v900 = vsel %vm863, %v897, %v899
    %v901 = vrot.slane %v708, 2
    %v902 = vsel %vm863, %v899, %v901
    %v903 = vrot.slane %v709, 2
    %v904 = vsel %vm863, %v901, %v903
    %v905 = vrot.slane %v860, 2
    %v906 = vsel %vm863, %v903, %v905
    %v928 = vmax.f32 %v838, %v866
    %v929 = vmax.f32 %v839, %v868
    %v930 = vmax.f32 %v840, %v870
    %v931 = vmax.f32 %v841, %v872
    %v932 = vmax.f32 %v842, %v874
    %v933 = vmax.f32 %v843, %v876
    %v934 = vmax.f32 %v844, %v878
    %v935 = vmax.f32 %v845, %v880
    %v936 = vmax.f32 %v846, %v882
    %v937 = vmax.f32 %v847, %v884
    %v938 = vmax.f32 %v848, %v886
    %v939 = vmax.f32 %v849, %v888
    %v940 = vmax.f32 %v850, %v890
    %v941 = vmax.f32 %v851, %v892
    %v942 = vmax.f32 %v852, %v894
    %v943 = vmax.f32 %v853, %v896
    %v944 = vmax.f32 %v854, %v898
    %v945 = vmax.f32 %v855, %v900
    %v946 = vmax.f32 %v856, %v902
    %v947 = vmax.f32 %v857, %v904
    %v948 = vmax.f32 %v858, %v906
    %v949 = vpack.c.bf16 %v928, %v928
    %v950 = vpack.c.bf16 %v929, %v929
    %v951 = vpack.c.bf16 %v930, %v930
    %v952 = vpack.c.bf16 %v931, %v931
    %v953 = vpack.c.bf16 %v932, %v932
    %v954 = vpack.c.bf16 %v933, %v933
    %v955 = vpack.c.bf16 %v934, %v934
    %v956 = vpack.c.bf16 %v935, %v935
    %v957 = vpack.c.bf16 %v936, %v936
    %v958 = vpack.c.bf16 %v937, %v937
    %v959 = vpack.c.bf16 %v938, %v938
    %v960 = vpack.c.bf16 %v939, %v939
    %v961 = vpack.c.bf16 %v940, %v940
    %v962 = vpack.c.bf16 %v941, %v941
    %v963 = vpack.c.bf16 %v942, %v942
    %v964 = vpack.c.bf16 %v943, %v943
    %v965 = vpack.c.bf16 %v944, %v944
    %v966 = vpack.c.bf16 %v945, %v945
    %v967 = vpack.c.bf16 %v946, %v946
    %v968 = vpack.c.bf16 %v947, %v947
    %v969 = vpack.c.bf16 %v948, %v948
    %v970 = vld [vmem:[#allocation2 + $0x4] sm:$0xe]
    %v971 = vld [vmem:[#allocation2 + $0x54] sm:$0xf]
    %v972 = vld [vmem:[#allocation2 + $0x58] sm:$0x1]
    %v973 = vunpack.c.l.bf16 %v949
    %v974 = vunpack.c.l.bf16 %v950
    %v975 = vunpack.c.l.bf16 %v951
    %v976 = vunpack.c.l.bf16 %v952
    %v977 = vunpack.c.l.bf16 %v953
    %v978 = vunpack.c.l.bf16 %v954
    %v979 = vunpack.c.l.bf16 %v955
    %v980 = vunpack.c.l.bf16 %v956
    %v981 = vunpack.c.l.bf16 %v957
    %v982 = vunpack.c.l.bf16 %v958
    %v983 = vunpack.c.l.bf16 %v959
    %v984 = vunpack.c.l.bf16 %v960
    %v985 = vunpack.c.l.bf16 %v961
    %v986 = vunpack.c.l.bf16 %v962
    %v987 = vunpack.c.l.bf16 %v963
    %v988 = vunpack.c.l.bf16 %v964
    %v989 = vunpack.c.l.bf16 %v965
    %v990 = vunpack.c.l.bf16 %v966
    %v991 = vunpack.c.l.bf16 %v967
    %v992 = vunpack.c.l.bf16 %v968
    %v993 = vunpack.c.l.bf16 %v969
    %v994 = vunpack.c.l.bf16 %v970
    %v995 = vunpack.c.l.bf16 %v971
    %v996 = vunpack.c.l.bf16 %v972
    %v1000 = vrot.slane %v994, 2
    %v1001 = vsel %vm863, %v1000, %v867
    %v1002 = vrot.slane %v995, 2
    %v1003 = vsel %vm863, %v903, %v1002
    %v1004 = vrot.slane %v996, 2
    %v1005 = vsel %vm863, %v1002, %v1004
    %v1009 = vmax.f32 %v973, %v1001
    %v1010 = vmax.f32 %v974, %v870
    %v1011 = vmax.f32 %v975, %v872
    %v1012 = vmax.f32 %v976, %v874
    %v1013 = vmax.f32 %v977, %v876
    %v1014 = vmax.f32 %v978, %v878
    %v1015 = vmax.f32 %v979, %v880
    %v1016 = vmax.f32 %v980, %v882
    %v1017 = vmax.f32 %v981, %v884
    %v1018 = vmax.f32 %v982, %v886
    %v1019 = vmax.f32 %v983, %v888
    %v1020 = vmax.f32 %v984, %v890
    %v1021 = vmax.f32 %v985, %v892
    %v1022 = vmax.f32 %v986, %v894
    %v1023 = vmax.f32 %v987, %v896
    %v1024 = vmax.f32 %v988, %v898
    %v1025 = vmax.f32 %v989, %v900
    %v1026 = vmax.f32 %v990, %v902
    %v1027 = vmax.f32 %v991, %v904
    %v1028 = vmax.f32 %v992, %v1003
    %v1029 = vmax.f32 %v993, %v1005
    %v1030 = vpack.c.bf16 %v1009, %v1009
    %v1031 = vpack.c.bf16 %v1010, %v1010
    %v1032 = vpack.c.bf16 %v1011, %v1011
    %v1033 = vpack.c.bf16 %v1012, %v1012
    %v1034 = vpack.c.bf16 %v1013, %v1013
    %v1035 = vpack.c.bf16 %v1014, %v1014
    %v1036 = vpack.c.bf16 %v1015, %v1015
    %v1037 = vpack.c.bf16 %v1016, %v1016
    %v1038 = vpack.c.bf16 %v1017, %v1017
    %v1039 = vpack.c.bf16 %v1018, %v1018
    %v1040 = vpack.c.bf16 %v1019, %v1019
    %v1041 = vpack.c.bf16 %v1020, %v1020
    %v1042 = vpack.c.bf16 %v1021, %v1021
    %v1043 = vpack.c.bf16 %v1022, %v1022
    %v1044 = vpack.c.bf16 %v1023, %v1023
    %v1045 = vpack.c.bf16 %v1024, %v1024
    %v1046 = vpack.c.bf16 %v1025, %v1025
    %v1047 = vpack.c.bf16 %v1026, %v1026
    %v1048 = vpack.c.bf16 %v1027, %v1027
    %v1049 = vpack.c.bf16 %v1028, %v1028
    %v1050 = vpack.c.bf16 %v1029, %v1029
    %v1051 = vunpack.c.l.bf16 %v1030
    %v1052 = vunpack.c.l.bf16 %v1031
    %v1053 = vunpack.c.l.bf16 %v1032
    %v1054 = vunpack.c.l.bf16 %v1033
    %v1055 = vunpack.c.l.bf16 %v1034
    %v1056 = vunpack.c.l.bf16 %v1035
    %v1057 = vunpack.c.l.bf16 %v1036
    %v1058 = vunpack.c.l.bf16 %v1037
    %v1059 = vunpack.c.l.bf16 %v1038
    %v1060 = vunpack.c.l.bf16 %v1039
    %v1061 = vunpack.c.l.bf16 %v1040
    %v1062 = vunpack.c.l.bf16 %v1041
    %v1063 = vunpack.c.l.bf16 %v1042
    %v1064 = vunpack.c.l.bf16 %v1043
    %v1065 = vunpack.c.l.bf16 %v1044
    %v1066 = vunpack.c.l.bf16 %v1045
    %v1067 = vunpack.c.l.bf16 %v1046
    %v1068 = vunpack.c.l.bf16 %v1047
    %v1069 = vunpack.c.l.bf16 %v1048
    %v1070 = vunpack.c.l.bf16 %v1049
    %v1071 = vunpack.c.l.bf16 %v1050
    %vm1072 = vcmask 1044480
    %v1073 = vrot.slane %v994, 3
    %v1074 = vrot.slane %v691, 3
    %v1075 = vsel %vm1072, %v1073, %v1074
    %v1076 = vrot.slane %v692, 3
    %v1077 = vsel %vm1072, %v1074, %v1076
    %v1078 = vrot.slane %v693, 3
    %v1079 = vsel %vm1072, %v1076, %v1078
    %v1080 = vrot.slane %v694, 3
    %v1081 = vsel %vm1072, %v1078, %v1080
    %v1082 = vrot.slane %v695, 3
    %v1083 = vsel %vm1072, %v1080, %v1082
    %v1084 = vrot.slane %v696, 3
    %v1085 = vsel %vm1072, %v1082, %v1084
    %v1086 = vrot.slane %v697, 3
    %v1087 = vsel %vm1072, %v1084, %v1086
    %v1088 = vrot.slane %v698, 3
    %v1089 = vsel %vm1072, %v1086, %v1088
    %v1090 = vrot.slane %v699, 3
    %v1091 = vsel %vm1072, %v1088, %v1090
    %v1092 = vrot.slane %v700, 3
    %v1093 = vsel %vm1072, %v1090, %v1092
    %v1094 = vrot.slane %v701, 3
    %v1095 = vsel %vm1072, %v1092, %v1094
    %v1096 = vrot.slane %v702, 3
    %v1097 = vsel %vm1072, %v1094, %v1096
    %v1098 = vrot.slane %v703, 3
    %v1099 = vsel %vm1072, %v1096, %v1098
    %v1100 = vrot.slane %v704, 3
    %v1101 = vsel %vm1072, %v1098, %v1100
    %v1102 = vrot.slane %v705, 3
    %v1103 = vsel %vm1072, %v1100, %v1102
    %v1104 = vrot.slane %v706, 3
    %v1105 = vsel %vm1072, %v1102, %v1104
    %v1106 = vrot.slane %v707, 3
    %v1107 = vsel %vm1072, %v1104, %v1106
    %v1108 = vrot.slane %v708, 3
    %v1109 = vsel %vm1072, %v1106, %v1108
    %v1110 = vrot.slane %v709, 3
    %v1111 = vsel %vm1072, %v1108, %v1110
    %v1112 = vrot.slane %v995, 3
    %v1113 = vsel %vm1072, %v1110, %v1112
    %v1114 = vrot.slane %v996, 3
    %v1115 = vsel %vm1072, %v1112, %v1114
    %v1137 = vmax.f32 %v1051, %v1075
    %v1138 = vmax.f32 %v1052, %v1077
    %v1139 = vmax.f32 %v1053, %v1079
    %v1140 = vmax.f32 %v1054, %v1081
    %v1141 = vmax.f32 %v1055, %v1083
    %v1142 = vmax.f32 %v1056, %v1085
    %v1143 = vmax.f32 %v1057, %v1087
    %v1144 = vmax.f32 %v1058, %v1089
    %v1145 = vmax.f32 %v1059, %v1091
    %v1146 = vmax.f32 %v1060, %v1093
    %v1147 = vmax.f32 %v1061, %v1095
    %v1148 = vmax.f32 %v1062, %v1097
    %v1149 = vmax.f32 %v1063, %v1099
    %v1150 = vmax.f32 %v1064, %v1101
    %v1151 = vmax.f32 %v1065, %v1103
    %v1152 = vmax.f32 %v1066, %v1105
    %v1153 = vmax.f32 %v1067, %v1107
    %v1154 = vmax.f32 %v1068, %v1109
    %v1155 = vmax.f32 %v1069, %v1111
    %v1156 = vmax.f32 %v1070, %v1113
    %v1157 = vmax.f32 %v1071, %v1115
    %v1158 = vpack.c.bf16 %v1137, %v1137
    %v1159 = vpack.c.bf16 %v1138, %v1138
    %v1160 = vpack.c.bf16 %v1139, %v1139
    %v1161 = vpack.c.bf16 %v1140, %v1140
    %v1162 = vpack.c.bf16 %v1141, %v1141
    %v1163 = vpack.c.bf16 %v1142, %v1142
    %v1164 = vpack.c.bf16 %v1143, %v1143
    %v1165 = vpack.c.bf16 %v1144, %v1144
    %v1166 = vpack.c.bf16 %v1145, %v1145
    %v1167 = vpack.c.bf16 %v1146, %v1146
    %v1168 = vpack.c.bf16 %v1147, %v1147
    %v1169 = vpack.c.bf16 %v1148, %v1148
    %v1170 = vpack.c.bf16 %v1149, %v1149
    %v1171 = vpack.c.bf16 %v1150, %v1150
    %v1172 = vpack.c.bf16 %v1151, %v1151
    %v1173 = vpack.c.bf16 %v1152, %v1152
    %v1174 = vpack.c.bf16 %v1153, %v1153
    %v1175 = vpack.c.bf16 %v1154, %v1154
    %v1176 = vpack.c.bf16 %v1155, %v1155
    %v1177 = vpack.c.bf16 %v1156, %v1156
    %v1178 = vpack.c.bf16 %v1157, %v1157
    %v1179 = vld [vmem:[#allocation2 + $0x4] sm:$0xc]
    %v1180 = vld [vmem:[#allocation2 + $0x58] sm:$0x3]
    %v1181 = vunpack.c.l.bf16 %v1158
    %v1182 = vunpack.c.l.bf16 %v1159
    %v1183 = vunpack.c.l.bf16 %v1160
    %v1184 = vunpack.c.l.bf16 %v1161
    %v1185 = vunpack.c.l.bf16 %v1162
    %v1186 = vunpack.c.l.bf16 %v1163
    %v1187 = vunpack.c.l.bf16 %v1164
    %v1188 = vunpack.c.l.bf16 %v1165
    %v1189 = vunpack.c.l.bf16 %v1166
    %v1190 = vunpack.c.l.bf16 %v1167
    %v1191 = vunpack.c.l.bf16 %v1168
    %v1192 = vunpack.c.l.bf16 %v1169
    %v1193 = vunpack.c.l.bf16 %v1170
    %v1194 = vunpack.c.l.bf16 %v1171
    %v1195 = vunpack.c.l.bf16 %v1172
    %v1196 = vunpack.c.l.bf16 %v1173
    %v1197 = vunpack.c.l.bf16 %v1174
    %v1198 = vunpack.c.l.bf16 %v1175
    %v1199 = vunpack.c.l.bf16 %v1176
    %v1200 = vunpack.c.l.bf16 %v1177
    %v1201 = vunpack.c.l.bf16 %v1178
    %v1202 = vunpack.c.l.bf16 %v1179
    %v1203 = vunpack.c.l.bf16 %v1180
    %vm1206 = vcmask 1043456
    %v1207 = vrot.slane %v1202, 4
    %v1208 = vrot.slane %v691, 4
    %v1209 = vsel %vm1206, %v1207, %v1208
    %v1210 = vrot.slane %v692, 4
    %v1211 = vsel %vm1206, %v1208, %v1210
    %v1212 = vrot.slane %v693, 4
    %v1213 = vsel %vm1206, %v1210, %v1212
    %v1214 = vrot.slane %v694, 4
    %v1215 = vsel %vm1206, %v1212, %v1214
    %v1216 = vrot.slane %v695, 4
    %v1217 = vsel %vm1206, %v1214, %v1216
    %v1218 = vrot.slane %v696, 4
    %v1219 = vsel %vm1206, %v1216, %v1218
    %v1220 = vrot.slane %v697, 4
    %v1221 = vsel %vm1206, %v1218, %v1220
    %v1222 = vrot.slane %v698, 4
    %v1223 = vsel %vm1206, %v1220, %v1222
    %v1224 = vrot.slane %v699, 4
    %v1225 = vsel %vm1206, %v1222, %v1224
    %v1226 = vrot.slane %v700, 4
    %v1227 = vsel %vm1206, %v1224, %v1226
    %v1228 = vrot.slane %v701, 4
    %v1229 = vsel %vm1206, %v1226, %v1228
    %v1230 = vrot.slane %v702, 4
    %v1231 = vsel %vm1206, %v1228, %v1230
    %v1232 = vrot.slane %v703, 4
    %v1233 = vsel %vm1206, %v1230, %v1232
    %v1234 = vrot.slane %v704, 4
    %v1235 = vsel %vm1206, %v1232, %v1234
    %v1236 = vrot.slane %v705, 4
    %v1237 = vsel %vm1206, %v1234, %v1236
    %v1238 = vrot.slane %v706, 4
    %v1239 = vsel %vm1206, %v1236, %v1238
    %v1240 = vrot.slane %v707, 4
    %v1241 = vsel %vm1206, %v1238, %v1240
    %v1242 = vrot.slane %v708, 4
    %v1243 = vsel %vm1206, %v1240, %v1242
    %v1244 = vrot.slane %v709, 4
    %v1245 = vsel %vm1206, %v1242, %v1244
    %v1246 = vrot.slane %v995, 4
    %v1247 = vsel %vm1206, %v1244, %v1246
    %v1248 = vrot.slane %v1203, 4
    %v1249 = vsel %vm1206, %v1246, %v1248
    %v1271 = vmax.f32 %v1181, %v1209
    %v1272 = vmax.f32 %v1182, %v1211
    %v1273 = vmax.f32 %v1183, %v1213
    %v1274 = vmax.f32 %v1184, %v1215
    %v1275 = vmax.f32 %v1185, %v1217
    %v1276 = vmax.f32 %v1186, %v1219
    %v1277 = vmax.f32 %v1187, %v1221
    %v1278 = vmax.f32 %v1188, %v1223
    %v1279 = vmax.f32 %v1189, %v1225
    %v1280 = vmax.f32 %v1190, %v1227
    %v1281 = vmax.f32 %v1191, %v1229
    %v1282 = vmax.f32 %v1192, %v1231
    %v1283 = vmax.f32 %v1193, %v1233
    %v1284 = vmax.f32 %v1194, %v1235
    %v1285 = vmax.f32 %v1195, %v1237
    %v1286 = vmax.f32 %v1196, %v1239
    %v1287 = vmax.f32 %v1197, %v1241
    %v1288 = vmax.f32 %v1198, %v1243
    %v1289 = vmax.f32 %v1199, %v1245
    %v1290 = vmax.f32 %v1200, %v1247
    %v1291 = vmax.f32 %v1201, %v1249
    %v1292 = vpack.c.bf16 %v1271, %v1271
    %v1293 = vpack.c.bf16 %v1272, %v1272
    %v1294 = vpack.c.bf16 %v1273, %v1273
    %v1295 = vpack.c.bf16 %v1274, %v1274
    %v1296 = vpack.c.bf16 %v1275, %v1275
    %v1297 = vpack.c.bf16 %v1276, %v1276
    %v1298 = vpack.c.bf16 %v1277, %v1277
    %v1299 = vpack.c.bf16 %v1278, %v1278
    %v1300 = vpack.c.bf16 %v1279, %v1279
    %v1301 = vpack.c.bf16 %v1280, %v1280
    %v1302 = vpack.c.bf16 %v1281, %v1281
    %v1303 = vpack.c.bf16 %v1282, %v1282
    %v1304 = vpack.c.bf16 %v1283, %v1283
    %v1305 = vpack.c.bf16 %v1284, %v1284
    %v1306 = vpack.c.bf16 %v1285, %v1285
    %v1307 = vpack.c.bf16 %v1286, %v1286
    %v1308 = vpack.c.bf16 %v1287, %v1287
    %v1309 = vpack.c.bf16 %v1288, %v1288
    %v1310 = vpack.c.bf16 %v1289, %v1289
    %v1311 = vpack.c.bf16 %v1290, %v1290
    %v1312 = vpack.c.bf16 %v1291, %v1291
    %v1313 = vld [vmem:[#allocation2 + $0x8] sm:$0xc]
    %v1314 = vld [vmem:[#allocation2 + $0x58] sm:$0xf]
    %v1315 = vld [vmem:[#allocation2 + $0x5c] sm:$0x3]
    %v1316 = vunpack.c.l.bf16 %v1292
    %v1317 = vunpack.c.l.bf16 %v1293
    %v1318 = vunpack.c.l.bf16 %v1294
    %v1319 = vunpack.c.l.bf16 %v1295
    %v1320 = vunpack.c.l.bf16 %v1296
    %v1321 = vunpack.c.l.bf16 %v1297
    %v1322 = vunpack.c.l.bf16 %v1298
    %v1323 = vunpack.c.l.bf16 %v1299
    %v1324 = vunpack.c.l.bf16 %v1300
    %v1325 = vunpack.c.l.bf16 %v1301
    %v1326 = vunpack.c.l.bf16 %v1302
    %v1327 = vunpack.c.l.bf16 %v1303
    %v1328 = vunpack.c.l.bf16 %v1304
    %v1329 = vunpack.c.l.bf16 %v1305
    %v1330 = vunpack.c.l.bf16 %v1306
    %v1331 = vunpack.c.l.bf16 %v1307
    %v1332 = vunpack.c.l.bf16 %v1308
    %v1333 = vunpack.c.l.bf16 %v1309
    %v1334 = vunpack.c.l.bf16 %v1310
    %v1335 = vunpack.c.l.bf16 %v1311
    %v1336 = vunpack.c.l.bf16 %v1312
    %v1337 = vunpack.c.l.bf16 %v1313
    %v1338 = vunpack.c.l.bf16 %v1314
    %v1339 = vunpack.c.l.bf16 %v1315
    %v1343 = vrot.slane %v1337, 4
    %v1344 = vsel %vm1206, %v1343, %v1210
    %v1345 = vrot.slane %v1338, 4
    %v1346 = vsel %vm1206, %v1246, %v1345
    %v1347 = vrot.slane %v1339, 4
    %v1348 = vsel %vm1206, %v1345, %v1347
    %v1352 = vmax.f32 %v1316, %v1344
    %v1353 = vmax.f32 %v1317, %v1213
    %v1354 = vmax.f32 %v1318, %v1215
    %v1355 = vmax.f32 %v1319, %v1217
    %v1356 = vmax.f32 %v1320, %v1219
    %v1357 = vmax.f32 %v1321, %v1221
    %v1358 = vmax.f32 %v1322, %v1223
    %v1359 = vmax.f32 %v1323, %v1225
    %v1360 = vmax.f32 %v1324, %v1227
    %v1361 = vmax.f32 %v1325, %v1229
    %v1362 = vmax.f32 %v1326, %v1231
    %v1363 = vmax.f32 %v1327, %v1233
    %v1364 = vmax.f32 %v1328, %v1235
    %v1365 = vmax.f32 %v1329, %v1237
    %v1366 = vmax.f32 %v1330, %v1239
    %v1367 = vmax.f32 %v1331, %v1241
    %v1368 = vmax.f32 %v1332, %v1243
    %v1369 = vmax.f32 %v1333, %v1245
    %v1370 = vmax.f32 %v1334, %v1247
    %v1371 = vmax.f32 %v1335, %v1346
    %v1372 = vmax.f32 %v1336, %v1348
    %v1373 = vpack.c.bf16 %v1352, %v1352
    %v1374 = vpack.c.bf16 %v1353, %v1353
    %v1375 = vpack.c.bf16 %v1354, %v1354
    %v1376 = vpack.c.bf16 %v1355, %v1355
    %v1377 = vpack.c.bf16 %v1356, %v1356
    %v1378 = vpack.c.bf16 %v1357, %v1357
    %v1379 = vpack.c.bf16 %v1358, %v1358
    %v1380 = vpack.c.bf16 %v1359, %v1359
    %v1381 = vpack.c.bf16 %v1360, %v1360
    %v1382 = vpack.c.bf16 %v1361, %v1361
    %v1383 = vpack.c.bf16 %v1362, %v1362
    %v1384 = vpack.c.bf16 %v1363, %v1363
    %v1385 = vpack.c.bf16 %v1364, %v1364
    %v1386 = vpack.c.bf16 %v1365, %v1365
    %v1387 = vpack.c.bf16 %v1366, %v1366
    %v1388 = vpack.c.bf16 %v1367, %v1367
    %v1389 = vpack.c.bf16 %v1368, %v1368
    %v1390 = vpack.c.bf16 %v1369, %v1369
    %v1391 = vpack.c.bf16 %v1370, %v1370
    %v1392 = vpack.c.bf16 %v1371, %v1371
    %v1393 = vpack.c.bf16 %v1372, %v1372
    %v1394 = vunpack.c.l.bf16 %v1373
    %v1395 = vunpack.c.l.bf16 %v1374
    %v1396 = vunpack.c.l.bf16 %v1375
    %v1397 = vunpack.c.l.bf16 %v1376
    %v1398 = vunpack.c.l.bf16 %v1377
    %v1399 = vunpack.c.l.bf16 %v1378
    %v1400 = vunpack.c.l.bf16 %v1379
    %v1401 = vunpack.c.l.bf16 %v1380
    %v1402 = vunpack.c.l.bf16 %v1381
    %v1403 = vunpack.c.l.bf16 %v1382
    %v1404 = vunpack.c.l.bf16 %v1383
    %v1405 = vunpack.c.l.bf16 %v1384
    %v1406 = vunpack.c.l.bf16 %v1385
    %v1407 = vunpack.c.l.bf16 %v1386
    %v1408 = vunpack.c.l.bf16 %v1387
    %v1409 = vunpack.c.l.bf16 %v1388
    %v1410 = vunpack.c.l.bf16 %v1389
    %v1411 = vunpack.c.l.bf16 %v1390
    %v1412 = vunpack.c.l.bf16 %v1391
    %v1413 = vunpack.c.l.bf16 %v1392
    %v1414 = vunpack.c.l.bf16 %v1393
    %vm1415 = vcmask 1042432
    %v1416 = vrot.slane %v1337, 5
    %v1417 = vrot.slane %v692, 5
    %v1418 = vsel %vm1415, %v1416, %v1417
    %v1419 = vrot.slane %v693, 5
    %v1420 = vsel %vm1415, %v1417, %v1419
    %v1421 = vrot.slane %v694, 5
    %v1422 = vsel %vm1415, %v1419, %v1421
    %v1423 = vrot.slane %v695, 5
    %v1424 = vsel %vm1415, %v1421, %v1423
    %v1425 = vrot.slane %v696, 5
    %v1426 = vsel %vm1415, %v1423, %v1425
    %v1427 = vrot.slane %v697, 5
    %v1428 = vsel %vm1415, %v1425, %v1427
    %v1429 = vrot.slane %v698, 5
    %v1430 = vsel %vm1415, %v1427, %v1429
    %v1431 = vrot.slane %v699, 5
    %v1432 = vsel %vm1415, %v1429, %v1431
    %v1433 = vrot.slane %v700, 5
    %v1434 = vsel %vm1415, %v1431, %v1433
    %v1435 = vrot.slane %v701, 5
    %v1436 = vsel %vm1415, %v1433, %v1435
    %v1437 = vrot.slane %v702, 5
    %v1438 = vsel %vm1415, %v1435, %v1437
    %v1439 = vrot.slane %v703, 5
    %v1440 = vsel %vm1415, %v1437, %v1439
    %v1441 = vrot.slane %v704, 5
    %v1442 = vsel %vm1415, %v1439, %v1441
    %v1443 = vrot.slane %v705, 5
    %v1444 = vsel %vm1415, %v1441, %v1443
    %v1445 = vrot.slane %v706, 5
    %v1446 = vsel %vm1415, %v1443, %v1445
    %v1447 = vrot.slane %v707, 5
    %v1448 = vsel %vm1415, %v1445, %v1447
    %v1449 = vrot.slane %v708, 5
    %v1450 = vsel %vm1415, %v1447, %v1449
    %v1451 = vrot.slane %v709, 5
    %v1452 = vsel %vm1415, %v1449, %v1451
    %v1453 = vrot.slane %v995, 5
    %v1454 = vsel %vm1415, %v1451, %v1453
    %v1455 = vrot.slane %v1338, 5
    %v1456 = vsel %vm1415, %v1453, %v1455
    %v1457 = vrot.slane %v1339, 5
    %v1458 = vsel %vm1415, %v1455, %v1457
    %v1480 = vmax.f32 %v1394, %v1418
    %v1481 = vmax.f32 %v1395, %v1420
    %v1482 = vmax.f32 %v1396, %v1422
    %v1483 = vmax.f32 %v1397, %v1424
    %v1484 = vmax.f32 %v1398, %v1426
    %v1485 = vmax.f32 %v1399, %v1428
    %v1486 = vmax.f32 %v1400, %v1430
    %v1487 = vmax.f32 %v1401, %v1432
    %v1488 = vmax.f32 %v1402, %v1434
    %v1489 = vmax.f32 %v1403, %v1436
    %v1490 = vmax.f32 %v1404, %v1438
    %v1491 = vmax.f32 %v1405, %v1440
    %v1492 = vmax.f32 %v1406, %v1442
    %v1493 = vmax.f32 %v1407, %v1444
    %v1494 = vmax.f32 %v1408, %v1446
    %v1495 = vmax.f32 %v1409, %v1448
    %v1496 = vmax.f32 %v1410, %v1450
    %v1497 = vmax.f32 %v1411, %v1452
    %v1498 = vmax.f32 %v1412, %v1454
    %v1499 = vmax.f32 %v1413, %v1456
    %v1500 = vmax.f32 %v1414, %v1458
    %v1501 = vpack.c.bf16 %v1480, %v1480
    %v1502 = vpack.c.bf16 %v1481, %v1481
    %v1503 = vpack.c.bf16 %v1482, %v1482
    %v1504 = vpack.c.bf16 %v1483, %v1483
    %v1505 = vpack.c.bf16 %v1484, %v1484
    %v1506 = vpack.c.bf16 %v1485, %v1485
    %v1507 = vpack.c.bf16 %v1486, %v1486
    %v1508 = vpack.c.bf16 %v1487, %v1487
    %v1509 = vpack.c.bf16 %v1488, %v1488
    %v1510 = vpack.c.bf16 %v1489, %v1489
    %v1511 = vpack.c.bf16 %v1490, %v1490
    %v1512 = vpack.c.bf16 %v1491, %v1491
    %v1513 = vpack.c.bf16 %v1492, %v1492
    %v1514 = vpack.c.bf16 %v1493, %v1493
    %v1515 = vpack.c.bf16 %v1494, %v1494
    %v1516 = vpack.c.bf16 %v1495, %v1495
    %v1517 = vpack.c.bf16 %v1496, %v1496
    %v1518 = vpack.c.bf16 %v1497, %v1497
    %v1519 = vpack.c.bf16 %v1498, %v1498
    %v1520 = vpack.c.bf16 %v1499, %v1499
    %v1521 = vpack.c.bf16 %v1500, %v1500
    %v1522 = vld [vmem:[#allocation2 + $0x8] sm:$0x8]
    %v1523 = vld [vmem:[#allocation2 + $0x5c] sm:$0x7]
    %v1524 = vunpack.c.l.bf16 %v1501
    %v1525 = vunpack.c.l.bf16 %v1502
    %v1526 = vunpack.c.l.bf16 %v1503
    %v1527 = vunpack.c.l.bf16 %v1504
    %v1528 = vunpack.c.l.bf16 %v1505
    %v1529 = vunpack.c.l.bf16 %v1506
    %v1530 = vunpack.c.l.bf16 %v1507
    %v1531 = vunpack.c.l.bf16 %v1508
    %v1532 = vunpack.c.l.bf16 %v1509
    %v1533 = vunpack.c.l.bf16 %v1510
    %v1534 = vunpack.c.l.bf16 %v1511
    %v1535 = vunpack.c.l.bf16 %v1512
    %v1536 = vunpack.c.l.bf16 %v1513
    %v1537 = vunpack.c.l.bf16 %v1514
    %v1538 = vunpack.c.l.bf16 %v1515
    %v1539 = vunpack.c.l.bf16 %v1516
    %v1540 = vunpack.c.l.bf16 %v1517
    %v1541 = vunpack.c.l.bf16 %v1518
    %v1542 = vunpack.c.l.bf16 %v1519
    %v1543 = vunpack.c.l.bf16 %v1520
    %v1544 = vunpack.c.l.bf16 %v1521
    %v1545 = vunpack.c.l.bf16 %v1522
    %v1546 = vunpack.c.l.bf16 %v1523
    %vm1549 = vcmask 1041408
    %v1550 = vrot.slane %v1545, 6
    %v1551 = vrot.slane %v692, 6
    %v1552 = vsel %vm1549, %v1550, %v1551
    %v1553 = vrot.slane %v693, 6
    %v1554 = vsel %vm1549, %v1551, %v1553
    %v1555 = vrot.slane %v694, 6
    %v1556 = vsel %vm1549, %v1553, %v1555
    %v1557 = vrot.slane %v695, 6
    %v1558 = vsel %vm1549, %v1555, %v1557
    %v1559 = vrot.slane %v696, 6
    %v1560 = vsel %vm1549, %v1557, %v1559
    %v1561 = vrot.slane %v697, 6
    %v1562 = vsel %vm1549, %v1559, %v1561
    %v1563 = vrot.slane %v698, 6
    %v1564 = vsel %vm1549, %v1561, %v1563
    %v1565 = vrot.slane %v699, 6
    %v1566 = vsel %vm1549, %v1563, %v1565
    %v1567 = vrot.slane %v700, 6
    %v1568 = vsel %vm1549, %v1565, %v1567
    %v1569 = vrot.slane %v701, 6
    %v1570 = vsel %vm1549, %v1567, %v1569
    %v1571 = vrot.slane %v702, 6
    %v1572 = vsel %vm1549, %v1569, %v1571
    %v1573 = vrot.slane %v703, 6
    %v1574 = vsel %vm1549, %v1571, %v1573
    %v1575 = vrot.slane %v704, 6
    %v1576 = vsel %vm1549, %v1573, %v1575
    %v1577 = vrot.slane %v705, 6
    %v1578 = vsel %vm1549, %v1575, %v1577
    %v1579 = vrot.slane %v706, 6
    %v1580 = vsel %vm1549, %v1577, %v1579
    %v1581 = vrot.slane %v707, 6
    %v1582 = vsel %vm1549, %v1579, %v1581
    %v1583 = vrot.slane %v708, 6
    %v1584 = vsel %vm1549, %v1581, %v1583
    %v1585 = vrot.slane %v709, 6
    %v1586 = vsel %vm1549, %v1583, %v1585
    %v1587 = vrot.slane %v995, 6
    %v1588 = vsel %vm1549, %v1585, %v1587
    %v1589 = vrot.slane %v1338, 6
    %v1590 = vsel %vm1549, %v1587, %v1589
    %v1591 = vrot.slane %v1546, 6
    %v1592 = vsel %vm1549, %v1589, %v1591
    %v1614 = vmax.f32 %v1524, %v1552
    %v1615 = vmax.f32 %v1525, %v1554
    %v1616 = vmax.f32 %v1526, %v1556
    %v1617 = vmax.f32 %v1527, %v1558
    %v1618 = vmax.f32 %v1528, %v1560
    %v1619 = vmax.f32 %v1529, %v1562
    %v1620 = vmax.f32 %v1530, %v1564
    %v1621 = vmax.f32 %v1531, %v1566
    %v1622 = vmax.f32 %v1532, %v1568
    %v1623 = vmax.f32 %v1533, %v1570
    %v1624 = vmax.f32 %v1534, %v1572
    %v1625 = vmax.f32 %v1535, %v1574
    %v1626 = vmax.f32 %v1536, %v1576
    %v1627 = vmax.f32 %v1537, %v1578
    %v1628 = vmax.f32 %v1538, %v1580
    %v1629 = vmax.f32 %v1539, %v1582
    %v1630 = vmax.f32 %v1540, %v1584
    %v1631 = vmax.f32 %v1541, %v1586
    %v1632 = vmax.f32 %v1542, %v1588
    %v1633 = vmax.f32 %v1543, %v1590
    %v1634 = vmax.f32 %v1544, %v1592
    %v1635 = vpack.c.bf16 %v1615, %v1614
    %v1636 = vpack.c.bf16 %v1617, %v1616
    %v1637 = vpack.c.bf16 %v1619, %v1618
    %v1638 = vpack.c.bf16 %v1621, %v1620
    %v1639 = vpack.c.bf16 %v1623, %v1622
    %v1640 = vpack.c.bf16 %v1625, %v1624
    %v1641 = vpack.c.bf16 %v1627, %v1626
    %v1642 = vpack.c.bf16 %v1629, %v1628
    %v1643 = vpack.c.bf16 %v1631, %v1630
    %v1644 = vpack.c.bf16 %v1633, %v1632
    %v1645 = vpack.c.bf16 %v1634, %v1634
    %v1646 = vld [vmem:[%s3] sm:$0xff]
    %v1647 = vld [vmem:[%s3 + $0x8] sm:$0xff]
    %v1648 = vld [vmem:[%s3 + $0x10] sm:$0xff]
    %v1649 = vld [vmem:[%s3 + $0x18] sm:$0xff]
    %v1650 = vld [vmem:[%s3 + $0x20] sm:$0xff]
    %v1651 = vld [vmem:[%s3 + $0x28] sm:$0xff]
    %v1652 = vld [vmem:[%s3 + $0x30] sm:$0xff]
    %v1653 = vld [vmem:[%s3 + $0x38] sm:$0xff]
    %v1654 = vld [vmem:[%s3 + $0x40] sm:$0xff]
    %v1664 = vunpack.c.l.b16 %v1646
    %v1665 = vunpack.c.h.b16 %v1646
    %v1666 = vunpack.c.l.b16 %v1647
    %v1667 = vunpack.c.h.b16 %v1647
    %v1668 = vunpack.c.l.b16 %v1648
    %v1669 = vunpack.c.h.b16 %v1648
    %v1670 = vunpack.c.l.b16 %v1649
    %v1671 = vunpack.c.h.b16 %v1649
    %v1672 = vunpack.c.l.b16 %v1650
    %v1673 = vunpack.c.h.b16 %v1650
    %v1674 = vunpack.c.l.b16 %v1651
    %v1675 = vunpack.c.h.b16 %v1651
    %v1676 = vunpack.c.l.b16 %v1652
    %v1677 = vunpack.c.h.b16 %v1652
    %v1678 = vunpack.c.l.b16 %v1653
    %v1679 = vunpack.c.h.b16 %v1653
    %v1680 = vunpack.c.l.b16 %v1654
    %v1681 = vunpack.c.h.b16 %v1654
    %v1682 = vpack.c.b16 %v1666, %v1664
    %v1683 = vpack.c.b16 %v1667, %v1665
    %v1684 = vpack.c.b16 %v1670, %v1668
    %v1685 = vpack.c.b16 %v1671, %v1669
    %v1686 = vpack.c.b16 %v1674, %v1672
    %v1687 = vpack.c.b16 %v1675, %v1673
    %v1688 = vpack.c.b16 %v1678, %v1676
    %v1689 = vpack.c.b16 %v1679, %v1677
    %v1690 = vpack.c.b16 %v1680, %v1680
    %v1691 = vpack.c.b16 %v1681, %v1681
    %vm1697 = vcmask 318464
    %v1699 = vsel %vm1697, %v1683, 0
    %v1702 = vsel %vm1697, %v1685, 0
    %v1705 = vsel %vm1697, %v1687, 0
    %v1708 = vsel %vm1697, %v1689, 0
    %v1711 = vsel %vm1697, %v1691, 0
    %v1713 = vsel %vm1415, 4294967295, 65535
    %v1714 = vsel %vm1206, %v1713, 0
    %v1716 = vand.u32 %v1645, %v1714
    %1718 = vmatpush.bf16.msra.mxu0 %v1642
    %1719 = vmatpush.bf16.msra.mxu0 %v1641
    %1720 = vmatpush.bf16.msra.mxu0 %v1640
    %1721 = vmatpush.bf16.msra.mxu0 %v1639
    %1722 = vmatpush.bf16.msra.mxu0 %v1638
    %1723 = vmatpush.bf16.msra.mxu0 %v1637
    %1724 = vmatpush.bf16.msra.mxu0 %v1636
    %1725 = vmatpush.bf16.msra.mxu0 %v1635
    %1726 = vmatmul.bf16.gmra.mxu0 %v1682
    %v1727 = vpop.f32.mrf.mxu0
    %v1728 = vadd.f32 0.0, %v1727
    %v1729 = vpop.f32.mrf.mxu0
    %v1730 = vadd.f32 0.0, %v1729
    %1731 = vmatmul.bf16.gmra.mxu0 %v1684
    %v1732 = vpop.f32.mrf.mxu0
    %v1733 = vadd.f32 0.0, %v1732
    %v1734 = vpop.f32.mrf.mxu0
    %v1735 = vadd.f32 0.0, %v1734
    %1736 = vmatmul.bf16.gmra.mxu0 %v1686
    %v1737 = vpop.f32.mrf.mxu0
    %v1738 = vadd.f32 0.0, %v1737
    %v1739 = vpop.f32.mrf.mxu0
    %v1740 = vadd.f32 0.0, %v1739
    %1741 = vmatmul.bf16.gmra.mxu0 %v1688
    %v1742 = vpop.f32.mrf.mxu0
    %v1743 = vadd.f32 0.0, %v1742
    %v1744 = vpop.f32.mrf.mxu0
    %v1745 = vadd.f32 0.0, %v1744
    %1746 = vmatmul.bf16.gmra.mxu0 %v1690
    %v1747 = vpop.f32.mrf.mxu0
    %v1748 = vadd.f32 0.0, %v1747
    %v1749 = vpop.f32.mrf.mxu0
    %1750 = vdwg.mxu0
    %1751 = vmatpush.bf16.msra.mxu0 0
    %1752 = vmatpush.bf16.msra.mxu0 0
    %1753 = vmatpush.bf16.msra.mxu0 0
    %1754 = vmatpush.bf16.msra.mxu0 0
    %1755 = vmatpush.bf16.msra.mxu0 0
    %1756 = vmatpush.bf16.msra.mxu0 %v1716
    %1757 = vmatpush.bf16.msra.mxu0 %v1644
    %1758 = vmatpush.bf16.msra.mxu0 %v1643
    %1759 = vmatmul.bf16.gmra.mxu0 %v1699
    %v1760 = vpop.f32.mrf.mxu0
    %v1761 = vadd.f32 %v1728, %v1760
    %v1762 = vpop.f32.mrf.mxu0
    %v1763 = vadd.f32 %v1730, %v1762
    %1764 = vmatmul.bf16.gmra.mxu0 %v1702
    %v1765 = vpop.f32.mrf.mxu0
    %v1766 = vadd.f32 %v1733, %v1765
    %v1767 = vpop.f32.mrf.mxu0
    %v1768 = vadd.f32 %v1735, %v1767
    %1769 = vmatmul.bf16.gmra.mxu0 %v1705
    %v1770 = vpop.f32.mrf.mxu0
    %v1771 = vadd.f32 %v1738, %v1770
    %v1772 = vpop.f32.mrf.mxu0
    %v1773 = vadd.f32 %v1740, %v1772
    %1774 = vmatmul.bf16.gmra.mxu0 %v1708
    %v1775 = vpop.f32.mrf.mxu0
    %v1776 = vadd.f32 %v1743, %v1775
    %v1777 = vpop.f32.mrf.mxu0
    %v1778 = vadd.f32 %v1745, %v1777
    %1779 = vmatmul.bf16.gmra.mxu0 %v1711
    %v1780 = vpop.f32.mrf.mxu0
    %v1781 = vadd.f32 %v1748, %v1780
    %v1782 = vpop.f32.mrf.mxu0
    %1783 = vdwg.mxu0
    %v1784 = vpack.c.bf16 %v1761, %v1761
    %v1785 = vpack.c.bf16 %v1763, %v1763
    %v1786 = vpack.c.bf16 %v1766, %v1766
    %v1787 = vpack.c.bf16 %v1768, %v1768
    %v1788 = vpack.c.bf16 %v1771, %v1771
    %v1789 = vpack.c.bf16 %v1773, %v1773
    %v1790 = vpack.c.bf16 %v1776, %v1776
    %v1791 = vpack.c.bf16 %v1778, %v1778
    %v1792 = vpack.c.bf16 %v1781, %v1781
    %1793 = vst.msk [vmem:[#allocation3] sm:$0xf] %vm642, %v1784
    %1794 = vst.msk [vmem:[#allocation3 + $0x4] sm:$0xf] %vm642, %v1785
    %1795 = vst.msk [vmem:[#allocation3 + $0x8] sm:$0xf] %vm642, %v1786
    %1796 = vst.msk [vmem:[#allocation3 + $0xc] sm:$0xf] %vm642, %v1787
    %1797 = vst.msk [vmem:[#allocation3 + $0x10] sm:$0xf] %vm642, %v1788
    %1798 = vst.msk [vmem:[#allocation3 + $0x14] sm:$0xf] %vm642, %v1789
    %1799 = vst.msk [vmem:[#allocation3 + $0x18] sm:$0xf] %vm642, %v1790
    %1800 = vst.msk [vmem:[#allocation3 + $0x1c] sm:$0xf] %vm642, %v1791
    %1801 = vst.msk [vmem:[#allocation3 + $0x20] sm:$0xf] %vm642, %v1792
    %v1802 = vld [vmem:[#allocation3] sm:$0xf]
    %v1803 = vld [vmem:[#allocation3 + $0x4] sm:$0xf]
    %v1804 = vld [vmem:[#allocation3 + $0x8] sm:$0xf]
    %v1805 = vld [vmem:[#allocation3 + $0xc] sm:$0xf]
    %v1806 = vld [vmem:[#allocation3 + $0x10] sm:$0xf]
    %v1807 = vld [vmem:[#allocation3 + $0x14] sm:$0xf]
    %v1808 = vld [vmem:[#allocation3 + $0x18] sm:$0xf]
    %v1809 = vld [vmem:[#allocation3 + $0x1c] sm:$0x1]
    %v1810 = vld [vmem:[%s19] sm:$0xf]
    %v1811 = vld [vmem:[%s19 + $0x4] sm:$0xf]
    %v1812 = vld [vmem:[%s19 + $0x8] sm:$0xf]
    %v1813 = vld [vmem:[%s19 + $0xc] sm:$0xf]
    %v1814 = vld [vmem:[%s19 + $0x10] sm:$0xf]
    %v1815 = vld [vmem:[%s19 + $0x14] sm:$0xf]
    %v1816 = vld [vmem:[%s19 + $0x18] sm:$0xf]
    %v1817 = vld [vmem:[%s19 + $0x1c] sm:$0xf]
    %v1818 = vld [vmem:[#allocation3 + $0x1c] sm:$0x3]
    %s1819 = scalar_lea.vmem %s19, 32
    %v1820 = vld [vmem:[%s1819] sm:$0xf]
    %v1821 = vld [vmem:[%s1819 + $0x4] sm:$0xf]
    %v1822 = vld [vmem:[%s1819 + $0x8] sm:$0xf]
    %v1823 = vld [vmem:[%s1819 + $0xc] sm:$0xf]
    %v1824 = vld [vmem:[%s1819 + $0x10] sm:$0xf]
    %v1825 = vld [vmem:[%s1819 + $0x14] sm:$0xf]
    %v1826 = vld [vmem:[%s1819 + $0x18] sm:$0xf]
    %v1827 = vld [vmem:[%s1819 + $0x1c] sm:$0xf]
    %v1836 = vunpack.c.l.b16 %v1802
    %v1837 = vunpack.c.l.b16 %v1803
    %v1838 = vunpack.c.l.b16 %v1804
    %v1839 = vunpack.c.l.b16 %v1805
    %v1840 = vunpack.c.l.b16 %v1806
    %v1841 = vunpack.c.l.b16 %v1807
    %v1842 = vunpack.c.l.b16 %v1808
    %v1843 = vunpack.c.l.b16 %v1818
    %v1844 = vpack.c.b16 %v1837, %v1836
    %v1845 = vpack.c.b16 %v1839, %v1838
    %v1846 = vpack.c.b16 %v1841, %v1840
    %v1847 = vpack.c.b16 %v1843, %v1842
    %vm1848 = vsmask.f32 7424
    %v1850 = vshrl.u32 %v1844, 16
    %v1852 = vshll.u32 %v1844, 16
    %v1854 = vrot.slane %v1852, 1
    %v1855 = vor.u32 %v1850, %v1854
    %v1857 = vshll.u32 %v1845, 16
    %v1859 = vrot.slane %v1857, 1
    %v1860 = vsel %vm1848, %v1855, %v1859
    %v1861 = vshrl.u32 %v1845, 16
    %v1863 = vor.u32 %v1861, %v1859
    %v1865 = vshll.u32 %v1846, 16
    %v1867 = vrot.slane %v1865, 1
    %v1868 = vsel %vm1848, %v1863, %v1867
    %v1869 = vshrl.u32 %v1846, 16
    %v1871 = vor.u32 %v1869, %v1867
    %v1873 = vshll.u32 %v1847, 16
    %v1875 = vrot.slane %v1873, 1
    %v1876 = vsel %vm1848, %v1871, %v1875
    %v1877 = vshrl.u32 %v1847, 16
    %v1879 = vor.u32 %v1877, %v1875
    %v1888 = vunpack.c.l.b16 %v1820
    %v1889 = vunpack.c.l.b16 %v1821
    %v1890 = vunpack.c.l.b16 %v1822
    %v1891 = vunpack.c.l.b16 %v1823
    %v1892 = vunpack.c.l.b16 %v1824
    %v1893 = vunpack.c.l.b16 %v1825
    %v1894 = vunpack.c.l.b16 %v1826
    %v1895 = vunpack.c.l.b16 %v1827
    %v1896 = vpack.c.b16 %v1889, %v1888
    %v1897 = vpack.c.b16 %v1891, %v1890
    %v1898 = vpack.c.b16 %v1893, %v1892
    %v1899 = vpack.c.b16 %v1895, %v1894
    %vm1904 = vcmask 523264
    %v1906 = vsel %vm1904, %v1860, 0
    %v1909 = vsel %vm1904, %v1868, 0
    %v1912 = vsel %vm1904, %v1876, 0
    %v1915 = vsel %vm1904, %v1879, 0
    %1917 = vmatpush.bf16.msra.mxu0 0
    %1918 = vmatpush.bf16.msra.mxu0 0
    %1919 = vmatpush.bf16.msra.mxu0 0
    %1920 = vmatpush.bf16.msra.mxu0 0
    %1921 = vmatpush.bf16.msra.mxu0 %v1899
    %1922 = vmatpush.bf16.msra.mxu0 %v1898
    %1923 = vmatpush.bf16.msra.mxu0 %v1897
    %1924 = vmatpush.bf16.msra.mxu0 %v1896
    %1925 = vmatmul.bf16.gmra.mxu0 %v1906
    %v1926 = vpop.f32.mrf.mxu0
    %v1927 = vadd.f32 0.0, %v1926
    %v1928 = vpop.f32.mrf.mxu0
    %v1929 = vadd.f32 0.0, %v1928
    %1930 = vmatmul.bf16.gmra.mxu0 %v1909
    %v1931 = vpop.f32.mrf.mxu0
    %v1932 = vadd.f32 0.0, %v1931
    %v1933 = vpop.f32.mrf.mxu0
    %v1934 = vadd.f32 0.0, %v1933
    %1935 = vmatmul.bf16.gmra.mxu0 %v1912
    %v1936 = vpop.f32.mrf.mxu0
    %v1937 = vadd.f32 0.0, %v1936
    %v1938 = vpop.f32.mrf.mxu0
    %v1939 = vadd.f32 0.0, %v1938
    %1940 = vmatmul.bf16.gmra.mxu0 %v1915
    %v1941 = vpop.f32.mrf.mxu0
    %v1942 = vadd.f32 0.0, %v1941
    %v1943 = vpop.f32.mrf.mxu0
    %v1944 = vadd.f32 0.0, %v1943
    %1945 = vdwg.mxu0
    %v1947 = vunpack.c.l.b16 %v1809
    %v1948 = vpack.c.b16 %v1947, %v1842
    %v1957 = vunpack.c.l.b16 %v1810
    %v1958 = vunpack.c.l.b16 %v1811
    %v1959 = vunpack.c.l.b16 %v1812
    %v1960 = vunpack.c.l.b16 %v1813
    %v1961 = vunpack.c.l.b16 %v1814
    %v1962 = vunpack.c.l.b16 %v1815
    %v1963 = vunpack.c.l.b16 %v1816
    %v1964 = vunpack.c.l.b16 %v1817
    %v1965 = vpack.c.b16 %v1958, %v1957
    %v1966 = vpack.c.b16 %v1960, %v1959
    %v1967 = vpack.c.b16 %v1962, %v1961
    %v1968 = vpack.c.b16 %v1964, %v1963
    %v1973 = vsel %vm1904, %v1844, 0
    %v1975 = vsel %vm1904, %v1845, 0
    %v1977 = vsel %vm1904, %v1846, 0
    %v1980 = vsel %vm1904, %v1948, 0
    %1982 = vmatpush.bf16.msra.mxu0 0
    %1983 = vmatpush.bf16.msra.mxu0 0
    %1984 = vmatpush.bf16.msra.mxu0 0
    %1985 = vmatpush.bf16.msra.mxu0 0
    %1986 = vmatpush.bf16.msra.mxu0 %v1968
    %1987 = vmatpush.bf16.msra.mxu0 %v1967
    %1988 = vmatpush.bf16.msra.mxu0 %v1966
    %1989 = vmatpush.bf16.msra.mxu0 %v1965
    %1990 = vmatmul.bf16.gmra.mxu0 %v1973
    %v1991 = vpop.f32.mrf.mxu0
    %v1992 = vadd.f32 %v1927, %v1991
    %v1993 = vpop.f32.mrf.mxu0
    %v1994 = vadd.f32 %v1929, %v1993
    %1995 = vmatmul.bf16.gmra.mxu0 %v1975
    %v1996 = vpop.f32.mrf.mxu0
    %v1997 = vadd.f32 %v1932, %v1996
    %v1998 = vpop.f32.mrf.mxu0
    %v1999 = vadd.f32 %v1934, %v1998
    %2000 = vmatmul.bf16.gmra.mxu0 %v1977
    %v2001 = vpop.f32.mrf.mxu0
    %v2002 = vadd.f32 %v1937, %v2001
    %v2003 = vpop.f32.mrf.mxu0
    %v2004 = vadd.f32 %v1939, %v2003
    %2005 = vmatmul.bf16.gmra.mxu0 %v1980
    %v2006 = vpop.f32.mrf.mxu0
    %v2007 = vadd.f32 %v1942, %v2006
    %v2008 = vpop.f32.mrf.mxu0
    %v2009 = vadd.f32 %v1944, %v2008
    %2010 = vdwg.mxu0
    %v2011 = vld [vmem:[#allocation3] sm:$0xe]
    %s2012 = scalar_lea.vmem %s19, 64
    %v2013 = vld [vmem:[%s2012] sm:$0xf]
    %v2014 = vld [vmem:[%s2012 + $0x4] sm:$0xf]
    %v2015 = vld [vmem:[%s2012 + $0x8] sm:$0xf]
    %v2016 = vld [vmem:[%s2012 + $0xc] sm:$0xf]
    %v2017 = vld [vmem:[%s2012 + $0x10] sm:$0xf]
    %v2018 = vld [vmem:[%s2012 + $0x14] sm:$0xf]
    %v2019 = vld [vmem:[%s2012 + $0x18] sm:$0xf]
    %v2020 = vld [vmem:[%s2012 + $0x1c] sm:$0xf]
    %v2022 = vunpack.c.l.b16 %v2011
    %v2023 = vpack.c.b16 %v1837, %v2022
    %vm2024 = vcmask 1046528
    %v2025 = vrot.slane %v2023, 1
    %v2026 = vrot.slane %v1845, 1
    %v2027 = vsel %vm2024, %v2025, %v2026
    %v2028 = vrot.slane %v1846, 1
    %v2029 = vsel %vm2024, %v2026, %v2028
    %v2030 = vrot.slane %v1847, 1
    %v2031 = vsel %vm2024, %v2028, %v2030
    %v2040 = vunpack.c.l.b16 %v2013
    %v2041 = vunpack.c.l.b16 %v2014
    %v2042 = vunpack.c.l.b16 %v2015
    %v2043 = vunpack.c.l.b16 %v2016
    %v2044 = vunpack.c.l.b16 %v2017
    %v2045 = vunpack.c.l.b16 %v2018
    %v2046 = vunpack.c.l.b16 %v2019
    %v2047 = vunpack.c.l.b16 %v2020
    %v2048 = vpack.c.b16 %v2041, %v2040
    %v2049 = vpack.c.b16 %v2043, %v2042
    %v2050 = vpack.c.b16 %v2045, %v2044
    %v2051 = vpack.c.b16 %v2047, %v2046
    %v2057 = vsel %vm1904, %v2027, 0
    %v2060 = vsel %vm1904, %v2029, 0
    %v2063 = vsel %vm1904, %v2031, 0
    %v2066 = vsel %vm1904, %v2030, 0
    %2068 = vmatpush.bf16.msra.mxu0 0
    %2069 = vmatpush.bf16.msra.mxu0 0
    %2070 = vmatpush.bf16.msra.mxu0 0
    %2071 = vmatpush.bf16.msra.mxu0 0
    %2072 = vmatpush.bf16.msra.mxu0 %v2051
    %2073 = vmatpush.bf16.msra.mxu0 %v2050
    %2074 = vmatpush.bf16.msra.mxu0 %v2049
    %2075 = vmatpush.bf16.msra.mxu0 %v2048
    %2076 = vmatmul.bf16.gmra.mxu0 %v2057
    %v2077 = vpop.f32.mrf.mxu0
    %v2078 = vadd.f32 0.0, %v2077
    %v2079 = vpop.f32.mrf.mxu0
    %v2080 = vadd.f32 0.0, %v2079
    %2081 = vmatmul.bf16.gmra.mxu0 %v2060
    %v2082 = vpop.f32.mrf.mxu0
    %v2083 = vadd.f32 0.0, %v2082
    %v2084 = vpop.f32.mrf.mxu0
    %v2085 = vadd.f32 0.0, %v2084
    %2086 = vmatmul.bf16.gmra.mxu0 %v2063
    %v2087 = vpop.f32.mrf.mxu0
    %v2088 = vadd.f32 0.0, %v2087
    %v2089 = vpop.f32.mrf.mxu0
    %v2090 = vadd.f32 0.0, %v2089
    %2091 = vmatmul.bf16.gmra.mxu0 %v2066
    %v2092 = vpop.f32.mrf.mxu0
    %v2093 = vadd.f32 0.0, %v2092
    %v2094 = vpop.f32.mrf.mxu0
    %v2095 = vadd.f32 0.0, %v2094
    %2096 = vdwg.mxu0
    %v2097 = vadd.f32 %v1992, %v2078
    %v2098 = vadd.f32 %v1994, %v2080
    %v2099 = vadd.f32 %v1997, %v2083
    %v2100 = vadd.f32 %v1999, %v2085
    %v2101 = vadd.f32 %v2002, %v2088
    %v2102 = vadd.f32 %v2004, %v2090
    %v2103 = vadd.f32 %v2007, %v2093
    %v2104 = vadd.f32 %v2009, %v2095
    %v2105 = vld [vmem:[#allocation3] sm:$0x8]
    %v2106 = vld [vmem:[#allocation3 + $0x1c] sm:$0xf]
    %s2107 = scalar_lea.vmem %s19, 96
    %v2108 = vld [vmem:[%s2107] sm:$0xf]
    %v2109 = vld [vmem:[%s2107 + $0x4] sm:$0xf]
    %v2110 = vld [vmem:[%s2107 + $0x8] sm:$0xf]
    %v2111 = vld [vmem:[%s2107 + $0xc] sm:$0xf]
    %v2112 = vld [vmem:[%s2107 + $0x10] sm:$0xf]
    %v2113 = vld [vmem:[%s2107 + $0x14] sm:$0xf]
    %v2114 = vld [vmem:[%s2107 + $0x18] sm:$0xf]
    %v2115 = vld [vmem:[%s2107 + $0x1c] sm:$0xf]
    %v2118 = vunpack.c.l.b16 %v2105
    %v2119 = vunpack.c.l.b16 %v2106
    %v2120 = vpack.c.b16 %v1837, %v2118
    %v2121 = vpack.c.b16 %v2119, %v1842
    %vm2122 = vcmask 1044480
    %v2123 = vrot.slane %v2120, 3
    %v2124 = vrot.slane %v1845, 3
    %v2125 = vsel %vm2122, %v2123, %v2124
    %v2126 = vrot.slane %v1846, 3
    %v2127 = vsel %vm2122, %v2124, %v2126
    %v2128 = vrot.slane %v2121, 3
    %v2129 = vsel %vm2122, %v2126, %v2128
    %v2138 = vunpack.c.l.b16 %v2108
    %v2139 = vunpack.c.l.b16 %v2109
    %v2140 = vunpack.c.l.b16 %v2110
    %v2141 = vunpack.c.l.b16 %v2111
    %v2142 = vunpack.c.l.b16 %v2112
    %v2143 = vunpack.c.l.b16 %v2113
    %v2144 = vunpack.c.l.b16 %v2114
    %v2145 = vunpack.c.l.b16 %v2115
    %v2146 = vpack.c.b16 %v2139, %v2138
    %v2147 = vpack.c.b16 %v2141, %v2140
    %v2148 = vpack.c.b16 %v2143, %v2142
    %v2149 = vpack.c.b16 %v2145, %v2144
    %v2155 = vsel %vm1904, %v2125, 0
    %v2158 = vsel %vm1904, %v2127, 0
    %v2161 = vsel %vm1904, %v2129, 0
    %v2164 = vsel %vm1904, %v2128, 0
    %2166 = vmatpush.bf16.msra.mxu0 0
    %2167 = vmatpush.bf16.msra.mxu0 0
    %2168 = vmatpush.bf16.msra.mxu0 0
    %2169 = vmatpush.bf16.msra.mxu0 0
    %2170 = vmatpush.bf16.msra.mxu0 %v2149
    %2171 = vmatpush.bf16.msra.mxu0 %v2148
    %2172 = vmatpush.bf16.msra.mxu0 %v2147
    %2173 = vmatpush.bf16.msra.mxu0 %v2146
    %2174 = vmatmul.bf16.gmra.mxu0 %v2155
    %v2175 = vpop.f32.mrf.mxu0
    %v2176 = vadd.f32 0.0, %v2175
    %v2177 = vpop.f32.mrf.mxu0
    %v2178 = vadd.f32 0.0, %v2177
    %2179 = vmatmul.bf16.gmra.mxu0 %v2158
    %v2180 = vpop.f32.mrf.mxu0
    %v2181 = vadd.f32 0.0, %v2180
    %v2182 = vpop.f32.mrf.mxu0
    %v2183 = vadd.f32 0.0, %v2182
    %2184 = vmatmul.bf16.gmra.mxu0 %v2161
    %v2185 = vpop.f32.mrf.mxu0
    %v2186 = vadd.f32 0.0, %v2185
    %v2187 = vpop.f32.mrf.mxu0
    %v2188 = vadd.f32 0.0, %v2187
    %2189 = vmatmul.bf16.gmra.mxu0 %v2164
    %v2190 = vpop.f32.mrf.mxu0
    %v2191 = vadd.f32 0.0, %v2190
    %v2192 = vpop.f32.mrf.mxu0
    %v2193 = vadd.f32 0.0, %v2192
    %2194 = vdwg.mxu0
    %v2195 = vadd.f32 %v2097, %v2176
    %v2196 = vadd.f32 %v2098, %v2178
    %v2197 = vadd.f32 %v2099, %v2181
    %v2198 = vadd.f32 %v2100, %v2183
    %v2199 = vadd.f32 %v2101, %v2186
    %v2200 = vadd.f32 %v2102, %v2188
    %v2201 = vadd.f32 %v2103, %v2191
    %v2202 = vadd.f32 %v2104, %v2193
    %v2203 = vld [vmem:[#allocation3] sm:$0x8]
    %v2204 = vld [vmem:[#allocation3 + $0x4] sm:$0xf]
    %v2205 = vld [vmem:[#allocation3 + $0x8] sm:$0xf]
    %v2206 = vld [vmem:[#allocation3 + $0xc] sm:$0xf]
    %v2207 = vld [vmem:[#allocation3 + $0x10] sm:$0xf]
    %v2208 = vld [vmem:[#allocation3 + $0x14] sm:$0xf]
    %v2209 = vld [vmem:[#allocation3 + $0x18] sm:$0xf]
    %v2210 = vld [vmem:[#allocation3 + $0x1c] sm:$0xf]
    %v2211 = vld [vmem:[#allocation3 + $0x20] sm:$0x1]
    %s2212 = scalar_lea.vmem %s19, 128
    %v2213 = vld [vmem:[%s2212] sm:$0xf]
    %v2214 = vld [vmem:[%s2212 + $0x4] sm:$0xf]
    %v2215 = vld [vmem:[%s2212 + $0x8] sm:$0xf]
    %v2216 = vld [vmem:[%s2212 + $0xc] sm:$0xf]
    %v2217 = vld [vmem:[%s2212 + $0x10] sm:$0xf]
    %v2218 = vld [vmem:[%s2212 + $0x14] sm:$0xf]
    %v2219 = vld [vmem:[%s2212 + $0x18] sm:$0xf]
    %v2220 = vld [vmem:[%s2212 + $0x1c] sm:$0xf]
    %v2230 = vunpack.c.l.b16 %v2203
    %v2231 = vunpack.c.l.b16 %v2204
    %v2232 = vunpack.c.l.b16 %v2205
    %v2233 = vunpack.c.l.b16 %v2206
    %v2234 = vunpack.c.l.b16 %v2207
    %v2235 = vunpack.c.l.b16 %v2208
    %v2236 = vunpack.c.l.b16 %v2209
    %v2237 = vunpack.c.l.b16 %v2210
    %v2238 = vunpack.c.l.b16 %v2211
    %v2239 = vpack.c.b16 %v2231, %v2230
    %v2240 = vpack.c.b16 %v2233, %v2232
    %v2241 = vpack.c.b16 %v2235, %v2234
    %v2242 = vpack.c.b16 %v2237, %v2236
    %v2243 = vpack.c.b16 %v2238, %v2238
    %vm2244 = vsmask.f32 4352
    %v2246 = vshrl.u32 %v2239, 16
    %v2248 = vrot.slane %v2246, 3
    %v2249 = vshll.u32 %v2239, 16
    %v2251 = vrot.slane %v2249, 4
    %v2252 = vor.u32 %v2248, %v2251
    %v2254 = vshrl.u32 %v2240, 16
    %v2256 = vrot.slane %v2254, 3
    %v2257 = vshll.u32 %v2240, 16
    %v2259 = vrot.slane %v2257, 4
    %v2260 = vor.u32 %v2256, %v2259
    %v2261 = vsel %vm2244, %v2252, %v2260
    %v2263 = vshrl.u32 %v2241, 16
    %v2265 = vrot.slane %v2263, 3
    %v2266 = vshll.u32 %v2241, 16
    %v2268 = vrot.slane %v2266, 4
    %v2269 = vor.u32 %v2265, %v2268
    %v2270 = vsel %vm2244, %v2260, %v2269
    %v2272 = vshrl.u32 %v2242, 16
    %v2274 = vrot.slane %v2272, 3
    %v2275 = vshll.u32 %v2242, 16
    %v2277 = vrot.slane %v2275, 4
    %v2278 = vor.u32 %v2274, %v2277
    %v2279 = vsel %vm2244, %v2269, %v2278
    %v2281 = vshll.u32 %v2243, 16
    %v2283 = vrot.slane %v2281, 4
    %v2284 = vsel %vm2244, %v2278, %v2283
    %v2293 = vunpack.c.l.b16 %v2213
    %v2294 = vunpack.c.l.b16 %v2214
    %v2295 = vunpack.c.l.b16 %v2215
    %v2296 = vunpack.c.l.b16 %v2216
    %v2297 = vunpack.c.l.b16 %v2217
    %v2298 = vunpack.c.l.b16 %v2218
    %v2299 = vunpack.c.l.b16 %v2219
    %v2300 = vunpack.c.l.b16 %v2220
    %v2301 = vpack.c.b16 %v2294, %v2293
    %v2302 = vpack.c.b16 %v2296, %v2295
    %v2303 = vpack.c.b16 %v2298, %v2297
    %v2304 = vpack.c.b16 %v2300, %v2299
    %v2310 = vsel %vm1904, %v2261, 0
    %v2313 = vsel %vm1904, %v2270, 0
    %v2316 = vsel %vm1904, %v2279, 0
    %v2319 = vsel %vm1904, %v2284, 0
    %2321 = vmatpush.bf16.msra.mxu0 0
    %2322 = vmatpush.bf16.msra.mxu0 0
    %2323 = vmatpush.bf16.msra.mxu0 0
    %2324 = vmatpush.bf16.msra.mxu0 0
    %2325 = vmatpush.bf16.msra.mxu0 %v2304
    %2326 = vmatpush.bf16.msra.mxu0 %v2303
    %2327 = vmatpush.bf16.msra.mxu0 %v2302
    %2328 = vmatpush.bf16.msra.mxu0 %v2301
    %2329 = vmatmul.bf16.gmra.mxu0 %v2310
    %v2330 = vpop.f32.mrf.mxu0
    %v2331 = vadd.f32 0.0, %v2330
    %v2332 = vpop.f32.mrf.mxu0
    %v2333 = vadd.f32 0.0, %v2332
    %2334 = vmatmul.bf16.gmra.mxu0 %v2313
    %v2335 = vpop.f32.mrf.mxu0
    %v2336 = vadd.f32 0.0, %v2335
    %v2337 = vpop.f32.mrf.mxu0
    %v2338 = vadd.f32 0.0, %v2337
    %2339 = vmatmul.bf16.gmra.mxu0 %v2316
    %v2340 = vpop.f32.mrf.mxu0
    %v2341 = vadd.f32 0.0, %v2340
    %v2342 = vpop.f32.mrf.mxu0
    %v2343 = vadd.f32 0.0, %v2342
    %2344 = vmatmul.bf16.gmra.mxu0 %v2319
    %v2345 = vpop.f32.mrf.mxu0
    %v2346 = vadd.f32 0.0, %v2345
    %v2347 = vpop.f32.mrf.mxu0
    %v2348 = vadd.f32 0.0, %v2347
    %2349 = vdwg.mxu0
    %v2350 = vadd.f32 %v2195, %v2331
    %v2351 = vadd.f32 %v2196, %v2333
    %v2352 = vadd.f32 %v2197, %v2336
    %v2353 = vadd.f32 %v2198, %v2338
    %v2354 = vadd.f32 %v2199, %v2341
    %v2355 = vadd.f32 %v2200, %v2343
    %v2356 = vadd.f32 %v2201, %v2346
    %v2357 = vadd.f32 %v2202, %v2348
    %s2358 = scalar_lea.vmem %s19, 160
    %v2359 = vld [vmem:[%s2358] sm:$0xf]
    %v2360 = vld [vmem:[%s2358 + $0x4] sm:$0xf]
    %v2361 = vld [vmem:[%s2358 + $0x8] sm:$0xf]
    %v2362 = vld [vmem:[%s2358 + $0xc] sm:$0xf]
    %v2363 = vld [vmem:[%s2358 + $0x10] sm:$0xf]
    %v2364 = vld [vmem:[%s2358 + $0x14] sm:$0xf]
    %v2365 = vld [vmem:[%s2358 + $0x18] sm:$0xf]
    %v2366 = vld [vmem:[%s2358 + $0x1c] sm:$0xf]
    %v2367 = vpack.c.b16 %v2232, %v2231
    %v2368 = vpack.c.b16 %v2234, %v2233
    %v2369 = vpack.c.b16 %v2236, %v2235
    %v2370 = vpack.c.b16 %v2238, %v2237
    %v2379 = vunpack.c.l.b16 %v2359
    %v2380 = vunpack.c.l.b16 %v2360
    %v2381 = vunpack.c.l.b16 %v2361
    %v2382 = vunpack.c.l.b16 %v2362
    %v2383 = vunpack.c.l.b16 %v2363
    %v2384 = vunpack.c.l.b16 %v2364
    %v2385 = vunpack.c.l.b16 %v2365
    %v2386 = vunpack.c.l.b16 %v2366
    %v2387 = vpack.c.b16 %v2380, %v2379
    %v2388 = vpack.c.b16 %v2382, %v2381
    %v2389 = vpack.c.b16 %v2384, %v2383
    %v2390 = vpack.c.b16 %v2386, %v2385
    %v2396 = vsel %vm1904, %v2367, 0
    %v2399 = vsel %vm1904, %v2368, 0
    %v2402 = vsel %vm1904, %v2369, 0
    %v2405 = vsel %vm1904, %v2370, 0
    %2407 = vmatpush.bf16.msra.mxu0 0
    %2408 = vmatpush.bf16.msra.mxu0 0
    %2409 = vmatpush.bf16.msra.mxu0 0
    %2410 = vmatpush.bf16.msra.mxu0 0
    %2411 = vmatpush.bf16.msra.mxu0 %v2390
    %2412 = vmatpush.bf16.msra.mxu0 %v2389
    %2413 = vmatpush.bf16.msra.mxu0 %v2388
    %2414 = vmatpush.bf16.msra.mxu0 %v2387
    %2415 = vmatmul.bf16.gmra.mxu0 %v2396
    %v2416 = vpop.f32.mrf.mxu0
    %v2417 = vadd.f32 0.0, %v2416
    %v2418 = vpop.f32.mrf.mxu0
    %v2419 = vadd.f32 0.0, %v2418
    %2420 = vmatmul.bf16.gmra.mxu0 %v2399
    %v2421 = vpop.f32.mrf.mxu0
    %v2422 = vadd.f32 0.0, %v2421
    %v2423 = vpop.f32.mrf.mxu0
    %v2424 = vadd.f32 0.0, %v2423
    %2425 = vmatmul.bf16.gmra.mxu0 %v2402
    %v2426 = vpop.f32.mrf.mxu0
    %v2427 = vadd.f32 0.0, %v2426
    %v2428 = vpop.f32.mrf.mxu0
    %v2429 = vadd.f32 0.0, %v2428
    %2430 = vmatmul.bf16.gmra.mxu0 %v2405
    %v2431 = vpop.f32.mrf.mxu0
    %v2432 = vadd.f32 0.0, %v2431
    %v2433 = vpop.f32.mrf.mxu0
    %v2434 = vadd.f32 0.0, %v2433
    %2435 = vdwg.mxu0
    %v2436 = vadd.f32 %v2350, %v2417
    %v2437 = vadd.f32 %v2351, %v2419
    %v2438 = vadd.f32 %v2352, %v2422
    %v2439 = vadd.f32 %v2353, %v2424
    %v2440 = vadd.f32 %v2354, %v2427
    %v2441 = vadd.f32 %v2355, %v2429
    %v2442 = vadd.f32 %v2356, %v2432
    %v2443 = vadd.f32 %v2357, %v2434
    %v2444 = vld [vmem:[#allocation3 + $0x4] sm:$0xc]
    %v2445 = vld [vmem:[#allocation3 + $0x20] sm:$0x7]
    %s2446 = scalar_lea.vmem %s19, 192
    %v2447 = vld [vmem:[%s2446] sm:$0xf]
    %v2448 = vld [vmem:[%s2446 + $0x4] sm:$0xf]
    %v2449 = vld [vmem:[%s2446 + $0x8] sm:$0xf]
    %v2450 = vld [vmem:[%s2446 + $0xc] sm:$0xf]
    %v2451 = vld [vmem:[%s2446 + $0x10] sm:$0xf]
    %v2452 = vld [vmem:[%s2446 + $0x14] sm:$0xf]
    %v2453 = vld [vmem:[%s2446 + $0x18] sm:$0xf]
    %v2454 = vld [vmem:[%s2446 + $0x1c] sm:$0xf]
    %v2457 = vunpack.c.l.b16 %v2444
    %v2458 = vunpack.c.l.b16 %v2445
    %v2459 = vpack.c.b16 %v2232, %v2457
    %v2460 = vpack.c.b16 %v2458, %v2237
    %vm2461 = vcmask 1045504
    %v2462 = vrot.slane %v2459, 2
    %v2463 = vrot.slane %v2368, 2
    %v2464 = vsel %vm2461, %v2462, %v2463
    %v2465 = vrot.slane %v2369, 2
    %v2466 = vsel %vm2461, %v2463, %v2465
    %v2467 = vrot.slane %v2460, 2
    %v2468 = vsel %vm2461, %v2465, %v2467
    %v2477 = vunpack.c.l.b16 %v2447
    %v2478 = vunpack.c.l.b16 %v2448
    %v2479 = vunpack.c.l.b16 %v2449
    %v2480 = vunpack.c.l.b16 %v2450
    %v2481 = vunpack.c.l.b16 %v2451
    %v2482 = vunpack.c.l.b16 %v2452
    %v2483 = vunpack.c.l.b16 %v2453
    %v2484 = vunpack.c.l.b16 %v2454
    %v2485 = vpack.c.b16 %v2478, %v2477
    %v2486 = vpack.c.b16 %v2480, %v2479
    %v2487 = vpack.c.b16 %v2482, %v2481
    %v2488 = vpack.c.b16 %v2484, %v2483
    %v2494 = vsel %vm1904, %v2464, 0
    %v2497 = vsel %vm1904, %v2466, 0
    %v2500 = vsel %vm1904, %v2468, 0
    %v2503 = vsel %vm1904, %v2467, 0
    %2505 = vmatpush.bf16.msra.mxu0 0
    %2506 = vmatpush.bf16.msra.mxu0 0
    %2507 = vmatpush.bf16.msra.mxu0 0
    %2508 = vmatpush.bf16.msra.mxu0 0
    %2509 = vmatpush.bf16.msra.mxu0 %v2488
    %2510 = vmatpush.bf16.msra.mxu0 %v2487
    %2511 = vmatpush.bf16.msra.mxu0 %v2486
    %2512 = vmatpush.bf16.msra.mxu0 %v2485
    %2513 = vmatmul.bf16.gmra.mxu0 %v2494
    %v2514 = vpop.f32.mrf.mxu0
    %v2515 = vadd.f32 0.0, %v2514
    %v2516 = vpop.f32.mrf.mxu0
    %v2517 = vadd.f32 0.0, %v2516
    %2518 = vmatmul.bf16.gmra.mxu0 %v2497
    %v2519 = vpop.f32.mrf.mxu0
    %v2520 = vadd.f32 0.0, %v2519
    %v2521 = vpop.f32.mrf.mxu0
    %v2522 = vadd.f32 0.0, %v2521
    %2523 = vmatmul.bf16.gmra.mxu0 %v2500
    %v2524 = vpop.f32.mrf.mxu0
    %v2525 = vadd.f32 0.0, %v2524
    %v2526 = vpop.f32.mrf.mxu0
    %v2527 = vadd.f32 0.0, %v2526
    %2528 = vmatmul.bf16.gmra.mxu0 %v2503
    %v2529 = vpop.f32.mrf.mxu0
    %v2530 = vadd.f32 0.0, %v2529
    %v2531 = vpop.f32.mrf.mxu0
    %v2532 = vadd.f32 0.0, %v2531
    %2533 = vdwg.mxu0
    %v2534 = vadd.f32 %v2436, %v2515
    %v2535 = vadd.f32 %v2437, %v2517
    %v2536 = vadd.f32 %v2438, %v2520
    %v2537 = vadd.f32 %v2439, %v2522
    %v2538 = vadd.f32 %v2440, %v2525
    %v2539 = vadd.f32 %v2441, %v2527
    %v2540 = vadd.f32 %v2442, %v2530
    %v2541 = vadd.f32 %v2443, %v2532
    %v2542 = vld [vmem:[#allocation3 + $0x20] sm:$0xf]
    %s2543 = scalar_lea.vmem %s19, 224
    %v2544 = vld [vmem:[%s2543] sm:$0xf]
    %v2545 = vld [vmem:[%s2543 + $0x4] sm:$0xf]
    %v2546 = vld [vmem:[%s2543 + $0x8] sm:$0xf]
    %v2547 = vld [vmem:[%s2543 + $0xc] sm:$0xf]
    %v2548 = vld [vmem:[%s2543 + $0x10] sm:$0xf]
    %v2549 = vld [vmem:[%s2543 + $0x14] sm:$0xf]
    %v2550 = vld [vmem:[%s2543 + $0x18] sm:$0xf]
    %v2551 = vld [vmem:[%s2543 + $0x1c] sm:$0xf]
    %v2553 = vunpack.c.l.b16 %v2542
    %v2554 = vpack.c.b16 %v2553, %v2237
    %vm2555 = vsmask.f32 5376
    %v2557 = vshrl.u32 %v2459, 16
    %v2559 = vrot.slane %v2557, 2
    %v2560 = vshll.u32 %v2459, 16
    %v2562 = vrot.slane %v2560, 3
    %v2563 = vor.u32 %v2559, %v2562
    %v2564 = vshrl.u32 %v2368, 16
    %v2566 = vrot.slane %v2564, 2
    %v2567 = vshll.u32 %v2368, 16
    %v2569 = vrot.slane %v2567, 3
    %v2570 = vor.u32 %v2566, %v2569
    %v2571 = vsel %vm2555, %v2563, %v2570
    %v2572 = vshrl.u32 %v2369, 16
    %v2574 = vrot.slane %v2572, 2
    %v2575 = vshll.u32 %v2369, 16
    %v2577 = vrot.slane %v2575, 3
    %v2578 = vor.u32 %v2574, %v2577
    %v2579 = vsel %vm2555, %v2570, %v2578
    %v2581 = vshrl.u32 %v2554, 16
    %v2583 = vrot.slane %v2581, 2
    %v2584 = vshll.u32 %v2554, 16
    %v2586 = vrot.slane %v2584, 3
    %v2587 = vor.u32 %v2583, %v2586
    %v2588 = vsel %vm2555, %v2578, %v2587
    %v2597 = vunpack.c.l.b16 %v2544
    %v2598 = vunpack.c.l.b16 %v2545
    %v2599 = vunpack.c.l.b16 %v2546
    %v2600 = vunpack.c.l.b16 %v2547
    %v2601 = vunpack.c.l.b16 %v2548
    %v2602 = vunpack.c.l.b16 %v2549
    %v2603 = vunpack.c.l.b16 %v2550
    %v2604 = vunpack.c.l.b16 %v2551
    %v2605 = vpack.c.b16 %v2598, %v2597
    %v2606 = vpack.c.b16 %v2600, %v2599
    %v2607 = vpack.c.b16 %v2602, %v2601
    %v2608 = vpack.c.b16 %v2604, %v2603
    %v2614 = vsel %vm1904, %v2571, 0
    %v2617 = vsel %vm1904, %v2579, 0
    %v2620 = vsel %vm1904, %v2588, 0
    %v2623 = vsel %vm1904, %v2587, 0
    %2625 = vmatpush.bf16.msra.mxu0 0
    %2626 = vmatpush.bf16.msra.mxu0 0
    %2627 = vmatpush.bf16.msra.mxu0 0
    %2628 = vmatpush.bf16.msra.mxu0 0
    %2629 = vmatpush.bf16.msra.mxu0 %v2608
    %2630 = vmatpush.bf16.msra.mxu0 %v2607
    %2631 = vmatpush.bf16.msra.mxu0 %v2606
    %2632 = vmatpush.bf16.msra.mxu0 %v2605
    %2633 = vmatmul.bf16.gmra.mxu0 %v2614
    %v2634 = vpop.f32.mrf.mxu0
    %v2635 = vadd.f32 0.0, %v2634
    %v2636 = vpop.f32.mrf.mxu0
    %v2637 = vadd.f32 0.0, %v2636
    %2638 = vmatmul.bf16.gmra.mxu0 %v2617
    %v2639 = vpop.f32.mrf.mxu0
    %v2640 = vadd.f32 0.0, %v2639
    %v2641 = vpop.f32.mrf.mxu0
    %v2642 = vadd.f32 0.0, %v2641
    %2643 = vmatmul.bf16.gmra.mxu0 %v2620
    %v2644 = vpop.f32.mrf.mxu0
    %v2645 = vadd.f32 0.0, %v2644
    %v2646 = vpop.f32.mrf.mxu0
    %v2647 = vadd.f32 0.0, %v2646
    %2648 = vmatmul.bf16.gmra.mxu0 %v2623
    %v2649 = vpop.f32.mrf.mxu0
    %v2650 = vadd.f32 0.0, %v2649
    %v2651 = vpop.f32.mrf.mxu0
    %v2652 = vadd.f32 0.0, %v2651
    %2653 = vdwg.mxu0
    %v2654 = vadd.f32 %v2534, %v2635
    %v2655 = vadd.f32 %v2535, %v2637
    %v2656 = vadd.f32 %v2536, %v2640
    %v2657 = vadd.f32 %v2537, %v2642
    %v2658 = vadd.f32 %v2538, %v2645
    %v2659 = vadd.f32 %v2539, %v2647
    %v2660 = vadd.f32 %v2540, %v2650
    %v2661 = vadd.f32 %v2541, %v2652
    %v2662 = vld [vmem:[#allocation3 + $0x4] sm:$0x8]
    %s2663 = scalar_lea.vmem %s19, 256
    %v2664 = vld [vmem:[%s2663] sm:$0xf]
    %v2665 = vld [vmem:[%s2663 + $0x4] sm:$0xf]
    %v2666 = vld [vmem:[%s2663 + $0x8] sm:$0xf]
    %v2667 = vld [vmem:[%s2663 + $0xc] sm:$0xf]
    %v2668 = vld [vmem:[%s2663 + $0x10] sm:$0xf]
    %v2669 = vld [vmem:[%s2663 + $0x14] sm:$0xf]
    %v2670 = vld [vmem:[%s2663 + $0x18] sm:$0xf]
    %v2671 = vld [vmem:[%s2663 + $0x1c] sm:$0xf]
    %v2673 = vunpack.c.l.b16 %v2662
    %v2674 = vpack.c.b16 %v2232, %v2673
    %v2675 = vrot.slane %v2674, 3
    %v2676 = vrot.slane %v2368, 3
    %v2677 = vsel %vm2122, %v2675, %v2676
    %v2678 = vrot.slane %v2369, 3
    %v2679 = vsel %vm2122, %v2676, %v2678
    %v2680 = vrot.slane %v2554, 3
    %v2681 = vsel %vm2122, %v2678, %v2680
    %v2690 = vunpack.c.l.b16 %v2664
    %v2691 = vunpack.c.l.b16 %v2665
    %v2692 = vunpack.c.l.b16 %v2666
    %v2693 = vunpack.c.l.b16 %v2667
    %v2694 = vunpack.c.l.b16 %v2668
    %v2695 = vunpack.c.l.b16 %v2669
    %v2696 = vunpack.c.l.b16 %v2670
    %v2697 = vunpack.c.l.b16 %v2671
    %v2698 = vpack.c.b16 %v2691, %v2690
    %v2699 = vpack.c.b16 %v2693, %v2692
    %v2700 = vpack.c.b16 %v2695, %v2694
    %v2701 = vpack.c.b16 %v2697, %v2696
    %v2707 = vsel %vm1904, %v2677, 0
    %v2710 = vsel %vm1904, %v2679, 0
    %v2713 = vsel %vm1904, %v2681, 0
    %v2716 = vsel %vm1904, %v2680, 0
    %2718 = vmatpush.bf16.msra.mxu0 0
    %2719 = vmatpush.bf16.msra.mxu0 0
    %2720 = vmatpush.bf16.msra.mxu0 0
    %2721 = vmatpush.bf16.msra.mxu0 0
    %2722 = vmatpush.bf16.msra.mxu0 %v2701
    %2723 = vmatpush.bf16.msra.mxu0 %v2700
    %2724 = vmatpush.bf16.msra.mxu0 %v2699
    %2725 = vmatpush.bf16.msra.mxu0 %v2698
    %2726 = vmatmul.bf16.gmra.mxu0 %v2707
    %v2727 = vpop.f32.mrf.mxu0
    %v2728 = vadd.f32 0.0, %v2727
    %v2729 = vpop.f32.mrf.mxu0
    %v2730 = vadd.f32 0.0, %v2729
    %2731 = vmatmul.bf16.gmra.mxu0 %v2710
    %v2732 = vpop.f32.mrf.mxu0
    %v2733 = vadd.f32 0.0, %v2732
    %v2734 = vpop.f32.mrf.mxu0
    %v2735 = vadd.f32 0.0, %v2734
    %2736 = vmatmul.bf16.gmra.mxu0 %v2713
    %v2737 = vpop.f32.mrf.mxu0
    %v2738 = vadd.f32 0.0, %v2737
    %v2739 = vpop.f32.mrf.mxu0
    %v2740 = vadd.f32 0.0, %v2739
    %2741 = vmatmul.bf16.gmra.mxu0 %v2716
    %v2742 = vpop.f32.mrf.mxu0
    %v2743 = vadd.f32 0.0, %v2742
    %v2744 = vpop.f32.mrf.mxu0
    %v2745 = vadd.f32 0.0, %v2744
    %2746 = vdwg.mxu0
    %v2747 = vadd.f32 %v2654, %v2728
    %v2748 = vadd.f32 %v2655, %v2730
    %v2749 = vadd.f32 %v2656, %v2733
    %v2750 = vadd.f32 %v2657, %v2735
    %v2751 = vadd.f32 %v2658, %v2738
    %v2752 = vadd.f32 %v2659, %v2740
    %v2753 = vadd.f32 %v2660, %v2743
    %v2754 = vadd.f32 %v2661, %v2745
    %v2755 = vld [vmem:[%s21] sm:$0x1]
    %v2757 = vperm.slane %v2755, 0
    %v2759 = vadd.f32 %v2747, %v2757
    %v2760 = vadd.f32 %v2748, %v2757
    %v2761 = vadd.f32 %v2749, %v2757
    %v2762 = vadd.f32 %v2750, %v2757
    %v2763 = vadd.f32 %v2751, %v2757
    %v2764 = vadd.f32 %v2752, %v2757
    %v2765 = vadd.f32 %v2753, %v2757
    %v2766 = vadd.f32 %v2754, %v2757
    %v2767 = vmax.f32 %v2759, 0.0
    %v2768 = vmax.f32 %v2760, 0.0
    %v2769 = vmax.f32 %v2761, 0.0
    %v2770 = vmax.f32 %v2762, 0.0
    %v2771 = vmax.f32 %v2763, 0.0
    %v2772 = vmax.f32 %v2764, 0.0
    %v2773 = vmax.f32 %v2765, 0.0
    %v2774 = vmax.f32 %v2766, 0.0
    %v2775 = vld [vmem:[%s5] sm:$0xf]
    %v2776 = vld [vmem:[%s5 + $0x4] sm:$0xf]
    %v2777 = vld [vmem:[%s5 + $0x8] sm:$0xf]
    %v2778 = vld [vmem:[%s5 + $0xc] sm:$0xf]
    %v2779 = vld [vmem:[%s5 + $0x10] sm:$0xf]
    %v2780 = vld [vmem:[%s5 + $0x14] sm:$0xf]
    %v2781 = vld [vmem:[%s5 + $0x18] sm:$0xf]
    %v2782 = vld [vmem:[%s5 + $0x1c] sm:$0xf]
    %v2783 = vld [vmem:[%s5 + $0x20] sm:$0xf]
    %v2784 = vpack.c.bf16 %v2768, %v2767
    %v2785 = vpack.c.bf16 %v2770, %v2769
    %v2786 = vpack.c.bf16 %v2772, %v2771
    %v2787 = vpack.c.bf16 %v2774, %v2773
    %v2797 = vunpack.c.l.b16 %v2775
    %v2798 = vunpack.c.l.b16 %v2776
    %v2799 = vunpack.c.l.b16 %v2777
    %v2800 = vunpack.c.l.b16 %v2778
    %v2801 = vunpack.c.l.b16 %v2779
    %v2802 = vunpack.c.l.b16 %v2780
    %v2803 = vunpack.c.l.b16 %v2781
    %v2804 = vunpack.c.l.b16 %v2782
    %v2805 = vunpack.c.l.b16 %v2783
    %v2806 = vpack.c.b16 %v2798, %v2797
    %v2807 = vpack.c.b16 %v2800, %v2799
    %v2808 = vpack.c.b16 %v2802, %v2801
    %v2809 = vpack.c.b16 %v2804, %v2803
    %v2810 = vpack.c.b16 %v2805, %v2805
    %vm2811 = vcmask 474112
    %v2813 = vsel %vm2811, %v2806, 0
    %v2816 = vsel %vm2811, %v2807, 0
    %v2819 = vsel %vm2811, %v2808, 0
    %v2822 = vsel %vm2811, %v2809, 0
    %v2825 = vsel %vm2811, %v2810, 0
    %v2828 = vsel %vm1072, %v2787, 0
    %2830 = vmatpush.bf16.msra.mxu0 0
    %2831 = vmatpush.bf16.msra.mxu0 0
    %2832 = vmatpush.bf16.msra.mxu0 0
    %2833 = vmatpush.bf16.msra.mxu0 0
    %2834 = vmatpush.bf16.msra.mxu0 %v2828
    %2835 = vmatpush.bf16.msra.mxu0 %v2786
    %2836 = vmatpush.bf16.msra.mxu0 %v2785
    %2837 = vmatpush.bf16.msra.mxu0 %v2784
    %2838 = vmatmul.bf16.gmra.mxu0 %v2813
    %v2839 = vpop.f32.mrf.mxu0
    %v2840 = vadd.f32 0.0, %v2839
    %v2841 = vpop.f32.mrf.mxu0
    %v2842 = vadd.f32 0.0, %v2841
    %2843 = vmatmul.bf16.gmra.mxu0 %v2816
    %v2844 = vpop.f32.mrf.mxu0
    %v2845 = vadd.f32 0.0, %v2844
    %v2846 = vpop.f32.mrf.mxu0
    %v2847 = vadd.f32 0.0, %v2846
    %2848 = vmatmul.bf16.gmra.mxu0 %v2819
    %v2849 = vpop.f32.mrf.mxu0
    %v2850 = vadd.f32 0.0, %v2849
    %v2851 = vpop.f32.mrf.mxu0
    %v2852 = vadd.f32 0.0, %v2851
    %2853 = vmatmul.bf16.gmra.mxu0 %v2822
    %v2854 = vpop.f32.mrf.mxu0
    %v2855 = vadd.f32 0.0, %v2854
    %v2856 = vpop.f32.mrf.mxu0
    %v2857 = vadd.f32 0.0, %v2856
    %2858 = vmatmul.bf16.gmra.mxu0 %v2825
    %v2859 = vpop.f32.mrf.mxu0
    %v2860 = vadd.f32 0.0, %v2859
    %v2861 = vpop.f32.mrf.mxu0
    %2862 = vdwg.mxu0
    %v2863 = vpack.c.bf16 %v2840, %v2840
    %v2864 = vpack.c.bf16 %v2842, %v2842
    %v2865 = vpack.c.bf16 %v2845, %v2845
    %v2866 = vpack.c.bf16 %v2847, %v2847
    %v2867 = vpack.c.bf16 %v2850, %v2850
    %v2868 = vpack.c.bf16 %v2852, %v2852
    %v2869 = vpack.c.bf16 %v2855, %v2855
    %v2870 = vpack.c.bf16 %v2857, %v2857
    %v2871 = vpack.c.bf16 %v2860, %v2860
    %2872 = vst.msk [vmem:[#allocation4] sm:$0xf] %vm642, %v2863
    %2873 = vst.msk [vmem:[#allocation4 + $0x4] sm:$0xf] %vm642, %v2864
    %2874 = vst.msk [vmem:[#allocation4 + $0x8] sm:$0xf] %vm642, %v2865
    %2875 = vst.msk [vmem:[#allocation4 + $0xc] sm:$0xf] %vm642, %v2866
    %2876 = vst.msk [vmem:[#allocation4 + $0x10] sm:$0xf] %vm642, %v2867
    %2877 = vst.msk [vmem:[#allocation4 + $0x14] sm:$0xf] %vm642, %v2868
    %2878 = vst.msk [vmem:[#allocation4 + $0x18] sm:$0xf] %vm642, %v2869
    %2879 = vst.msk [vmem:[#allocation4 + $0x1c] sm:$0xf] %vm642, %v2870
    %2880 = vst.msk [vmem:[#allocation4 + $0x20] sm:$0xf] %vm642, %v2871
    %v2881 = vld [vmem:[#allocation4] sm:$0xf]
    %v2882 = vld [vmem:[#allocation4 + $0x4] sm:$0xf]
    %v2883 = vld [vmem:[#allocation4 + $0x8] sm:$0xf]
    %v2884 = vld [vmem:[#allocation4 + $0xc] sm:$0xf]
    %v2885 = vld [vmem:[#allocation4 + $0x10] sm:$0xf]
    %v2886 = vld [vmem:[#allocation4 + $0x14] sm:$0xf]
    %v2887 = vld [vmem:[#allocation4 + $0x18] sm:$0xf]
    %v2888 = vld [vmem:[#allocation4 + $0x1c] sm:$0x1]
    %v2889 = vld [vmem:[%s23] sm:$0xf]
    %v2890 = vld [vmem:[%s23 + $0x4] sm:$0xf]
    %v2891 = vld [vmem:[%s23 + $0x8] sm:$0xf]
    %v2892 = vld [vmem:[%s23 + $0xc] sm:$0xf]
    %v2893 = vld [vmem:[%s23 + $0x10] sm:$0xf]
    %v2894 = vld [vmem:[%s23 + $0x14] sm:$0xf]
    %v2895 = vld [vmem:[%s23 + $0x18] sm:$0xf]
    %v2896 = vld [vmem:[%s23 + $0x1c] sm:$0xf]
    %v2897 = vld [vmem:[#allocation4 + $0x1c] sm:$0x3]
    %s2898 = scalar_lea.vmem %s23, 32
    %v2899 = vld [vmem:[%s2898] sm:$0xf]
    %v2900 = vld [vmem:[%s2898 + $0x4] sm:$0xf]
    %v2901 = vld [vmem:[%s2898 + $0x8] sm:$0xf]
    %v2902 = vld [vmem:[%s2898 + $0xc] sm:$0xf]
    %v2903 = vld [vmem:[%s2898 + $0x10] sm:$0xf]
    %v2904 = vld [vmem:[%s2898 + $0x14] sm:$0xf]
    %v2905 = vld [vmem:[%s2898 + $0x18] sm:$0xf]
    %v2906 = vld [vmem:[%s2898 + $0x1c] sm:$0xf]
    %v2915 = vunpack.c.l.b16 %v2881
    %v2916 = vunpack.c.l.b16 %v2882
    %v2917 = vunpack.c.l.b16 %v2883
    %v2918 = vunpack.c.l.b16 %v2884
    %v2919 = vunpack.c.l.b16 %v2885
    %v2920 = vunpack.c.l.b16 %v2886
    %v2921 = vunpack.c.l.b16 %v2887
    %v2922 = vunpack.c.l.b16 %v2897
    %v2923 = vpack.c.b16 %v2916, %v2915
    %v2924 = vpack.c.b16 %v2918, %v2917
    %v2925 = vpack.c.b16 %v2920, %v2919
    %v2926 = vpack.c.b16 %v2922, %v2921
    %v2928 = vshrl.u32 %v2923, 16
    %v2930 = vshll.u32 %v2923, 16
    %v2932 = vrot.slane %v2930, 1
    %v2933 = vor.u32 %v2928, %v2932
    %v2935 = vshll.u32 %v2924, 16
    %v2937 = vrot.slane %v2935, 1
    %v2938 = vsel %vm1848, %v2933, %v2937
    %v2939 = vshrl.u32 %v2924, 16
    %v2941 = vor.u32 %v2939, %v2937
    %v2943 = vshll.u32 %v2925, 16
    %v2945 = vrot.slane %v2943, 1
    %v2946 = vsel %vm1848, %v2941, %v2945
    %v2947 = vshrl.u32 %v2925, 16
    %v2949 = vor.u32 %v2947, %v2945
    %v2951 = vshll.u32 %v2926, 16
    %v2953 = vrot.slane %v2951, 1
    %v2954 = vsel %vm1848, %v2949, %v2953
    %v2955 = vshrl.u32 %v2926, 16
    %v2957 = vor.u32 %v2955, %v2953
    %v2966 = vunpack.c.l.b16 %v2899
    %v2967 = vunpack.c.l.b16 %v2900
    %v2968 = vunpack.c.l.b16 %v2901
    %v2969 = vunpack.c.l.b16 %v2902
    %v2970 = vunpack.c.l.b16 %v2903
    %v2971 = vunpack.c.l.b16 %v2904
    %v2972 = vunpack.c.l.b16 %v2905
    %v2973 = vunpack.c.l.b16 %v2906
    %v2974 = vpack.c.b16 %v2967, %v2966
    %v2975 = vpack.c.b16 %v2969, %v2968
    %v2976 = vpack.c.b16 %v2971, %v2970
    %v2977 = vpack.c.b16 %v2973, %v2972
    %v2983 = vsel %vm1904, %v2938, 0
    %v2986 = vsel %vm1904, %v2946, 0
    %v2989 = vsel %vm1904, %v2954, 0
    %v2992 = vsel %vm1904, %v2957, 0
    %2994 = vmatpush.bf16.msra.mxu0 0
    %2995 = vmatpush.bf16.msra.mxu0 0
    %2996 = vmatpush.bf16.msra.mxu0 0
    %2997 = vmatpush.bf16.msra.mxu0 0
    %2998 = vmatpush.bf16.msra.mxu0 %v2977
    %2999 = vmatpush.bf16.msra.mxu0 %v2976
    %3000 = vmatpush.bf16.msra.mxu0 %v2975
    %3001 = vmatpush.bf16.msra.mxu0 %v2974
    %3002 = vmatmul.bf16.gmra.mxu0 %v2983
    %v3003 = vpop.f32.mrf.mxu0
    %v3004 = vadd.f32 0.0, %v3003
    %v3005 = vpop.f32.mrf.mxu0
    %v3006 = vadd.f32 0.0, %v3005
    %3007 = vmatmul.bf16.gmra.mxu0 %v2986
    %v3008 = vpop.f32.mrf.mxu0
    %v3009 = vadd.f32 0.0, %v3008
    %v3010 = vpop.f32.mrf.mxu0
    %v3011 = vadd.f32 0.0, %v3010
    %3012 = vmatmul.bf16.gmra.mxu0 %v2989
    %v3013 = vpop.f32.mrf.mxu0
    %v3014 = vadd.f32 0.0, %v3013
    %v3015 = vpop.f32.mrf.mxu0
    %v3016 = vadd.f32 0.0, %v3015
    %3017 = vmatmul.bf16.gmra.mxu0 %v2992
    %v3018 = vpop.f32.mrf.mxu0
    %v3019 = vadd.f32 0.0, %v3018
    %v3020 = vpop.f32.mrf.mxu0
    %v3021 = vadd.f32 0.0, %v3020
    %3022 = vdwg.mxu0
    %v3024 = vunpack.c.l.b16 %v2888
    %v3025 = vpack.c.b16 %v3024, %v2921
    %v3034 = vunpack.c.l.b16 %v2889
    %v3035 = vunpack.c.l.b16 %v2890
    %v3036 = vunpack.c.l.b16 %v2891
    %v3037 = vunpack.c.l.b16 %v2892
    %v3038 = vunpack.c.l.b16 %v2893
    %v3039 = vunpack.c.l.b16 %v2894
    %v3040 = vunpack.c.l.b16 %v2895
    %v3041 = vunpack.c.l.b16 %v2896
    %v3042 = vpack.c.b16 %v3035, %v3034
    %v3043 = vpack.c.b16 %v3037, %v3036
    %v3044 = vpack.c.b16 %v3039, %v3038
    %v3045 = vpack.c.b16 %v3041, %v3040
    %v3050 = vsel %vm1904, %v2923, 0
    %v3052 = vsel %vm1904, %v2924, 0
    %v3054 = vsel %vm1904, %v2925, 0
    %v3057 = vsel %vm1904, %v3025, 0
    %3059 = vmatpush.bf16.msra.mxu0 0
    %3060 = vmatpush.bf16.msra.mxu0 0
    %3061 = vmatpush.bf16.msra.mxu0 0
    %3062 = vmatpush.bf16.msra.mxu0 0
    %3063 = vmatpush.bf16.msra.mxu0 %v3045
    %3064 = vmatpush.bf16.msra.mxu0 %v3044
    %3065 = vmatpush.bf16.msra.mxu0 %v3043
    %3066 = vmatpush.bf16.msra.mxu0 %v3042
    %3067 = vmatmul.bf16.gmra.mxu0 %v3050
    %v3068 = vpop.f32.mrf.mxu0
    %v3069 = vadd.f32 %v3004, %v3068
    %v3070 = vpop.f32.mrf.mxu0
    %v3071 = vadd.f32 %v3006, %v3070
    %3072 = vmatmul.bf16.gmra.mxu0 %v3052
    %v3073 = vpop.f32.mrf.mxu0
    %v3074 = vadd.f32 %v3009, %v3073
    %v3075 = vpop.f32.mrf.mxu0
    %v3076 = vadd.f32 %v3011, %v3075
    %3077 = vmatmul.bf16.gmra.mxu0 %v3054
    %v3078 = vpop.f32.mrf.mxu0
    %v3079 = vadd.f32 %v3014, %v3078
    %v3080 = vpop.f32.mrf.mxu0
    %v3081 = vadd.f32 %v3016, %v3080
    %3082 = vmatmul.bf16.gmra.mxu0 %v3057
    %v3083 = vpop.f32.mrf.mxu0
    %v3084 = vadd.f32 %v3019, %v3083
    %v3085 = vpop.f32.mrf.mxu0
    %v3086 = vadd.f32 %v3021, %v3085
    %3087 = vdwg.mxu0
    %v3088 = vld [vmem:[#allocation4] sm:$0xe]
    %s3089 = scalar_lea.vmem %s23, 64
    %v3090 = vld [vmem:[%s3089] sm:$0xf]
    %v3091 = vld [vmem:[%s3089 + $0x4] sm:$0xf]
    %v3092 = vld [vmem:[%s3089 + $0x8] sm:$0xf]
    %v3093 = vld [vmem:[%s3089 + $0xc] sm:$0xf]
    %v3094 = vld [vmem:[%s3089 + $0x10] sm:$0xf]
    %v3095 = vld [vmem:[%s3089 + $0x14] sm:$0xf]
    %v3096 = vld [vmem:[%s3089 + $0x18] sm:$0xf]
    %v3097 = vld [vmem:[%s3089 + $0x1c] sm:$0xf]
    %v3099 = vunpack.c.l.b16 %v3088
    %v3100 = vpack.c.b16 %v2916, %v3099
    %v3101 = vrot.slane %v3100, 1
    %v3102 = vrot.slane %v2924, 1
    %v3103 = vsel %vm2024, %v3101, %v3102
    %v3104 = vrot.slane %v2925, 1
    %v3105 = vsel %vm2024, %v3102, %v3104
    %v3106 = vrot.slane %v2926, 1
    %v3107 = vsel %vm2024, %v3104, %v3106
    %v3116 = vunpack.c.l.b16 %v3090
    %v3117 = vunpack.c.l.b16 %v3091
    %v3118 = vunpack.c.l.b16 %v3092
    %v3119 = vunpack.c.l.b16 %v3093
    %v3120 = vunpack.c.l.b16 %v3094
    %v3121 = vunpack.c.l.b16 %v3095
    %v3122 = vunpack.c.l.b16 %v3096
    %v3123 = vunpack.c.l.b16 %v3097
    %v3124 = vpack.c.b16 %v3117, %v3116
    %v3125 = vpack.c.b16 %v3119, %v3118
    %v3126 = vpack.c.b16 %v3121, %v3120
    %v3127 = vpack.c.b16 %v3123, %v3122
    %v3133 = vsel %vm1904, %v3103, 0
    %v3136 = vsel %vm1904, %v3105, 0
    %v3139 = vsel %vm1904, %v3107, 0
    %v3142 = vsel %vm1904, %v3106, 0
    %3144 = vmatpush.bf16.msra.mxu0 0
    %3145 = vmatpush.bf16.msra.mxu0 0
    %3146 = vmatpush.bf16.msra.mxu0 0
    %3147 = vmatpush.bf16.msra.mxu0 0
    %3148 = vmatpush.bf16.msra.mxu0 %v3127
    %3149 = vmatpush.bf16.msra.mxu0 %v3126
    %3150 = vmatpush.bf16.msra.mxu0 %v3125
    %3151 = vmatpush.bf16.msra.mxu0 %v3124
    %3152 = vmatmul.bf16.gmra.mxu0 %v3133
    %v3153 = vpop.f32.mrf.mxu0
    %v3154 = vadd.f32 0.0, %v3153
    %v3155 = vpop.f32.mrf.mxu0
    %v3156 = vadd.f32 0.0, %v3155
    %3157 = vmatmul.bf16.gmra.mxu0 %v3136
    %v3158 = vpop.f32.mrf.mxu0
    %v3159 = vadd.f32 0.0, %v3158
    %v3160 = vpop.f32.mrf.mxu0
    %v3161 = vadd.f32 0.0, %v3160
    %3162 = vmatmul.bf16.gmra.mxu0 %v3139
    %v3163 = vpop.f32.mrf.mxu0
    %v3164 = vadd.f32 0.0, %v3163
    %v3165 = vpop.f32.mrf.mxu0
    %v3166 = vadd.f32 0.0, %v3165
    %3167 = vmatmul.bf16.gmra.mxu0 %v3142
    %v3168 = vpop.f32.mrf.mxu0
    %v3169 = vadd.f32 0.0, %v3168
    %v3170 = vpop.f32.mrf.mxu0
    %v3171 = vadd.f32 0.0, %v3170
    %3172 = vdwg.mxu0
    %v3173 = vadd.f32 %v3069, %v3154
    %v3174 = vadd.f32 %v3071, %v3156
    %v3175 = vadd.f32 %v3074, %v3159
    %v3176 = vadd.f32 %v3076, %v3161
    %v3177 = vadd.f32 %v3079, %v3164
    %v3178 = vadd.f32 %v3081, %v3166
    %v3179 = vadd.f32 %v3084, %v3169
    %v3180 = vadd.f32 %v3086, %v3171
    %v3181 = vld [vmem:[#allocation4] sm:$0x8]
    %v3182 = vld [vmem:[#allocation4 + $0x1c] sm:$0xf]
    %s3183 = scalar_lea.vmem %s23, 96
    %v3184 = vld [vmem:[%s3183] sm:$0xf]
    %v3185 = vld [vmem:[%s3183 + $0x4] sm:$0xf]
    %v3186 = vld [vmem:[%s3183 + $0x8] sm:$0xf]
    %v3187 = vld [vmem:[%s3183 + $0xc] sm:$0xf]
    %v3188 = vld [vmem:[%s3183 + $0x10] sm:$0xf]
    %v3189 = vld [vmem:[%s3183 + $0x14] sm:$0xf]
    %v3190 = vld [vmem:[%s3183 + $0x18] sm:$0xf]
    %v3191 = vld [vmem:[%s3183 + $0x1c] sm:$0xf]
    %v3194 = vunpack.c.l.b16 %v3181
    %v3195 = vunpack.c.l.b16 %v3182
    %v3196 = vpack.c.b16 %v2916, %v3194
    %v3197 = vpack.c.b16 %v3195, %v2921
    %v3198 = vrot.slane %v3196, 3
    %v3199 = vrot.slane %v2924, 3
    %v3200 = vsel %vm2122, %v3198, %v3199
    %v3201 = vrot.slane %v2925, 3
    %v3202 = vsel %vm2122, %v3199, %v3201
    %v3203 = vrot.slane %v3197, 3
    %v3204 = vsel %vm2122, %v3201, %v3203
    %v3213 = vunpack.c.l.b16 %v3184
    %v3214 = vunpack.c.l.b16 %v3185
    %v3215 = vunpack.c.l.b16 %v3186
    %v3216 = vunpack.c.l.b16 %v3187
    %v3217 = vunpack.c.l.b16 %v3188
    %v3218 = vunpack.c.l.b16 %v3189
    %v3219 = vunpack.c.l.b16 %v3190
    %v3220 = vunpack.c.l.b16 %v3191
    %v3221 = vpack.c.b16 %v3214, %v3213
    %v3222 = vpack.c.b16 %v3216, %v3215
    %v3223 = vpack.c.b16 %v3218, %v3217
    %v3224 = vpack.c.b16 %v3220, %v3219
    %v3230 = vsel %vm1904, %v3200, 0
    %v3233 = vsel %vm1904, %v3202, 0
    %v3236 = vsel %vm1904, %v3204, 0
    %v3239 = vsel %vm1904, %v3203, 0
    %3241 = vmatpush.bf16.msra.mxu0 0
    %3242 = vmatpush.bf16.msra.mxu0 0
    %3243 = vmatpush.bf16.msra.mxu0 0
    %3244 = vmatpush.bf16.msra.mxu0 0
    %3245 = vmatpush.bf16.msra.mxu0 %v3224
    %3246 = vmatpush.bf16.msra.mxu0 %v3223
    %3247 = vmatpush.bf16.msra.mxu0 %v3222
    %3248 = vmatpush.bf16.msra.mxu0 %v3221
    %3249 = vmatmul.bf16.gmra.mxu0 %v3230
    %v3250 = vpop.f32.mrf.mxu0
    %v3251 = vadd.f32 0.0, %v3250
    %v3252 = vpop.f32.mrf.mxu0
    %v3253 = vadd.f32 0.0, %v3252
    %3254 = vmatmul.bf16.gmra.mxu0 %v3233
    %v3255 = vpop.f32.mrf.mxu0
    %v3256 = vadd.f32 0.0, %v3255
    %v3257 = vpop.f32.mrf.mxu0
    %v3258 = vadd.f32 0.0, %v3257
    %3259 = vmatmul.bf16.gmra.mxu0 %v3236
    %v3260 = vpop.f32.mrf.mxu0
    %v3261 = vadd.f32 0.0, %v3260
    %v3262 = vpop.f32.mrf.mxu0
    %v3263 = vadd.f32 0.0, %v3262
    %3264 = vmatmul.bf16.gmra.mxu0 %v3239
    %v3265 = vpop.f32.mrf.mxu0
    %v3266 = vadd.f32 0.0, %v3265
    %v3267 = vpop.f32.mrf.mxu0
    %v3268 = vadd.f32 0.0, %v3267
    %3269 = vdwg.mxu0
    %v3270 = vadd.f32 %v3173, %v3251
    %v3271 = vadd.f32 %v3174, %v3253
    %v3272 = vadd.f32 %v3175, %v3256
    %v3273 = vadd.f32 %v3176, %v3258
    %v3274 = vadd.f32 %v3177, %v3261
    %v3275 = vadd.f32 %v3178, %v3263
    %v3276 = vadd.f32 %v3179, %v3266
    %v3277 = vadd.f32 %v3180, %v3268
    %v3278 = vld [vmem:[#allocation4] sm:$0x8]
    %v3279 = vld [vmem:[#allocation4 + $0x4] sm:$0xf]
    %v3280 = vld [vmem:[#allocation4 + $0x8] sm:$0xf]
    %v3281 = vld [vmem:[#allocation4 + $0xc] sm:$0xf]
    %v3282 = vld [vmem:[#allocation4 + $0x10] sm:$0xf]
    %v3283 = vld [vmem:[#allocation4 + $0x14] sm:$0xf]
    %v3284 = vld [vmem:[#allocation4 + $0x18] sm:$0xf]
    %v3285 = vld [vmem:[#allocation4 + $0x1c] sm:$0xf]
    %v3286 = vld [vmem:[#allocation4 + $0x20] sm:$0x1]
    %s3287 = scalar_lea.vmem %s23, 128
    %v3288 = vld [vmem:[%s3287] sm:$0xf]
    %v3289 = vld [vmem:[%s3287 + $0x4] sm:$0xf]
    %v3290 = vld [vmem:[%s3287 + $0x8] sm:$0xf]
    %v3291 = vld [vmem:[%s3287 + $0xc] sm:$0xf]
    %v3292 = vld [vmem:[%s3287 + $0x10] sm:$0xf]
    %v3293 = vld [vmem:[%s3287 + $0x14] sm:$0xf]
    %v3294 = vld [vmem:[%s3287 + $0x18] sm:$0xf]
    %v3295 = vld [vmem:[%s3287 + $0x1c] sm:$0xf]
    %v3305 = vunpack.c.l.b16 %v3278
    %v3306 = vunpack.c.l.b16 %v3279
    %v3307 = vunpack.c.l.b16 %v3280
    %v3308 = vunpack.c.l.b16 %v3281
    %v3309 = vunpack.c.l.b16 %v3282
    %v3310 = vunpack.c.l.b16 %v3283
    %v3311 = vunpack.c.l.b16 %v3284
    %v3312 = vunpack.c.l.b16 %v3285
    %v3313 = vunpack.c.l.b16 %v3286
    %v3314 = vpack.c.b16 %v3306, %v3305
    %v3315 = vpack.c.b16 %v3308, %v3307
    %v3316 = vpack.c.b16 %v3310, %v3309
    %v3317 = vpack.c.b16 %v3312, %v3311
    %v3318 = vpack.c.b16 %v3313, %v3313
    %v3320 = vshrl.u32 %v3314, 16
    %v3322 = vrot.slane %v3320, 3
    %v3323 = vshll.u32 %v3314, 16
    %v3325 = vrot.slane %v3323, 4
    %v3326 = vor.u32 %v3322, %v3325
    %v3328 = vshrl.u32 %v3315, 16
    %v3330 = vrot.slane %v3328, 3
    %v3331 = vshll.u32 %v3315, 16
    %v3333 = vrot.slane %v3331, 4
    %v3334 = vor.u32 %v3330, %v3333
    %v3335 = vsel %vm2244, %v3326, %v3334
    %v3337 = vshrl.u32 %v3316, 16
    %v3339 = vrot.slane %v3337, 3
    %v3340 = vshll.u32 %v3316, 16
    %v3342 = vrot.slane %v3340, 4
    %v3343 = vor.u32 %v3339, %v3342
    %v3344 = vsel %vm2244, %v3334, %v3343
    %v3346 = vshrl.u32 %v3317, 16
    %v3348 = vrot.slane %v3346, 3
    %v3349 = vshll.u32 %v3317, 16
    %v3351 = vrot.slane %v3349, 4
    %v3352 = vor.u32 %v3348, %v3351
    %v3353 = vsel %vm2244, %v3343, %v3352
    %v3355 = vshll.u32 %v3318, 16
    %v3357 = vrot.slane %v3355, 4
    %v3358 = vsel %vm2244, %v3352, %v3357
    %v3367 = vunpack.c.l.b16 %v3288
    %v3368 = vunpack.c.l.b16 %v3289
    %v3369 = vunpack.c.l.b16 %v3290
    %v3370 = vunpack.c.l.b16 %v3291
    %v3371 = vunpack.c.l.b16 %v3292
    %v3372 = vunpack.c.l.b16 %v3293
    %v3373 = vunpack.c.l.b16 %v3294
    %v3374 = vunpack.c.l.b16 %v3295
    %v3375 = vpack.c.b16 %v3368, %v3367
    %v3376 = vpack.c.b16 %v3370, %v3369
    %v3377 = vpack.c.b16 %v3372, %v3371
    %v3378 = vpack.c.b16 %v3374, %v3373
    %v3384 = vsel %vm1904, %v3335, 0
    %v3387 = vsel %vm1904, %v3344, 0
    %v3390 = vsel %vm1904, %v3353, 0
    %v3393 = vsel %vm1904, %v3358, 0
    %3395 = vmatpush.bf16.msra.mxu0 0
    %3396 = vmatpush.bf16.msra.mxu0 0
    %3397 = vmatpush.bf16.msra.mxu0 0
    %3398 = vmatpush.bf16.msra.mxu0 0
    %3399 = vmatpush.bf16.msra.mxu0 %v3378
    %3400 = vmatpush.bf16.msra.mxu0 %v3377
    %3401 = vmatpush.bf16.msra.mxu0 %v3376
    %3402 = vmatpush.bf16.msra.mxu0 %v3375
    %3403 = vmatmul.bf16.gmra.mxu0 %v3384
    %v3404 = vpop.f32.mrf.mxu0
    %v3405 = vadd.f32 0.0, %v3404
    %v3406 = vpop.f32.mrf.mxu0
    %v3407 = vadd.f32 0.0, %v3406
    %3408 = vmatmul.bf16.gmra.mxu0 %v3387
    %v3409 = vpop.f32.mrf.mxu0
    %v3410 = vadd.f32 0.0, %v3409
    %v3411 = vpop.f32.mrf.mxu0
    %v3412 = vadd.f32 0.0, %v3411
    %3413 = vmatmul.bf16.gmra.mxu0 %v3390
    %v3414 = vpop.f32.mrf.mxu0
    %v3415 = vadd.f32 0.0, %v3414
    %v3416 = vpop.f32.mrf.mxu0
    %v3417 = vadd.f32 0.0, %v3416
    %3418 = vmatmul.bf16.gmra.mxu0 %v3393
    %v3419 = vpop.f32.mrf.mxu0
    %v3420 = vadd.f32 0.0, %v3419
    %v3421 = vpop.f32.mrf.mxu0
    %v3422 = vadd.f32 0.0, %v3421
    %3423 = vdwg.mxu0
    %v3424 = vadd.f32 %v3270, %v3405
    %v3425 = vadd.f32 %v3271, %v3407
    %v3426 = vadd.f32 %v3272, %v3410
    %v3427 = vadd.f32 %v3273, %v3412
    %v3428 = vadd.f32 %v3274, %v3415
    %v3429 = vadd.f32 %v3275, %v3417
    %v3430 = vadd.f32 %v3276, %v3420
    %v3431 = vadd.f32 %v3277, %v3422
    %s3432 = scalar_lea.vmem %s23, 160
    %v3433 = vld [vmem:[%s3432] sm:$0xf]
    %v3434 = vld [vmem:[%s3432 + $0x4] sm:$0xf]
    %v3435 = vld [vmem:[%s3432 + $0x8] sm:$0xf]
    %v3436 = vld [vmem:[%s3432 + $0xc] sm:$0xf]
    %v3437 = vld [vmem:[%s3432 + $0x10] sm:$0xf]
    %v3438 = vld [vmem:[%s3432 + $0x14] sm:$0xf]
    %v3439 = vld [vmem:[%s3432 + $0x18] sm:$0xf]
    %v3440 = vld [vmem:[%s3432 + $0x1c] sm:$0xf]
    %v3441 = vpack.c.b16 %v3307, %v3306
    %v3442 = vpack.c.b16 %v3309, %v3308
    %v3443 = vpack.c.b16 %v3311, %v3310
    %v3444 = vpack.c.b16 %v3313, %v3312
    %v3453 = vunpack.c.l.b16 %v3433
    %v3454 = vunpack.c.l.b16 %v3434
    %v3455 = vunpack.c.l.b16 %v3435
    %v3456 = vunpack.c.l.b16 %v3436
    %v3457 = vunpack.c.l.b16 %v3437
    %v3458 = vunpack.c.l.b16 %v3438
    %v3459 = vunpack.c.l.b16 %v3439
    %v3460 = vunpack.c.l.b16 %v3440
    %v3461 = vpack.c.b16 %v3454, %v3453
    %v3462 = vpack.c.b16 %v3456, %v3455
    %v3463 = vpack.c.b16 %v3458, %v3457
    %v3464 = vpack.c.b16 %v3460, %v3459
    %v3470 = vsel %vm1904, %v3441, 0
    %v3473 = vsel %vm1904, %v3442, 0
    %v3476 = vsel %vm1904, %v3443, 0
    %v3479 = vsel %vm1904, %v3444, 0
    %3481 = vmatpush.bf16.msra.mxu0 0
    %3482 = vmatpush.bf16.msra.mxu0 0
    %3483 = vmatpush.bf16.msra.mxu0 0
    %3484 = vmatpush.bf16.msra.mxu0 0
    %3485 = vmatpush.bf16.msra.mxu0 %v3464
    %3486 = vmatpush.bf16.msra.mxu0 %v3463
    %3487 = vmatpush.bf16.msra.mxu0 %v3462
    %3488 = vmatpush.bf16.msra.mxu0 %v3461
    %3489 = vmatmul.bf16.gmra.mxu0 %v3470
    %v3490 = vpop.f32.mrf.mxu0
    %v3491 = vadd.f32 0.0, %v3490
    %v3492 = vpop.f32.mrf.mxu0
    %v3493 = vadd.f32 0.0, %v3492
    %3494 = vmatmul.bf16.gmra.mxu0 %v3473
    %v3495 = vpop.f32.mrf.mxu0
    %v3496 = vadd.f32 0.0, %v3495
    %v3497 = vpop.f32.mrf.mxu0
    %v3498 = vadd.f32 0.0, %v3497
    %3499 = vmatmul.bf16.gmra.mxu0 %v3476
    %v3500 = vpop.f32.mrf.mxu0
    %v3501 = vadd.f32 0.0, %v3500
    %v3502 = vpop.f32.mrf.mxu0
    %v3503 = vadd.f32 0.0, %v3502
    %3504 = vmatmul.bf16.gmra.mxu0 %v3479
    %v3505 = vpop.f32.mrf.mxu0
    %v3506 = vadd.f32 0.0, %v3505
    %v3507 = vpop.f32.mrf.mxu0
    %v3508 = vadd.f32 0.0, %v3507
    %3509 = vdwg.mxu0
    %v3510 = vadd.f32 %v3424, %v3491
    %v3511 = vadd.f32 %v3425, %v3493
    %v3512 = vadd.f32 %v3426, %v3496
    %v3513 = vadd.f32 %v3427, %v3498
    %v3514 = vadd.f32 %v3428, %v3501
    %v3515 = vadd.f32 %v3429, %v3503
    %v3516 = vadd.f32 %v3430, %v3506
    %v3517 = vadd.f32 %v3431, %v3508
    %v3518 = vld [vmem:[#allocation4 + $0x4] sm:$0xc]
    %v3519 = vld [vmem:[#allocation4 + $0x20] sm:$0x7]
    %s3520 = scalar_lea.vmem %s23, 192
    %v3521 = vld [vmem:[%s3520] sm:$0xf]
    %v3522 = vld [vmem:[%s3520 + $0x4] sm:$0xf]
    %v3523 = vld [vmem:[%s3520 + $0x8] sm:$0xf]
    %v3524 = vld [vmem:[%s3520 + $0xc] sm:$0xf]
    %v3525 = vld [vmem:[%s3520 + $0x10] sm:$0xf]
    %v3526 = vld [vmem:[%s3520 + $0x14] sm:$0xf]
    %v3527 = vld [vmem:[%s3520 + $0x18] sm:$0xf]
    %v3528 = vld [vmem:[%s3520 + $0x1c] sm:$0xf]
    %v3531 = vunpack.c.l.b16 %v3518
    %v3532 = vunpack.c.l.b16 %v3519
    %v3533 = vpack.c.b16 %v3307, %v3531
    %v3534 = vpack.c.b16 %v3532, %v3312
    %v3535 = vrot.slane %v3533, 2
    %v3536 = vrot.slane %v3442, 2
    %v3537 = vsel %vm2461, %v3535, %v3536
    %v3538 = vrot.slane %v3443, 2
    %v3539 = vsel %vm2461, %v3536, %v3538
    %v3540 = vrot.slane %v3534, 2
    %v3541 = vsel %vm2461, %v3538, %v3540
    %v3550 = vunpack.c.l.b16 %v3521
    %v3551 = vunpack.c.l.b16 %v3522
    %v3552 = vunpack.c.l.b16 %v3523
    %v3553 = vunpack.c.l.b16 %v3524
    %v3554 = vunpack.c.l.b16 %v3525
    %v3555 = vunpack.c.l.b16 %v3526
    %v3556 = vunpack.c.l.b16 %v3527
    %v3557 = vunpack.c.l.b16 %v3528
    %v3558 = vpack.c.b16 %v3551, %v3550
    %v3559 = vpack.c.b16 %v3553, %v3552
    %v3560 = vpack.c.b16 %v3555, %v3554
    %v3561 = vpack.c.b16 %v3557, %v3556
    %v3567 = vsel %vm1904, %v3537, 0
    %v3570 = vsel %vm1904, %v3539, 0
    %v3573 = vsel %vm1904, %v3541, 0
    %v3576 = vsel %vm1904, %v3540, 0
    %3578 = vmatpush.bf16.msra.mxu0 0
    %3579 = vmatpush.bf16.msra.mxu0 0
    %3580 = vmatpush.bf16.msra.mxu0 0
    %3581 = vmatpush.bf16.msra.mxu0 0
    %3582 = vmatpush.bf16.msra.mxu0 %v3561
    %3583 = vmatpush.bf16.msra.mxu0 %v3560
    %3584 = vmatpush.bf16.msra.mxu0 %v3559
    %3585 = vmatpush.bf16.msra.mxu0 %v3558
    %3586 = vmatmul.bf16.gmra.mxu0 %v3567
    %v3587 = vpop.f32.mrf.mxu0
    %v3588 = vadd.f32 0.0, %v3587
    %v3589 = vpop.f32.mrf.mxu0
    %v3590 = vadd.f32 0.0, %v3589
    %3591 = vmatmul.bf16.gmra.mxu0 %v3570
    %v3592 = vpop.f32.mrf.mxu0
    %v3593 = vadd.f32 0.0, %v3592
    %v3594 = vpop.f32.mrf.mxu0
    %v3595 = vadd.f32 0.0, %v3594
    %3596 = vmatmul.bf16.gmra.mxu0 %v3573
    %v3597 = vpop.f32.mrf.mxu0
    %v3598 = vadd.f32 0.0, %v3597
    %v3599 = vpop.f32.mrf.mxu0
    %v3600 = vadd.f32 0.0, %v3599
    %3601 = vmatmul.bf16.gmra.mxu0 %v3576
    %v3602 = vpop.f32.mrf.mxu0
    %v3603 = vadd.f32 0.0, %v3602
    %v3604 = vpop.f32.mrf.mxu0
    %v3605 = vadd.f32 0.0, %v3604
    %3606 = vdwg.mxu0
    %v3607 = vadd.f32 %v3510, %v3588
    %v3608 = vadd.f32 %v3511, %v3590
    %v3609 = vadd.f32 %v3512, %v3593
    %v3610 = vadd.f32 %v3513, %v3595
    %v3611 = vadd.f32 %v3514, %v3598
    %v3612 = vadd.f32 %v3515, %v3600
    %v3613 = vadd.f32 %v3516, %v3603
    %v3614 = vadd.f32 %v3517, %v3605
    %v3615 = vld [vmem:[#allocation4 + $0x20] sm:$0xf]
    %s3616 = scalar_lea.vmem %s23, 224
    %v3617 = vld [vmem:[%s3616] sm:$0xf]
    %v3618 = vld [vmem:[%s3616 + $0x4] sm:$0xf]
    %v3619 = vld [vmem:[%s3616 + $0x8] sm:$0xf]
    %v3620 = vld [vmem:[%s3616 + $0xc] sm:$0xf]
    %v3621 = vld [vmem:[%s3616 + $0x10] sm:$0xf]
    %v3622 = vld [vmem:[%s3616 + $0x14] sm:$0xf]
    %v3623 = vld [vmem:[%s3616 + $0x18] sm:$0xf]
    %v3624 = vld [vmem:[%s3616 + $0x1c] sm:$0xf]
    %v3626 = vunpack.c.l.b16 %v3615
    %v3627 = vpack.c.b16 %v3626, %v3312
    %v3629 = vshrl.u32 %v3533, 16
    %v3631 = vrot.slane %v3629, 2
    %v3632 = vshll.u32 %v3533, 16
    %v3634 = vrot.slane %v3632, 3
    %v3635 = vor.u32 %v3631, %v3634
    %v3636 = vshrl.u32 %v3442, 16
    %v3638 = vrot.slane %v3636, 2
    %v3639 = vshll.u32 %v3442, 16
    %v3641 = vrot.slane %v3639, 3
    %v3642 = vor.u32 %v3638, %v3641
    %v3643 = vsel %vm2555, %v3635, %v3642
    %v3644 = vshrl.u32 %v3443, 16
    %v3646 = vrot.slane %v3644, 2
    %v3647 = vshll.u32 %v3443, 16
    %v3649 = vrot.slane %v3647, 3
    %v3650 = vor.u32 %v3646, %v3649
    %v3651 = vsel %vm2555, %v3642, %v3650
    %v3653 = vshrl.u32 %v3627, 16
    %v3655 = vrot.slane %v3653, 2
    %v3656 = vshll.u32 %v3627, 16
    %v3658 = vrot.slane %v3656, 3
    %v3659 = vor.u32 %v3655, %v3658
    %v3660 = vsel %vm2555, %v3650, %v3659
    %v3669 = vunpack.c.l.b16 %v3617
    %v3670 = vunpack.c.l.b16 %v3618
    %v3671 = vunpack.c.l.b16 %v3619
    %v3672 = vunpack.c.l.b16 %v3620
    %v3673 = vunpack.c.l.b16 %v3621
    %v3674 = vunpack.c.l.b16 %v3622
    %v3675 = vunpack.c.l.b16 %v3623
    %v3676 = vunpack.c.l.b16 %v3624
    %v3677 = vpack.c.b16 %v3670, %v3669
    %v3678 = vpack.c.b16 %v3672, %v3671
    %v3679 = vpack.c.b16 %v3674, %v3673
    %v3680 = vpack.c.b16 %v3676, %v3675
    %v3686 = vsel %vm1904, %v3643, 0
    %v3689 = vsel %vm1904, %v3651, 0
    %v3692 = vsel %vm1904, %v3660, 0
    %v3695 = vsel %vm1904, %v3659, 0
    %3697 = vmatpush.bf16.msra.mxu0 0
    %3698 = vmatpush.bf16.msra.mxu0 0
    %3699 = vmatpush.bf16.msra.mxu0 0
    %3700 = vmatpush.bf16.msra.mxu0 0
    %3701 = vmatpush.bf16.msra.mxu0 %v3680
    %3702 = vmatpush.bf16.msra.mxu0 %v3679
    %3703 = vmatpush.bf16.msra.mxu0 %v3678
    %3704 = vmatpush.bf16.msra.mxu0 %v3677
    %3705 = vmatmul.bf16.gmra.mxu0 %v3686
    %v3706 = vpop.f32.mrf.mxu0
    %v3707 = vadd.f32 0.0, %v3706
    %v3708 = vpop.f32.mrf.mxu0
    %v3709 = vadd.f32 0.0, %v3708
    %3710 = vmatmul.bf16.gmra.mxu0 %v3689
    %v3711 = vpop.f32.mrf.mxu0
    %v3712 = vadd.f32 0.0, %v3711
    %v3713 = vpop.f32.mrf.mxu0
    %v3714 = vadd.f32 0.0, %v3713
    %3715 = vmatmul.bf16.gmra.mxu0 %v3692
    %v3716 = vpop.f32.mrf.mxu0
    %v3717 = vadd.f32 0.0, %v3716
    %v3718 = vpop.f32.mrf.mxu0
    %v3719 = vadd.f32 0.0, %v3718
    %3720 = vmatmul.bf16.gmra.mxu0 %v3695
    %v3721 = vpop.f32.mrf.mxu0
    %v3722 = vadd.f32 0.0, %v3721
    %v3723 = vpop.f32.mrf.mxu0
    %v3724 = vadd.f32 0.0, %v3723
    %3725 = vdwg.mxu0
    %v3726 = vadd.f32 %v3607, %v3707
    %v3727 = vadd.f32 %v3608, %v3709
    %v3728 = vadd.f32 %v3609, %v3712
    %v3729 = vadd.f32 %v3610, %v3714
    %v3730 = vadd.f32 %v3611, %v3717
    %v3731 = vadd.f32 %v3612, %v3719
    %v3732 = vadd.f32 %v3613, %v3722
    %v3733 = vadd.f32 %v3614, %v3724
    %v3734 = vld [vmem:[#allocation4 + $0x4] sm:$0x8]
    %s3735 = scalar_lea.vmem %s23, 256
    %v3736 = vld [vmem:[%s3735] sm:$0xf]
    %v3737 = vld [vmem:[%s3735 + $0x4] sm:$0xf]
    %v3738 = vld [vmem:[%s3735 + $0x8] sm:$0xf]
    %v3739 = vld [vmem:[%s3735 + $0xc] sm:$0xf]
    %v3740 = vld [vmem:[%s3735 + $0x10] sm:$0xf]
    %v3741 = vld [vmem:[%s3735 + $0x14] sm:$0xf]
    %v3742 = vld [vmem:[%s3735 + $0x18] sm:$0xf]
    %v3743 = vld [vmem:[%s3735 + $0x1c] sm:$0xf]
    %v3745 = vunpack.c.l.b16 %v3734
    %v3746 = vpack.c.b16 %v3307, %v3745
    %v3747 = vrot.slane %v3746, 3
    %v3748 = vrot.slane %v3442, 3
    %v3749 = vsel %vm2122, %v3747, %v3748
    %v3750 = vrot.slane %v3443, 3
    %v3751 = vsel %vm2122, %v3748, %v3750
    %v3752 = vrot.slane %v3627, 3
    %v3753 = vsel %vm2122, %v3750, %v3752
    %v3762 = vunpack.c.l.b16 %v3736
    %v3763 = vunpack.c.l.b16 %v3737
    %v3764 = vunpack.c.l.b16 %v3738
    %v3765 = vunpack.c.l.b16 %v3739
    %v3766 = vunpack.c.l.b16 %v3740
    %v3767 = vunpack.c.l.b16 %v3741
    %v3768 = vunpack.c.l.b16 %v3742
    %v3769 = vunpack.c.l.b16 %v3743
    %v3770 = vpack.c.b16 %v3763, %v3762
    %v3771 = vpack.c.b16 %v3765, %v3764
    %v3772 = vpack.c.b16 %v3767, %v3766
    %v3773 = vpack.c.b16 %v3769, %v3768
    %v3779 = vsel %vm1904, %v3749, 0
    %v3782 = vsel %vm1904, %v3751, 0
    %v3785 = vsel %vm1904, %v3753, 0
    %v3788 = vsel %vm1904, %v3752, 0
    %3790 = vmatpush.bf16.msra.mxu0 0
    %3791 = vmatpush.bf16.msra.mxu0 0
    %3792 = vmatpush.bf16.msra.mxu0 0
    %3793 = vmatpush.bf16.msra.mxu0 0
    %3794 = vmatpush.bf16.msra.mxu0 %v3773
    %3795 = vmatpush.bf16.msra.mxu0 %v3772
    %3796 = vmatpush.bf16.msra.mxu0 %v3771
    %3797 = vmatpush.bf16.msra.mxu0 %v3770
    %3798 = vmatmul.bf16.gmra.mxu0 %v3779
    %v3799 = vpop.f32.mrf.mxu0
    %v3800 = vadd.f32 0.0, %v3799
    %v3801 = vpop.f32.mrf.mxu0
    %v3802 = vadd.f32 0.0, %v3801
    %3803 = vmatmul.bf16.gmra.mxu0 %v3782
    %v3804 = vpop.f32.mrf.mxu0
    %v3805 = vadd.f32 0.0, %v3804
    %v3806 = vpop.f32.mrf.mxu0
    %v3807 = vadd.f32 0.0, %v3806
    %3808 = vmatmul.bf16.gmra.mxu0 %v3785
    %v3809 = vpop.f32.mrf.mxu0
    %v3810 = vadd.f32 0.0, %v3809
    %v3811 = vpop.f32.mrf.mxu0
    %v3812 = vadd.f32 0.0, %v3811
    %3813 = vmatmul.bf16.gmra.mxu0 %v3788
    %v3814 = vpop.f32.mrf.mxu0
    %v3815 = vadd.f32 0.0, %v3814
    %v3816 = vpop.f32.mrf.mxu0
    %v3817 = vadd.f32 0.0, %v3816
    %3818 = vdwg.mxu0
    %v3819 = vadd.f32 %v3726, %v3800
    %v3820 = vadd.f32 %v3727, %v3802
    %v3821 = vadd.f32 %v3728, %v3805
    %v3822 = vadd.f32 %v3729, %v3807
    %v3823 = vadd.f32 %v3730, %v3810
    %v3824 = vadd.f32 %v3731, %v3812
    %v3825 = vadd.f32 %v3732, %v3815
    %v3826 = vadd.f32 %v3733, %v3817
    %v3827 = vld [vmem:[%s25] sm:$0x1]
    %v3829 = vperm.slane %v3827, 0
    %v3831 = vadd.f32 %v3819, %v3829
    %v3832 = vadd.f32 %v3820, %v3829
    %v3833 = vadd.f32 %v3821, %v3829
    %v3834 = vadd.f32 %v3822, %v3829
    %v3835 = vadd.f32 %v3823, %v3829
    %v3836 = vadd.f32 %v3824, %v3829
    %v3837 = vadd.f32 %v3825, %v3829
    %v3838 = vadd.f32 %v3826, %v3829
    %v3839 = vld [vmem:[#allocation3] sm:$0x8]
    %v3840 = vld [vmem:[#allocation3 + $0x4] sm:$0xf]
    %v3841 = vld [vmem:[#allocation3 + $0x8] sm:$0xf]
    %v3842 = vld [vmem:[#allocation3 + $0xc] sm:$0xf]
    %v3843 = vld [vmem:[#allocation3 + $0x10] sm:$0xf]
    %v3844 = vld [vmem:[#allocation3 + $0x14] sm:$0xf]
    %v3845 = vld [vmem:[#allocation3 + $0x18] sm:$0xf]
    %v3846 = vld [vmem:[#allocation3 + $0x1c] sm:$0xf]
    %v3847 = vld [vmem:[#allocation3 + $0x20] sm:$0x1]
    %v3848 = vunpack.c.l.bf16 %v3839
    %v3849 = vunpack.c.l.bf16 %v3840
    %v3850 = vunpack.c.l.bf16 %v3841
    %v3851 = vunpack.c.l.bf16 %v3842
    %v3852 = vunpack.c.l.bf16 %v3843
    %v3853 = vunpack.c.l.bf16 %v3844
    %v3854 = vunpack.c.l.bf16 %v3845
    %v3855 = vunpack.c.l.bf16 %v3846
    %v3856 = vunpack.c.l.bf16 %v3847
    %vm3866 = vcmask 1040384
    %v3867 = vrot.slane %v3848, 7
    %v3868 = vrot.slane %v3849, 7
    %v3869 = vsel %vm3866, %v3867, %v3868
    %v3870 = vrot.slane %v3850, 7
    %v3871 = vsel %vm3866, %v3868, %v3870
    %v3872 = vrot.slane %v3851, 7
    %v3873 = vsel %vm3866, %v3870, %v3872
    %v3874 = vrot.slane %v3852, 7
    %v3875 = vsel %vm3866, %v3872, %v3874
    %v3876 = vrot.slane %v3853, 7
    %v3877 = vsel %vm3866, %v3874, %v3876
    %v3878 = vrot.slane %v3854, 7
    %v3879 = vsel %vm3866, %v3876, %v3878
    %v3880 = vrot.slane %v3855, 7
    %v3881 = vsel %vm3866, %v3878, %v3880
    %v3882 = vrot.slane %v3856, 7
    %v3883 = vsel %vm3866, %v3880, %v3882
    %v3892 = vadd.f32 %v3831, %v3869
    %v3893 = vadd.f32 %v3832, %v3871
    %v3894 = vadd.f32 %v3833, %v3873
    %v3895 = vadd.f32 %v3834, %v3875
    %v3896 = vadd.f32 %v3835, %v3877
    %v3897 = vadd.f32 %v3836, %v3879
    %v3898 = vadd.f32 %v3837, %v3881
    %v3899 = vadd.f32 %v3838, %v3883
    %v3900 = vmax.f32 %v3892, 0.0
    %v3901 = vmax.f32 %v3893, 0.0
    %v3902 = vmax.f32 %v3894, 0.0
    %v3903 = vmax.f32 %v3895, 0.0
    %v3904 = vmax.f32 %v3896, 0.0
    %v3905 = vmax.f32 %v3897, 0.0
    %v3906 = vmax.f32 %v3898, 0.0
    %v3907 = vmax.f32 %v3899, 0.0
    %v3908 = vld [vmem:[%s5] sm:$0xf]
    %v3909 = vld [vmem:[%s5 + $0x4] sm:$0xf]
    %v3910 = vld [vmem:[%s5 + $0x8] sm:$0xf]
    %v3911 = vld [vmem:[%s5 + $0xc] sm:$0xf]
    %v3912 = vld [vmem:[%s5 + $0x10] sm:$0xf]
    %v3913 = vld [vmem:[%s5 + $0x14] sm:$0xf]
    %v3914 = vld [vmem:[%s5 + $0x18] sm:$0xf]
    %v3915 = vld [vmem:[%s5 + $0x1c] sm:$0xf]
    %v3916 = vld [vmem:[%s5 + $0x20] sm:$0xf]
    %v3917 = vpack.c.bf16 %v3901, %v3900
    %v3918 = vpack.c.bf16 %v3903, %v3902
    %v3919 = vpack.c.bf16 %v3905, %v3904
    %v3920 = vpack.c.bf16 %v3907, %v3906
    %v3930 = vunpack.c.l.b16 %v3908
    %v3931 = vunpack.c.l.b16 %v3909
    %v3932 = vunpack.c.l.b16 %v3910
    %v3933 = vunpack.c.l.b16 %v3911
    %v3934 = vunpack.c.l.b16 %v3912
    %v3935 = vunpack.c.l.b16 %v3913
    %v3936 = vunpack.c.l.b16 %v3914
    %v3937 = vunpack.c.l.b16 %v3915
    %v3938 = vunpack.c.l.b16 %v3916
    %v3939 = vpack.c.b16 %v3931, %v3930
    %v3940 = vpack.c.b16 %v3933, %v3932
    %v3941 = vpack.c.b16 %v3935, %v3934
    %v3942 = vpack.c.b16 %v3937, %v3936
    %v3943 = vpack.c.b16 %v3938, %v3938
    %v3945 = vsel %vm2811, %v3939, 0
    %v3948 = vsel %vm2811, %v3940, 0
    %v3951 = vsel %vm2811, %v3941, 0
    %v3954 = vsel %vm2811, %v3942, 0
    %v3957 = vsel %vm2811, %v3943, 0
    %v3960 = vsel %vm1072, %v3920, 0
    %3962 = vmatpush.bf16.msra.mxu0 0
    %3963 = vmatpush.bf16.msra.mxu0 0
    %3964 = vmatpush.bf16.msra.mxu0 0
    %3965 = vmatpush.bf16.msra.mxu0 0
    %3966 = vmatpush.bf16.msra.mxu0 %v3960
    %3967 = vmatpush.bf16.msra.mxu0 %v3919
    %3968 = vmatpush.bf16.msra.mxu0 %v3918
    %3969 = vmatpush.bf16.msra.mxu0 %v3917
    %3970 = vmatmul.bf16.gmra.mxu0 %v3945
    %v3971 = vpop.f32.mrf.mxu0
    %v3972 = vadd.f32 0.0, %v3971
    %v3973 = vpop.f32.mrf.mxu0
    %v3974 = vadd.f32 0.0, %v3973
    %3975 = vmatmul.bf16.gmra.mxu0 %v3948
    %v3976 = vpop.f32.mrf.mxu0
    %v3977 = vadd.f32 0.0, %v3976
    %v3978 = vpop.f32.mrf.mxu0
    %v3979 = vadd.f32 0.0, %v3978
    %3980 = vmatmul.bf16.gmra.mxu0 %v3951
    %v3981 = vpop.f32.mrf.mxu0
    %v3982 = vadd.f32 0.0, %v3981
    %v3983 = vpop.f32.mrf.mxu0
    %v3984 = vadd.f32 0.0, %v3983
    %3985 = vmatmul.bf16.gmra.mxu0 %v3954
    %v3986 = vpop.f32.mrf.mxu0
    %v3987 = vadd.f32 0.0, %v3986
    %v3988 = vpop.f32.mrf.mxu0
    %v3989 = vadd.f32 0.0, %v3988
    %3990 = vmatmul.bf16.gmra.mxu0 %v3957
    %v3991 = vpop.f32.mrf.mxu0
    %v3992 = vadd.f32 0.0, %v3991
    %v3993 = vpop.f32.mrf.mxu0
    %3994 = vdwg.mxu0
    %v3995 = vpack.c.bf16 %v3972, %v3972
    %v3996 = vpack.c.bf16 %v3974, %v3974
    %v3997 = vpack.c.bf16 %v3977, %v3977
    %v3998 = vpack.c.bf16 %v3979, %v3979
    %v3999 = vpack.c.bf16 %v3982, %v3982
    %v4000 = vpack.c.bf16 %v3984, %v3984
    %v4001 = vpack.c.bf16 %v3987, %v3987
    %v4002 = vpack.c.bf16 %v3989, %v3989
    %v4003 = vpack.c.bf16 %v3992, %v3992
    %4004 = vst.msk [vmem:[#allocation3] sm:$0xf] %vm642, %v3995
    %4005 = vst.msk [vmem:[#allocation3 + $0x4] sm:$0xf] %vm642, %v3996
    %4006 = vst.msk [vmem:[#allocation3 + $0x8] sm:$0xf] %vm642, %v3997
    %4007 = vst.msk [vmem:[#allocation3 + $0xc] sm:$0xf] %vm642, %v3998
    %4008 = vst.msk [vmem:[#allocation3 + $0x10] sm:$0xf] %vm642, %v3999
    %4009 = vst.msk [vmem:[#allocation3 + $0x14] sm:$0xf] %vm642, %v4000
    %4010 = vst.msk [vmem:[#allocation3 + $0x18] sm:$0xf] %vm642, %v4001
    %4011 = vst.msk [vmem:[#allocation3 + $0x1c] sm:$0xf] %vm642, %v4002
    %4012 = vst.msk [vmem:[#allocation3 + $0x20] sm:$0xf] %vm642, %v4003
    %v4013 = vld [vmem:[#allocation3] sm:$0xf]
    %v4014 = vld [vmem:[#allocation3 + $0x4] sm:$0xf]
    %v4015 = vld [vmem:[#allocation3 + $0x8] sm:$0xf]
    %v4016 = vld [vmem:[#allocation3 + $0xc] sm:$0xf]
    %v4017 = vld [vmem:[#allocation3 + $0x10] sm:$0xf]
    %v4018 = vld [vmem:[#allocation3 + $0x14] sm:$0xf]
    %v4019 = vld [vmem:[#allocation3 + $0x18] sm:$0xf]
    %v4020 = vld [vmem:[#allocation3 + $0x1c] sm:$0x1]
    %v4021 = vld [vmem:[%s27] sm:$0xf]
    %v4022 = vld [vmem:[%s27 + $0x4] sm:$0xf]
    %v4023 = vld [vmem:[%s27 + $0x8] sm:$0xf]
    %v4024 = vld [vmem:[%s27 + $0xc] sm:$0xf]
    %v4025 = vld [vmem:[%s27 + $0x10] sm:$0xf]
    %v4026 = vld [vmem:[%s27 + $0x14] sm:$0xf]
    %v4027 = vld [vmem:[%s27 + $0x18] sm:$0xf]
    %v4028 = vld [vmem:[%s27 + $0x1c] sm:$0xf]
    %v4029 = vld [vmem:[#allocation3 + $0x1c] sm:$0x3]
    %s4030 = scalar_lea.vmem %s27, 32
    %v4031 = vld [vmem:[%s4030] sm:$0xf]
    %v4032 = vld [vmem:[%s4030 + $0x4] sm:$0xf]
    %v4033 = vld [vmem:[%s4030 + $0x8] sm:$0xf]
    %v4034 = vld [vmem:[%s4030 + $0xc] sm:$0xf]
    %v4035 = vld [vmem:[%s4030 + $0x10] sm:$0xf]
    %v4036 = vld [vmem:[%s4030 + $0x14] sm:$0xf]
    %v4037 = vld [vmem:[%s4030 + $0x18] sm:$0xf]
    %v4038 = vld [vmem:[%s4030 + $0x1c] sm:$0xf]
    %v4047 = vunpack.c.l.b16 %v4013
    %v4048 = vunpack.c.l.b16 %v4014
    %v4049 = vunpack.c.l.b16 %v4015
    %v4050 = vunpack.c.l.b16 %v4016
    %v4051 = vunpack.c.l.b16 %v4017
    %v4052 = vunpack.c.l.b16 %v4018
    %v4053 = vunpack.c.l.b16 %v4019
    %v4054 = vunpack.c.l.b16 %v4029
    %v4055 = vpack.c.b16 %v4048, %v4047
    %v4056 = vpack.c.b16 %v4050, %v4049
    %v4057 = vpack.c.b16 %v4052, %v4051
    %v4058 = vpack.c.b16 %v4054, %v4053
    %v4060 = vshrl.u32 %v4055, 16
    %v4062 = vshll.u32 %v4055, 16
    %v4064 = vrot.slane %v4062, 1
    %v4065 = vor.u32 %v4060, %v4064
    %v4067 = vshll.u32 %v4056, 16
    %v4069 = vrot.slane %v4067, 1
    %v4070 = vsel %vm1848, %v4065, %v4069
    %v4071 = vshrl.u32 %v4056, 16
    %v4073 = vor.u32 %v4071, %v4069
    %v4075 = vshll.u32 %v4057, 16
    %v4077 = vrot.slane %v4075, 1
    %v4078 = vsel %vm1848, %v4073, %v4077
    %v4079 = vshrl.u32 %v4057, 16
    %v4081 = vor.u32 %v4079, %v4077
    %v4083 = vshll.u32 %v4058, 16
    %v4085 = vrot.slane %v4083, 1
    %v4086 = vsel %vm1848, %v4081, %v4085
    %v4087 = vshrl.u32 %v4058, 16
    %v4089 = vor.u32 %v4087, %v4085
    %v4098 = vunpack.c.l.b16 %v4031
    %v4099 = vunpack.c.l.b16 %v4032
    %v4100 = vunpack.c.l.b16 %v4033
    %v4101 = vunpack.c.l.b16 %v4034
    %v4102 = vunpack.c.l.b16 %v4035
    %v4103 = vunpack.c.l.b16 %v4036
    %v4104 = vunpack.c.l.b16 %v4037
    %v4105 = vunpack.c.l.b16 %v4038
    %v4106 = vpack.c.b16 %v4099, %v4098
    %v4107 = vpack.c.b16 %v4101, %v4100
    %v4108 = vpack.c.b16 %v4103, %v4102
    %v4109 = vpack.c.b16 %v4105, %v4104
    %v4115 = vsel %vm1904, %v4070, 0
    %v4118 = vsel %vm1904, %v4078, 0
    %v4121 = vsel %vm1904, %v4086, 0
    %v4124 = vsel %vm1904, %v4089, 0
    %4126 = vmatpush.bf16.msra.mxu0 0
    %4127 = vmatpush.bf16.msra.mxu0 0
    %4128 = vmatpush.bf16.msra.mxu0 0
    %4129 = vmatpush.bf16.msra.mxu0 0
    %4130 = vmatpush.bf16.msra.mxu0 %v4109
    %4131 = vmatpush.bf16.msra.mxu0 %v4108
    %4132 = vmatpush.bf16.msra.mxu0 %v4107
    %4133 = vmatpush.bf16.msra.mxu0 %v4106
    %4134 = vmatmul.bf16.gmra.mxu0 %v4115
    %v4135 = vpop.f32.mrf.mxu0
    %v4136 = vadd.f32 0.0, %v4135
    %v4137 = vpop.f32.mrf.mxu0
    %v4138 = vadd.f32 0.0, %v4137
    %4139 = vmatmul.bf16.gmra.mxu0 %v4118
    %v4140 = vpop.f32.mrf.mxu0
    %v4141 = vadd.f32 0.0, %v4140
    %v4142 = vpop.f32.mrf.mxu0
    %v4143 = vadd.f32 0.0, %v4142
    %4144 = vmatmul.bf16.gmra.mxu0 %v4121
    %v4145 = vpop.f32.mrf.mxu0
    %v4146 = vadd.f32 0.0, %v4145
    %v4147 = vpop.f32.mrf.mxu0
    %v4148 = vadd.f32 0.0, %v4147
    %4149 = vmatmul.bf16.gmra.mxu0 %v4124
    %v4150 = vpop.f32.mrf.mxu0
    %v4151 = vadd.f32 0.0, %v4150
    %v4152 = vpop.f32.mrf.mxu0
    %v4153 = vadd.f32 0.0, %v4152
    %4154 = vdwg.mxu0
    %v4156 = vunpack.c.l.b16 %v4020
    %v4157 = vpack.c.b16 %v4156, %v4053
    %v4166 = vunpack.c.l.b16 %v4021
    %v4167 = vunpack.c.l.b16 %v4022
    %v4168 = vunpack.c.l.b16 %v4023
    %v4169 = vunpack.c.l.b16 %v4024
    %v4170 = vunpack.c.l.b16 %v4025
    %v4171 = vunpack.c.l.b16 %v4026
    %v4172 = vunpack.c.l.b16 %v4027
    %v4173 = vunpack.c.l.b16 %v4028
    %v4174 = vpack.c.b16 %v4167, %v4166
    %v4175 = vpack.c.b16 %v4169, %v4168
    %v4176 = vpack.c.b16 %v4171, %v4170
    %v4177 = vpack.c.b16 %v4173, %v4172
    %v4182 = vsel %vm1904, %v4055, 0
    %v4184 = vsel %vm1904, %v4056, 0
    %v4186 = vsel %vm1904, %v4057, 0
    %v4189 = vsel %vm1904, %v4157, 0
    %4191 = vmatpush.bf16.msra.mxu0 0
    %4192 = vmatpush.bf16.msra.mxu0 0
    %4193 = vmatpush.bf16.msra.mxu0 0
    %4194 = vmatpush.bf16.msra.mxu0 0
    %4195 = vmatpush.bf16.msra.mxu0 %v4177
    %4196 = vmatpush.bf16.msra.mxu0 %v4176
    %4197 = vmatpush.bf16.msra.mxu0 %v4175
    %4198 = vmatpush.bf16.msra.mxu0 %v4174
    %4199 = vmatmul.bf16.gmra.mxu0 %v4182
    %v4200 = vpop.f32.mrf.mxu0
    %v4201 = vadd.f32 %v4136, %v4200
    %v4202 = vpop.f32.mrf.mxu0
    %v4203 = vadd.f32 %v4138, %v4202
    %4204 = vmatmul.bf16.gmra.mxu0 %v4184
    %v4205 = vpop.f32.mrf.mxu0
    %v4206 = vadd.f32 %v4141, %v4205
    %v4207 = vpop.f32.mrf.mxu0
    %v4208 = vadd.f32 %v4143, %v4207
    %4209 = vmatmul.bf16.gmra.mxu0 %v4186
    %v4210 = vpop.f32.mrf.mxu0
    %v4211 = vadd.f32 %v4146, %v4210
    %v4212 = vpop.f32.mrf.mxu0
    %v4213 = vadd.f32 %v4148, %v4212
    %4214 = vmatmul.bf16.gmra.mxu0 %v4189
    %v4215 = vpop.f32.mrf.mxu0
    %v4216 = vadd.f32 %v4151, %v4215
    %v4217 = vpop.f32.mrf.mxu0
    %v4218 = vadd.f32 %v4153, %v4217
    %4219 = vdwg.mxu0
    %v4220 = vld [vmem:[#allocation3] sm:$0xe]
    %s4221 = scalar_lea.vmem %s27, 64
    %v4222 = vld [vmem:[%s4221] sm:$0xf]
    %v4223 = vld [vmem:[%s4221 + $0x4] sm:$0xf]
    %v4224 = vld [vmem:[%s4221 + $0x8] sm:$0xf]
    %v4225 = vld [vmem:[%s4221 + $0xc] sm:$0xf]
    %v4226 = vld [vmem:[%s4221 + $0x10] sm:$0xf]
    %v4227 = vld [vmem:[%s4221 + $0x14] sm:$0xf]
    %v4228 = vld [vmem:[%s4221 + $0x18] sm:$0xf]
    %v4229 = vld [vmem:[%s4221 + $0x1c] sm:$0xf]
    %v4231 = vunpack.c.l.b16 %v4220
    %v4232 = vpack.c.b16 %v4048, %v4231
    %v4233 = vrot.slane %v4232, 1
    %v4234 = vrot.slane %v4056, 1
    %v4235 = vsel %vm2024, %v4233, %v4234
    %v4236 = vrot.slane %v4057, 1
    %v4237 = vsel %vm2024, %v4234, %v4236
    %v4238 = vrot.slane %v4058, 1
    %v4239 = vsel %vm2024, %v4236, %v4238
    %v4248 = vunpack.c.l.b16 %v4222
    %v4249 = vunpack.c.l.b16 %v4223
    %v4250 = vunpack.c.l.b16 %v4224
    %v4251 = vunpack.c.l.b16 %v4225
    %v4252 = vunpack.c.l.b16 %v4226
    %v4253 = vunpack.c.l.b16 %v4227
    %v4254 = vunpack.c.l.b16 %v4228
    %v4255 = vunpack.c.l.b16 %v4229
    %v4256 = vpack.c.b16 %v4249, %v4248
    %v4257 = vpack.c.b16 %v4251, %v4250
    %v4258 = vpack.c.b16 %v4253, %v4252
    %v4259 = vpack.c.b16 %v4255, %v4254
    %v4265 = vsel %vm1904, %v4235, 0
    %v4268 = vsel %vm1904, %v4237, 0
    %v4271 = vsel %vm1904, %v4239, 0
    %v4274 = vsel %vm1904, %v4238, 0
    %4276 = vmatpush.bf16.msra.mxu0 0
    %4277 = vmatpush.bf16.msra.mxu0 0
    %4278 = vmatpush.bf16.msra.mxu0 0
    %4279 = vmatpush.bf16.msra.mxu0 0
    %4280 = vmatpush.bf16.msra.mxu0 %v4259
    %4281 = vmatpush.bf16.msra.mxu0 %v4258
    %4282 = vmatpush.bf16.msra.mxu0 %v4257
    %4283 = vmatpush.bf16.msra.mxu0 %v4256
    %4284 = vmatmul.bf16.gmra.mxu0 %v4265
    %v4285 = vpop.f32.mrf.mxu0
    %v4286 = vadd.f32 0.0, %v4285
    %v4287 = vpop.f32.mrf.mxu0
    %v4288 = vadd.f32 0.0, %v4287
    %4289 = vmatmul.bf16.gmra.mxu0 %v4268
    %v4290 = vpop.f32.mrf.mxu0
    %v4291 = vadd.f32 0.0, %v4290
    %v4292 = vpop.f32.mrf.mxu0
    %v4293 = vadd.f32 0.0, %v4292
    %4294 = vmatmul.bf16.gmra.mxu0 %v4271
    %v4295 = vpop.f32.mrf.mxu0
    %v4296 = vadd.f32 0.0, %v4295
    %v4297 = vpop.f32.mrf.mxu0
    %v4298 = vadd.f32 0.0, %v4297
    %4299 = vmatmul.bf16.gmra.mxu0 %v4274
    %v4300 = vpop.f32.mrf.mxu0
    %v4301 = vadd.f32 0.0, %v4300
    %v4302 = vpop.f32.mrf.mxu0
    %v4303 = vadd.f32 0.0, %v4302
    %4304 = vdwg.mxu0
    %v4305 = vadd.f32 %v4201, %v4286
    %v4306 = vadd.f32 %v4203, %v4288
    %v4307 = vadd.f32 %v4206, %v4291
    %v4308 = vadd.f32 %v4208, %v4293
    %v4309 = vadd.f32 %v4211, %v4296
    %v4310 = vadd.f32 %v4213, %v4298
    %v4311 = vadd.f32 %v4216, %v4301
    %v4312 = vadd.f32 %v4218, %v4303
    %v4313 = vld [vmem:[#allocation3] sm:$0x8]
    %v4314 = vld [vmem:[#allocation3 + $0x1c] sm:$0xf]
    %s4315 = scalar_lea.vmem %s27, 96
    %v4316 = vld [vmem:[%s4315] sm:$0xf]
    %v4317 = vld [vmem:[%s4315 + $0x4] sm:$0xf]
    %v4318 = vld [vmem:[%s4315 + $0x8] sm:$0xf]
    %v4319 = vld [vmem:[%s4315 + $0xc] sm:$0xf]
    %v4320 = vld [vmem:[%s4315 + $0x10] sm:$0xf]
    %v4321 = vld [vmem:[%s4315 + $0x14] sm:$0xf]
    %v4322 = vld [vmem:[%s4315 + $0x18] sm:$0xf]
    %v4323 = vld [vmem:[%s4315 + $0x1c] sm:$0xf]
    %v4326 = vunpack.c.l.b16 %v4313
    %v4327 = vunpack.c.l.b16 %v4314
    %v4328 = vpack.c.b16 %v4048, %v4326
    %v4329 = vpack.c.b16 %v4327, %v4053
    %v4330 = vrot.slane %v4328, 3
    %v4331 = vrot.slane %v4056, 3
    %v4332 = vsel %vm2122, %v4330, %v4331
    %v4333 = vrot.slane %v4057, 3
    %v4334 = vsel %vm2122, %v4331, %v4333
    %v4335 = vrot.slane %v4329, 3
    %v4336 = vsel %vm2122, %v4333, %v4335
    %v4345 = vunpack.c.l.b16 %v4316
    %v4346 = vunpack.c.l.b16 %v4317
    %v4347 = vunpack.c.l.b16 %v4318
    %v4348 = vunpack.c.l.b16 %v4319
    %v4349 = vunpack.c.l.b16 %v4320
    %v4350 = vunpack.c.l.b16 %v4321
    %v4351 = vunpack.c.l.b16 %v4322
    %v4352 = vunpack.c.l.b16 %v4323
    %v4353 = vpack.c.b16 %v4346, %v4345
    %v4354 = vpack.c.b16 %v4348, %v4347
    %v4355 = vpack.c.b16 %v4350, %v4349
    %v4356 = vpack.c.b16 %v4352, %v4351
    %v4362 = vsel %vm1904, %v4332, 0
    %v4365 = vsel %vm1904, %v4334, 0
    %v4368 = vsel %vm1904, %v4336, 0
    %v4371 = vsel %vm1904, %v4335, 0
    %4373 = vmatpush.bf16.msra.mxu0 0
    %4374 = vmatpush.bf16.msra.mxu0 0
    %4375 = vmatpush.bf16.msra.mxu0 0
    %4376 = vmatpush.bf16.msra.mxu0 0
    %4377 = vmatpush.bf16.msra.mxu0 %v4356
    %4378 = vmatpush.bf16.msra.mxu0 %v4355
    %4379 = vmatpush.bf16.msra.mxu0 %v4354
    %4380 = vmatpush.bf16.msra.mxu0 %v4353
    %4381 = vmatmul.bf16.gmra.mxu0 %v4362
    %v4382 = vpop.f32.mrf.mxu0
    %v4383 = vadd.f32 0.0, %v4382
    %v4384 = vpop.f32.mrf.mxu0
    %v4385 = vadd.f32 0.0, %v4384
    %4386 = vmatmul.bf16.gmra.mxu0 %v4365
    %v4387 = vpop.f32.mrf.mxu0
    %v4388 = vadd.f32 0.0, %v4387
    %v4389 = vpop.f32.mrf.mxu0
    %v4390 = vadd.f32 0.0, %v4389
    %4391 = vmatmul.bf16.gmra.mxu0 %v4368
    %v4392 = vpop.f32.mrf.mxu0
    %v4393 = vadd.f32 0.0, %v4392
    %v4394 = vpop.f32.mrf.mxu0
    %v4395 = vadd.f32 0.0, %v4394
    %4396 = vmatmul.bf16.gmra.mxu0 %v4371
    %v4397 = vpop.f32.mrf.mxu0
    %v4398 = vadd.f32 0.0, %v4397
    %v4399 = vpop.f32.mrf.mxu0
    %v4400 = vadd.f32 0.0, %v4399
    %4401 = vdwg.mxu0
    %v4402 = vadd.f32 %v4305, %v4383
    %v4403 = vadd.f32 %v4306, %v4385
    %v4404 = vadd.f32 %v4307, %v4388
    %v4405 = vadd.f32 %v4308, %v4390
    %v4406 = vadd.f32 %v4309, %v4393
    %v4407 = vadd.f32 %v4310, %v4395
    %v4408 = vadd.f32 %v4311, %v4398
    %v4409 = vadd.f32 %v4312, %v4400
    %v4410 = vld [vmem:[#allocation3] sm:$0x8]
    %v4411 = vld [vmem:[#allocation3 + $0x4] sm:$0xf]
    %v4412 = vld [vmem:[#allocation3 + $0x8] sm:$0xf]
    %v4413 = vld [vmem:[#allocation3 + $0xc] sm:$0xf]
    %v4414 = vld [vmem:[#allocation3 + $0x10] sm:$0xf]
    %v4415 = vld [vmem:[#allocation3 + $0x14] sm:$0xf]
    %v4416 = vld [vmem:[#allocation3 + $0x18] sm:$0xf]
    %v4417 = vld [vmem:[#allocation3 + $0x1c] sm:$0xf]
    %v4418 = vld [vmem:[#allocation3 + $0x20] sm:$0x1]
    %s4419 = scalar_lea.vmem %s27, 128
    %v4420 = vld [vmem:[%s4419] sm:$0xf]
    %v4421 = vld [vmem:[%s4419 + $0x4] sm:$0xf]
    %v4422 = vld [vmem:[%s4419 + $0x8] sm:$0xf]
    %v4423 = vld [vmem:[%s4419 + $0xc] sm:$0xf]
    %v4424 = vld [vmem:[%s4419 + $0x10] sm:$0xf]
    %v4425 = vld [vmem:[%s4419 + $0x14] sm:$0xf]
    %v4426 = vld [vmem:[%s4419 + $0x18] sm:$0xf]
    %v4427 = vld [vmem:[%s4419 + $0x1c] sm:$0xf]
    %v4437 = vunpack.c.l.b16 %v4410
    %v4438 = vunpack.c.l.b16 %v4411
    %v4439 = vunpack.c.l.b16 %v4412
    %v4440 = vunpack.c.l.b16 %v4413
    %v4441 = vunpack.c.l.b16 %v4414
    %v4442 = vunpack.c.l.b16 %v4415
    %v4443 = vunpack.c.l.b16 %v4416
    %v4444 = vunpack.c.l.b16 %v4417
    %v4445 = vunpack.c.l.b16 %v4418
    %v4446 = vpack.c.b16 %v4438, %v4437
    %v4447 = vpack.c.b16 %v4440, %v4439
    %v4448 = vpack.c.b16 %v4442, %v4441
    %v4449 = vpack.c.b16 %v4444, %v4443
    %v4450 = vpack.c.b16 %v4445, %v4445
    %v4452 = vshrl.u32 %v4446, 16
    %v4454 = vrot.slane %v4452, 3
    %v4455 = vshll.u32 %v4446, 16
    %v4457 = vrot.slane %v4455, 4
    %v4458 = vor.u32 %v4454, %v4457
    %v4460 = vshrl.u32 %v4447, 16
    %v4462 = vrot.slane %v4460, 3
    %v4463 = vshll.u32 %v4447, 16
    %v4465 = vrot.slane %v4463, 4
    %v4466 = vor.u32 %v4462, %v4465
    %v4467 = vsel %vm2244, %v4458, %v4466
    %v4469 = vshrl.u32 %v4448, 16
    %v4471 = vrot.slane %v4469, 3
    %v4472 = vshll.u32 %v4448, 16
    %v4474 = vrot.slane %v4472, 4
    %v4475 = vor.u32 %v4471, %v4474
    %v4476 = vsel %vm2244, %v4466, %v4475
    %v4478 = vshrl.u32 %v4449, 16
    %v4480 = vrot.slane %v4478, 3
    %v4481 = vshll.u32 %v4449, 16
    %v4483 = vrot.slane %v4481, 4
    %v4484 = vor.u32 %v4480, %v4483
    %v4485 = vsel %vm2244, %v4475, %v4484
    %v4487 = vshll.u32 %v4450, 16
    %v4489 = vrot.slane %v4487, 4
    %v4490 = vsel %vm2244, %v4484, %v4489
    %v4499 = vunpack.c.l.b16 %v4420
    %v4500 = vunpack.c.l.b16 %v4421
    %v4501 = vunpack.c.l.b16 %v4422
    %v4502 = vunpack.c.l.b16 %v4423
    %v4503 = vunpack.c.l.b16 %v4424
    %v4504 = vunpack.c.l.b16 %v4425
    %v4505 = vunpack.c.l.b16 %v4426
    %v4506 = vunpack.c.l.b16 %v4427
    %v4507 = vpack.c.b16 %v4500, %v4499
    %v4508 = vpack.c.b16 %v4502, %v4501
    %v4509 = vpack.c.b16 %v4504, %v4503
    %v4510 = vpack.c.b16 %v4506, %v4505
    %v4516 = vsel %vm1904, %v4467, 0
    %v4519 = vsel %vm1904, %v4476, 0
    %v4522 = vsel %vm1904, %v4485, 0
    %v4525 = vsel %vm1904, %v4490, 0
    %4527 = vmatpush.bf16.msra.mxu0 0
    %4528 = vmatpush.bf16.msra.mxu0 0
    %4529 = vmatpush.bf16.msra.mxu0 0
    %4530 = vmatpush.bf16.msra.mxu0 0
    %4531 = vmatpush.bf16.msra.mxu0 %v4510
    %4532 = vmatpush.bf16.msra.mxu0 %v4509
    %4533 = vmatpush.bf16.msra.mxu0 %v4508
    %4534 = vmatpush.bf16.msra.mxu0 %v4507
    %4535 = vmatmul.bf16.gmra.mxu0 %v4516
    %v4536 = vpop.f32.mrf.mxu0
    %v4537 = vadd.f32 0.0, %v4536
    %v4538 = vpop.f32.mrf.mxu0
    %v4539 = vadd.f32 0.0, %v4538
    %4540 = vmatmul.bf16.gmra.mxu0 %v4519
    %v4541 = vpop.f32.mrf.mxu0
    %v4542 = vadd.f32 0.0, %v4541
    %v4543 = vpop.f32.mrf.mxu0
    %v4544 = vadd.f32 0.0, %v4543
    %4545 = vmatmul.bf16.gmra.mxu0 %v4522
    %v4546 = vpop.f32.mrf.mxu0
    %v4547 = vadd.f32 0.0, %v4546
    %v4548 = vpop.f32.mrf.mxu0
    %v4549 = vadd.f32 0.0, %v4548
    %4550 = vmatmul.bf16.gmra.mxu0 %v4525
    %v4551 = vpop.f32.mrf.mxu0
    %v4552 = vadd.f32 0.0, %v4551
    %v4553 = vpop.f32.mrf.mxu0
    %v4554 = vadd.f32 0.0, %v4553
    %4555 = vdwg.mxu0
    %v4556 = vadd.f32 %v4402, %v4537
    %v4557 = vadd.f32 %v4403, %v4539
    %v4558 = vadd.f32 %v4404, %v4542
    %v4559 = vadd.f32 %v4405, %v4544
    %v4560 = vadd.f32 %v4406, %v4547
    %v4561 = vadd.f32 %v4407, %v4549
    %v4562 = vadd.f32 %v4408, %v4552
    %v4563 = vadd.f32 %v4409, %v4554
    %s4564 = scalar_lea.vmem %s27, 160
    %v4565 = vld [vmem:[%s4564] sm:$0xf]
    %v4566 = vld [vmem:[%s4564 + $0x4] sm:$0xf]
    %v4567 = vld [vmem:[%s4564 + $0x8] sm:$0xf]
    %v4568 = vld [vmem:[%s4564 + $0xc] sm:$0xf]
    %v4569 = vld [vmem:[%s4564 + $0x10] sm:$0xf]
    %v4570 = vld [vmem:[%s4564 + $0x14] sm:$0xf]
    %v4571 = vld [vmem:[%s4564 + $0x18] sm:$0xf]
    %v4572 = vld [vmem:[%s4564 + $0x1c] sm:$0xf]
    %v4573 = vpack.c.b16 %v4439, %v4438
    %v4574 = vpack.c.b16 %v4441, %v4440
    %v4575 = vpack.c.b16 %v4443, %v4442
    %v4576 = vpack.c.b16 %v4445, %v4444
    %v4585 = vunpack.c.l.b16 %v4565
    %v4586 = vunpack.c.l.b16 %v4566
    %v4587 = vunpack.c.l.b16 %v4567
    %v4588 = vunpack.c.l.b16 %v4568
    %v4589 = vunpack.c.l.b16 %v4569
    %v4590 = vunpack.c.l.b16 %v4570
    %v4591 = vunpack.c.l.b16 %v4571
    %v4592 = vunpack.c.l.b16 %v4572
    %v4593 = vpack.c.b16 %v4586, %v4585
    %v4594 = vpack.c.b16 %v4588, %v4587
    %v4595 = vpack.c.b16 %v4590, %v4589
    %v4596 = vpack.c.b16 %v4592, %v4591
    %v4602 = vsel %vm1904, %v4573, 0
    %v4605 = vsel %vm1904, %v4574, 0
    %v4608 = vsel %vm1904, %v4575, 0
    %v4611 = vsel %vm1904, %v4576, 0
    %4613 = vmatpush.bf16.msra.mxu0 0
    %4614 = vmatpush.bf16.msra.mxu0 0
    %4615 = vmatpush.bf16.msra.mxu0 0
    %4616 = vmatpush.bf16.msra.mxu0 0
    %4617 = vmatpush.bf16.msra.mxu0 %v4596
    %4618 = vmatpush.bf16.msra.mxu0 %v4595
    %4619 = vmatpush.bf16.msra.mxu0 %v4594
    %4620 = vmatpush.bf16.msra.mxu0 %v4593
    %4621 = vmatmul.bf16.gmra.mxu0 %v4602
    %v4622 = vpop.f32.mrf.mxu0
    %v4623 = vadd.f32 0.0, %v4622
    %v4624 = vpop.f32.mrf.mxu0
    %v4625 = vadd.f32 0.0, %v4624
    %4626 = vmatmul.bf16.gmra.mxu0 %v4605
    %v4627 = vpop.f32.mrf.mxu0
    %v4628 = vadd.f32 0.0, %v4627
    %v4629 = vpop.f32.mrf.mxu0
    %v4630 = vadd.f32 0.0, %v4629
    %4631 = vmatmul.bf16.gmra.mxu0 %v4608
    %v4632 = vpop.f32.mrf.mxu0
    %v4633 = vadd.f32 0.0, %v4632
    %v4634 = vpop.f32.mrf.mxu0
    %v4635 = vadd.f32 0.0, %v4634
    %4636 = vmatmul.bf16.gmra.mxu0 %v4611
    %v4637 = vpop.f32.mrf.mxu0
    %v4638 = vadd.f32 0.0, %v4637
    %v4639 = vpop.f32.mrf.mxu0
    %v4640 = vadd.f32 0.0, %v4639
    %4641 = vdwg.mxu0
    %v4642 = vadd.f32 %v4556, %v4623
    %v4643 = vadd.f32 %v4557, %v4625
    %v4644 = vadd.f32 %v4558, %v4628
    %v4645 = vadd.f32 %v4559, %v4630
    %v4646 = vadd.f32 %v4560, %v4633
    %v4647 = vadd.f32 %v4561, %v4635
    %v4648 = vadd.f32 %v4562, %v4638
    %v4649 = vadd.f32 %v4563, %v4640
    %v4650 = vld [vmem:[#allocation3 + $0x4] sm:$0xc]
    %v4651 = vld [vmem:[#allocation3 + $0x20] sm:$0x7]
    %s4652 = scalar_lea.vmem %s27, 192
    %v4653 = vld [vmem:[%s4652] sm:$0xf]
    %v4654 = vld [vmem:[%s4652 + $0x4] sm:$0xf]
    %v4655 = vld [vmem:[%s4652 + $0x8] sm:$0xf]
    %v4656 = vld [vmem:[%s4652 + $0xc] sm:$0xf]
    %v4657 = vld [vmem:[%s4652 + $0x10] sm:$0xf]
    %v4658 = vld [vmem:[%s4652 + $0x14] sm:$0xf]
    %v4659 = vld [vmem:[%s4652 + $0x18] sm:$0xf]
    %v4660 = vld [vmem:[%s4652 + $0x1c] sm:$0xf]
    %v4663 = vunpack.c.l.b16 %v4650
    %v4664 = vunpack.c.l.b16 %v4651
    %v4665 = vpack.c.b16 %v4439, %v4663
    %v4666 = vpack.c.b16 %v4664, %v4444
    %v4667 = vrot.slane %v4665, 2
    %v4668 = vrot.slane %v4574, 2
    %v4669 = vsel %vm2461, %v4667, %v4668
    %v4670 = vrot.slane %v4575, 2
    %v4671 = vsel %vm2461, %v4668, %v4670
    %v4672 = vrot.slane %v4666, 2
    %v4673 = vsel %vm2461, %v4670, %v4672
    %v4682 = vunpack.c.l.b16 %v4653
    %v4683 = vunpack.c.l.b16 %v4654
    %v4684 = vunpack.c.l.b16 %v4655
    %v4685 = vunpack.c.l.b16 %v4656
    %v4686 = vunpack.c.l.b16 %v4657
    %v4687 = vunpack.c.l.b16 %v4658
    %v4688 = vunpack.c.l.b16 %v4659
    %v4689 = vunpack.c.l.b16 %v4660
    %v4690 = vpack.c.b16 %v4683, %v4682
    %v4691 = vpack.c.b16 %v4685, %v4684
    %v4692 = vpack.c.b16 %v4687, %v4686
    %v4693 = vpack.c.b16 %v4689, %v4688
    %v4699 = vsel %vm1904, %v4669, 0
    %v4702 = vsel %vm1904, %v4671, 0
    %v4705 = vsel %vm1904, %v4673, 0
    %v4708 = vsel %vm1904, %v4672, 0
    %4710 = vmatpush.bf16.msra.mxu0 0
    %4711 = vmatpush.bf16.msra.mxu0 0
    %4712 = vmatpush.bf16.msra.mxu0 0
    %4713 = vmatpush.bf16.msra.mxu0 0
    %4714 = vmatpush.bf16.msra.mxu0 %v4693
    %4715 = vmatpush.bf16.msra.mxu0 %v4692
    %4716 = vmatpush.bf16.msra.mxu0 %v4691
    %4717 = vmatpush.bf16.msra.mxu0 %v4690
    %4718 = vmatmul.bf16.gmra.mxu0 %v4699
    %v4719 = vpop.f32.mrf.mxu0
    %v4720 = vadd.f32 0.0, %v4719
    %v4721 = vpop.f32.mrf.mxu0
    %v4722 = vadd.f32 0.0, %v4721
    %4723 = vmatmul.bf16.gmra.mxu0 %v4702
    %v4724 = vpop.f32.mrf.mxu0
    %v4725 = vadd.f32 0.0, %v4724
    %v4726 = vpop.f32.mrf.mxu0
    %v4727 = vadd.f32 0.0, %v4726
    %4728 = vmatmul.bf16.gmra.mxu0 %v4705
    %v4729 = vpop.f32.mrf.mxu0
    %v4730 = vadd.f32 0.0, %v4729
    %v4731 = vpop.f32.mrf.mxu0
    %v4732 = vadd.f32 0.0, %v4731
    %4733 = vmatmul.bf16.gmra.mxu0 %v4708
    %v4734 = vpop.f32.mrf.mxu0
    %v4735 = vadd.f32 0.0, %v4734
    %v4736 = vpop.f32.mrf.mxu0
    %v4737 = vadd.f32 0.0, %v4736
    %4738 = vdwg.mxu0
    %v4739 = vadd.f32 %v4642, %v4720
    %v4740 = vadd.f32 %v4643, %v4722
    %v4741 = vadd.f32 %v4644, %v4725
    %v4742 = vadd.f32 %v4645, %v4727
    %v4743 = vadd.f32 %v4646, %v4730
    %v4744 = vadd.f32 %v4647, %v4732
    %v4745 = vadd.f32 %v4648, %v4735
    %v4746 = vadd.f32 %v4649, %v4737
    %v4747 = vld [vmem:[#allocation3 + $0x20] sm:$0xf]
    %s4748 = scalar_lea.vmem %s27, 224
    %v4749 = vld [vmem:[%s4748] sm:$0xf]
    %v4750 = vld [vmem:[%s4748 + $0x4] sm:$0xf]
    %v4751 = vld [vmem:[%s4748 + $0x8] sm:$0xf]
    %v4752 = vld [vmem:[%s4748 + $0xc] sm:$0xf]
    %v4753 = vld [vmem:[%s4748 + $0x10] sm:$0xf]
    %v4754 = vld [vmem:[%s4748 + $0x14] sm:$0xf]
    %v4755 = vld [vmem:[%s4748 + $0x18] sm:$0xf]
    %v4756 = vld [vmem:[%s4748 + $0x1c] sm:$0xf]
    %v4758 = vunpack.c.l.b16 %v4747
    %v4759 = vpack.c.b16 %v4758, %v4444
    %v4761 = vshrl.u32 %v4665, 16
    %v4763 = vrot.slane %v4761, 2
    %v4764 = vshll.u32 %v4665, 16
    %v4766 = vrot.slane %v4764, 3
    %v4767 = vor.u32 %v4763, %v4766
    %v4768 = vshrl.u32 %v4574, 16
    %v4770 = vrot.slane %v4768, 2
    %v4771 = vshll.u32 %v4574, 16
    %v4773 = vrot.slane %v4771, 3
    %v4774 = vor.u32 %v4770, %v4773
    %v4775 = vsel %vm2555, %v4767, %v4774
    %v4776 = vshrl.u32 %v4575, 16
    %v4778 = vrot.slane %v4776, 2
    %v4779 = vshll.u32 %v4575, 16
    %v4781 = vrot.slane %v4779, 3
    %v4782 = vor.u32 %v4778, %v4781
    %v4783 = vsel %vm2555, %v4774, %v4782
    %v4785 = vshrl.u32 %v4759, 16
    %v4787 = vrot.slane %v4785, 2
    %v4788 = vshll.u32 %v4759, 16
    %v4790 = vrot.slane %v4788, 3
    %v4791 = vor.u32 %v4787, %v4790
    %v4792 = vsel %vm2555, %v4782, %v4791
    %v4801 = vunpack.c.l.b16 %v4749
    %v4802 = vunpack.c.l.b16 %v4750
    %v4803 = vunpack.c.l.b16 %v4751
    %v4804 = vunpack.c.l.b16 %v4752
    %v4805 = vunpack.c.l.b16 %v4753
    %v4806 = vunpack.c.l.b16 %v4754
    %v4807 = vunpack.c.l.b16 %v4755
    %v4808 = vunpack.c.l.b16 %v4756
    %v4809 = vpack.c.b16 %v4802, %v4801
    %v4810 = vpack.c.b16 %v4804, %v4803
    %v4811 = vpack.c.b16 %v4806, %v4805
    %v4812 = vpack.c.b16 %v4808, %v4807
    %v4818 = vsel %vm1904, %v4775, 0
    %v4821 = vsel %vm1904, %v4783, 0
    %v4824 = vsel %vm1904, %v4792, 0
    %v4827 = vsel %vm1904, %v4791, 0
    %4829 = vmatpush.bf16.msra.mxu0 0
    %4830 = vmatpush.bf16.msra.mxu0 0
    %4831 = vmatpush.bf16.msra.mxu0 0
    %4832 = vmatpush.bf16.msra.mxu0 0
    %4833 = vmatpush.bf16.msra.mxu0 %v4812
    %4834 = vmatpush.bf16.msra.mxu0 %v4811
    %4835 = vmatpush.bf16.msra.mxu0 %v4810
    %4836 = vmatpush.bf16.msra.mxu0 %v4809
    %4837 = vmatmul.bf16.gmra.mxu0 %v4818
    %v4838 = vpop.f32.mrf.mxu0
    %v4839 = vadd.f32 0.0, %v4838
    %v4840 = vpop.f32.mrf.mxu0
    %v4841 = vadd.f32 0.0, %v4840
    %4842 = vmatmul.bf16.gmra.mxu0 %v4821
    %v4843 = vpop.f32.mrf.mxu0
    %v4844 = vadd.f32 0.0, %v4843
    %v4845 = vpop.f32.mrf.mxu0
    %v4846 = vadd.f32 0.0, %v4845
    %4847 = vmatmul.bf16.gmra.mxu0 %v4824
    %v4848 = vpop.f32.mrf.mxu0
    %v4849 = vadd.f32 0.0, %v4848
    %v4850 = vpop.f32.mrf.mxu0
    %v4851 = vadd.f32 0.0, %v4850
    %4852 = vmatmul.bf16.gmra.mxu0 %v4827
    %v4853 = vpop.f32.mrf.mxu0
    %v4854 = vadd.f32 0.0, %v4853
    %v4855 = vpop.f32.mrf.mxu0
    %v4856 = vadd.f32 0.0, %v4855
    %4857 = vdwg.mxu0
    %v4858 = vadd.f32 %v4739, %v4839
    %v4859 = vadd.f32 %v4740, %v4841
    %v4860 = vadd.f32 %v4741, %v4844
    %v4861 = vadd.f32 %v4742, %v4846
    %v4862 = vadd.f32 %v4743, %v4849
    %v4863 = vadd.f32 %v4744, %v4851
    %v4864 = vadd.f32 %v4745, %v4854
    %v4865 = vadd.f32 %v4746, %v4856
    %v4866 = vld [vmem:[#allocation3 + $0x4] sm:$0x8]
    %s4867 = scalar_lea.vmem %s27, 256
    %v4868 = vld [vmem:[%s4867] sm:$0xf]
    %v4869 = vld [vmem:[%s4867 + $0x4] sm:$0xf]
    %v4870 = vld [vmem:[%s4867 + $0x8] sm:$0xf]
    %v4871 = vld [vmem:[%s4867 + $0xc] sm:$0xf]
    %v4872 = vld [vmem:[%s4867 + $0x10] sm:$0xf]
    %v4873 = vld [vmem:[%s4867 + $0x14] sm:$0xf]
    %v4874 = vld [vmem:[%s4867 + $0x18] sm:$0xf]
    %v4875 = vld [vmem:[%s4867 + $0x1c] sm:$0xf]
    %v4877 = vunpack.c.l.b16 %v4866
    %v4878 = vpack.c.b16 %v4439, %v4877
    %v4879 = vrot.slane %v4878, 3
    %v4880 = vrot.slane %v4574, 3
    %v4881 = vsel %vm2122, %v4879, %v4880
    %v4882 = vrot.slane %v4575, 3
    %v4883 = vsel %vm2122, %v4880, %v4882
    %v4884 = vrot.slane %v4759, 3
    %v4885 = vsel %vm2122, %v4882, %v4884
    %v4894 = vunpack.c.l.b16 %v4868
    %v4895 = vunpack.c.l.b16 %v4869
    %v4896 = vunpack.c.l.b16 %v4870
    %v4897 = vunpack.c.l.b16 %v4871
    %v4898 = vunpack.c.l.b16 %v4872
    %v4899 = vunpack.c.l.b16 %v4873
    %v4900 = vunpack.c.l.b16 %v4874
    %v4901 = vunpack.c.l.b16 %v4875
    %v4902 = vpack.c.b16 %v4895, %v4894
    %v4903 = vpack.c.b16 %v4897, %v4896
    %v4904 = vpack.c.b16 %v4899, %v4898
    %v4905 = vpack.c.b16 %v4901, %v4900
    %v4911 = vsel %vm1904, %v4881, 0
    %v4914 = vsel %vm1904, %v4883, 0
    %v4917 = vsel %vm1904, %v4885, 0
    %v4920 = vsel %vm1904, %v4884, 0
    %4922 = vmatpush.bf16.msra.mxu0 0
    %4923 = vmatpush.bf16.msra.mxu0 0
    %4924 = vmatpush.bf16.msra.mxu0 0
    %4925 = vmatpush.bf16.msra.mxu0 0
    %4926 = vmatpush.bf16.msra.mxu0 %v4905
    %4927 = vmatpush.bf16.msra.mxu0 %v4904
    %4928 = vmatpush.bf16.msra.mxu0 %v4903
    %4929 = vmatpush.bf16.msra.mxu0 %v4902
    %4930 = vmatmul.bf16.gmra.mxu0 %v4911
    %v4931 = vpop.f32.mrf.mxu0
    %v4932 = vadd.f32 0.0, %v4931
    %v4933 = vpop.f32.mrf.mxu0
    %v4934 = vadd.f32 0.0, %v4933
    %4935 = vmatmul.bf16.gmra.mxu0 %v4914
    %v4936 = vpop.f32.mrf.mxu0
    %v4937 = vadd.f32 0.0, %v4936
    %v4938 = vpop.f32.mrf.mxu0
    %v4939 = vadd.f32 0.0, %v4938
    %4940 = vmatmul.bf16.gmra.mxu0 %v4917
    %v4941 = vpop.f32.mrf.mxu0
    %v4942 = vadd.f32 0.0, %v4941
    %v4943 = vpop.f32.mrf.mxu0
    %v4944 = vadd.f32 0.0, %v4943
    %4945 = vmatmul.bf16.gmra.mxu0 %v4920
    %v4946 = vpop.f32.mrf.mxu0
    %v4947 = vadd.f32 0.0, %v4946
    %v4948 = vpop.f32.mrf.mxu0
    %v4949 = vadd.f32 0.0, %v4948
    %4950 = vdwg.mxu0
    %v4951 = vadd.f32 %v4858, %v4932
    %v4952 = vadd.f32 %v4859, %v4934
    %v4953 = vadd.f32 %v4860, %v4937
    %v4954 = vadd.f32 %v4861, %v4939
    %v4955 = vadd.f32 %v4862, %v4942
    %v4956 = vadd.f32 %v4863, %v4944
    %v4957 = vadd.f32 %v4864, %v4947
    %v4958 = vadd.f32 %v4865, %v4949
    %v4959 = vld [vmem:[%s29] sm:$0x1]
    %v4961 = vperm.slane %v4959, 0
    %v4963 = vadd.f32 %v4951, %v4961
    %v4964 = vadd.f32 %v4952, %v4961
    %v4965 = vadd.f32 %v4953, %v4961
    %v4966 = vadd.f32 %v4954, %v4961
    %v4967 = vadd.f32 %v4955, %v4961
    %v4968 = vadd.f32 %v4956, %v4961
    %v4969 = vadd.f32 %v4957, %v4961
    %v4970 = vadd.f32 %v4958, %v4961
    %v4971 = vmax.f32 %v4963, 0.0
    %v4972 = vmax.f32 %v4964, 0.0
    %v4973 = vmax.f32 %v4965, 0.0
    %v4974 = vmax.f32 %v4966, 0.0
    %v4975 = vmax.f32 %v4967, 0.0
    %v4976 = vmax.f32 %v4968, 0.0
    %v4977 = vmax.f32 %v4969, 0.0
    %v4978 = vmax.f32 %v4970, 0.0
    %v4979 = vld [vmem:[%s5] sm:$0xf]
    %v4980 = vld [vmem:[%s5 + $0x4] sm:$0xf]
    %v4981 = vld [vmem:[%s5 + $0x8] sm:$0xf]
    %v4982 = vld [vmem:[%s5 + $0xc] sm:$0xf]
    %v4983 = vld [vmem:[%s5 + $0x10] sm:$0xf]
    %v4984 = vld [vmem:[%s5 + $0x14] sm:$0xf]
    %v4985 = vld [vmem:[%s5 + $0x18] sm:$0xf]
    %v4986 = vld [vmem:[%s5 + $0x1c] sm:$0xf]
    %v4987 = vld [vmem:[%s5 + $0x20] sm:$0xf]
    %v4988 = vpack.c.bf16 %v4972, %v4971
    %v4989 = vpack.c.bf16 %v4974, %v4973
    %v4990 = vpack.c.bf16 %v4976, %v4975
    %v4991 = vpack.c.bf16 %v4978, %v4977
    %v5001 = vunpack.c.l.b16 %v4979
    %v5002 = vunpack.c.l.b16 %v4980
    %v5003 = vunpack.c.l.b16 %v4981
    %v5004 = vunpack.c.l.b16 %v4982
    %v5005 = vunpack.c.l.b16 %v4983
    %v5006 = vunpack.c.l.b16 %v4984
    %v5007 = vunpack.c.l.b16 %v4985
    %v5008 = vunpack.c.l.b16 %v4986
    %v5009 = vunpack.c.l.b16 %v4987
    %v5010 = vpack.c.b16 %v5002, %v5001
    %v5011 = vpack.c.b16 %v5004, %v5003
    %v5012 = vpack.c.b16 %v5006, %v5005
    %v5013 = vpack.c.b16 %v5008, %v5007
    %v5014 = vpack.c.b16 %v5009, %v5009
    %v5016 = vsel %vm2811, %v5010, 0
    %v5019 = vsel %vm2811, %v5011, 0
    %v5022 = vsel %vm2811, %v5012, 0
    %v5025 = vsel %vm2811, %v5013, 0
    %v5028 = vsel %vm2811, %v5014, 0
    %v5031 = vsel %vm1072, %v4991, 0
    %5033 = vmatpush.bf16.msra.mxu0 0
    %5034 = vmatpush.bf16.msra.mxu0 0
    %5035 = vmatpush.bf16.msra.mxu0 0
    %5036 = vmatpush.bf16.msra.mxu0 0
    %5037 = vmatpush.bf16.msra.mxu0 %v5031
    %5038 = vmatpush.bf16.msra.mxu0 %v4990
    %5039 = vmatpush.bf16.msra.mxu0 %v4989
    %5040 = vmatpush.bf16.msra.mxu0 %v4988
    %5041 = vmatmul.bf16.gmra.mxu0 %v5016
    %v5042 = vpop.f32.mrf.mxu0
    %v5043 = vadd.f32 0.0, %v5042
    %v5044 = vpop.f32.mrf.mxu0
    %v5045 = vadd.f32 0.0, %v5044
    %5046 = vmatmul.bf16.gmra.mxu0 %v5019
    %v5047 = vpop.f32.mrf.mxu0
    %v5048 = vadd.f32 0.0, %v5047
    %v5049 = vpop.f32.mrf.mxu0
    %v5050 = vadd.f32 0.0, %v5049
    %5051 = vmatmul.bf16.gmra.mxu0 %v5022
    %v5052 = vpop.f32.mrf.mxu0
    %v5053 = vadd.f32 0.0, %v5052
    %v5054 = vpop.f32.mrf.mxu0
    %v5055 = vadd.f32 0.0, %v5054
    %5056 = vmatmul.bf16.gmra.mxu0 %v5025
    %v5057 = vpop.f32.mrf.mxu0
    %v5058 = vadd.f32 0.0, %v5057
    %v5059 = vpop.f32.mrf.mxu0
    %v5060 = vadd.f32 0.0, %v5059
    %5061 = vmatmul.bf16.gmra.mxu0 %v5028
    %v5062 = vpop.f32.mrf.mxu0
    %v5063 = vadd.f32 0.0, %v5062
    %v5064 = vpop.f32.mrf.mxu0
    %5065 = vdwg.mxu0
    %v5066 = vpack.c.bf16 %v5043, %v5043
    %v5067 = vpack.c.bf16 %v5045, %v5045
    %v5068 = vpack.c.bf16 %v5048, %v5048
    %v5069 = vpack.c.bf16 %v5050, %v5050
    %v5070 = vpack.c.bf16 %v5053, %v5053
    %v5071 = vpack.c.bf16 %v5055, %v5055
    %v5072 = vpack.c.bf16 %v5058, %v5058
    %v5073 = vpack.c.bf16 %v5060, %v5060
    %v5074 = vpack.c.bf16 %v5063, %v5063
    %5075 = vst.msk [vmem:[#allocation4] sm:$0xf] %vm642, %v5066
    %5076 = vst.msk [vmem:[#allocation4 + $0x4] sm:$0xf] %vm642, %v5067
    %5077 = vst.msk [vmem:[#allocation4 + $0x8] sm:$0xf] %vm642, %v5068
    %5078 = vst.msk [vmem:[#allocation4 + $0xc] sm:$0xf] %vm642, %v5069
    %5079 = vst.msk [vmem:[#allocation4 + $0x10] sm:$0xf] %vm642, %v5070
    %5080 = vst.msk [vmem:[#allocation4 + $0x14] sm:$0xf] %vm642, %v5071
    %5081 = vst.msk [vmem:[#allocation4 + $0x18] sm:$0xf] %vm642, %v5072
    %5082 = vst.msk [vmem:[#allocation4 + $0x1c] sm:$0xf] %vm642, %v5073
    %5083 = vst.msk [vmem:[#allocation4 + $0x20] sm:$0xf] %vm642, %v5074
    %v5084 = vld [vmem:[#allocation4] sm:$0xf]
    %v5085 = vld [vmem:[#allocation4 + $0x4] sm:$0xf]
    %v5086 = vld [vmem:[#allocation4 + $0x8] sm:$0xf]
    %v5087 = vld [vmem:[#allocation4 + $0xc] sm:$0xf]
    %v5088 = vld [vmem:[#allocation4 + $0x10] sm:$0xf]
    %v5089 = vld [vmem:[#allocation4 + $0x14] sm:$0xf]
    %v5090 = vld [vmem:[#allocation4 + $0x18] sm:$0xf]
    %v5091 = vld [vmem:[#allocation4 + $0x1c] sm:$0x1]
    %v5092 = vld [vmem:[%s31] sm:$0xf]
    %v5093 = vld [vmem:[%s31 + $0x4] sm:$0xf]
    %v5094 = vld [vmem:[%s31 + $0x8] sm:$0xf]
    %v5095 = vld [vmem:[%s31 + $0xc] sm:$0xf]
    %v5096 = vld [vmem:[%s31 + $0x10] sm:$0xf]
    %v5097 = vld [vmem:[%s31 + $0x14] sm:$0xf]
    %v5098 = vld [vmem:[%s31 + $0x18] sm:$0xf]
    %v5099 = vld [vmem:[%s31 + $0x1c] sm:$0xf]
    %v5100 = vld [vmem:[#allocation4 + $0x1c] sm:$0x3]
    %s5101 = scalar_lea.vmem %s31, 32
    %v5102 = vld [vmem:[%s5101] sm:$0xf]
    %v5103 = vld [vmem:[%s5101 + $0x4] sm:$0xf]
    %v5104 = vld [vmem:[%s5101 + $0x8] sm:$0xf]
    %v5105 = vld [vmem:[%s5101 + $0xc] sm:$0xf]
    %v5106 = vld [vmem:[%s5101 + $0x10] sm:$0xf]
    %v5107 = vld [vmem:[%s5101 + $0x14] sm:$0xf]
    %v5108 = vld [vmem:[%s5101 + $0x18] sm:$0xf]
    %v5109 = vld [vmem:[%s5101 + $0x1c] sm:$0xf]
    %v5118 = vunpack.c.l.b16 %v5084
    %v5119 = vunpack.c.l.b16 %v5085
    %v5120 = vunpack.c.l.b16 %v5086
    %v5121 = vunpack.c.l.b16 %v5087
    %v5122 = vunpack.c.l.b16 %v5088
    %v5123 = vunpack.c.l.b16 %v5089
    %v5124 = vunpack.c.l.b16 %v5090
    %v5125 = vunpack.c.l.b16 %v5100
    %v5126 = vpack.c.b16 %v5119, %v5118
    %v5127 = vpack.c.b16 %v5121, %v5120
    %v5128 = vpack.c.b16 %v5123, %v5122
    %v5129 = vpack.c.b16 %v5125, %v5124
    %v5131 = vshrl.u32 %v5126, 16
    %v5133 = vshll.u32 %v5126, 16
    %v5135 = vrot.slane %v5133, 1
    %v5136 = vor.u32 %v5131, %v5135
    %v5138 = vshll.u32 %v5127, 16
    %v5140 = vrot.slane %v5138, 1
    %v5141 = vsel %vm1848, %v5136, %v5140
    %v5142 = vshrl.u32 %v5127, 16
    %v5144 = vor.u32 %v5142, %v5140
    %v5146 = vshll.u32 %v5128, 16
    %v5148 = vrot.slane %v5146, 1
    %v5149 = vsel %vm1848, %v5144, %v5148
    %v5150 = vshrl.u32 %v5128, 16
    %v5152 = vor.u32 %v5150, %v5148
    %v5154 = vshll.u32 %v5129, 16
    %v5156 = vrot.slane %v5154, 1
    %v5157 = vsel %vm1848, %v5152, %v5156
    %v5158 = vshrl.u32 %v5129, 16
    %v5160 = vor.u32 %v5158, %v5156
    %v5169 = vunpack.c.l.b16 %v5102
    %v5170 = vunpack.c.l.b16 %v5103
    %v5171 = vunpack.c.l.b16 %v5104
    %v5172 = vunpack.c.l.b16 %v5105
    %v5173 = vunpack.c.l.b16 %v5106
    %v5174 = vunpack.c.l.b16 %v5107
    %v5175 = vunpack.c.l.b16 %v5108
    %v5176 = vunpack.c.l.b16 %v5109
    %v5177 = vpack.c.b16 %v5170, %v5169
    %v5178 = vpack.c.b16 %v5172, %v5171
    %v5179 = vpack.c.b16 %v5174, %v5173
    %v5180 = vpack.c.b16 %v5176, %v5175
    %v5186 = vsel %vm1904, %v5141, 0
    %v5189 = vsel %vm1904, %v5149, 0
    %v5192 = vsel %vm1904, %v5157, 0
    %v5195 = vsel %vm1904, %v5160, 0
    %5197 = vmatpush.bf16.msra.mxu0 0
    %5198 = vmatpush.bf16.msra.mxu0 0
    %5199 = vmatpush.bf16.msra.mxu0 0
    %5200 = vmatpush.bf16.msra.mxu0 0
    %5201 = vmatpush.bf16.msra.mxu0 %v5180
    %5202 = vmatpush.bf16.msra.mxu0 %v5179
    %5203 = vmatpush.bf16.msra.mxu0 %v5178
    %5204 = vmatpush.bf16.msra.mxu0 %v5177
    %5205 = vmatmul.bf16.gmra.mxu0 %v5186
    %v5206 = vpop.f32.mrf.mxu0
    %v5207 = vadd.f32 0.0, %v5206
    %v5208 = vpop.f32.mrf.mxu0
    %v5209 = vadd.f32 0.0, %v5208
    %5210 = vmatmul.bf16.gmra.mxu0 %v5189
    %v5211 = vpop.f32.mrf.mxu0
    %v5212 = vadd.f32 0.0, %v5211
    %v5213 = vpop.f32.mrf.mxu0
    %v5214 = vadd.f32 0.0, %v5213
    %5215 = vmatmul.bf16.gmra.mxu0 %v5192
    %v5216 = vpop.f32.mrf.mxu0
    %v5217 = vadd.f32 0.0, %v5216
    %v5218 = vpop.f32.mrf.mxu0
    %v5219 = vadd.f32 0.0, %v5218
    %5220 = vmatmul.bf16.gmra.mxu0 %v5195
    %v5221 = vpop.f32.mrf.mxu0
    %v5222 = vadd.f32 0.0, %v5221
    %v5223 = vpop.f32.mrf.mxu0
    %v5224 = vadd.f32 0.0, %v5223
    %5225 = vdwg.mxu0
    %v5227 = vunpack.c.l.b16 %v5091
    %v5228 = vpack.c.b16 %v5227, %v5124
    %v5237 = vunpack.c.l.b16 %v5092
    %v5238 = vunpack.c.l.b16 %v5093
    %v5239 = vunpack.c.l.b16 %v5094
    %v5240 = vunpack.c.l.b16 %v5095
    %v5241 = vunpack.c.l.b16 %v5096
    %v5242 = vunpack.c.l.b16 %v5097
    %v5243 = vunpack.c.l.b16 %v5098
    %v5244 = vunpack.c.l.b16 %v5099
    %v5245 = vpack.c.b16 %v5238, %v5237
    %v5246 = vpack.c.b16 %v5240, %v5239
    %v5247 = vpack.c.b16 %v5242, %v5241
    %v5248 = vpack.c.b16 %v5244, %v5243
    %v5253 = vsel %vm1904, %v5126, 0
    %v5255 = vsel %vm1904, %v5127, 0
    %v5257 = vsel %vm1904, %v5128, 0
    %v5260 = vsel %vm1904, %v5228, 0
    %5262 = vmatpush.bf16.msra.mxu0 0
    %5263 = vmatpush.bf16.msra.mxu0 0
    %5264 = vmatpush.bf16.msra.mxu0 0
    %5265 = vmatpush.bf16.msra.mxu0 0
    %5266 = vmatpush.bf16.msra.mxu0 %v5248
    %5267 = vmatpush.bf16.msra.mxu0 %v5247
    %5268 = vmatpush.bf16.msra.mxu0 %v5246
    %5269 = vmatpush.bf16.msra.mxu0 %v5245
    %5270 = vmatmul.bf16.gmra.mxu0 %v5253
    %v5271 = vpop.f32.mrf.mxu0
    %v5272 = vadd.f32 %v5207, %v5271
    %v5273 = vpop.f32.mrf.mxu0
    %v5274 = vadd.f32 %v5209, %v5273
    %5275 = vmatmul.bf16.gmra.mxu0 %v5255
    %v5276 = vpop.f32.mrf.mxu0
    %v5277 = vadd.f32 %v5212, %v5276
    %v5278 = vpop.f32.mrf.mxu0
    %v5279 = vadd.f32 %v5214, %v5278
    %5280 = vmatmul.bf16.gmra.mxu0 %v5257
    %v5281 = vpop.f32.mrf.mxu0
    %v5282 = vadd.f32 %v5217, %v5281
    %v5283 = vpop.f32.mrf.mxu0
    %v5284 = vadd.f32 %v5219, %v5283
    %5285 = vmatmul.bf16.gmra.mxu0 %v5260
    %v5286 = vpop.f32.mrf.mxu0
    %v5287 = vadd.f32 %v5222, %v5286
    %v5288 = vpop.f32.mrf.mxu0
    %v5289 = vadd.f32 %v5224, %v5288
    %5290 = vdwg.mxu0
    %v5291 = vld [vmem:[#allocation4] sm:$0xe]
    %s5292 = scalar_lea.vmem %s31, 64
    %v5293 = vld [vmem:[%s5292] sm:$0xf]
    %v5294 = vld [vmem:[%s5292 + $0x4] sm:$0xf]
    %v5295 = vld [vmem:[%s5292 + $0x8] sm:$0xf]
    %v5296 = vld [vmem:[%s5292 + $0xc] sm:$0xf]
    %v5297 = vld [vmem:[%s5292 + $0x10] sm:$0xf]
    %v5298 = vld [vmem:[%s5292 + $0x14] sm:$0xf]
    %v5299 = vld [vmem:[%s5292 + $0x18] sm:$0xf]
    %v5300 = vld [vmem:[%s5292 + $0x1c] sm:$0xf]
    %v5302 = vunpack.c.l.b16 %v5291
    %v5303 = vpack.c.b16 %v5119, %v5302
    %v5304 = vrot.slane %v5303, 1
    %v5305 = vrot.slane %v5127, 1
    %v5306 = vsel %vm2024, %v5304, %v5305
    %v5307 = vrot.slane %v5128, 1
    %v5308 = vsel %vm2024, %v5305, %v5307
    %v5309 = vrot.slane %v5129, 1
    %v5310 = vsel %vm2024, %v5307, %v5309
    %v5319 = vunpack.c.l.b16 %v5293
    %v5320 = vunpack.c.l.b16 %v5294
    %v5321 = vunpack.c.l.b16 %v5295
    %v5322 = vunpack.c.l.b16 %v5296
    %v5323 = vunpack.c.l.b16 %v5297
    %v5324 = vunpack.c.l.b16 %v5298
    %v5325 = vunpack.c.l.b16 %v5299
    %v5326 = vunpack.c.l.b16 %v5300
    %v5327 = vpack.c.b16 %v5320, %v5319
    %v5328 = vpack.c.b16 %v5322, %v5321
    %v5329 = vpack.c.b16 %v5324, %v5323
    %v5330 = vpack.c.b16 %v5326, %v5325
    %v5336 = vsel %vm1904, %v5306, 0
    %v5339 = vsel %vm1904, %v5308, 0
    %v5342 = vsel %vm1904, %v5310, 0
    %v5345 = vsel %vm1904, %v5309, 0
    %5347 = vmatpush.bf16.msra.mxu0 0
    %5348 = vmatpush.bf16.msra.mxu0 0
    %5349 = vmatpush.bf16.msra.mxu0 0
    %5350 = vmatpush.bf16.msra.mxu0 0
    %5351 = vmatpush.bf16.msra.mxu0 %v5330
    %5352 = vmatpush.bf16.msra.mxu0 %v5329
    %5353 = vmatpush.bf16.msra.mxu0 %v5328
    %5354 = vmatpush.bf16.msra.mxu0 %v5327
    %5355 = vmatmul.bf16.gmra.mxu0 %v5336
    %v5356 = vpop.f32.mrf.mxu0
    %v5357 = vadd.f32 0.0, %v5356
    %v5358 = vpop.f32.mrf.mxu0
    %v5359 = vadd.f32 0.0, %v5358
    %5360 = vmatmul.bf16.gmra.mxu0 %v5339
    %v5361 = vpop.f32.mrf.mxu0
    %v5362 = vadd.f32 0.0, %v5361
    %v5363 = vpop.f32.mrf.mxu0
    %v5364 = vadd.f32 0.0, %v5363
    %5365 = vmatmul.bf16.gmra.mxu0 %v5342
    %v5366 = vpop.f32.mrf.mxu0
    %v5367 = vadd.f32 0.0, %v5366
    %v5368 = vpop.f32.mrf.mxu0
    %v5369 = vadd.f32 0.0, %v5368
    %5370 = vmatmul.bf16.gmra.mxu0 %v5345
    %v5371 = vpop.f32.mrf.mxu0
    %v5372 = vadd.f32 0.0, %v5371
    %v5373 = vpop.f32.mrf.mxu0
    %v5374 = vadd.f32 0.0, %v5373
    %5375 = vdwg.mxu0
    %v5376 = vadd.f32 %v5272, %v5357
    %v5377 = vadd.f32 %v5274, %v5359
    %v5378 = vadd.f32 %v5277, %v5362
    %v5379 = vadd.f32 %v5279, %v5364
    %v5380 = vadd.f32 %v5282, %v5367
    %v5381 = vadd.f32 %v5284, %v5369
    %v5382 = vadd.f32 %v5287, %v5372
    %v5383 = vadd.f32 %v5289, %v5374
    %v5384 = vld [vmem:[#allocation4] sm:$0x8]
    %v5385 = vld [vmem:[#allocation4 + $0x1c] sm:$0xf]
    %s5386 = scalar_lea.vmem %s31, 96
    %v5387 = vld [vmem:[%s5386] sm:$0xf]
    %v5388 = vld [vmem:[%s5386 + $0x4] sm:$0xf]
    %v5389 = vld [vmem:[%s5386 + $0x8] sm:$0xf]
    %v5390 = vld [vmem:[%s5386 + $0xc] sm:$0xf]
    %v5391 = vld [vmem:[%s5386 + $0x10] sm:$0xf]
    %v5392 = vld [vmem:[%s5386 + $0x14] sm:$0xf]
    %v5393 = vld [vmem:[%s5386 + $0x18] sm:$0xf]
    %v5394 = vld [vmem:[%s5386 + $0x1c] sm:$0xf]
    %v5397 = vunpack.c.l.b16 %v5384
    %v5398 = vunpack.c.l.b16 %v5385
    %v5399 = vpack.c.b16 %v5119, %v5397
    %v5400 = vpack.c.b16 %v5398, %v5124
    %v5401 = vrot.slane %v5399, 3
    %v5402 = vrot.slane %v5127, 3
    %v5403 = vsel %vm2122, %v5401, %v5402
    %v5404 = vrot.slane %v5128, 3
    %v5405 = vsel %vm2122, %v5402, %v5404
    %v5406 = vrot.slane %v5400, 3
    %v5407 = vsel %vm2122, %v5404, %v5406
    %v5416 = vunpack.c.l.b16 %v5387
    %v5417 = vunpack.c.l.b16 %v5388
    %v5418 = vunpack.c.l.b16 %v5389
    %v5419 = vunpack.c.l.b16 %v5390
    %v5420 = vunpack.c.l.b16 %v5391
    %v5421 = vunpack.c.l.b16 %v5392
    %v5422 = vunpack.c.l.b16 %v5393
    %v5423 = vunpack.c.l.b16 %v5394
    %v5424 = vpack.c.b16 %v5417, %v5416
    %v5425 = vpack.c.b16 %v5419, %v5418
    %v5426 = vpack.c.b16 %v5421, %v5420
    %v5427 = vpack.c.b16 %v5423, %v5422
    %v5433 = vsel %vm1904, %v5403, 0
    %v5436 = vsel %vm1904, %v5405, 0
    %v5439 = vsel %vm1904, %v5407, 0
    %v5442 = vsel %vm1904, %v5406, 0
    %5444 = vmatpush.bf16.msra.mxu0 0
    %5445 = vmatpush.bf16.msra.mxu0 0
    %5446 = vmatpush.bf16.msra.mxu0 0
    %5447 = vmatpush.bf16.msra.mxu0 0
    %5448 = vmatpush.bf16.msra.mxu0 %v5427
    %5449 = vmatpush.bf16.msra.mxu0 %v5426
    %5450 = vmatpush.bf16.msra.mxu0 %v5425
    %5451 = vmatpush.bf16.msra.mxu0 %v5424
    %5452 = vmatmul.bf16.gmra.mxu0 %v5433
    %v5453 = vpop.f32.mrf.mxu0
    %v5454 = vadd.f32 0.0, %v5453
    %v5455 = vpop.f32.mrf.mxu0
    %v5456 = vadd.f32 0.0, %v5455
    %5457 = vmatmul.bf16.gmra.mxu0 %v5436
    %v5458 = vpop.f32.mrf.mxu0
    %v5459 = vadd.f32 0.0, %v5458
    %v5460 = vpop.f32.mrf.mxu0
    %v5461 = vadd.f32 0.0, %v5460
    %5462 = vmatmul.bf16.gmra.mxu0 %v5439
    %v5463 = vpop.f32.mrf.mxu0
    %v5464 = vadd.f32 0.0, %v5463
    %v5465 = vpop.f32.mrf.mxu0
    %v5466 = vadd.f32 0.0, %v5465
    %5467 = vmatmul.bf16.gmra.mxu0 %v5442
    %v5468 = vpop.f32.mrf.mxu0
    %v5469 = vadd.f32 0.0, %v5468
    %v5470 = vpop.f32.mrf.mxu0
    %v5471 = vadd.f32 0.0, %v5470
    %5472 = vdwg.mxu0
    %v5473 = vadd.f32 %v5376, %v5454
    %v5474 = vadd.f32 %v5377, %v5456
    %v5475 = vadd.f32 %v5378, %v5459
    %v5476 = vadd.f32 %v5379, %v5461
    %v5477 = vadd.f32 %v5380, %v5464
    %v5478 = vadd.f32 %v5381, %v5466
    %v5479 = vadd.f32 %v5382, %v5469
    %v5480 = vadd.f32 %v5383, %v5471
    %v5481 = vld [vmem:[#allocation4] sm:$0x8]
    %v5482 = vld [vmem:[#allocation4 + $0x4] sm:$0xf]
    %v5483 = vld [vmem:[#allocation4 + $0x8] sm:$0xf]
    %v5484 = vld [vmem:[#allocation4 + $0xc] sm:$0xf]
    %v5485 = vld [vmem:[#allocation4 + $0x10] sm:$0xf]
    %v5486 = vld [vmem:[#allocation4 + $0x14] sm:$0xf]
    %v5487 = vld [vmem:[#allocation4 + $0x18] sm:$0xf]
    %v5488 = vld [vmem:[#allocation4 + $0x1c] sm:$0xf]
    %v5489 = vld [vmem:[#allocation4 + $0x20] sm:$0x1]
    %s5490 = scalar_lea.vmem %s31, 128
    %v5491 = vld [vmem:[%s5490] sm:$0xf]
    %v5492 = vld [vmem:[%s5490 + $0x4] sm:$0xf]
    %v5493 = vld [vmem:[%s5490 + $0x8] sm:$0xf]
    %v5494 = vld [vmem:[%s5490 + $0xc] sm:$0xf]
    %v5495 = vld [vmem:[%s5490 + $0x10] sm:$0xf]
    %v5496 = vld [vmem:[%s5490 + $0x14] sm:$0xf]
    %v5497 = vld [vmem:[%s5490 + $0x18] sm:$0xf]
    %v5498 = vld [vmem:[%s5490 + $0x1c] sm:$0xf]
    %v5508 = vunpack.c.l.b16 %v5481
    %v5509 = vunpack.c.l.b16 %v5482
    %v5510 = vunpack.c.l.b16 %v5483
    %v5511 = vunpack.c.l.b16 %v5484
    %v5512 = vunpack.c.l.b16 %v5485
    %v5513 = vunpack.c.l.b16 %v5486
    %v5514 = vunpack.c.l.b16 %v5487
    %v5515 = vunpack.c.l.b16 %v5488
    %v5516 = vunpack.c.l.b16 %v5489
    %v5517 = vpack.c.b16 %v5509, %v5508
    %v5518 = vpack.c.b16 %v5511, %v5510
    %v5519 = vpack.c.b16 %v5513, %v5512
    %v5520 = vpack.c.b16 %v5515, %v5514
    %v5521 = vpack.c.b16 %v5516, %v5516
    %v5523 = vshrl.u32 %v5517, 16
    %v5525 = vrot.slane %v5523, 3
    %v5526 = vshll.u32 %v5517, 16
    %v5528 = vrot.slane %v5526, 4
    %v5529 = vor.u32 %v5525, %v5528
    %v5531 = vshrl.u32 %v5518, 16
    %v5533 = vrot.slane %v5531, 3
    %v5534 = vshll.u32 %v5518, 16
    %v5536 = vrot.slane %v5534, 4
    %v5537 = vor.u32 %v5533, %v5536
    %v5538 = vsel %vm2244, %v5529, %v5537
    %v5540 = vshrl.u32 %v5519, 16
    %v5542 = vrot.slane %v5540, 3
    %v5543 = vshll.u32 %v5519, 16
    %v5545 = vrot.slane %v5543, 4
    %v5546 = vor.u32 %v5542, %v5545
    %v5547 = vsel %vm2244, %v5537, %v5546
    %v5549 = vshrl.u32 %v5520, 16
    %v5551 = vrot.slane %v5549, 3
    %v5552 = vshll.u32 %v5520, 16
    %v5554 = vrot.slane %v5552, 4
    %v5555 = vor.u32 %v5551, %v5554
    %v5556 = vsel %vm2244, %v5546, %v5555
    %v5558 = vshll.u32 %v5521, 16
    %v5560 = vrot.slane %v5558, 4
    %v5561 = vsel %vm2244, %v5555, %v5560
    %v5570 = vunpack.c.l.b16 %v5491
    %v5571 = vunpack.c.l.b16 %v5492
    %v5572 = vunpack.c.l.b16 %v5493
    %v5573 = vunpack.c.l.b16 %v5494
    %v5574 = vunpack.c.l.b16 %v5495
    %v5575 = vunpack.c.l.b16 %v5496
    %v5576 = vunpack.c.l.b16 %v5497
    %v5577 = vunpack.c.l.b16 %v5498
    %v5578 = vpack.c.b16 %v5571, %v5570
    %v5579 = vpack.c.b16 %v5573, %v5572
    %v5580 = vpack.c.b16 %v5575, %v5574
    %v5581 = vpack.c.b16 %v5577, %v5576
    %v5587 = vsel %vm1904, %v5538, 0
    %v5590 = vsel %vm1904, %v5547, 0
    %v5593 = vsel %vm1904, %v5556, 0
    %v5596 = vsel %vm1904, %v5561, 0
    %5598 = vmatpush.bf16.msra.mxu0 0
    %5599 = vmatpush.bf16.msra.mxu0 0
    %5600 = vmatpush.bf16.msra.mxu0 0
    %5601 = vmatpush.bf16.msra.mxu0 0
    %5602 = vmatpush.bf16.msra.mxu0 %v5581
    %5603 = vmatpush.bf16.msra.mxu0 %v5580
    %5604 = vmatpush.bf16.msra.mxu0 %v5579
    %5605 = vmatpush.bf16.msra.mxu0 %v5578
    %5606 = vmatmul.bf16.gmra.mxu0 %v5587
    %v5607 = vpop.f32.mrf.mxu0
    %v5608 = vadd.f32 0.0, %v5607
    %v5609 = vpop.f32.mrf.mxu0
    %v5610 = vadd.f32 0.0, %v5609
    %5611 = vmatmul.bf16.gmra.mxu0 %v5590
    %v5612 = vpop.f32.mrf.mxu0
    %v5613 = vadd.f32 0.0, %v5612
    %v5614 = vpop.f32.mrf.mxu0
    %v5615 = vadd.f32 0.0, %v5614
    %5616 = vmatmul.bf16.gmra.mxu0 %v5593
    %v5617 = vpop.f32.mrf.mxu0
    %v5618 = vadd.f32 0.0, %v5617
    %v5619 = vpop.f32.mrf.mxu0
    %v5620 = vadd.f32 0.0, %v5619
    %5621 = vmatmul.bf16.gmra.mxu0 %v5596
    %v5622 = vpop.f32.mrf.mxu0
    %v5623 = vadd.f32 0.0, %v5622
    %v5624 = vpop.f32.mrf.mxu0
    %v5625 = vadd.f32 0.0, %v5624
    %5626 = vdwg.mxu0
    %v5627 = vadd.f32 %v5473, %v5608
    %v5628 = vadd.f32 %v5474, %v5610
    %v5629 = vadd.f32 %v5475, %v5613
    %v5630 = vadd.f32 %v5476, %v5615
    %v5631 = vadd.f32 %v5477, %v5618
    %v5632 = vadd.f32 %v5478, %v5620
    %v5633 = vadd.f32 %v5479, %v5623
    %v5634 = vadd.f32 %v5480, %v5625
    %s5635 = scalar_lea.vmem %s31, 160
    %v5636 = vld [vmem:[%s5635] sm:$0xf]
    %v5637 = vld [vmem:[%s5635 + $0x4] sm:$0xf]
    %v5638 = vld [vmem:[%s5635 + $0x8] sm:$0xf]
    %v5639 = vld [vmem:[%s5635 + $0xc] sm:$0xf]
    %v5640 = vld [vmem:[%s5635 + $0x10] sm:$0xf]
    %v5641 = vld [vmem:[%s5635 + $0x14] sm:$0xf]
    %v5642 = vld [vmem:[%s5635 + $0x18] sm:$0xf]
    %v5643 = vld [vmem:[%s5635 + $0x1c] sm:$0xf]
    %v5644 = vpack.c.b16 %v5510, %v5509
    %v5645 = vpack.c.b16 %v5512, %v5511
    %v5646 = vpack.c.b16 %v5514, %v5513
    %v5647 = vpack.c.b16 %v5516, %v5515
    %v5656 = vunpack.c.l.b16 %v5636
    %v5657 = vunpack.c.l.b16 %v5637
    %v5658 = vunpack.c.l.b16 %v5638
    %v5659 = vunpack.c.l.b16 %v5639
    %v5660 = vunpack.c.l.b16 %v5640
    %v5661 = vunpack.c.l.b16 %v5641
    %v5662 = vunpack.c.l.b16 %v5642
    %v5663 = vunpack.c.l.b16 %v5643
    %v5664 = vpack.c.b16 %v5657, %v5656
    %v5665 = vpack.c.b16 %v5659, %v5658
    %v5666 = vpack.c.b16 %v5661, %v5660
    %v5667 = vpack.c.b16 %v5663, %v5662
    %v5673 = vsel %vm1904, %v5644, 0
    %v5676 = vsel %vm1904, %v5645, 0
    %v5679 = vsel %vm1904, %v5646, 0
    %v5682 = vsel %vm1904, %v5647, 0
    %5684 = vmatpush.bf16.msra.mxu0 0
    %5685 = vmatpush.bf16.msra.mxu0 0
    %5686 = vmatpush.bf16.msra.mxu0 0
    %5687 = vmatpush.bf16.msra.mxu0 0
    %5688 = vmatpush.bf16.msra.mxu0 %v5667
    %5689 = vmatpush.bf16.msra.mxu0 %v5666
    %5690 = vmatpush.bf16.msra.mxu0 %v5665
    %5691 = vmatpush.bf16.msra.mxu0 %v5664
    %5692 = vmatmul.bf16.gmra.mxu0 %v5673
    %v5693 = vpop.f32.mrf.mxu0
    %v5694 = vadd.f32 0.0, %v5693
    %v5695 = vpop.f32.mrf.mxu0
    %v5696 = vadd.f32 0.0, %v5695
    %5697 = vmatmul.bf16.gmra.mxu0 %v5676
    %v5698 = vpop.f32.mrf.mxu0
    %v5699 = vadd.f32 0.0, %v5698
    %v5700 = vpop.f32.mrf.mxu0
    %v5701 = vadd.f32 0.0, %v5700
    %5702 = vmatmul.bf16.gmra.mxu0 %v5679
    %v5703 = vpop.f32.mrf.mxu0
    %v5704 = vadd.f32 0.0, %v5703
    %v5705 = vpop.f32.mrf.mxu0
    %v5706 = vadd.f32 0.0, %v5705
    %5707 = vmatmul.bf16.gmra.mxu0 %v5682
    %v5708 = vpop.f32.mrf.mxu0
    %v5709 = vadd.f32 0.0, %v5708
    %v5710 = vpop.f32.mrf.mxu0
    %v5711 = vadd.f32 0.0, %v5710
    %5712 = vdwg.mxu0
    %v5713 = vadd.f32 %v5627, %v5694
    %v5714 = vadd.f32 %v5628, %v5696
    %v5715 = vadd.f32 %v5629, %v5699
    %v5716 = vadd.f32 %v5630, %v5701
    %v5717 = vadd.f32 %v5631, %v5704
    %v5718 = vadd.f32 %v5632, %v5706
    %v5719 = vadd.f32 %v5633, %v5709
    %v5720 = vadd.f32 %v5634, %v5711
    %v5721 = vld [vmem:[#allocation4 + $0x4] sm:$0xc]
    %v5722 = vld [vmem:[#allocation4 + $0x20] sm:$0x7]
    %s5723 = scalar_lea.vmem %s31, 192
    %v5724 = vld [vmem:[%s5723] sm:$0xf]
    %v5725 = vld [vmem:[%s5723 + $0x4] sm:$0xf]
    %v5726 = vld [vmem:[%s5723 + $0x8] sm:$0xf]
    %v5727 = vld [vmem:[%s5723 + $0xc] sm:$0xf]
    %v5728 = vld [vmem:[%s5723 + $0x10] sm:$0xf]
    %v5729 = vld [vmem:[%s5723 + $0x14] sm:$0xf]
    %v5730 = vld [vmem:[%s5723 + $0x18] sm:$0xf]
    %v5731 = vld [vmem:[%s5723 + $0x1c] sm:$0xf]
    %v5734 = vunpack.c.l.b16 %v5721
    %v5735 = vunpack.c.l.b16 %v5722
    %v5736 = vpack.c.b16 %v5510, %v5734
    %v5737 = vpack.c.b16 %v5735, %v5515
    %v5738 = vrot.slane %v5736, 2
    %v5739 = vrot.slane %v5645, 2
    %v5740 = vsel %vm2461, %v5738, %v5739
    %v5741 = vrot.slane %v5646, 2
    %v5742 = vsel %vm2461, %v5739, %v5741
    %v5743 = vrot.slane %v5737, 2
    %v5744 = vsel %vm2461, %v5741, %v5743
    %v5753 = vunpack.c.l.b16 %v5724
    %v5754 = vunpack.c.l.b16 %v5725
    %v5755 = vunpack.c.l.b16 %v5726
    %v5756 = vunpack.c.l.b16 %v5727
    %v5757 = vunpack.c.l.b16 %v5728
    %v5758 = vunpack.c.l.b16 %v5729
    %v5759 = vunpack.c.l.b16 %v5730
    %v5760 = vunpack.c.l.b16 %v5731
    %v5761 = vpack.c.b16 %v5754, %v5753
    %v5762 = vpack.c.b16 %v5756, %v5755
    %v5763 = vpack.c.b16 %v5758, %v5757
    %v5764 = vpack.c.b16 %v5760, %v5759
    %v5770 = vsel %vm1904, %v5740, 0
    %v5773 = vsel %vm1904, %v5742, 0
    %v5776 = vsel %vm1904, %v5744, 0
    %v5779 = vsel %vm1904, %v5743, 0
    %5781 = vmatpush.bf16.msra.mxu0 0
    %5782 = vmatpush.bf16.msra.mxu0 0
    %5783 = vmatpush.bf16.msra.mxu0 0
    %5784 = vmatpush.bf16.msra.mxu0 0
    %5785 = vmatpush.bf16.msra.mxu0 %v5764
    %5786 = vmatpush.bf16.msra.mxu0 %v5763
    %5787 = vmatpush.bf16.msra.mxu0 %v5762
    %5788 = vmatpush.bf16.msra.mxu0 %v5761
    %5789 = vmatmul.bf16.gmra.mxu0 %v5770
    %v5790 = vpop.f32.mrf.mxu0
    %v5791 = vadd.f32 0.0, %v5790
    %v5792 = vpop.f32.mrf.mxu0
    %v5793 = vadd.f32 0.0, %v5792
    %5794 = vmatmul.bf16.gmra.mxu0 %v5773
    %v5795 = vpop.f32.mrf.mxu0
    %v5796 = vadd.f32 0.0, %v5795
    %v5797 = vpop.f32.mrf.mxu0
    %v5798 = vadd.f32 0.0, %v5797
    %5799 = vmatmul.bf16.gmra.mxu0 %v5776
    %v5800 = vpop.f32.mrf.mxu0
    %v5801 = vadd.f32 0.0, %v5800
    %v5802 = vpop.f32.mrf.mxu0
    %v5803 = vadd.f32 0.0, %v5802
    %5804 = vmatmul.bf16.gmra.mxu0 %v5779
    %v5805 = vpop.f32.mrf.mxu0
    %v5806 = vadd.f32 0.0, %v5805
    %v5807 = vpop.f32.mrf.mxu0
    %v5808 = vadd.f32 0.0, %v5807
    %5809 = vdwg.mxu0
    %v5810 = vadd.f32 %v5713, %v5791
    %v5811 = vadd.f32 %v5714, %v5793
    %v5812 = vadd.f32 %v5715, %v5796
    %v5813 = vadd.f32 %v5716, %v5798
    %v5814 = vadd.f32 %v5717, %v5801
    %v5815 = vadd.f32 %v5718, %v5803
    %v5816 = vadd.f32 %v5719, %v5806
    %v5817 = vadd.f32 %v5720, %v5808
    %v5818 = vld [vmem:[#allocation4 + $0x20] sm:$0xf]
    %s5819 = scalar_lea.vmem %s31, 224
    %v5820 = vld [vmem:[%s5819] sm:$0xf]
    %v5821 = vld [vmem:[%s5819 + $0x4] sm:$0xf]
    %v5822 = vld [vmem:[%s5819 + $0x8] sm:$0xf]
    %v5823 = vld [vmem:[%s5819 + $0xc] sm:$0xf]
    %v5824 = vld [vmem:[%s5819 + $0x10] sm:$0xf]
    %v5825 = vld [vmem:[%s5819 + $0x14] sm:$0xf]
    %v5826 = vld [vmem:[%s5819 + $0x18] sm:$0xf]
    %v5827 = vld [vmem:[%s5819 + $0x1c] sm:$0xf]
    %v5829 = vunpack.c.l.b16 %v5818
    %v5830 = vpack.c.b16 %v5829, %v5515
    %v5832 = vshrl.u32 %v5736, 16
    %v5834 = vrot.slane %v5832, 2
    %v5835 = vshll.u32 %v5736, 16
    %v5837 = vrot.slane %v5835, 3
    %v5838 = vor.u32 %v5834, %v5837
    %v5839 = vshrl.u32 %v5645, 16
    %v5841 = vrot.slane %v5839, 2
    %v5842 = vshll.u32 %v5645, 16
    %v5844 = vrot.slane %v5842, 3
    %v5845 = vor.u32 %v5841, %v5844
    %v5846 = vsel %vm2555, %v5838, %v5845
    %v5847 = vshrl.u32 %v5646, 16
    %v5849 = vrot.slane %v5847, 2
    %v5850 = vshll.u32 %v5646, 16
    %v5852 = vrot.slane %v5850, 3
    %v5853 = vor.u32 %v5849, %v5852
    %v5854 = vsel %vm2555, %v5845, %v5853
    %v5856 = vshrl.u32 %v5830, 16
    %v5858 = vrot.slane %v5856, 2
    %v5859 = vshll.u32 %v5830, 16
    %v5861 = vrot.slane %v5859, 3
    %v5862 = vor.u32 %v5858, %v5861
    %v5863 = vsel %vm2555, %v5853, %v5862
    %v5872 = vunpack.c.l.b16 %v5820
    %v5873 = vunpack.c.l.b16 %v5821
    %v5874 = vunpack.c.l.b16 %v5822
    %v5875 = vunpack.c.l.b16 %v5823
    %v5876 = vunpack.c.l.b16 %v5824
    %v5877 = vunpack.c.l.b16 %v5825
    %v5878 = vunpack.c.l.b16 %v5826
    %v5879 = vunpack.c.l.b16 %v5827
    %v5880 = vpack.c.b16 %v5873, %v5872
    %v5881 = vpack.c.b16 %v5875, %v5874
    %v5882 = vpack.c.b16 %v5877, %v5876
    %v5883 = vpack.c.b16 %v5879, %v5878
    %v5889 = vsel %vm1904, %v5846, 0
    %v5892 = vsel %vm1904, %v5854, 0
    %v5895 = vsel %vm1904, %v5863, 0
    %v5898 = vsel %vm1904, %v5862, 0
    %5900 = vmatpush.bf16.msra.mxu0 0
    %5901 = vmatpush.bf16.msra.mxu0 0
    %5902 = vmatpush.bf16.msra.mxu0 0
    %5903 = vmatpush.bf16.msra.mxu0 0
    %5904 = vmatpush.bf16.msra.mxu0 %v5883
    %5905 = vmatpush.bf16.msra.mxu0 %v5882
    %5906 = vmatpush.bf16.msra.mxu0 %v5881
    %5907 = vmatpush.bf16.msra.mxu0 %v5880
    %5908 = vmatmul.bf16.gmra.mxu0 %v5889
    %v5909 = vpop.f32.mrf.mxu0
    %v5910 = vadd.f32 0.0, %v5909
    %v5911 = vpop.f32.mrf.mxu0
    %v5912 = vadd.f32 0.0, %v5911
    %5913 = vmatmul.bf16.gmra.mxu0 %v5892
    %v5914 = vpop.f32.mrf.mxu0
    %v5915 = vadd.f32 0.0, %v5914
    %v5916 = vpop.f32.mrf.mxu0
    %v5917 = vadd.f32 0.0, %v5916
    %5918 = vmatmul.bf16.gmra.mxu0 %v5895
    %v5919 = vpop.f32.mrf.mxu0
    %v5920 = vadd.f32 0.0, %v5919
    %v5921 = vpop.f32.mrf.mxu0
    %v5922 = vadd.f32 0.0, %v5921
    %5923 = vmatmul.bf16.gmra.mxu0 %v5898
    %v5924 = vpop.f32.mrf.mxu0
    %v5925 = vadd.f32 0.0, %v5924
    %v5926 = vpop.f32.mrf.mxu0
    %v5927 = vadd.f32 0.0, %v5926
    %5928 = vdwg.mxu0
    %v5929 = vadd.f32 %v5810, %v5910
    %v5930 = vadd.f32 %v5811, %v5912
    %v5931 = vadd.f32 %v5812, %v5915
    %v5932 = vadd.f32 %v5813, %v5917
    %v5933 = vadd.f32 %v5814, %v5920
    %v5934 = vadd.f32 %v5815, %v5922
    %v5935 = vadd.f32 %v5816, %v5925
    %v5936 = vadd.f32 %v5817, %v5927
    %v5937 = vld [vmem:[#allocation4 + $0x4] sm:$0x8]
    %s5938 = scalar_lea.vmem %s31, 256
    %v5939 = vld [vmem:[%s5938] sm:$0xf]
    %v5940 = vld [vmem:[%s5938 + $0x4] sm:$0xf]
    %v5941 = vld [vmem:[%s5938 + $0x8] sm:$0xf]
    %v5942 = vld [vmem:[%s5938 + $0xc] sm:$0xf]
    %v5943 = vld [vmem:[%s5938 + $0x10] sm:$0xf]
    %v5944 = vld [vmem:[%s5938 + $0x14] sm:$0xf]
    %v5945 = vld [vmem:[%s5938 + $0x18] sm:$0xf]
    %v5946 = vld [vmem:[%s5938 + $0x1c] sm:$0xf]
    %v5948 = vunpack.c.l.b16 %v5937
    %v5949 = vpack.c.b16 %v5510, %v5948
    %v5950 = vrot.slane %v5949, 3
    %v5951 = vrot.slane %v5645, 3
    %v5952 = vsel %vm2122, %v5950, %v5951
    %v5953 = vrot.slane %v5646, 3
    %v5954 = vsel %vm2122, %v5951, %v5953
    %v5955 = vrot.slane %v5830, 3
    %v5956 = vsel %vm2122, %v5953, %v5955
    %v5965 = vunpack.c.l.b16 %v5939
    %v5966 = vunpack.c.l.b16 %v5940
    %v5967 = vunpack.c.l.b16 %v5941
    %v5968 = vunpack.c.l.b16 %v5942
    %v5969 = vunpack.c.l.b16 %v5943
    %v5970 = vunpack.c.l.b16 %v5944
    %v5971 = vunpack.c.l.b16 %v5945
    %v5972 = vunpack.c.l.b16 %v5946
    %v5973 = vpack.c.b16 %v5966, %v5965
    %v5974 = vpack.c.b16 %v5968, %v5967
    %v5975 = vpack.c.b16 %v5970, %v5969
    %v5976 = vpack.c.b16 %v5972, %v5971
    %v5982 = vsel %vm1904, %v5952, 0
    %v5985 = vsel %vm1904, %v5954, 0
    %v5988 = vsel %vm1904, %v5956, 0
    %v5991 = vsel %vm1904, %v5955, 0
    %5993 = vmatpush.bf16.msra.mxu0 0
    %5994 = vmatpush.bf16.msra.mxu0 0
    %5995 = vmatpush.bf16.msra.mxu0 0
    %5996 = vmatpush.bf16.msra.mxu0 0
    %5997 = vmatpush.bf16.msra.mxu0 %v5976
    %5998 = vmatpush.bf16.msra.mxu0 %v5975
    %5999 = vmatpush.bf16.msra.mxu0 %v5974
    %6000 = vmatpush.bf16.msra.mxu0 %v5973
    %6001 = vmatmul.bf16.gmra.mxu0 %v5982
    %v6002 = vpop.f32.mrf.mxu0
    %v6003 = vadd.f32 0.0, %v6002
    %v6004 = vpop.f32.mrf.mxu0
    %v6005 = vadd.f32 0.0, %v6004
    %6006 = vmatmul.bf16.gmra.mxu0 %v5985
    %v6007 = vpop.f32.mrf.mxu0
    %v6008 = vadd.f32 0.0, %v6007
    %v6009 = vpop.f32.mrf.mxu0
    %v6010 = vadd.f32 0.0, %v6009
    %6011 = vmatmul.bf16.gmra.mxu0 %v5988
    %v6012 = vpop.f32.mrf.mxu0
    %v6013 = vadd.f32 0.0, %v6012
    %v6014 = vpop.f32.mrf.mxu0
    %v6015 = vadd.f32 0.0, %v6014
    %6016 = vmatmul.bf16.gmra.mxu0 %v5991
    %v6017 = vpop.f32.mrf.mxu0
    %v6018 = vadd.f32 0.0, %v6017
    %v6019 = vpop.f32.mrf.mxu0
    %v6020 = vadd.f32 0.0, %v6019
    %6021 = vdwg.mxu0
    %v6022 = vadd.f32 %v5929, %v6003
    %v6023 = vadd.f32 %v5930, %v6005
    %v6024 = vadd.f32 %v5931, %v6008
    %v6025 = vadd.f32 %v5932, %v6010
    %v6026 = vadd.f32 %v5933, %v6013
    %v6027 = vadd.f32 %v5934, %v6015
    %v6028 = vadd.f32 %v5935, %v6018
    %v6029 = vadd.f32 %v5936, %v6020
    %v6030 = vld [vmem:[%s33] sm:$0x1]
    %v6032 = vperm.slane %v6030, 0
    %v6034 = vadd.f32 %v6022, %v6032
    %v6035 = vadd.f32 %v6023, %v6032
    %v6036 = vadd.f32 %v6024, %v6032
    %v6037 = vadd.f32 %v6025, %v6032
    %v6038 = vadd.f32 %v6026, %v6032
    %v6039 = vadd.f32 %v6027, %v6032
    %v6040 = vadd.f32 %v6028, %v6032
    %v6041 = vadd.f32 %v6029, %v6032
    %v6042 = vld [vmem:[#allocation3] sm:$0x8]
    %v6043 = vld [vmem:[#allocation3 + $0x4] sm:$0xf]
    %v6044 = vld [vmem:[#allocation3 + $0x8] sm:$0xf]
    %v6045 = vld [vmem:[#allocation3 + $0xc] sm:$0xf]
    %v6046 = vld [vmem:[#allocation3 + $0x10] sm:$0xf]
    %v6047 = vld [vmem:[#allocation3 + $0x14] sm:$0xf]
    %v6048 = vld [vmem:[#allocation3 + $0x18] sm:$0xf]
    %v6049 = vld [vmem:[#allocation3 + $0x1c] sm:$0xf]
    %v6050 = vld [vmem:[#allocation3 + $0x20] sm:$0x1]
    %v6051 = vunpack.c.l.bf16 %v6042
    %v6052 = vunpack.c.l.bf16 %v6043
    %v6053 = vunpack.c.l.bf16 %v6044
    %v6054 = vunpack.c.l.bf16 %v6045
    %v6055 = vunpack.c.l.bf16 %v6046
    %v6056 = vunpack.c.l.bf16 %v6047
    %v6057 = vunpack.c.l.bf16 %v6048
    %v6058 = vunpack.c.l.bf16 %v6049
    %v6059 = vunpack.c.l.bf16 %v6050
    %v6069 = vrot.slane %v6051, 7
    %v6070 = vrot.slane %v6052, 7
    %v6071 = vsel %vm3866, %v6069, %v6070
    %v6072 = vrot.slane %v6053, 7
    %v6073 = vsel %vm3866, %v6070, %v6072
    %v6074 = vrot.slane %v6054, 7
    %v6075 = vsel %vm3866, %v6072, %v6074
    %v6076 = vrot.slane %v6055, 7
    %v6077 = vsel %vm3866, %v6074, %v6076
    %v6078 = vrot.slane %v6056, 7
    %v6079 = vsel %vm3866, %v6076, %v6078
    %v6080 = vrot.slane %v6057, 7
    %v6081 = vsel %vm3866, %v6078, %v6080
    %v6082 = vrot.slane %v6058, 7
    %v6083 = vsel %vm3866, %v6080, %v6082
    %v6084 = vrot.slane %v6059, 7
    %v6085 = vsel %vm3866, %v6082, %v6084
    %v6094 = vadd.f32 %v6034, %v6071
    %v6095 = vadd.f32 %v6035, %v6073
    %v6096 = vadd.f32 %v6036, %v6075
    %v6097 = vadd.f32 %v6037, %v6077
    %v6098 = vadd.f32 %v6038, %v6079
    %v6099 = vadd.f32 %v6039, %v6081
    %v6100 = vadd.f32 %v6040, %v6083
    %v6101 = vadd.f32 %v6041, %v6085
    %v6102 = vmax.f32 %v6094, 0.0
    %v6103 = vmax.f32 %v6095, 0.0
    %v6104 = vmax.f32 %v6096, 0.0
    %v6105 = vmax.f32 %v6097, 0.0
    %v6106 = vmax.f32 %v6098, 0.0
    %v6107 = vmax.f32 %v6099, 0.0
    %v6108 = vmax.f32 %v6100, 0.0
    %v6109 = vmax.f32 %v6101, 0.0
    %v6110 = vld [vmem:[%s5] sm:$0xf]
    %v6111 = vld [vmem:[%s5 + $0x4] sm:$0xf]
    %v6112 = vld [vmem:[%s5 + $0x8] sm:$0xf]
    %v6113 = vld [vmem:[%s5 + $0xc] sm:$0xf]
    %v6114 = vld [vmem:[%s5 + $0x10] sm:$0xf]
    %v6115 = vld [vmem:[%s5 + $0x14] sm:$0xf]
    %v6116 = vld [vmem:[%s5 + $0x18] sm:$0xf]
    %v6117 = vld [vmem:[%s5 + $0x1c] sm:$0xf]
    %v6118 = vld [vmem:[%s5 + $0x20] sm:$0xf]
    %v6119 = vpack.c.bf16 %v6103, %v6102
    %v6120 = vpack.c.bf16 %v6105, %v6104
    %v6121 = vpack.c.bf16 %v6107, %v6106
    %v6122 = vpack.c.bf16 %v6109, %v6108
    %v6132 = vunpack.c.l.b16 %v6110
    %v6133 = vunpack.c.l.b16 %v6111
    %v6134 = vunpack.c.l.b16 %v6112
    %v6135 = vunpack.c.l.b16 %v6113
    %v6136 = vunpack.c.l.b16 %v6114
    %v6137 = vunpack.c.l.b16 %v6115
    %v6138 = vunpack.c.l.b16 %v6116
    %v6139 = vunpack.c.l.b16 %v6117
    %v6140 = vunpack.c.l.b16 %v6118
    %v6141 = vpack.c.b16 %v6133, %v6132
    %v6142 = vpack.c.b16 %v6135, %v6134
    %v6143 = vpack.c.b16 %v6137, %v6136
    %v6144 = vpack.c.b16 %v6139, %v6138
    %v6145 = vpack.c.b16 %v6140, %v6140
    %v6147 = vsel %vm2811, %v6141, 0
    %v6150 = vsel %vm2811, %v6142, 0
    %v6153 = vsel %vm2811, %v6143, 0
    %v6156 = vsel %vm2811, %v6144, 0
    %v6159 = vsel %vm2811, %v6145, 0
    %v6162 = vsel %vm1072, %v6122, 0
    %6164 = vmatpush.bf16.msra.mxu0 0
    %6165 = vmatpush.bf16.msra.mxu0 0
    %6166 = vmatpush.bf16.msra.mxu0 0
    %6167 = vmatpush.bf16.msra.mxu0 0
    %6168 = vmatpush.bf16.msra.mxu0 %v6162
    %6169 = vmatpush.bf16.msra.mxu0 %v6121
    %6170 = vmatpush.bf16.msra.mxu0 %v6120
    %6171 = vmatpush.bf16.msra.mxu0 %v6119
    %6172 = vmatmul.bf16.gmra.mxu0 %v6147
    %v6173 = vpop.f32.mrf.mxu0
    %v6174 = vadd.f32 0.0, %v6173
    %v6175 = vpop.f32.mrf.mxu0
    %v6176 = vadd.f32 0.0, %v6175
    %6177 = vmatmul.bf16.gmra.mxu0 %v6150
    %v6178 = vpop.f32.mrf.mxu0
    %v6179 = vadd.f32 0.0, %v6178
    %v6180 = vpop.f32.mrf.mxu0
    %v6181 = vadd.f32 0.0, %v6180
    %6182 = vmatmul.bf16.gmra.mxu0 %v6153
    %v6183 = vpop.f32.mrf.mxu0
    %v6184 = vadd.f32 0.0, %v6183
    %v6185 = vpop.f32.mrf.mxu0
    %v6186 = vadd.f32 0.0, %v6185
    %6187 = vmatmul.bf16.gmra.mxu0 %v6156
    %v6188 = vpop.f32.mrf.mxu0
    %v6189 = vadd.f32 0.0, %v6188
    %v6190 = vpop.f32.mrf.mxu0
    %v6191 = vadd.f32 0.0, %v6190
    %6192 = vmatmul.bf16.gmra.mxu0 %v6159
    %v6193 = vpop.f32.mrf.mxu0
    %v6194 = vadd.f32 0.0, %v6193
    %v6195 = vpop.f32.mrf.mxu0
    %6196 = vdwg.mxu0
    %v6197 = vpack.c.bf16 %v6174, %v6174
    %v6198 = vpack.c.bf16 %v6176, %v6176
    %v6199 = vpack.c.bf16 %v6179, %v6179
    %v6200 = vpack.c.bf16 %v6181, %v6181
    %v6201 = vpack.c.bf16 %v6184, %v6184
    %v6202 = vpack.c.bf16 %v6186, %v6186
    %v6203 = vpack.c.bf16 %v6189, %v6189
    %v6204 = vpack.c.bf16 %v6191, %v6191
    %v6205 = vpack.c.bf16 %v6194, %v6194
    %6206 = vst.msk [vmem:[#allocation3] sm:$0xf] %vm642, %v6197
    %6207 = vst.msk [vmem:[#allocation3 + $0x4] sm:$0xf] %vm642, %v6198
    %6208 = vst.msk [vmem:[#allocation3 + $0x8] sm:$0xf] %vm642, %v6199
    %6209 = vst.msk [vmem:[#allocation3 + $0xc] sm:$0xf] %vm642, %v6200
    %6210 = vst.msk [vmem:[#allocation3 + $0x10] sm:$0xf] %vm642, %v6201
    %6211 = vst.msk [vmem:[#allocation3 + $0x14] sm:$0xf] %vm642, %v6202
    %6212 = vst.msk [vmem:[#allocation3 + $0x18] sm:$0xf] %vm642, %v6203
    %6213 = vst.msk [vmem:[#allocation3 + $0x1c] sm:$0xf] %vm642, %v6204
    %6214 = vst.msk [vmem:[#allocation3 + $0x20] sm:$0xf] %vm642, %v6205
    %v6215 = vld [vmem:[#allocation3] sm:$0x8]
    %v6216 = vld [vmem:[#allocation3 + $0x4] sm:$0xf]
    %v6217 = vld [vmem:[#allocation3 + $0x8] sm:$0xf]
    %v6218 = vld [vmem:[#allocation3 + $0xc] sm:$0xf]
    %v6219 = vld [vmem:[#allocation3 + $0x10] sm:$0xf]
    %v6220 = vld [vmem:[#allocation3 + $0x14] sm:$0xf]
    %v6221 = vld [vmem:[#allocation3 + $0x18] sm:$0xf]
    %v6222 = vld [vmem:[#allocation3 + $0x1c] sm:$0x1]
    %v6223 = vld [vmem:[%s43] sm:$0xf]
    %v6224 = vld [vmem:[%s43 + $0x4] sm:$0xf]
    %v6225 = vld [vmem:[%s43 + $0x8] sm:$0xf]
    %v6226 = vld [vmem:[%s43 + $0xc] sm:$0xf]
    %v6227 = vld [vmem:[%s43 + $0x10] sm:$0xf]
    %v6228 = vld [vmem:[%s43 + $0x14] sm:$0xf]
    %v6229 = vld [vmem:[%s43 + $0x18] sm:$0xf]
    %v6230 = vld [vmem:[%s43 + $0x1c] sm:$0xf]
    %v6231 = vld [vmem:[%s45] sm:$0x1]
    %v6233 = vperm.slane %v6231, 0
    %v6243 = vunpack.c.l.b16 %v6215
    %v6244 = vunpack.c.l.b16 %v6216
    %v6245 = vunpack.c.l.b16 %v6217
    %v6246 = vunpack.c.l.b16 %v6218
    %v6247 = vunpack.c.l.b16 %v6219
    %v6248 = vunpack.c.l.b16 %v6220
    %v6249 = vunpack.c.l.b16 %v6221
    %v6250 = vunpack.c.l.b16 %v6222
    %v6251 = vpack.c.b16 %v6244, %v6243
    %v6252 = vpack.c.b16 %v6246, %v6245
    %v6253 = vpack.c.b16 %v6248, %v6247
    %v6254 = vpack.c.b16 %v6250, %v6249
    %v6256 = vshrl.u32 %v6251, 16
    %v6258 = vrot.slane %v6256, 3
    %v6259 = vshll.u32 %v6251, 16
    %v6261 = vrot.slane %v6259, 4
    %v6262 = vor.u32 %v6258, %v6261
    %v6264 = vshrl.u32 %v6252, 16
    %v6266 = vrot.slane %v6264, 3
    %v6267 = vshll.u32 %v6252, 16
    %v6269 = vrot.slane %v6267, 4
    %v6270 = vor.u32 %v6266, %v6269
    %v6271 = vsel %vm2244, %v6262, %v6270
    %v6273 = vshrl.u32 %v6253, 16
    %v6275 = vrot.slane %v6273, 3
    %v6276 = vshll.u32 %v6253, 16
    %v6278 = vrot.slane %v6276, 4
    %v6279 = vor.u32 %v6275, %v6278
    %v6280 = vsel %vm2244, %v6270, %v6279
    %v6282 = vshrl.u32 %v6254, 16
    %v6284 = vrot.slane %v6282, 3
    %v6285 = vshll.u32 %v6254, 16
    %v6287 = vrot.slane %v6285, 4
    %v6288 = vor.u32 %v6284, %v6287
    %v6289 = vsel %vm2244, %v6279, %v6288
    %v6298 = vunpack.c.l.b16 %v6223
    %v6299 = vunpack.c.l.b16 %v6224
    %v6300 = vunpack.c.l.b16 %v6225
    %v6301 = vunpack.c.l.b16 %v6226
    %v6302 = vunpack.c.l.b16 %v6227
    %v6303 = vunpack.c.l.b16 %v6228
    %v6304 = vunpack.c.l.b16 %v6229
    %v6305 = vunpack.c.l.b16 %v6230
    %v6306 = vpack.c.b16 %v6299, %v6298
    %v6307 = vpack.c.b16 %v6301, %v6300
    %v6308 = vpack.c.b16 %v6303, %v6302
    %v6309 = vpack.c.b16 %v6305, %v6304
    %v6315 = vsel %vm1904, %v6271, 0
    %v6318 = vsel %vm1904, %v6280, 0
    %v6321 = vsel %vm1904, %v6289, 0
    %v6324 = vsel %vm1904, %v6288, 0
    %6326 = vmatpush.bf16.msra.mxu0 0
    %6327 = vmatpush.bf16.msra.mxu0 0
    %6328 = vmatpush.bf16.msra.mxu0 0
    %6329 = vmatpush.bf16.msra.mxu0 0
    %6330 = vmatpush.bf16.msra.mxu0 %v6309
    %6331 = vmatpush.bf16.msra.mxu0 %v6308
    %6332 = vmatpush.bf16.msra.mxu0 %v6307
    %6333 = vmatpush.bf16.msra.mxu0 %v6306
    %6334 = vmatmul.bf16.gmra.mxu0 %v6315
    %v6335 = vpop.f32.mrf.mxu0
    %v6336 = vadd.f32 %v6233, %v6335
    %v6337 = vpop.f32.mrf.mxu0
    %v6338 = vadd.f32 %v6233, %v6337
    %6339 = vmatmul.bf16.gmra.mxu0 %v6318
    %v6340 = vpop.f32.mrf.mxu0
    %v6341 = vadd.f32 %v6233, %v6340
    %v6342 = vpop.f32.mrf.mxu0
    %v6343 = vadd.f32 %v6233, %v6342
    %6344 = vmatmul.bf16.gmra.mxu0 %v6321
    %v6345 = vpop.f32.mrf.mxu0
    %v6346 = vadd.f32 %v6233, %v6345
    %v6347 = vpop.f32.mrf.mxu0
    %v6348 = vadd.f32 %v6233, %v6347
    %6349 = vmatmul.bf16.gmra.mxu0 %v6324
    %v6350 = vpop.f32.mrf.mxu0
    %v6351 = vadd.f32 %v6233, %v6350
    %v6352 = vpop.f32.mrf.mxu0
    %6353 = vdwg.mxu0
    %v6354 = vld [vmem:[%s7] sm:$0xf]
    %v6355 = vld [vmem:[%s7 + $0x4] sm:$0xf]
    %v6356 = vld [vmem:[%s7 + $0x8] sm:$0xf]
    %v6357 = vld [vmem:[%s7 + $0xc] sm:$0xf]
    %v6358 = vpack.c.bf16 %v6338, %v6336
    %v6359 = vpack.c.bf16 %v6343, %v6341
    %v6360 = vpack.c.bf16 %v6348, %v6346
    %v6361 = vpack.c.bf16 %v6351, %v6351
    %v6366 = vunpack.c.l.b16 %v6354
    %v6367 = vunpack.c.l.b16 %v6355
    %v6368 = vunpack.c.l.b16 %v6356
    %v6369 = vunpack.c.l.b16 %v6357
    %v6370 = vpack.c.b16 %v6367, %v6366
    %v6371 = vpack.c.b16 %v6369, %v6368
    %vm6372 = vcmask 416768
    %v6374 = vsel %vm6372, %v6370, 0
    %v6377 = vsel %vm6372, %v6371, 0
    %v6379 = vsel %vm3866, 4294967295, 65535
    %v6380 = vsel %vm1549, %v6379, 0
    %v6382 = vand.u32 %v6361, %v6380
    %6384 = vmatpush.bf16.msra.mxu0 0
    %6385 = vmatpush.bf16.msra.mxu0 0
    %6386 = vmatpush.bf16.msra.mxu0 0
    %6387 = vmatpush.bf16.msra.mxu0 0
    %6388 = vmatpush.bf16.msra.mxu0 %v6382
    %6389 = vmatpush.bf16.msra.mxu0 %v6360
    %6390 = vmatpush.bf16.msra.mxu0 %v6359
    %6391 = vmatpush.bf16.msra.mxu0 %v6358
    %6392 = vmatmul.bf16.gmra.mxu0 %v6374
    %v6393 = vpop.f32.mrf.mxu0
    %v6394 = vadd.f32 0.0, %v6393
    %v6395 = vpop.f32.mrf.mxu0
    %v6396 = vadd.f32 0.0, %v6395
    %6397 = vmatmul.bf16.gmra.mxu0 %v6377
    %v6398 = vpop.f32.mrf.mxu0
    %v6399 = vadd.f32 0.0, %v6398
    %v6400 = vpop.f32.mrf.mxu0
    %v6401 = vadd.f32 0.0, %v6400
    %6402 = vdwg.mxu0
    %v6403 = vpack.c.bf16 %v6394, %v6394
    %v6404 = vpack.c.bf16 %v6396, %v6396
    %v6405 = vpack.c.bf16 %v6399, %v6399
    %v6406 = vpack.c.bf16 %v6401, %v6401
    %6407 = vst [vmem:[#allocation5] sm:$0xf] %v6403
    %6408 = vst [vmem:[#allocation5 + $0x4] sm:$0xf] %v6404
    %6409 = vst [vmem:[#allocation5 + $0x8] sm:$0xf] %v6405
    %6410 = vst [vmem:[#allocation5 + $0xc] sm:$0xf] %v6406
    %v6411 = vld [vmem:[#allocation3] sm:$0xf]
    %v6412 = vld [vmem:[#allocation3 + $0x4] sm:$0xf]
    %v6413 = vld [vmem:[#allocation3 + $0x8] sm:$0xf]
    %v6414 = vld [vmem:[#allocation3 + $0xc] sm:$0xf]
    %v6415 = vld [vmem:[#allocation3 + $0x10] sm:$0xf]
    %v6416 = vld [vmem:[#allocation3 + $0x14] sm:$0xf]
    %v6417 = vld [vmem:[#allocation3 + $0x18] sm:$0x3]
    %v6418 = vld [vmem:[%s35] sm:$0xf]
    %v6419 = vld [vmem:[%s35 + $0x4] sm:$0xf]
    %v6420 = vld [vmem:[%s35 + $0x8] sm:$0xf]
    %v6421 = vld [vmem:[%s35 + $0xc] sm:$0xf]
    %v6422 = vld [vmem:[%s35 + $0x10] sm:$0xf]
    %v6423 = vld [vmem:[%s35 + $0x14] sm:$0xf]
    %v6424 = vld [vmem:[%s35 + $0x18] sm:$0xf]
    %v6425 = vld [vmem:[%s35 + $0x1c] sm:$0xf]
    %s6426 = scalar_lea.vmem %s35, 32
    %v6427 = vld [vmem:[%s6426] sm:$0xf]
    %v6428 = vld [vmem:[%s6426 + $0x4] sm:$0xf]
    %v6429 = vld [vmem:[%s6426 + $0x8] sm:$0xf]
    %v6430 = vld [vmem:[%s6426 + $0xc] sm:$0xf]
    %v6431 = vld [vmem:[%s6426 + $0x10] sm:$0xf]
    %v6432 = vld [vmem:[%s6426 + $0x14] sm:$0xf]
    %v6433 = vld [vmem:[%s6426 + $0x18] sm:$0xf]
    %v6434 = vld [vmem:[%s6426 + $0x1c] sm:$0xf]
    %v6442 = vunpack.c.l.b16 %v6411
    %v6443 = vunpack.c.l.b16 %v6412
    %v6444 = vunpack.c.l.b16 %v6413
    %v6445 = vunpack.c.l.b16 %v6414
    %v6446 = vunpack.c.l.b16 %v6415
    %v6447 = vunpack.c.l.b16 %v6416
    %v6448 = vunpack.c.l.b16 %v6417
    %v6449 = vpack.c.b16 %v6443, %v6442
    %v6450 = vpack.c.b16 %v6445, %v6444
    %v6451 = vpack.c.b16 %v6447, %v6446
    %v6452 = vpack.c.b16 %v6448, %v6448
    %v6454 = vshrl.u32 %v6449, 16
    %v6456 = vshll.u32 %v6449, 16
    %v6458 = vrot.slane %v6456, 1
    %v6459 = vor.u32 %v6454, %v6458
    %v6461 = vshll.u32 %v6450, 16
    %v6463 = vrot.slane %v6461, 1
    %v6464 = vsel %vm1848, %v6459, %v6463
    %v6465 = vshrl.u32 %v6450, 16
    %v6467 = vor.u32 %v6465, %v6463
    %v6469 = vshll.u32 %v6451, 16
    %v6471 = vrot.slane %v6469, 1
    %v6472 = vsel %vm1848, %v6467, %v6471
    %v6473 = vshrl.u32 %v6451, 16
    %v6475 = vor.u32 %v6473, %v6471
    %v6477 = vshll.u32 %v6452, 16
    %v6479 = vrot.slane %v6477, 1
    %v6480 = vsel %vm1848, %v6475, %v6479
    %v6481 = vshrl.u32 %v6452, 16
    %v6483 = vor.u32 %v6481, %v6479
    %v6492 = vunpack.c.l.b16 %v6427
    %v6493 = vunpack.c.l.b16 %v6428
    %v6494 = vunpack.c.l.b16 %v6429
    %v6495 = vunpack.c.l.b16 %v6430
    %v6496 = vunpack.c.l.b16 %v6431
    %v6497 = vunpack.c.l.b16 %v6432
    %v6498 = vunpack.c.l.b16 %v6433
    %v6499 = vunpack.c.l.b16 %v6434
    %v6500 = vpack.c.b16 %v6493, %v6492
    %v6501 = vpack.c.b16 %v6495, %v6494
    %v6502 = vpack.c.b16 %v6497, %v6496
    %v6503 = vpack.c.b16 %v6499, %v6498
    %v6509 = vsel %vm1904, %v6464, 0
    %v6512 = vsel %vm1904, %v6472, 0
    %v6515 = vsel %vm1904, %v6480, 0
    %v6518 = vsel %vm1904, %v6483, 0
    %6520 = vmatpush.bf16.msra.mxu0 0
    %6521 = vmatpush.bf16.msra.mxu0 0
    %6522 = vmatpush.bf16.msra.mxu0 0
    %6523 = vmatpush.bf16.msra.mxu0 0
    %6524 = vmatpush.bf16.msra.mxu0 %v6503
    %6525 = vmatpush.bf16.msra.mxu0 %v6502
    %6526 = vmatpush.bf16.msra.mxu0 %v6501
    %6527 = vmatpush.bf16.msra.mxu0 %v6500
    %6528 = vmatmul.bf16.gmra.mxu0 %v6509
    %v6529 = vpop.f32.mrf.mxu0
    %v6530 = vadd.f32 0.0, %v6529
    %v6531 = vpop.f32.mrf.mxu0
    %v6532 = vadd.f32 0.0, %v6531
    %6533 = vmatmul.bf16.gmra.mxu0 %v6512
    %v6534 = vpop.f32.mrf.mxu0
    %v6535 = vadd.f32 0.0, %v6534
    %v6536 = vpop.f32.mrf.mxu0
    %v6537 = vadd.f32 0.0, %v6536
    %6538 = vmatmul.bf16.gmra.mxu0 %v6515
    %v6539 = vpop.f32.mrf.mxu0
    %v6540 = vadd.f32 0.0, %v6539
    %v6541 = vpop.f32.mrf.mxu0
    %v6542 = vadd.f32 0.0, %v6541
    %6543 = vmatmul.bf16.gmra.mxu0 %v6518
    %v6544 = vpop.f32.mrf.mxu0
    %v6545 = vadd.f32 0.0, %v6544
    %v6546 = vpop.f32.mrf.mxu0
    %6547 = vdwg.mxu0
    %v6556 = vunpack.c.l.b16 %v6418
    %v6557 = vunpack.c.l.b16 %v6419
    %v6558 = vunpack.c.l.b16 %v6420
    %v6559 = vunpack.c.l.b16 %v6421
    %v6560 = vunpack.c.l.b16 %v6422
    %v6561 = vunpack.c.l.b16 %v6423
    %v6562 = vunpack.c.l.b16 %v6424
    %v6563 = vunpack.c.l.b16 %v6425
    %v6564 = vpack.c.b16 %v6557, %v6556
    %v6565 = vpack.c.b16 %v6559, %v6558
    %v6566 = vpack.c.b16 %v6561, %v6560
    %v6567 = vpack.c.b16 %v6563, %v6562
    %v6572 = vsel %vm1904, %v6449, 0
    %v6574 = vsel %vm1904, %v6450, 0
    %v6576 = vsel %vm1904, %v6451, 0
    %v6578 = vsel %vm1904, %v6452, 0
    %6580 = vmatpush.bf16.msra.mxu0 0
    %6581 = vmatpush.bf16.msra.mxu0 0
    %6582 = vmatpush.bf16.msra.mxu0 0
    %6583 = vmatpush.bf16.msra.mxu0 0
    %6584 = vmatpush.bf16.msra.mxu0 %v6567
    %6585 = vmatpush.bf16.msra.mxu0 %v6566
    %6586 = vmatpush.bf16.msra.mxu0 %v6565
    %6587 = vmatpush.bf16.msra.mxu0 %v6564
    %6588 = vmatmul.bf16.gmra.mxu0 %v6572
    %v6589 = vpop.f32.mrf.mxu0
    %v6590 = vadd.f32 %v6530, %v6589
    %v6591 = vpop.f32.mrf.mxu0
    %v6592 = vadd.f32 %v6532, %v6591
    %6593 = vmatmul.bf16.gmra.mxu0 %v6574
    %v6594 = vpop.f32.mrf.mxu0
    %v6595 = vadd.f32 %v6535, %v6594
    %v6596 = vpop.f32.mrf.mxu0
    %v6597 = vadd.f32 %v6537, %v6596
    %6598 = vmatmul.bf16.gmra.mxu0 %v6576
    %v6599 = vpop.f32.mrf.mxu0
    %v6600 = vadd.f32 %v6540, %v6599
    %v6601 = vpop.f32.mrf.mxu0
    %v6602 = vadd.f32 %v6542, %v6601
    %6603 = vmatmul.bf16.gmra.mxu0 %v6578
    %v6604 = vpop.f32.mrf.mxu0
    %v6605 = vadd.f32 %v6545, %v6604
    %v6606 = vpop.f32.mrf.mxu0
    %6607 = vdwg.mxu0
    %v6608 = vld [vmem:[#allocation3] sm:$0xe]
    %v6609 = vld [vmem:[#allocation3 + $0x18] sm:$0x7]
    %s6610 = scalar_lea.vmem %s35, 64
    %v6611 = vld [vmem:[%s6610] sm:$0xf]
    %v6612 = vld [vmem:[%s6610 + $0x4] sm:$0xf]
    %v6613 = vld [vmem:[%s6610 + $0x8] sm:$0xf]
    %v6614 = vld [vmem:[%s6610 + $0xc] sm:$0xf]
    %v6615 = vld [vmem:[%s6610 + $0x10] sm:$0xf]
    %v6616 = vld [vmem:[%s6610 + $0x14] sm:$0xf]
    %v6617 = vld [vmem:[%s6610 + $0x18] sm:$0xf]
    %v6618 = vld [vmem:[%s6610 + $0x1c] sm:$0xf]
    %v6621 = vunpack.c.l.b16 %v6608
    %v6622 = vunpack.c.l.b16 %v6609
    %v6623 = vpack.c.b16 %v6443, %v6621
    %v6624 = vpack.c.b16 %v6622, %v6622
    %v6625 = vrot.slane %v6623, 1
    %v6626 = vrot.slane %v6450, 1
    %v6627 = vsel %vm2024, %v6625, %v6626
    %v6628 = vrot.slane %v6451, 1
    %v6629 = vsel %vm2024, %v6626, %v6628
    %v6630 = vrot.slane %v6624, 1
    %v6631 = vsel %vm2024, %v6628, %v6630
    %v6640 = vunpack.c.l.b16 %v6611
    %v6641 = vunpack.c.l.b16 %v6612
    %v6642 = vunpack.c.l.b16 %v6613
    %v6643 = vunpack.c.l.b16 %v6614
    %v6644 = vunpack.c.l.b16 %v6615
    %v6645 = vunpack.c.l.b16 %v6616
    %v6646 = vunpack.c.l.b16 %v6617
    %v6647 = vunpack.c.l.b16 %v6618
    %v6648 = vpack.c.b16 %v6641, %v6640
    %v6649 = vpack.c.b16 %v6643, %v6642
    %v6650 = vpack.c.b16 %v6645, %v6644
    %v6651 = vpack.c.b16 %v6647, %v6646
    %v6657 = vsel %vm1904, %v6627, 0
    %v6660 = vsel %vm1904, %v6629, 0
    %v6663 = vsel %vm1904, %v6631, 0
    %v6666 = vsel %vm1904, %v6630, 0
    %6668 = vmatpush.bf16.msra.mxu0 0
    %6669 = vmatpush.bf16.msra.mxu0 0
    %6670 = vmatpush.bf16.msra.mxu0 0
    %6671 = vmatpush.bf16.msra.mxu0 0
    %6672 = vmatpush.bf16.msra.mxu0 %v6651
    %6673 = vmatpush.bf16.msra.mxu0 %v6650
    %6674 = vmatpush.bf16.msra.mxu0 %v6649
    %6675 = vmatpush.bf16.msra.mxu0 %v6648
    %6676 = vmatmul.bf16.gmra.mxu0 %v6657
    %v6677 = vpop.f32.mrf.mxu0
    %v6678 = vadd.f32 0.0, %v6677
    %v6679 = vpop.f32.mrf.mxu0
    %v6680 = vadd.f32 0.0, %v6679
    %6681 = vmatmul.bf16.gmra.mxu0 %v6660
    %v6682 = vpop.f32.mrf.mxu0
    %v6683 = vadd.f32 0.0, %v6682
    %v6684 = vpop.f32.mrf.mxu0
    %v6685 = vadd.f32 0.0, %v6684
    %6686 = vmatmul.bf16.gmra.mxu0 %v6663
    %v6687 = vpop.f32.mrf.mxu0
    %v6688 = vadd.f32 0.0, %v6687
    %v6689 = vpop.f32.mrf.mxu0
    %v6690 = vadd.f32 0.0, %v6689
    %6691 = vmatmul.bf16.gmra.mxu0 %v6666
    %v6692 = vpop.f32.mrf.mxu0
    %v6693 = vadd.f32 0.0, %v6692
    %v6694 = vpop.f32.mrf.mxu0
    %6695 = vdwg.mxu0
    %v6696 = vadd.f32 %v6590, %v6678
    %v6697 = vadd.f32 %v6592, %v6680
    %v6698 = vadd.f32 %v6595, %v6683
    %v6699 = vadd.f32 %v6597, %v6685
    %v6700 = vadd.f32 %v6600, %v6688
    %v6701 = vadd.f32 %v6602, %v6690
    %v6702 = vadd.f32 %v6605, %v6693
    %v6703 = vld [vmem:[#allocation3] sm:$0x8]
    %v6704 = vld [vmem:[#allocation3 + $0x4] sm:$0xf]
    %v6705 = vld [vmem:[#allocation3 + $0x8] sm:$0xf]
    %v6706 = vld [vmem:[#allocation3 + $0xc] sm:$0xf]
    %v6707 = vld [vmem:[#allocation3 + $0x10] sm:$0xf]
    %v6708 = vld [vmem:[#allocation3 + $0x14] sm:$0xf]
    %v6709 = vld [vmem:[#allocation3 + $0x18] sm:$0xf]
    %v6710 = vld [vmem:[#allocation3 + $0x1c] sm:$0x1]
    %s6711 = scalar_lea.vmem %s35, 96
    %v6712 = vld [vmem:[%s6711] sm:$0xf]
    %v6713 = vld [vmem:[%s6711 + $0x4] sm:$0xf]
    %v6714 = vld [vmem:[%s6711 + $0x8] sm:$0xf]
    %v6715 = vld [vmem:[%s6711 + $0xc] sm:$0xf]
    %v6716 = vld [vmem:[%s6711 + $0x10] sm:$0xf]
    %v6717 = vld [vmem:[%s6711 + $0x14] sm:$0xf]
    %v6718 = vld [vmem:[%s6711 + $0x18] sm:$0xf]
    %v6719 = vld [vmem:[%s6711 + $0x1c] sm:$0xf]
    %v6728 = vunpack.c.l.b16 %v6703
    %v6729 = vunpack.c.l.b16 %v6704
    %v6730 = vunpack.c.l.b16 %v6705
    %v6731 = vunpack.c.l.b16 %v6706
    %v6732 = vunpack.c.l.b16 %v6707
    %v6733 = vunpack.c.l.b16 %v6708
    %v6734 = vunpack.c.l.b16 %v6709
    %v6735 = vunpack.c.l.b16 %v6710
    %v6736 = vpack.c.b16 %v6729, %v6728
    %v6737 = vpack.c.b16 %v6731, %v6730
    %v6738 = vpack.c.b16 %v6733, %v6732
    %v6739 = vpack.c.b16 %v6735, %v6734
    %v6740 = vrot.slane %v6736, 3
    %v6741 = vrot.slane %v6737, 3
    %v6742 = vsel %vm2122, %v6740, %v6741
    %v6743 = vrot.slane %v6738, 3
    %v6744 = vsel %vm2122, %v6741, %v6743
    %v6745 = vrot.slane %v6739, 3
    %v6746 = vsel %vm2122, %v6743, %v6745
    %v6755 = vunpack.c.l.b16 %v6712
    %v6756 = vunpack.c.l.b16 %v6713
    %v6757 = vunpack.c.l.b16 %v6714
    %v6758 = vunpack.c.l.b16 %v6715
    %v6759 = vunpack.c.l.b16 %v6716
    %v6760 = vunpack.c.l.b16 %v6717
    %v6761 = vunpack.c.l.b16 %v6718
    %v6762 = vunpack.c.l.b16 %v6719
    %v6763 = vpack.c.b16 %v6756, %v6755
    %v6764 = vpack.c.b16 %v6758, %v6757
    %v6765 = vpack.c.b16 %v6760, %v6759
    %v6766 = vpack.c.b16 %v6762, %v6761
    %v6772 = vsel %vm1904, %v6742, 0
    %v6775 = vsel %vm1904, %v6744, 0
    %v6778 = vsel %vm1904, %v6746, 0
    %v6781 = vsel %vm1904, %v6745, 0
    %6783 = vmatpush.bf16.msra.mxu0 0
    %6784 = vmatpush.bf16.msra.mxu0 0
    %6785 = vmatpush.bf16.msra.mxu0 0
    %6786 = vmatpush.bf16.msra.mxu0 0
    %6787 = vmatpush.bf16.msra.mxu0 %v6766
    %6788 = vmatpush.bf16.msra.mxu0 %v6765
    %6789 = vmatpush.bf16.msra.mxu0 %v6764
    %6790 = vmatpush.bf16.msra.mxu0 %v6763
    %6791 = vmatmul.bf16.gmra.mxu0 %v6772
    %v6792 = vpop.f32.mrf.mxu0
    %v6793 = vadd.f32 0.0, %v6792
    %v6794 = vpop.f32.mrf.mxu0
    %v6795 = vadd.f32 0.0, %v6794
    %6796 = vmatmul.bf16.gmra.mxu0 %v6775
    %v6797 = vpop.f32.mrf.mxu0
    %v6798 = vadd.f32 0.0, %v6797
    %v6799 = vpop.f32.mrf.mxu0
    %v6800 = vadd.f32 0.0, %v6799
    %6801 = vmatmul.bf16.gmra.mxu0 %v6778
    %v6802 = vpop.f32.mrf.mxu0
    %v6803 = vadd.f32 0.0, %v6802
    %v6804 = vpop.f32.mrf.mxu0
    %v6805 = vadd.f32 0.0, %v6804
    %6806 = vmatmul.bf16.gmra.mxu0 %v6781
    %v6807 = vpop.f32.mrf.mxu0
    %v6808 = vadd.f32 0.0, %v6807
    %v6809 = vpop.f32.mrf.mxu0
    %6810 = vdwg.mxu0
    %v6811 = vadd.f32 %v6696, %v6793
    %v6812 = vadd.f32 %v6697, %v6795
    %v6813 = vadd.f32 %v6698, %v6798
    %v6814 = vadd.f32 %v6699, %v6800
    %v6815 = vadd.f32 %v6700, %v6803
    %v6816 = vadd.f32 %v6701, %v6805
    %v6817 = vadd.f32 %v6702, %v6808
    %s6818 = scalar_lea.vmem %s35, 128
    %v6819 = vld [vmem:[%s6818] sm:$0xf]
    %v6820 = vld [vmem:[%s6818 + $0x4] sm:$0xf]
    %v6821 = vld [vmem:[%s6818 + $0x8] sm:$0xf]
    %v6822 = vld [vmem:[%s6818 + $0xc] sm:$0xf]
    %v6823 = vld [vmem:[%s6818 + $0x10] sm:$0xf]
    %v6824 = vld [vmem:[%s6818 + $0x14] sm:$0xf]
    %v6825 = vld [vmem:[%s6818 + $0x18] sm:$0xf]
    %v6826 = vld [vmem:[%s6818 + $0x1c] sm:$0xf]
    %v6828 = vshrl.u32 %v6736, 16
    %v6830 = vrot.slane %v6828, 3
    %v6831 = vshll.u32 %v6736, 16
    %v6833 = vrot.slane %v6831, 4
    %v6834 = vor.u32 %v6830, %v6833
    %v6836 = vshrl.u32 %v6737, 16
    %v6838 = vrot.slane %v6836, 3
    %v6839 = vshll.u32 %v6737, 16
    %v6841 = vrot.slane %v6839, 4
    %v6842 = vor.u32 %v6838, %v6841
    %v6843 = vsel %vm2244, %v6834, %v6842
    %v6845 = vshrl.u32 %v6738, 16
    %v6847 = vrot.slane %v6845, 3
    %v6848 = vshll.u32 %v6738, 16
    %v6850 = vrot.slane %v6848, 4
    %v6851 = vor.u32 %v6847, %v6850
    %v6852 = vsel %vm2244, %v6842, %v6851
    %v6854 = vshrl.u32 %v6739, 16
    %v6856 = vrot.slane %v6854, 3
    %v6857 = vshll.u32 %v6739, 16
    %v6859 = vrot.slane %v6857, 4
    %v6860 = vor.u32 %v6856, %v6859
    %v6861 = vsel %vm2244, %v6851, %v6860
    %v6870 = vunpack.c.l.b16 %v6819
    %v6871 = vunpack.c.l.b16 %v6820
    %v6872 = vunpack.c.l.b16 %v6821
    %v6873 = vunpack.c.l.b16 %v6822
    %v6874 = vunpack.c.l.b16 %v6823
    %v6875 = vunpack.c.l.b16 %v6824
    %v6876 = vunpack.c.l.b16 %v6825
    %v6877 = vunpack.c.l.b16 %v6826
    %v6878 = vpack.c.b16 %v6871, %v6870
    %v6879 = vpack.c.b16 %v6873, %v6872
    %v6880 = vpack.c.b16 %v6875, %v6874
    %v6881 = vpack.c.b16 %v6877, %v6876
    %v6887 = vsel %vm1904, %v6843, 0
    %v6890 = vsel %vm1904, %v6852, 0
    %v6893 = vsel %vm1904, %v6861, 0
    %v6896 = vsel %vm1904, %v6860, 0
    %6898 = vmatpush.bf16.msra.mxu0 0
    %6899 = vmatpush.bf16.msra.mxu0 0
    %6900 = vmatpush.bf16.msra.mxu0 0
    %6901 = vmatpush.bf16.msra.mxu0 0
    %6902 = vmatpush.bf16.msra.mxu0 %v6881
    %6903 = vmatpush.bf16.msra.mxu0 %v6880
    %6904 = vmatpush.bf16.msra.mxu0 %v6879
    %6905 = vmatpush.bf16.msra.mxu0 %v6878
    %6906 = vmatmul.bf16.gmra.mxu0 %v6887
    %v6907 = vpop.f32.mrf.mxu0
    %v6908 = vadd.f32 0.0, %v6907
    %v6909 = vpop.f32.mrf.mxu0
    %v6910 = vadd.f32 0.0, %v6909
    %6911 = vmatmul.bf16.gmra.mxu0 %v6890
    %v6912 = vpop.f32.mrf.mxu0
    %v6913 = vadd.f32 0.0, %v6912
    %v6914 = vpop.f32.mrf.mxu0
    %v6915 = vadd.f32 0.0, %v6914
    %6916 = vmatmul.bf16.gmra.mxu0 %v6893
    %v6917 = vpop.f32.mrf.mxu0
    %v6918 = vadd.f32 0.0, %v6917
    %v6919 = vpop.f32.mrf.mxu0
    %v6920 = vadd.f32 0.0, %v6919
    %6921 = vmatmul.bf16.gmra.mxu0 %v6896
    %v6922 = vpop.f32.mrf.mxu0
    %v6923 = vadd.f32 0.0, %v6922
    %v6924 = vpop.f32.mrf.mxu0
    %6925 = vdwg.mxu0
    %v6926 = vadd.f32 %v6811, %v6908
    %v6927 = vadd.f32 %v6812, %v6910
    %v6928 = vadd.f32 %v6813, %v6913
    %v6929 = vadd.f32 %v6814, %v6915
    %v6930 = vadd.f32 %v6815, %v6918
    %v6931 = vadd.f32 %v6816, %v6920
    %v6932 = vadd.f32 %v6817, %v6923
    %v6933 = vld [vmem:[#allocation3 + $0x1c] sm:$0x3]
    %s6934 = scalar_lea.vmem %s35, 160
    %v6935 = vld [vmem:[%s6934] sm:$0xf]
    %v6936 = vld [vmem:[%s6934 + $0x4] sm:$0xf]
    %v6937 = vld [vmem:[%s6934 + $0x8] sm:$0xf]
    %v6938 = vld [vmem:[%s6934 + $0xc] sm:$0xf]
    %v6939 = vld [vmem:[%s6934 + $0x10] sm:$0xf]
    %v6940 = vld [vmem:[%s6934 + $0x14] sm:$0xf]
    %v6941 = vld [vmem:[%s6934 + $0x18] sm:$0xf]
    %v6942 = vld [vmem:[%s6934 + $0x1c] sm:$0xf]
    %v6944 = vunpack.c.l.b16 %v6933
    %v6945 = vpack.c.b16 %v6730, %v6729
    %v6946 = vpack.c.b16 %v6732, %v6731
    %v6947 = vpack.c.b16 %v6734, %v6733
    %v6948 = vpack.c.b16 %v6944, %v6944
    %v6957 = vunpack.c.l.b16 %v6935
    %v6958 = vunpack.c.l.b16 %v6936
    %v6959 = vunpack.c.l.b16 %v6937
    %v6960 = vunpack.c.l.b16 %v6938
    %v6961 = vunpack.c.l.b16 %v6939
    %v6962 = vunpack.c.l.b16 %v6940
    %v6963 = vunpack.c.l.b16 %v6941
    %v6964 = vunpack.c.l.b16 %v6942
    %v6965 = vpack.c.b16 %v6958, %v6957
    %v6966 = vpack.c.b16 %v6960, %v6959
    %v6967 = vpack.c.b16 %v6962, %v6961
    %v6968 = vpack.c.b16 %v6964, %v6963
    %v6974 = vsel %vm1904, %v6945, 0
    %v6977 = vsel %vm1904, %v6946, 0
    %v6980 = vsel %vm1904, %v6947, 0
    %v6983 = vsel %vm1904, %v6948, 0
    %6985 = vmatpush.bf16.msra.mxu0 0
    %6986 = vmatpush.bf16.msra.mxu0 0
    %6987 = vmatpush.bf16.msra.mxu0 0
    %6988 = vmatpush.bf16.msra.mxu0 0
    %6989 = vmatpush.bf16.msra.mxu0 %v6968
    %6990 = vmatpush.bf16.msra.mxu0 %v6967
    %6991 = vmatpush.bf16.msra.mxu0 %v6966
    %6992 = vmatpush.bf16.msra.mxu0 %v6965
    %6993 = vmatmul.bf16.gmra.mxu0 %v6974
    %v6994 = vpop.f32.mrf.mxu0
    %v6995 = vadd.f32 0.0, %v6994
    %v6996 = vpop.f32.mrf.mxu0
    %v6997 = vadd.f32 0.0, %v6996
    %6998 = vmatmul.bf16.gmra.mxu0 %v6977
    %v6999 = vpop.f32.mrf.mxu0
    %v7000 = vadd.f32 0.0, %v6999
    %v7001 = vpop.f32.mrf.mxu0
    %v7002 = vadd.f32 0.0, %v7001
    %7003 = vmatmul.bf16.gmra.mxu0 %v6980
    %v7004 = vpop.f32.mrf.mxu0
    %v7005 = vadd.f32 0.0, %v7004
    %v7006 = vpop.f32.mrf.mxu0
    %v7007 = vadd.f32 0.0, %v7006
    %7008 = vmatmul.bf16.gmra.mxu0 %v6983
    %v7009 = vpop.f32.mrf.mxu0
    %v7010 = vadd.f32 0.0, %v7009
    %v7011 = vpop.f32.mrf.mxu0
    %7012 = vdwg.mxu0
    %v7013 = vadd.f32 %v6926, %v6995
    %v7014 = vadd.f32 %v6927, %v6997
    %v7015 = vadd.f32 %v6928, %v7000
    %v7016 = vadd.f32 %v6929, %v7002
    %v7017 = vadd.f32 %v6930, %v7005
    %v7018 = vadd.f32 %v6931, %v7007
    %v7019 = vadd.f32 %v6932, %v7010
    %v7020 = vld [vmem:[#allocation3 + $0x4] sm:$0xc]
    %v7021 = vld [vmem:[#allocation3 + $0x1c] sm:$0xf]
    %s7022 = scalar_lea.vmem %s35, 192
    %v7023 = vld [vmem:[%s7022] sm:$0xf]
    %v7024 = vld [vmem:[%s7022 + $0x4] sm:$0xf]
    %v7025 = vld [vmem:[%s7022 + $0x8] sm:$0xf]
    %v7026 = vld [vmem:[%s7022 + $0xc] sm:$0xf]
    %v7027 = vld [vmem:[%s7022 + $0x10] sm:$0xf]
    %v7028 = vld [vmem:[%s7022 + $0x14] sm:$0xf]
    %v7029 = vld [vmem:[%s7022 + $0x18] sm:$0xf]
    %v7030 = vld [vmem:[%s7022 + $0x1c] sm:$0xf]
    %v7033 = vunpack.c.l.b16 %v7020
    %v7034 = vunpack.c.l.b16 %v7021
    %v7035 = vpack.c.b16 %v6730, %v7033
    %v7036 = vpack.c.b16 %v7034, %v7034
    %v7037 = vrot.slane %v7035, 2
    %v7038 = vrot.slane %v6946, 2
    %v7039 = vsel %vm2461, %v7037, %v7038
    %v7040 = vrot.slane %v6947, 2
    %v7041 = vsel %vm2461, %v7038, %v7040
    %v7042 = vrot.slane %v7036, 2
    %v7043 = vsel %vm2461, %v7040, %v7042
    %v7052 = vunpack.c.l.b16 %v7023
    %v7053 = vunpack.c.l.b16 %v7024
    %v7054 = vunpack.c.l.b16 %v7025
    %v7055 = vunpack.c.l.b16 %v7026
    %v7056 = vunpack.c.l.b16 %v7027
    %v7057 = vunpack.c.l.b16 %v7028
    %v7058 = vunpack.c.l.b16 %v7029
    %v7059 = vunpack.c.l.b16 %v7030
    %v7060 = vpack.c.b16 %v7053, %v7052
    %v7061 = vpack.c.b16 %v7055, %v7054
    %v7062 = vpack.c.b16 %v7057, %v7056
    %v7063 = vpack.c.b16 %v7059, %v7058
    %v7069 = vsel %vm1904, %v7039, 0
    %v7072 = vsel %vm1904, %v7041, 0
    %v7075 = vsel %vm1904, %v7043, 0
    %v7078 = vsel %vm1904, %v7042, 0
    %7080 = vmatpush.bf16.msra.mxu0 0
    %7081 = vmatpush.bf16.msra.mxu0 0
    %7082 = vmatpush.bf16.msra.mxu0 0
    %7083 = vmatpush.bf16.msra.mxu0 0
    %7084 = vmatpush.bf16.msra.mxu0 %v7063
    %7085 = vmatpush.bf16.msra.mxu0 %v7062
    %7086 = vmatpush.bf16.msra.mxu0 %v7061
    %7087 = vmatpush.bf16.msra.mxu0 %v7060
    %7088 = vmatmul.bf16.gmra.mxu0 %v7069
    %v7089 = vpop.f32.mrf.mxu0
    %v7090 = vadd.f32 0.0, %v7089
    %v7091 = vpop.f32.mrf.mxu0
    %v7092 = vadd.f32 0.0, %v7091
    %7093 = vmatmul.bf16.gmra.mxu0 %v7072
    %v7094 = vpop.f32.mrf.mxu0
    %v7095 = vadd.f32 0.0, %v7094
    %v7096 = vpop.f32.mrf.mxu0
    %v7097 = vadd.f32 0.0, %v7096
    %7098 = vmatmul.bf16.gmra.mxu0 %v7075
    %v7099 = vpop.f32.mrf.mxu0
    %v7100 = vadd.f32 0.0, %v7099
    %v7101 = vpop.f32.mrf.mxu0
    %v7102 = vadd.f32 0.0, %v7101
    %7103 = vmatmul.bf16.gmra.mxu0 %v7078
    %v7104 = vpop.f32.mrf.mxu0
    %v7105 = vadd.f32 0.0, %v7104
    %v7106 = vpop.f32.mrf.mxu0
    %7107 = vdwg.mxu0
    %v7108 = vadd.f32 %v7013, %v7090
    %v7109 = vadd.f32 %v7014, %v7092
    %v7110 = vadd.f32 %v7015, %v7095
    %v7111 = vadd.f32 %v7016, %v7097
    %v7112 = vadd.f32 %v7017, %v7100
    %v7113 = vadd.f32 %v7018, %v7102
    %v7114 = vadd.f32 %v7019, %v7105
    %s7115 = scalar_lea.vmem %s35, 224
    %v7116 = vld [vmem:[%s7115] sm:$0xf]
    %v7117 = vld [vmem:[%s7115 + $0x4] sm:$0xf]
    %v7118 = vld [vmem:[%s7115 + $0x8] sm:$0xf]
    %v7119 = vld [vmem:[%s7115 + $0xc] sm:$0xf]
    %v7120 = vld [vmem:[%s7115 + $0x10] sm:$0xf]
    %v7121 = vld [vmem:[%s7115 + $0x14] sm:$0xf]
    %v7122 = vld [vmem:[%s7115 + $0x18] sm:$0xf]
    %v7123 = vld [vmem:[%s7115 + $0x1c] sm:$0xf]
    %v7125 = vshrl.u32 %v7035, 16
    %v7127 = vrot.slane %v7125, 2
    %v7128 = vshll.u32 %v7035, 16
    %v7130 = vrot.slane %v7128, 3
    %v7131 = vor.u32 %v7127, %v7130
    %v7132 = vshrl.u32 %v6946, 16
    %v7134 = vrot.slane %v7132, 2
    %v7135 = vshll.u32 %v6946, 16
    %v7137 = vrot.slane %v7135, 3
    %v7138 = vor.u32 %v7134, %v7137
    %v7139 = vsel %vm2555, %v7131, %v7138
    %v7140 = vshrl.u32 %v6947, 16
    %v7142 = vrot.slane %v7140, 2
    %v7143 = vshll.u32 %v6947, 16
    %v7145 = vrot.slane %v7143, 3
    %v7146 = vor.u32 %v7142, %v7145
    %v7147 = vsel %vm2555, %v7138, %v7146
    %v7149 = vshrl.u32 %v7036, 16
    %v7151 = vrot.slane %v7149, 2
    %v7152 = vshll.u32 %v7036, 16
    %v7154 = vrot.slane %v7152, 3
    %v7155 = vor.u32 %v7151, %v7154
    %v7156 = vsel %vm2555, %v7146, %v7155
    %v7165 = vunpack.c.l.b16 %v7116
    %v7166 = vunpack.c.l.b16 %v7117
    %v7167 = vunpack.c.l.b16 %v7118
    %v7168 = vunpack.c.l.b16 %v7119
    %v7169 = vunpack.c.l.b16 %v7120
    %v7170 = vunpack.c.l.b16 %v7121
    %v7171 = vunpack.c.l.b16 %v7122
    %v7172 = vunpack.c.l.b16 %v7123
    %v7173 = vpack.c.b16 %v7166, %v7165
    %v7174 = vpack.c.b16 %v7168, %v7167
    %v7175 = vpack.c.b16 %v7170, %v7169
    %v7176 = vpack.c.b16 %v7172, %v7171
    %v7182 = vsel %vm1904, %v7139, 0
    %v7185 = vsel %vm1904, %v7147, 0
    %v7188 = vsel %vm1904, %v7156, 0
    %v7191 = vsel %vm1904, %v7155, 0
    %7193 = vmatpush.bf16.msra.mxu0 0
    %7194 = vmatpush.bf16.msra.mxu0 0
    %7195 = vmatpush.bf16.msra.mxu0 0
    %7196 = vmatpush.bf16.msra.mxu0 0
    %7197 = vmatpush.bf16.msra.mxu0 %v7176
    %7198 = vmatpush.bf16.msra.mxu0 %v7175
    %7199 = vmatpush.bf16.msra.mxu0 %v7174
    %7200 = vmatpush.bf16.msra.mxu0 %v7173
    %7201 = vmatmul.bf16.gmra.mxu0 %v7182
    %v7202 = vpop.f32.mrf.mxu0
    %v7203 = vadd.f32 0.0, %v7202
    %v7204 = vpop.f32.mrf.mxu0
    %v7205 = vadd.f32 0.0, %v7204
    %7206 = vmatmul.bf16.gmra.mxu0 %v7185
    %v7207 = vpop.f32.mrf.mxu0
    %v7208 = vadd.f32 0.0, %v7207
    %v7209 = vpop.f32.mrf.mxu0
    %v7210 = vadd.f32 0.0, %v7209
    %7211 = vmatmul.bf16.gmra.mxu0 %v7188
    %v7212 = vpop.f32.mrf.mxu0
    %v7213 = vadd.f32 0.0, %v7212
    %v7214 = vpop.f32.mrf.mxu0
    %v7215 = vadd.f32 0.0, %v7214
    %7216 = vmatmul.bf16.gmra.mxu0 %v7191
    %v7217 = vpop.f32.mrf.mxu0
    %v7218 = vadd.f32 0.0, %v7217
    %v7219 = vpop.f32.mrf.mxu0
    %7220 = vdwg.mxu0
    %v7221 = vadd.f32 %v7108, %v7203
    %v7222 = vadd.f32 %v7109, %v7205
    %v7223 = vadd.f32 %v7110, %v7208
    %v7224 = vadd.f32 %v7111, %v7210
    %v7225 = vadd.f32 %v7112, %v7213
    %v7226 = vadd.f32 %v7113, %v7215
    %v7227 = vadd.f32 %v7114, %v7218
    %v7228 = vld [vmem:[#allocation3 + $0x4] sm:$0x8]
    %v7229 = vld [vmem:[#allocation3 + $0x8] sm:$0xf]
    %v7230 = vld [vmem:[#allocation3 + $0xc] sm:$0xf]
    %v7231 = vld [vmem:[#allocation3 + $0x10] sm:$0xf]
    %v7232 = vld [vmem:[#allocation3 + $0x14] sm:$0xf]
    %v7233 = vld [vmem:[#allocation3 + $0x18] sm:$0xf]
    %v7234 = vld [vmem:[#allocation3 + $0x1c] sm:$0xf]
    %v7235 = vld [vmem:[#allocation3 + $0x20] sm:$0x1]
    %s7236 = scalar_lea.vmem %s35, 256
    %v7237 = vld [vmem:[%s7236] sm:$0xf]
    %v7238 = vld [vmem:[%s7236 + $0x4] sm:$0xf]
    %v7239 = vld [vmem:[%s7236 + $0x8] sm:$0xf]
    %v7240 = vld [vmem:[%s7236 + $0xc] sm:$0xf]
    %v7241 = vld [vmem:[%s7236 + $0x10] sm:$0xf]
    %v7242 = vld [vmem:[%s7236 + $0x14] sm:$0xf]
    %v7243 = vld [vmem:[%s7236 + $0x18] sm:$0xf]
    %v7244 = vld [vmem:[%s7236 + $0x1c] sm:$0xf]
    %v7253 = vunpack.c.l.b16 %v7228
    %v7254 = vunpack.c.l.b16 %v7229
    %v7255 = vunpack.c.l.b16 %v7230
    %v7256 = vunpack.c.l.b16 %v7231
    %v7257 = vunpack.c.l.b16 %v7232
    %v7258 = vunpack.c.l.b16 %v7233
    %v7259 = vunpack.c.l.b16 %v7234
    %v7260 = vunpack.c.l.b16 %v7235
    %v7261 = vpack.c.b16 %v7254, %v7253
    %v7262 = vpack.c.b16 %v7256, %v7255
    %v7263 = vpack.c.b16 %v7258, %v7257
    %v7264 = vpack.c.b16 %v7260, %v7259
    %v7265 = vrot.slane %v7261, 3
    %v7266 = vrot.slane %v7262, 3
    %v7267 = vsel %vm2122, %v7265, %v7266
    %v7268 = vrot.slane %v7263, 3
    %v7269 = vsel %vm2122, %v7266, %v7268
    %v7270 = vrot.slane %v7264, 3
    %v7271 = vsel %vm2122, %v7268, %v7270
    %v7280 = vunpack.c.l.b16 %v7237
    %v7281 = vunpack.c.l.b16 %v7238
    %v7282 = vunpack.c.l.b16 %v7239
    %v7283 = vunpack.c.l.b16 %v7240
    %v7284 = vunpack.c.l.b16 %v7241
    %v7285 = vunpack.c.l.b16 %v7242
    %v7286 = vunpack.c.l.b16 %v7243
    %v7287 = vunpack.c.l.b16 %v7244
    %v7288 = vpack.c.b16 %v7281, %v7280
    %v7289 = vpack.c.b16 %v7283, %v7282
    %v7290 = vpack.c.b16 %v7285, %v7284
    %v7291 = vpack.c.b16 %v7287, %v7286
    %v7297 = vsel %vm1904, %v7267, 0
    %v7300 = vsel %vm1904, %v7269, 0
    %v7303 = vsel %vm1904, %v7271, 0
    %v7306 = vsel %vm1904, %v7270, 0
    %7308 = vmatpush.bf16.msra.mxu0 0
    %7309 = vmatpush.bf16.msra.mxu0 0
    %7310 = vmatpush.bf16.msra.mxu0 0
    %7311 = vmatpush.bf16.msra.mxu0 0
    %7312 = vmatpush.bf16.msra.mxu0 %v7291
    %7313 = vmatpush.bf16.msra.mxu0 %v7290
    %7314 = vmatpush.bf16.msra.mxu0 %v7289
    %7315 = vmatpush.bf16.msra.mxu0 %v7288
    %7316 = vmatmul.bf16.gmra.mxu0 %v7297
    %v7317 = vpop.f32.mrf.mxu0
    %v7318 = vadd.f32 0.0, %v7317
    %v7319 = vpop.f32.mrf.mxu0
    %v7320 = vadd.f32 0.0, %v7319
    %7321 = vmatmul.bf16.gmra.mxu0 %v7300
    %v7322 = vpop.f32.mrf.mxu0
    %v7323 = vadd.f32 0.0, %v7322
    %v7324 = vpop.f32.mrf.mxu0
    %v7325 = vadd.f32 0.0, %v7324
    %7326 = vmatmul.bf16.gmra.mxu0 %v7303
    %v7327 = vpop.f32.mrf.mxu0
    %v7328 = vadd.f32 0.0, %v7327
    %v7329 = vpop.f32.mrf.mxu0
    %v7330 = vadd.f32 0.0, %v7329
    %7331 = vmatmul.bf16.gmra.mxu0 %v7306
    %v7332 = vpop.f32.mrf.mxu0
    %v7333 = vadd.f32 0.0, %v7332
    %v7334 = vpop.f32.mrf.mxu0
    %7335 = vdwg.mxu0
    %v7336 = vadd.f32 %v7221, %v7318
    %v7337 = vadd.f32 %v7222, %v7320
    %v7338 = vadd.f32 %v7223, %v7323
    %v7339 = vadd.f32 %v7224, %v7325
    %v7340 = vadd.f32 %v7225, %v7328
    %v7341 = vadd.f32 %v7226, %v7330
    %v7342 = vadd.f32 %v7227, %v7333
    %v7343 = vld [vmem:[%s37] sm:$0x1]
    %v7345 = vperm.slane %v7343, 0
    %v7347 = vadd.f32 %v7336, %v7345
    %v7348 = vadd.f32 %v7337, %v7345
    %v7349 = vadd.f32 %v7338, %v7345
    %v7350 = vadd.f32 %v7339, %v7345
    %v7351 = vadd.f32 %v7340, %v7345
    %v7352 = vadd.f32 %v7341, %v7345
    %v7353 = vadd.f32 %v7342, %v7345
    %v7354 = vmax.f32 %v7347, 0.0
    %v7355 = vmax.f32 %v7348, 0.0
    %v7356 = vmax.f32 %v7349, 0.0
    %v7357 = vmax.f32 %v7350, 0.0
    %v7358 = vmax.f32 %v7351, 0.0
    %v7359 = vmax.f32 %v7352, 0.0
    %v7360 = vmax.f32 %v7353, 0.0
    %v7361 = vld [vmem:[%s7] sm:$0xf]
    %v7362 = vld [vmem:[%s7 + $0x4] sm:$0xf]
    %v7363 = vld [vmem:[%s7 + $0x8] sm:$0xf]
    %v7364 = vld [vmem:[%s7 + $0xc] sm:$0xf]
    %v7365 = vpack.c.bf16 %v7355, %v7354
    %v7366 = vpack.c.bf16 %v7357, %v7356
    %v7367 = vpack.c.bf16 %v7359, %v7358
    %v7368 = vpack.c.bf16 %v7360, %v7360
    %v7373 = vunpack.c.l.b16 %v7361
    %v7374 = vunpack.c.l.b16 %v7362
    %v7375 = vunpack.c.l.b16 %v7363
    %v7376 = vunpack.c.l.b16 %v7364
    %v7377 = vpack.c.b16 %v7374, %v7373
    %v7378 = vpack.c.b16 %v7376, %v7375
    %v7380 = vsel %vm6372, %v7377, 0
    %v7383 = vsel %vm6372, %v7378, 0
    %v7386 = vand.u32 %v7368, %v6380
    %7388 = vmatpush.bf16.msra.mxu0 0
    %7389 = vmatpush.bf16.msra.mxu0 0
    %7390 = vmatpush.bf16.msra.mxu0 0
    %7391 = vmatpush.bf16.msra.mxu0 0
    %7392 = vmatpush.bf16.msra.mxu0 %v7386
    %7393 = vmatpush.bf16.msra.mxu0 %v7367
    %7394 = vmatpush.bf16.msra.mxu0 %v7366
    %7395 = vmatpush.bf16.msra.mxu0 %v7365
    %7396 = vmatmul.bf16.gmra.mxu0 %v7380
    %v7397 = vpop.f32.mrf.mxu0
    %v7398 = vadd.f32 0.0, %v7397
    %v7399 = vpop.f32.mrf.mxu0
    %v7400 = vadd.f32 0.0, %v7399
    %7401 = vmatmul.bf16.gmra.mxu0 %v7383
    %v7402 = vpop.f32.mrf.mxu0
    %v7403 = vadd.f32 0.0, %v7402
    %v7404 = vpop.f32.mrf.mxu0
    %v7405 = vadd.f32 0.0, %v7404
    %7406 = vdwg.mxu0
    %v7407 = vpack.c.bf16 %v7398, %v7398
    %v7408 = vpack.c.bf16 %v7400, %v7400
    %v7409 = vpack.c.bf16 %v7403, %v7403
    %v7410 = vpack.c.bf16 %v7405, %v7405
    %7411 = vst [vmem:[#allocation6] sm:$0xf] %v7407
    %7412 = vst [vmem:[#allocation6 + $0x4] sm:$0xf] %v7408
    %7413 = vst [vmem:[#allocation6 + $0x8] sm:$0xf] %v7409
    %7414 = vst [vmem:[#allocation6 + $0xc] sm:$0xf] %v7410
    %v7415 = vld [vmem:[#allocation6] sm:$0xf]
    %v7416 = vld [vmem:[#allocation6 + $0x4] sm:$0xf]
    %v7417 = vld [vmem:[#allocation6 + $0x8] sm:$0x7]
    %v7418 = vld [vmem:[%s39] sm:$0xf]
    %v7419 = vld [vmem:[%s39 + $0x4] sm:$0xf]
    %v7420 = vld [vmem:[%s39 + $0x8] sm:$0xf]
    %v7421 = vld [vmem:[%s39 + $0xc] sm:$0xf]
    %v7422 = vld [vmem:[%s39 + $0x10] sm:$0xf]
    %v7423 = vld [vmem:[%s39 + $0x14] sm:$0xf]
    %v7424 = vld [vmem:[%s39 + $0x18] sm:$0xf]
    %v7425 = vld [vmem:[%s39 + $0x1c] sm:$0xf]
    %v7426 = vld [vmem:[%s39 + $0x20] sm:$0xf]
    %v7427 = vld [vmem:[%s39 + $0x24] sm:$0xf]
    %v7428 = vld [vmem:[%s39 + $0x28] sm:$0xf]
    %v7429 = vld [vmem:[%s39 + $0x2c] sm:$0xf]
    %v7430 = vld [vmem:[%s39 + $0x30] sm:$0xf]
    %v7431 = vld [vmem:[%s39 + $0x34] sm:$0xf]
    %v7432 = vld [vmem:[%s39 + $0x38] sm:$0xf]
    %v7433 = vld [vmem:[%s39 + $0x3c] sm:$0xf]
    %v7434 = vld [vmem:[#allocation6 + $0x8] sm:$0xf]
    %s7435 = scalar_lea.vmem %s39, 64
    %v7436 = vld [vmem:[%s7435] sm:$0xf]
    %v7437 = vld [vmem:[%s7435 + $0x4] sm:$0xf]
    %v7438 = vld [vmem:[%s7435 + $0x8] sm:$0xf]
    %v7439 = vld [vmem:[%s7435 + $0xc] sm:$0xf]
    %v7440 = vld [vmem:[%s7435 + $0x10] sm:$0xf]
    %v7441 = vld [vmem:[%s7435 + $0x14] sm:$0xf]
    %v7442 = vld [vmem:[%s7435 + $0x18] sm:$0xf]
    %v7443 = vld [vmem:[%s7435 + $0x1c] sm:$0xf]
    %v7444 = vld [vmem:[%s7435 + $0x20] sm:$0xf]
    %v7445 = vld [vmem:[%s7435 + $0x24] sm:$0xf]
    %v7446 = vld [vmem:[%s7435 + $0x28] sm:$0xf]
    %v7447 = vld [vmem:[%s7435 + $0x2c] sm:$0xf]
    %v7448 = vld [vmem:[%s7435 + $0x30] sm:$0xf]
    %v7449 = vld [vmem:[%s7435 + $0x34] sm:$0xf]
    %v7450 = vld [vmem:[%s7435 + $0x38] sm:$0xf]
    %v7451 = vld [vmem:[%s7435 + $0x3c] sm:$0xf]
    %v7455 = vunpack.c.l.b16 %v7415
    %v7456 = vunpack.c.l.b16 %v7416
    %v7457 = vunpack.c.l.b16 %v7434
    %v7458 = vpack.c.b16 %v7456, %v7455
    %v7459 = vpack.c.b16 %v7457, %v7457
    %v7461 = vshrl.u32 %v7458, 16
    %v7463 = vshll.u32 %v7458, 16
    %v7465 = vrot.slane %v7463, 1
    %v7466 = vor.u32 %v7461, %v7465
    %v7468 = vshll.u32 %v7459, 16
    %v7470 = vrot.slane %v7468, 1
    %v7471 = vsel %vm1848, %v7466, %v7470
    %v7472 = vshrl.u32 %v7459, 16
    %v7474 = vor.u32 %v7472, %v7470
    %v7493 = vunpack.c.l.b16 %v7436
    %v7494 = vunpack.c.l.b16 %v7437
    %v7495 = vunpack.c.l.b16 %v7438
    %v7496 = vunpack.c.l.b16 %v7439
    %v7497 = vunpack.c.l.b16 %v7440
    %v7498 = vunpack.c.l.b16 %v7441
    %v7499 = vunpack.c.l.b16 %v7442
    %v7500 = vunpack.c.l.b16 %v7443
    %v7501 = vunpack.c.l.b16 %v7444
    %v7502 = vunpack.c.l.b16 %v7445
    %v7503 = vunpack.c.l.b16 %v7446
    %v7504 = vunpack.c.l.b16 %v7447
    %v7505 = vunpack.c.l.b16 %v7448
    %v7506 = vunpack.c.l.b16 %v7449
    %v7507 = vunpack.c.l.b16 %v7450
    %v7508 = vunpack.c.l.b16 %v7451
    %v7509 = vpack.c.b16 %v7494, %v7493
    %v7510 = vpack.c.b16 %v7496, %v7495
    %v7511 = vpack.c.b16 %v7498, %v7497
    %v7512 = vpack.c.b16 %v7500, %v7499
    %v7513 = vpack.c.b16 %v7502, %v7501
    %v7514 = vpack.c.b16 %v7504, %v7503
    %v7515 = vpack.c.b16 %v7506, %v7505
    %v7516 = vpack.c.b16 %v7508, %v7507
    %7525 = vmatpush.bf16.msra.mxu0 %v7516
    %7526 = vmatpush.bf16.msra.mxu0 %v7515
    %7527 = vmatpush.bf16.msra.mxu0 %v7514
    %7528 = vmatpush.bf16.msra.mxu0 %v7513
    %7529 = vmatpush.bf16.msra.mxu0 %v7512
    %7530 = vmatpush.bf16.msra.mxu0 %v7511
    %7531 = vmatpush.bf16.msra.mxu0 %v7510
    %7532 = vmatpush.bf16.msra.mxu0 %v7509
    %7533 = vmatmul.bf16.gmra.mxu0 %v7471
    %v7534 = vpop.f32.mrf.mxu0
    %v7535 = vadd.f32 0.0, %v7534
    %v7536 = vpop.f32.mrf.mxu0
    %v7537 = vadd.f32 0.0, %v7536
    %7538 = vmatmul.bf16.gmra.mxu0 %v7474
    %v7539 = vpop.f32.mrf.mxu0
    %v7540 = vadd.f32 0.0, %v7539
    %v7541 = vpop.f32.mrf.mxu0
    %7542 = vdwg.mxu0
    %v7544 = vunpack.c.l.b16 %v7417
    %v7545 = vpack.c.b16 %v7544, %v7544
    %v7564 = vunpack.c.l.b16 %v7418
    %v7565 = vunpack.c.l.b16 %v7419
    %v7566 = vunpack.c.l.b16 %v7420
    %v7567 = vunpack.c.l.b16 %v7421
    %v7568 = vunpack.c.l.b16 %v7422
    %v7569 = vunpack.c.l.b16 %v7423
    %v7570 = vunpack.c.l.b16 %v7424
    %v7571 = vunpack.c.l.b16 %v7425
    %v7572 = vunpack.c.l.b16 %v7426
    %v7573 = vunpack.c.l.b16 %v7427
    %v7574 = vunpack.c.l.b16 %v7428
    %v7575 = vunpack.c.l.b16 %v7429
    %v7576 = vunpack.c.l.b16 %v7430
    %v7577 = vunpack.c.l.b16 %v7431
    %v7578 = vunpack.c.l.b16 %v7432
    %v7579 = vunpack.c.l.b16 %v7433
    %v7580 = vpack.c.b16 %v7565, %v7564
    %v7581 = vpack.c.b16 %v7567, %v7566
    %v7582 = vpack.c.b16 %v7569, %v7568
    %v7583 = vpack.c.b16 %v7571, %v7570
    %v7584 = vpack.c.b16 %v7573, %v7572
    %v7585 = vpack.c.b16 %v7575, %v7574
    %v7586 = vpack.c.b16 %v7577, %v7576
    %v7587 = vpack.c.b16 %v7579, %v7578
    %7596 = vmatpush.bf16.msra.mxu0 %v7587
    %7597 = vmatpush.bf16.msra.mxu0 %v7586
    %7598 = vmatpush.bf16.msra.mxu0 %v7585
    %7599 = vmatpush.bf16.msra.mxu0 %v7584
    %7600 = vmatpush.bf16.msra.mxu0 %v7583
    %7601 = vmatpush.bf16.msra.mxu0 %v7582
    %7602 = vmatpush.bf16.msra.mxu0 %v7581
    %7603 = vmatpush.bf16.msra.mxu0 %v7580
    %7604 = vmatmul.bf16.gmra.mxu0 %v7458
    %v7605 = vpop.f32.mrf.mxu0
    %v7606 = vadd.f32 %v7535, %v7605
    %v7607 = vpop.f32.mrf.mxu0
    %v7608 = vadd.f32 %v7537, %v7607
    %7609 = vmatmul.bf16.gmra.mxu0 %v7545
    %v7610 = vpop.f32.mrf.mxu0
    %v7611 = vadd.f32 %v7540, %v7610
    %v7612 = vpop.f32.mrf.mxu0
    %7613 = vdwg.mxu0
    %v7614 = vld [vmem:[#allocation6] sm:$0xe]
    %s7615 = scalar_lea.vmem %s39, 128
    %v7616 = vld [vmem:[%s7615] sm:$0xf]
    %v7617 = vld [vmem:[%s7615 + $0x4] sm:$0xf]
    %v7618 = vld [vmem:[%s7615 + $0x8] sm:$0xf]
    %v7619 = vld [vmem:[%s7615 + $0xc] sm:$0xf]
    %v7620 = vld [vmem:[%s7615 + $0x10] sm:$0xf]
    %v7621 = vld [vmem:[%s7615 + $0x14] sm:$0xf]
    %v7622 = vld [vmem:[%s7615 + $0x18] sm:$0xf]
    %v7623 = vld [vmem:[%s7615 + $0x1c] sm:$0xf]
    %v7624 = vld [vmem:[%s7615 + $0x20] sm:$0xf]
    %v7625 = vld [vmem:[%s7615 + $0x24] sm:$0xf]
    %v7626 = vld [vmem:[%s7615 + $0x28] sm:$0xf]
    %v7627 = vld [vmem:[%s7615 + $0x2c] sm:$0xf]
    %v7628 = vld [vmem:[%s7615 + $0x30] sm:$0xf]
    %v7629 = vld [vmem:[%s7615 + $0x34] sm:$0xf]
    %v7630 = vld [vmem:[%s7615 + $0x38] sm:$0xf]
    %v7631 = vld [vmem:[%s7615 + $0x3c] sm:$0xf]
    %v7633 = vunpack.c.l.b16 %v7614
    %v7634 = vpack.c.b16 %v7456, %v7633
    %v7635 = vrot.slane %v7634, 1
    %v7636 = vrot.slane %v7459, 1
    %v7637 = vsel %vm2024, %v7635, %v7636
    %v7656 = vunpack.c.l.b16 %v7616
    %v7657 = vunpack.c.l.b16 %v7617
    %v7658 = vunpack.c.l.b16 %v7618
    %v7659 = vunpack.c.l.b16 %v7619
    %v7660 = vunpack.c.l.b16 %v7620
    %v7661 = vunpack.c.l.b16 %v7621
    %v7662 = vunpack.c.l.b16 %v7622
    %v7663 = vunpack.c.l.b16 %v7623
    %v7664 = vunpack.c.l.b16 %v7624
    %v7665 = vunpack.c.l.b16 %v7625
    %v7666 = vunpack.c.l.b16 %v7626
    %v7667 = vunpack.c.l.b16 %v7627
    %v7668 = vunpack.c.l.b16 %v7628
    %v7669 = vunpack.c.l.b16 %v7629
    %v7670 = vunpack.c.l.b16 %v7630
    %v7671 = vunpack.c.l.b16 %v7631
    %v7672 = vpack.c.b16 %v7657, %v7656
    %v7673 = vpack.c.b16 %v7659, %v7658
    %v7674 = vpack.c.b16 %v7661, %v7660
    %v7675 = vpack.c.b16 %v7663, %v7662
    %v7676 = vpack.c.b16 %v7665, %v7664
    %v7677 = vpack.c.b16 %v7667, %v7666
    %v7678 = vpack.c.b16 %v7669, %v7668
    %v7679 = vpack.c.b16 %v7671, %v7670
    %7688 = vmatpush.bf16.msra.mxu0 %v7679
    %7689 = vmatpush.bf16.msra.mxu0 %v7678
    %7690 = vmatpush.bf16.msra.mxu0 %v7677
    %7691 = vmatpush.bf16.msra.mxu0 %v7676
    %7692 = vmatpush.bf16.msra.mxu0 %v7675
    %7693 = vmatpush.bf16.msra.mxu0 %v7674
    %7694 = vmatpush.bf16.msra.mxu0 %v7673
    %7695 = vmatpush.bf16.msra.mxu0 %v7672
    %7696 = vmatmul.bf16.gmra.mxu0 %v7637
    %v7697 = vpop.f32.mrf.mxu0
    %v7698 = vadd.f32 0.0, %v7697
    %v7699 = vpop.f32.mrf.mxu0
    %v7700 = vadd.f32 0.0, %v7699
    %7701 = vmatmul.bf16.gmra.mxu0 %v7636
    %v7702 = vpop.f32.mrf.mxu0
    %v7703 = vadd.f32 0.0, %v7702
    %v7704 = vpop.f32.mrf.mxu0
    %7705 = vdwg.mxu0
    %v7706 = vadd.f32 %v7606, %v7698
    %v7707 = vadd.f32 %v7608, %v7700
    %v7708 = vadd.f32 %v7611, %v7703
    %v7709 = vld [vmem:[#allocation6] sm:$0xc]
    %v7710 = vld [vmem:[#allocation6 + $0x4] sm:$0xf]
    %v7711 = vld [vmem:[#allocation6 + $0x8] sm:$0xf]
    %v7712 = vld [vmem:[#allocation6 + $0xc] sm:$0x1]
    %s7713 = scalar_lea.vmem %s39, 192
    %v7714 = vld [vmem:[%s7713] sm:$0xf]
    %v7715 = vld [vmem:[%s7713 + $0x4] sm:$0xf]
    %v7716 = vld [vmem:[%s7713 + $0x8] sm:$0xf]
    %v7717 = vld [vmem:[%s7713 + $0xc] sm:$0xf]
    %v7718 = vld [vmem:[%s7713 + $0x10] sm:$0xf]
    %v7719 = vld [vmem:[%s7713 + $0x14] sm:$0xf]
    %v7720 = vld [vmem:[%s7713 + $0x18] sm:$0xf]
    %v7721 = vld [vmem:[%s7713 + $0x1c] sm:$0xf]
    %v7722 = vld [vmem:[%s7713 + $0x20] sm:$0xf]
    %v7723 = vld [vmem:[%s7713 + $0x24] sm:$0xf]
    %v7724 = vld [vmem:[%s7713 + $0x28] sm:$0xf]
    %v7725 = vld [vmem:[%s7713 + $0x2c] sm:$0xf]
    %v7726 = vld [vmem:[%s7713 + $0x30] sm:$0xf]
    %v7727 = vld [vmem:[%s7713 + $0x34] sm:$0xf]
    %v7728 = vld [vmem:[%s7713 + $0x38] sm:$0xf]
    %v7729 = vld [vmem:[%s7713 + $0x3c] sm:$0xf]
    %v7734 = vunpack.c.l.b16 %v7709
    %v7735 = vunpack.c.l.b16 %v7710
    %v7736 = vunpack.c.l.b16 %v7711
    %v7737 = vunpack.c.l.b16 %v7712
    %v7738 = vpack.c.b16 %v7735, %v7734
    %v7739 = vpack.c.b16 %v7737, %v7736
    %v7740 = vrot.slane %v7738, 2
    %v7741 = vrot.slane %v7739, 2
    %v7742 = vsel %vm2461, %v7740, %v7741
    %v7761 = vunpack.c.l.b16 %v7714
    %v7762 = vunpack.c.l.b16 %v7715
    %v7763 = vunpack.c.l.b16 %v7716
    %v7764 = vunpack.c.l.b16 %v7717
    %v7765 = vunpack.c.l.b16 %v7718
    %v7766 = vunpack.c.l.b16 %v7719
    %v7767 = vunpack.c.l.b16 %v7720
    %v7768 = vunpack.c.l.b16 %v7721
    %v7769 = vunpack.c.l.b16 %v7722
    %v7770 = vunpack.c.l.b16 %v7723
    %v7771 = vunpack.c.l.b16 %v7724
    %v7772 = vunpack.c.l.b16 %v7725
    %v7773 = vunpack.c.l.b16 %v7726
    %v7774 = vunpack.c.l.b16 %v7727
    %v7775 = vunpack.c.l.b16 %v7728
    %v7776 = vunpack.c.l.b16 %v7729
    %v7777 = vpack.c.b16 %v7762, %v7761
    %v7778 = vpack.c.b16 %v7764, %v7763
    %v7779 = vpack.c.b16 %v7766, %v7765
    %v7780 = vpack.c.b16 %v7768, %v7767
    %v7781 = vpack.c.b16 %v7770, %v7769
    %v7782 = vpack.c.b16 %v7772, %v7771
    %v7783 = vpack.c.b16 %v7774, %v7773
    %v7784 = vpack.c.b16 %v7776, %v7775
    %7793 = vmatpush.bf16.msra.mxu0 %v7784
    %7794 = vmatpush.bf16.msra.mxu0 %v7783
    %7795 = vmatpush.bf16.msra.mxu0 %v7782
    %7796 = vmatpush.bf16.msra.mxu0 %v7781
    %7797 = vmatpush.bf16.msra.mxu0 %v7780
    %7798 = vmatpush.bf16.msra.mxu0 %v7779
    %7799 = vmatpush.bf16.msra.mxu0 %v7778
    %7800 = vmatpush.bf16.msra.mxu0 %v7777
    %7801 = vmatmul.bf16.gmra.mxu0 %v7742
    %v7802 = vpop.f32.mrf.mxu0
    %v7803 = vadd.f32 0.0, %v7802
    %v7804 = vpop.f32.mrf.mxu0
    %v7805 = vadd.f32 0.0, %v7804
    %7806 = vmatmul.bf16.gmra.mxu0 %v7741
    %v7807 = vpop.f32.mrf.mxu0
    %v7808 = vadd.f32 0.0, %v7807
    %v7809 = vpop.f32.mrf.mxu0
    %7810 = vdwg.mxu0
    %v7811 = vadd.f32 %v7706, %v7803
    %v7812 = vadd.f32 %v7707, %v7805
    %v7813 = vadd.f32 %v7708, %v7808
    %v7814 = vld [vmem:[#allocation6 + $0xc] sm:$0x3]
    %s7815 = scalar_lea.vmem %s39, 256
    %v7816 = vld [vmem:[%s7815] sm:$0xf]
    %v7817 = vld [vmem:[%s7815 + $0x4] sm:$0xf]
    %v7818 = vld [vmem:[%s7815 + $0x8] sm:$0xf]
    %v7819 = vld [vmem:[%s7815 + $0xc] sm:$0xf]
    %v7820 = vld [vmem:[%s7815 + $0x10] sm:$0xf]
    %v7821 = vld [vmem:[%s7815 + $0x14] sm:$0xf]
    %v7822 = vld [vmem:[%s7815 + $0x18] sm:$0xf]
    %v7823 = vld [vmem:[%s7815 + $0x1c] sm:$0xf]
    %v7824 = vld [vmem:[%s7815 + $0x20] sm:$0xf]
    %v7825 = vld [vmem:[%s7815 + $0x24] sm:$0xf]
    %v7826 = vld [vmem:[%s7815 + $0x28] sm:$0xf]
    %v7827 = vld [vmem:[%s7815 + $0x2c] sm:$0xf]
    %v7828 = vld [vmem:[%s7815 + $0x30] sm:$0xf]
    %v7829 = vld [vmem:[%s7815 + $0x34] sm:$0xf]
    %v7830 = vld [vmem:[%s7815 + $0x38] sm:$0xf]
    %v7831 = vld [vmem:[%s7815 + $0x3c] sm:$0xf]
    %v7833 = vunpack.c.l.b16 %v7814
    %v7834 = vpack.c.b16 %v7833, %v7736
    %v7836 = vshrl.u32 %v7738, 16
    %v7838 = vrot.slane %v7836, 2
    %v7839 = vshll.u32 %v7738, 16
    %v7841 = vrot.slane %v7839, 3
    %v7842 = vor.u32 %v7838, %v7841
    %v7844 = vshrl.u32 %v7834, 16
    %v7846 = vrot.slane %v7844, 2
    %v7847 = vshll.u32 %v7834, 16
    %v7849 = vrot.slane %v7847, 3
    %v7850 = vor.u32 %v7846, %v7849
    %v7851 = vsel %vm2555, %v7842, %v7850
    %v7870 = vunpack.c.l.b16 %v7816
    %v7871 = vunpack.c.l.b16 %v7817
    %v7872 = vunpack.c.l.b16 %v7818
    %v7873 = vunpack.c.l.b16 %v7819
    %v7874 = vunpack.c.l.b16 %v7820
    %v7875 = vunpack.c.l.b16 %v7821
    %v7876 = vunpack.c.l.b16 %v7822
    %v7877 = vunpack.c.l.b16 %v7823
    %v7878 = vunpack.c.l.b16 %v7824
    %v7879 = vunpack.c.l.b16 %v7825
    %v7880 = vunpack.c.l.b16 %v7826
    %v7881 = vunpack.c.l.b16 %v7827
    %v7882 = vunpack.c.l.b16 %v7828
    %v7883 = vunpack.c.l.b16 %v7829
    %v7884 = vunpack.c.l.b16 %v7830
    %v7885 = vunpack.c.l.b16 %v7831
    %v7886 = vpack.c.b16 %v7871, %v7870
    %v7887 = vpack.c.b16 %v7873, %v7872
    %v7888 = vpack.c.b16 %v7875, %v7874
    %v7889 = vpack.c.b16 %v7877, %v7876
    %v7890 = vpack.c.b16 %v7879, %v7878
    %v7891 = vpack.c.b16 %v7881, %v7880
    %v7892 = vpack.c.b16 %v7883, %v7882
    %v7893 = vpack.c.b16 %v7885, %v7884
    %7902 = vmatpush.bf16.msra.mxu0 %v7893
    %7903 = vmatpush.bf16.msra.mxu0 %v7892
    %7904 = vmatpush.bf16.msra.mxu0 %v7891
    %7905 = vmatpush.bf16.msra.mxu0 %v7890
    %7906 = vmatpush.bf16.msra.mxu0 %v7889
    %7907 = vmatpush.bf16.msra.mxu0 %v7888
    %7908 = vmatpush.bf16.msra.mxu0 %v7887
    %7909 = vmatpush.bf16.msra.mxu0 %v7886
    %7910 = vmatmul.bf16.gmra.mxu0 %v7851
    %v7911 = vpop.f32.mrf.mxu0
    %v7912 = vadd.f32 0.0, %v7911
    %v7913 = vpop.f32.mrf.mxu0
    %v7914 = vadd.f32 0.0, %v7913
    %7915 = vmatmul.bf16.gmra.mxu0 %v7850
    %v7916 = vpop.f32.mrf.mxu0
    %v7917 = vadd.f32 0.0, %v7916
    %v7918 = vpop.f32.mrf.mxu0
    %7919 = vdwg.mxu0
    %v7920 = vadd.f32 %v7811, %v7912
    %v7921 = vadd.f32 %v7812, %v7914
    %v7922 = vadd.f32 %v7813, %v7917
    %v7923 = vld [vmem:[#allocation6] sm:$0x8]
    %s7924 = scalar_lea.vmem %s39, 320
    %v7925 = vld [vmem:[%s7924] sm:$0xf]
    %v7926 = vld [vmem:[%s7924 + $0x4] sm:$0xf]
    %v7927 = vld [vmem:[%s7924 + $0x8] sm:$0xf]
    %v7928 = vld [vmem:[%s7924 + $0xc] sm:$0xf]
    %v7929 = vld [vmem:[%s7924 + $0x10] sm:$0xf]
    %v7930 = vld [vmem:[%s7924 + $0x14] sm:$0xf]
    %v7931 = vld [vmem:[%s7924 + $0x18] sm:$0xf]
    %v7932 = vld [vmem:[%s7924 + $0x1c] sm:$0xf]
    %v7933 = vld [vmem:[%s7924 + $0x20] sm:$0xf]
    %v7934 = vld [vmem:[%s7924 + $0x24] sm:$0xf]
    %v7935 = vld [vmem:[%s7924 + $0x28] sm:$0xf]
    %v7936 = vld [vmem:[%s7924 + $0x2c] sm:$0xf]
    %v7937 = vld [vmem:[%s7924 + $0x30] sm:$0xf]
    %v7938 = vld [vmem:[%s7924 + $0x34] sm:$0xf]
    %v7939 = vld [vmem:[%s7924 + $0x38] sm:$0xf]
    %v7940 = vld [vmem:[%s7924 + $0x3c] sm:$0xf]
    %v7942 = vunpack.c.l.b16 %v7923
    %v7943 = vpack.c.b16 %v7735, %v7942
    %v7944 = vrot.slane %v7943, 3
    %v7945 = vrot.slane %v7834, 3
    %v7946 = vsel %vm2122, %v7944, %v7945
    %v7965 = vunpack.c.l.b16 %v7925
    %v7966 = vunpack.c.l.b16 %v7926
    %v7967 = vunpack.c.l.b16 %v7927
    %v7968 = vunpack.c.l.b16 %v7928
    %v7969 = vunpack.c.l.b16 %v7929
    %v7970 = vunpack.c.l.b16 %v7930
    %v7971 = vunpack.c.l.b16 %v7931
    %v7972 = vunpack.c.l.b16 %v7932
    %v7973 = vunpack.c.l.b16 %v7933
    %v7974 = vunpack.c.l.b16 %v7934
    %v7975 = vunpack.c.l.b16 %v7935
    %v7976 = vunpack.c.l.b16 %v7936
    %v7977 = vunpack.c.l.b16 %v7937
    %v7978 = vunpack.c.l.b16 %v7938
    %v7979 = vunpack.c.l.b16 %v7939
    %v7980 = vunpack.c.l.b16 %v7940
    %v7981 = vpack.c.b16 %v7966, %v7965
    %v7982 = vpack.c.b16 %v7968, %v7967
    %v7983 = vpack.c.b16 %v7970, %v7969
    %v7984 = vpack.c.b16 %v7972, %v7971
    %v7985 = vpack.c.b16 %v7974, %v7973
    %v7986 = vpack.c.b16 %v7976, %v7975
    %v7987 = vpack.c.b16 %v7978, %v7977
    %v7988 = vpack.c.b16 %v7980, %v7979
    %7997 = vmatpush.bf16.msra.mxu0 %v7988
    %7998 = vmatpush.bf16.msra.mxu0 %v7987
    %7999 = vmatpush.bf16.msra.mxu0 %v7986
    %8000 = vmatpush.bf16.msra.mxu0 %v7985
    %8001 = vmatpush.bf16.msra.mxu0 %v7984
    %8002 = vmatpush.bf16.msra.mxu0 %v7983
    %8003 = vmatpush.bf16.msra.mxu0 %v7982
    %8004 = vmatpush.bf16.msra.mxu0 %v7981
    %8005 = vmatmul.bf16.gmra.mxu0 %v7946
    %v8006 = vpop.f32.mrf.mxu0
    %v8007 = vadd.f32 0.0, %v8006
    %v8008 = vpop.f32.mrf.mxu0
    %v8009 = vadd.f32 0.0, %v8008
    %8010 = vmatmul.bf16.gmra.mxu0 %v7945
    %v8011 = vpop.f32.mrf.mxu0
    %v8012 = vadd.f32 0.0, %v8011
    %v8013 = vpop.f32.mrf.mxu0
    %8014 = vdwg.mxu0
    %v8015 = vadd.f32 %v7920, %v8007
    %v8016 = vadd.f32 %v7921, %v8009
    %v8017 = vadd.f32 %v7922, %v8012
    %v8018 = vld [vmem:[#allocation6 + $0xc] sm:$0x7]
    %s8019 = scalar_lea.vmem %s39, 384
    %v8020 = vld [vmem:[%s8019] sm:$0xf]
    %v8021 = vld [vmem:[%s8019 + $0x4] sm:$0xf]
    %v8022 = vld [vmem:[%s8019 + $0x8] sm:$0xf]
    %v8023 = vld [vmem:[%s8019 + $0xc] sm:$0xf]
    %v8024 = vld [vmem:[%s8019 + $0x10] sm:$0xf]
    %v8025 = vld [vmem:[%s8019 + $0x14] sm:$0xf]
    %v8026 = vld [vmem:[%s8019 + $0x18] sm:$0xf]
    %v8027 = vld [vmem:[%s8019 + $0x1c] sm:$0xf]
    %v8028 = vld [vmem:[%s8019 + $0x20] sm:$0xf]
    %v8029 = vld [vmem:[%s8019 + $0x24] sm:$0xf]
    %v8030 = vld [vmem:[%s8019 + $0x28] sm:$0xf]
    %v8031 = vld [vmem:[%s8019 + $0x2c] sm:$0xf]
    %v8032 = vld [vmem:[%s8019 + $0x30] sm:$0xf]
    %v8033 = vld [vmem:[%s8019 + $0x34] sm:$0xf]
    %v8034 = vld [vmem:[%s8019 + $0x38] sm:$0xf]
    %v8035 = vld [vmem:[%s8019 + $0x3c] sm:$0xf]
    %v8037 = vunpack.c.l.b16 %v8018
    %v8038 = vpack.c.b16 %v7736, %v7735
    %v8039 = vpack.c.b16 %v8037, %v8037
    %v8058 = vunpack.c.l.b16 %v8020
    %v8059 = vunpack.c.l.b16 %v8021
    %v8060 = vunpack.c.l.b16 %v8022
    %v8061 = vunpack.c.l.b16 %v8023
    %v8062 = vunpack.c.l.b16 %v8024
    %v8063 = vunpack.c.l.b16 %v8025
    %v8064 = vunpack.c.l.b16 %v8026
    %v8065 = vunpack.c.l.b16 %v8027
    %v8066 = vunpack.c.l.b16 %v8028
    %v8067 = vunpack.c.l.b16 %v8029
    %v8068 = vunpack.c.l.b16 %v8030
    %v8069 = vunpack.c.l.b16 %v8031
    %v8070 = vunpack.c.l.b16 %v8032
    %v8071 = vunpack.c.l.b16 %v8033
    %v8072 = vunpack.c.l.b16 %v8034
    %v8073 = vunpack.c.l.b16 %v8035
    %v8074 = vpack.c.b16 %v8059, %v8058
    %v8075 = vpack.c.b16 %v8061, %v8060
    %v8076 = vpack.c.b16 %v8063, %v8062
    %v8077 = vpack.c.b16 %v8065, %v8064
    %v8078 = vpack.c.b16 %v8067, %v8066
    %v8079 = vpack.c.b16 %v8069, %v8068
    %v8080 = vpack.c.b16 %v8071, %v8070
    %v8081 = vpack.c.b16 %v8073, %v8072
    %8090 = vmatpush.bf16.msra.mxu0 %v8081
    %8091 = vmatpush.bf16.msra.mxu0 %v8080
    %8092 = vmatpush.bf16.msra.mxu0 %v8079
    %8093 = vmatpush.bf16.msra.mxu0 %v8078
    %8094 = vmatpush.bf16.msra.mxu0 %v8077
    %8095 = vmatpush.bf16.msra.mxu0 %v8076
    %8096 = vmatpush.bf16.msra.mxu0 %v8075
    %8097 = vmatpush.bf16.msra.mxu0 %v8074
    %8098 = vmatmul.bf16.gmra.mxu0 %v8038
    %v8099 = vpop.f32.mrf.mxu0
    %v8100 = vadd.f32 0.0, %v8099
    %v8101 = vpop.f32.mrf.mxu0
    %v8102 = vadd.f32 0.0, %v8101
    %8103 = vmatmul.bf16.gmra.mxu0 %v8039
    %v8104 = vpop.f32.mrf.mxu0
    %v8105 = vadd.f32 0.0, %v8104
    %v8106 = vpop.f32.mrf.mxu0
    %8107 = vdwg.mxu0
    %v8108 = vadd.f32 %v8015, %v8100
    %v8109 = vadd.f32 %v8016, %v8102
    %v8110 = vadd.f32 %v8017, %v8105
    %v8111 = vld [vmem:[#allocation6 + $0xc] sm:$0xf]
    %s8112 = scalar_lea.vmem %s39, 448
    %v8113 = vld [vmem:[%s8112] sm:$0xf]
    %v8114 = vld [vmem:[%s8112 + $0x4] sm:$0xf]
    %v8115 = vld [vmem:[%s8112 + $0x8] sm:$0xf]
    %v8116 = vld [vmem:[%s8112 + $0xc] sm:$0xf]
    %v8117 = vld [vmem:[%s8112 + $0x10] sm:$0xf]
    %v8118 = vld [vmem:[%s8112 + $0x14] sm:$0xf]
    %v8119 = vld [vmem:[%s8112 + $0x18] sm:$0xf]
    %v8120 = vld [vmem:[%s8112 + $0x1c] sm:$0xf]
    %v8121 = vld [vmem:[%s8112 + $0x20] sm:$0xf]
    %v8122 = vld [vmem:[%s8112 + $0x24] sm:$0xf]
    %v8123 = vld [vmem:[%s8112 + $0x28] sm:$0xf]
    %v8124 = vld [vmem:[%s8112 + $0x2c] sm:$0xf]
    %v8125 = vld [vmem:[%s8112 + $0x30] sm:$0xf]
    %v8126 = vld [vmem:[%s8112 + $0x34] sm:$0xf]
    %v8127 = vld [vmem:[%s8112 + $0x38] sm:$0xf]
    %v8128 = vld [vmem:[%s8112 + $0x3c] sm:$0xf]
    %v8130 = vunpack.c.l.b16 %v8111
    %v8131 = vpack.c.b16 %v8130, %v8130
    %v8133 = vshrl.u32 %v8038, 16
    %v8135 = vshll.u32 %v8038, 16
    %v8137 = vrot.slane %v8135, 1
    %v8138 = vor.u32 %v8133, %v8137
    %v8140 = vshll.u32 %v8131, 16
    %v8142 = vrot.slane %v8140, 1
    %v8143 = vsel %vm1848, %v8138, %v8142
    %v8144 = vshrl.u32 %v8131, 16
    %v8146 = vor.u32 %v8144, %v8142
    %v8165 = vunpack.c.l.b16 %v8113
    %v8166 = vunpack.c.l.b16 %v8114
    %v8167 = vunpack.c.l.b16 %v8115
    %v8168 = vunpack.c.l.b16 %v8116
    %v8169 = vunpack.c.l.b16 %v8117
    %v8170 = vunpack.c.l.b16 %v8118
    %v8171 = vunpack.c.l.b16 %v8119
    %v8172 = vunpack.c.l.b16 %v8120
    %v8173 = vunpack.c.l.b16 %v8121
    %v8174 = vunpack.c.l.b16 %v8122
    %v8175 = vunpack.c.l.b16 %v8123
    %v8176 = vunpack.c.l.b16 %v8124
    %v8177 = vunpack.c.l.b16 %v8125
    %v8178 = vunpack.c.l.b16 %v8126
    %v8179 = vunpack.c.l.b16 %v8127
    %v8180 = vunpack.c.l.b16 %v8128
    %v8181 = vpack.c.b16 %v8166, %v8165
    %v8182 = vpack.c.b16 %v8168, %v8167
    %v8183 = vpack.c.b16 %v8170, %v8169
    %v8184 = vpack.c.b16 %v8172, %v8171
    %v8185 = vpack.c.b16 %v8174, %v8173
    %v8186 = vpack.c.b16 %v8176, %v8175
    %v8187 = vpack.c.b16 %v8178, %v8177
    %v8188 = vpack.c.b16 %v8180, %v8179
    %8197 = vmatpush.bf16.msra.mxu0 %v8188
    %8198 = vmatpush.bf16.msra.mxu0 %v8187
    %8199 = vmatpush.bf16.msra.mxu0 %v8186
    %8200 = vmatpush.bf16.msra.mxu0 %v8185
    %8201 = vmatpush.bf16.msra.mxu0 %v8184
    %8202 = vmatpush.bf16.msra.mxu0 %v8183
    %8203 = vmatpush.bf16.msra.mxu0 %v8182
    %8204 = vmatpush.bf16.msra.mxu0 %v8181
    %8205 = vmatmul.bf16.gmra.mxu0 %v8143
    %v8206 = vpop.f32.mrf.mxu0
    %v8207 = vadd.f32 0.0, %v8206
    %v8208 = vpop.f32.mrf.mxu0
    %v8209 = vadd.f32 0.0, %v8208
    %8210 = vmatmul.bf16.gmra.mxu0 %v8146
    %v8211 = vpop.f32.mrf.mxu0
    %v8212 = vadd.f32 0.0, %v8211
    %v8213 = vpop.f32.mrf.mxu0
    %8214 = vdwg.mxu0
    %v8215 = vadd.f32 %v8108, %v8207
    %v8216 = vadd.f32 %v8109, %v8209
    %v8217 = vadd.f32 %v8110, %v8212
    %v8218 = vld [vmem:[#allocation6 + $0x4] sm:$0xe]
    %s8219 = scalar_lea.vmem %s39, 512
    %v8220 = vld [vmem:[%s8219] sm:$0xf]
    %v8221 = vld [vmem:[%s8219 + $0x4] sm:$0xf]
    %v8222 = vld [vmem:[%s8219 + $0x8] sm:$0xf]
    %v8223 = vld [vmem:[%s8219 + $0xc] sm:$0xf]
    %v8224 = vld [vmem:[%s8219 + $0x10] sm:$0xf]
    %v8225 = vld [vmem:[%s8219 + $0x14] sm:$0xf]
    %v8226 = vld [vmem:[%s8219 + $0x18] sm:$0xf]
    %v8227 = vld [vmem:[%s8219 + $0x1c] sm:$0xf]
    %v8228 = vld [vmem:[%s8219 + $0x20] sm:$0xf]
    %v8229 = vld [vmem:[%s8219 + $0x24] sm:$0xf]
    %v8230 = vld [vmem:[%s8219 + $0x28] sm:$0xf]
    %v8231 = vld [vmem:[%s8219 + $0x2c] sm:$0xf]
    %v8232 = vld [vmem:[%s8219 + $0x30] sm:$0xf]
    %v8233 = vld [vmem:[%s8219 + $0x34] sm:$0xf]
    %v8234 = vld [vmem:[%s8219 + $0x38] sm:$0xf]
    %v8235 = vld [vmem:[%s8219 + $0x3c] sm:$0xf]
    %v8237 = vunpack.c.l.b16 %v8218
    %v8238 = vpack.c.b16 %v7736, %v8237
    %v8239 = vrot.slane %v8238, 1
    %v8240 = vrot.slane %v8131, 1
    %v8241 = vsel %vm2024, %v8239, %v8240
    %v8260 = vunpack.c.l.b16 %v8220
    %v8261 = vunpack.c.l.b16 %v8221
    %v8262 = vunpack.c.l.b16 %v8222
    %v8263 = vunpack.c.l.b16 %v8223
    %v8264 = vunpack.c.l.b16 %v8224
    %v8265 = vunpack.c.l.b16 %v8225
    %v8266 = vunpack.c.l.b16 %v8226
    %v8267 = vunpack.c.l.b16 %v8227
    %v8268 = vunpack.c.l.b16 %v8228
    %v8269 = vunpack.c.l.b16 %v8229
    %v8270 = vunpack.c.l.b16 %v8230
    %v8271 = vunpack.c.l.b16 %v8231
    %v8272 = vunpack.c.l.b16 %v8232
    %v8273 = vunpack.c.l.b16 %v8233
    %v8274 = vunpack.c.l.b16 %v8234
    %v8275 = vunpack.c.l.b16 %v8235
    %v8276 = vpack.c.b16 %v8261, %v8260
    %v8277 = vpack.c.b16 %v8263, %v8262
    %v8278 = vpack.c.b16 %v8265, %v8264
    %v8279 = vpack.c.b16 %v8267, %v8266
    %v8280 = vpack.c.b16 %v8269, %v8268
    %v8281 = vpack.c.b16 %v8271, %v8270
    %v8282 = vpack.c.b16 %v8273, %v8272
    %v8283 = vpack.c.b16 %v8275, %v8274
    %8292 = vmatpush.bf16.msra.mxu0 %v8283
    %8293 = vmatpush.bf16.msra.mxu0 %v8282
    %8294 = vmatpush.bf16.msra.mxu0 %v8281
    %8295 = vmatpush.bf16.msra.mxu0 %v8280
    %8296 = vmatpush.bf16.msra.mxu0 %v8279
    %8297 = vmatpush.bf16.msra.mxu0 %v8278
    %8298 = vmatpush.bf16.msra.mxu0 %v8277
    %8299 = vmatpush.bf16.msra.mxu0 %v8276
    %8300 = vmatmul.bf16.gmra.mxu0 %v8241
    %v8301 = vpop.f32.mrf.mxu0
    %v8302 = vadd.f32 0.0, %v8301
    %v8303 = vpop.f32.mrf.mxu0
    %v8304 = vadd.f32 0.0, %v8303
    %8305 = vmatmul.bf16.gmra.mxu0 %v8240
    %v8306 = vpop.f32.mrf.mxu0
    %v8307 = vadd.f32 0.0, %v8306
    %v8308 = vpop.f32.mrf.mxu0
    %8309 = vdwg.mxu0
    %v8310 = vadd.f32 %v8215, %v8302
    %v8311 = vadd.f32 %v8216, %v8304
    %v8312 = vadd.f32 %v8217, %v8307
    %v8313 = vld [vmem:[%s41] sm:$0x1]
    %v8315 = vperm.slane %v8313, 0
    %v8317 = vadd.f32 %v8310, %v8315
    %v8318 = vadd.f32 %v8311, %v8315
    %v8319 = vadd.f32 %v8312, %v8315
    %v8320 = vld [vmem:[#allocation5] sm:$0xc]
    %v8321 = vld [vmem:[#allocation5 + $0x4] sm:$0xf]
    %v8322 = vld [vmem:[#allocation5 + $0x8] sm:$0xf]
    %v8323 = vld [vmem:[#allocation5 + $0xc] sm:$0x3]
    %v8324 = vunpack.c.l.bf16 %v8320
    %v8325 = vunpack.c.l.bf16 %v8321
    %v8326 = vunpack.c.l.bf16 %v8322
    %v8327 = vunpack.c.l.bf16 %v8323
    %v8332 = vrot.slane %v8324, 5
    %v8333 = vrot.slane %v8325, 5
    %v8334 = vsel %vm1415, %v8332, %v8333
    %v8335 = vrot.slane %v8326, 5
    %v8336 = vsel %vm1415, %v8333, %v8335
    %v8337 = vrot.slane %v8327, 5
    %v8338 = vsel %vm1415, %v8335, %v8337
    %v8342 = vadd.f32 %v8317, %v8334
    %v8343 = vadd.f32 %v8318, %v8336
    %v8344 = vadd.f32 %v8319, %v8338
    %v8345 = vmax.f32 %v8342, 0.0
    %v8346 = vmax.f32 %v8343, 0.0
    %v8347 = vmax.f32 %v8344, 0.0
    %v8348 = vld [vmem:[%s9] sm:$0xf]
    %v8349 = vld [vmem:[%s9 + $0x4] sm:$0xf]
    %v8350 = vld [vmem:[%s9 + $0x8] sm:$0xf]
    %v8351 = vld [vmem:[%s9 + $0xc] sm:$0xf]
    %v8352 = vpack.c.bf16 %v8346, %v8345
    %v8353 = vpack.c.bf16 %v8347, %v8347
    %v8358 = vunpack.c.l.b16 %v8348
    %v8359 = vunpack.c.l.b16 %v8349
    %v8360 = vunpack.c.l.b16 %v8350
    %v8361 = vunpack.c.l.b16 %v8351
    %v8362 = vpack.c.b16 %v8359, %v8358
    %v8363 = vpack.c.b16 %v8361, %v8360
    %vm8364 = vcmask 179200
    %v8366 = vsel %vm8364, %v8362, 0
    %v8369 = vsel %vm8364, %v8363, 0
    %v8372 = vsel %vm1415, %v8353, 0
    %8374 = vmatpush.bf16.msra.mxu0 0
    %8375 = vmatpush.bf16.msra.mxu0 0
    %8376 = vmatpush.bf16.msra.mxu0 0
    %8377 = vmatpush.bf16.msra.mxu0 0
    %8378 = vmatpush.bf16.msra.mxu0 0
    %8379 = vmatpush.bf16.msra.mxu0 0
    %8380 = vmatpush.bf16.msra.mxu0 %v8372
    %8381 = vmatpush.bf16.msra.mxu0 %v8352
    %8382 = vmatmul.bf16.gmra.mxu0 %v8366
    %v8383 = vpop.f32.mrf.mxu0
    %v8384 = vadd.f32 0.0, %v8383
    %v8385 = vpop.f32.mrf.mxu0
    %v8386 = vadd.f32 0.0, %v8385
    %8387 = vmatmul.bf16.gmra.mxu0 %v8369
    %v8388 = vpop.f32.mrf.mxu0
    %v8389 = vadd.f32 0.0, %v8388
    %v8390 = vpop.f32.mrf.mxu0
    %v8391 = vadd.f32 0.0, %v8390
    %8392 = vdwg.mxu0
    %v8393 = vpack.c.bf16 %v8384, %v8384
    %v8394 = vpack.c.bf16 %v8386, %v8386
    %v8395 = vpack.c.bf16 %v8389, %v8389
    %v8396 = vpack.c.bf16 %v8391, %v8391
    %8397 = vst [vmem:[#allocation5] sm:$0xf] %v8393
    %8398 = vst [vmem:[#allocation5 + $0x4] sm:$0xf] %v8394
    %8399 = vst [vmem:[#allocation5 + $0x8] sm:$0xf] %v8395
    %8400 = vst [vmem:[#allocation5 + $0xc] sm:$0xf] %v8396
    %v8401 = vld [vmem:[#allocation5] sm:$0xf]
    %v8402 = vld [vmem:[#allocation5 + $0x4] sm:$0xf]
    %v8403 = vld [vmem:[#allocation5 + $0x8] sm:$0x7]
    %v8404 = vld [vmem:[%s47] sm:$0xf]
    %v8405 = vld [vmem:[%s47 + $0x4] sm:$0xf]
    %v8406 = vld [vmem:[%s47 + $0x8] sm:$0xf]
    %v8407 = vld [vmem:[%s47 + $0xc] sm:$0xf]
    %v8408 = vld [vmem:[%s47 + $0x10] sm:$0xf]
    %v8409 = vld [vmem:[%s47 + $0x14] sm:$0xf]
    %v8410 = vld [vmem:[%s47 + $0x18] sm:$0xf]
    %v8411 = vld [vmem:[%s47 + $0x1c] sm:$0xf]
    %v8412 = vld [vmem:[%s47 + $0x20] sm:$0xf]
    %v8413 = vld [vmem:[%s47 + $0x24] sm:$0xf]
    %v8414 = vld [vmem:[%s47 + $0x28] sm:$0xf]
    %v8415 = vld [vmem:[%s47 + $0x2c] sm:$0xf]
    %v8416 = vld [vmem:[%s47 + $0x30] sm:$0xf]
    %v8417 = vld [vmem:[%s47 + $0x34] sm:$0xf]
    %v8418 = vld [vmem:[%s47 + $0x38] sm:$0xf]
    %v8419 = vld [vmem:[%s47 + $0x3c] sm:$0xf]
    %v8420 = vld [vmem:[#allocation5 + $0x8] sm:$0xf]
    %s8421 = scalar_lea.vmem %s47, 64
    %v8422 = vld [vmem:[%s8421] sm:$0xf]
    %v8423 = vld [vmem:[%s8421 + $0x4] sm:$0xf]
    %v8424 = vld [vmem:[%s8421 + $0x8] sm:$0xf]
    %v8425 = vld [vmem:[%s8421 + $0xc] sm:$0xf]
    %v8426 = vld [vmem:[%s8421 + $0x10] sm:$0xf]
    %v8427 = vld [vmem:[%s8421 + $0x14] sm:$0xf]
    %v8428 = vld [vmem:[%s8421 + $0x18] sm:$0xf]
    %v8429 = vld [vmem:[%s8421 + $0x1c] sm:$0xf]
    %v8430 = vld [vmem:[%s8421 + $0x20] sm:$0xf]
    %v8431 = vld [vmem:[%s8421 + $0x24] sm:$0xf]
    %v8432 = vld [vmem:[%s8421 + $0x28] sm:$0xf]
    %v8433 = vld [vmem:[%s8421 + $0x2c] sm:$0xf]
    %v8434 = vld [vmem:[%s8421 + $0x30] sm:$0xf]
    %v8435 = vld [vmem:[%s8421 + $0x34] sm:$0xf]
    %v8436 = vld [vmem:[%s8421 + $0x38] sm:$0xf]
    %v8437 = vld [vmem:[%s8421 + $0x3c] sm:$0xf]
    %v8441 = vunpack.c.l.b16 %v8401
    %v8442 = vunpack.c.l.b16 %v8402
    %v8443 = vunpack.c.l.b16 %v8420
    %v8444 = vpack.c.b16 %v8442, %v8441
    %v8445 = vpack.c.b16 %v8443, %v8443
    %v8447 = vshrl.u32 %v8444, 16
    %v8449 = vshll.u32 %v8444, 16
    %v8451 = vrot.slane %v8449, 1
    %v8452 = vor.u32 %v8447, %v8451
    %v8454 = vshll.u32 %v8445, 16
    %v8456 = vrot.slane %v8454, 1
    %v8457 = vsel %vm1848, %v8452, %v8456
    %v8458 = vshrl.u32 %v8445, 16
    %v8460 = vor.u32 %v8458, %v8456
    %v8479 = vunpack.c.l.b16 %v8422
    %v8480 = vunpack.c.l.b16 %v8423
    %v8481 = vunpack.c.l.b16 %v8424
    %v8482 = vunpack.c.l.b16 %v8425
    %v8483 = vunpack.c.l.b16 %v8426
    %v8484 = vunpack.c.l.b16 %v8427
    %v8485 = vunpack.c.l.b16 %v8428
    %v8486 = vunpack.c.l.b16 %v8429
    %v8487 = vunpack.c.l.b16 %v8430
    %v8488 = vunpack.c.l.b16 %v8431
    %v8489 = vunpack.c.l.b16 %v8432
    %v8490 = vunpack.c.l.b16 %v8433
    %v8491 = vunpack.c.l.b16 %v8434
    %v8492 = vunpack.c.l.b16 %v8435
    %v8493 = vunpack.c.l.b16 %v8436
    %v8494 = vunpack.c.l.b16 %v8437
    %v8495 = vpack.c.b16 %v8480, %v8479
    %v8496 = vpack.c.b16 %v8482, %v8481
    %v8497 = vpack.c.b16 %v8484, %v8483
    %v8498 = vpack.c.b16 %v8486, %v8485
    %v8499 = vpack.c.b16 %v8488, %v8487
    %v8500 = vpack.c.b16 %v8490, %v8489
    %v8501 = vpack.c.b16 %v8492, %v8491
    %v8502 = vpack.c.b16 %v8494, %v8493
    %8511 = vmatpush.bf16.msra.mxu0 %v8502
    %8512 = vmatpush.bf16.msra.mxu0 %v8501
    %8513 = vmatpush.bf16.msra.mxu0 %v8500
    %8514 = vmatpush.bf16.msra.mxu0 %v8499
    %8515 = vmatpush.bf16.msra.mxu0 %v8498
    %8516 = vmatpush.bf16.msra.mxu0 %v8497
    %8517 = vmatpush.bf16.msra.mxu0 %v8496
    %8518 = vmatpush.bf16.msra.mxu0 %v8495
    %8519 = vmatmul.bf16.gmra.mxu0 %v8457
    %v8520 = vpop.f32.mrf.mxu0
    %v8521 = vadd.f32 0.0, %v8520
    %v8522 = vpop.f32.mrf.mxu0
    %v8523 = vadd.f32 0.0, %v8522
    %8524 = vmatmul.bf16.gmra.mxu0 %v8460
    %v8525 = vpop.f32.mrf.mxu0
    %v8526 = vadd.f32 0.0, %v8525
    %v8527 = vpop.f32.mrf.mxu0
    %8528 = vdwg.mxu0
    %v8530 = vunpack.c.l.b16 %v8403
    %v8531 = vpack.c.b16 %v8530, %v8530
    %v8550 = vunpack.c.l.b16 %v8404
    %v8551 = vunpack.c.l.b16 %v8405
    %v8552 = vunpack.c.l.b16 %v8406
    %v8553 = vunpack.c.l.b16 %v8407
    %v8554 = vunpack.c.l.b16 %v8408
    %v8555 = vunpack.c.l.b16 %v8409
    %v8556 = vunpack.c.l.b16 %v8410
    %v8557 = vunpack.c.l.b16 %v8411
    %v8558 = vunpack.c.l.b16 %v8412
    %v8559 = vunpack.c.l.b16 %v8413
    %v8560 = vunpack.c.l.b16 %v8414
    %v8561 = vunpack.c.l.b16 %v8415
    %v8562 = vunpack.c.l.b16 %v8416
    %v8563 = vunpack.c.l.b16 %v8417
    %v8564 = vunpack.c.l.b16 %v8418
    %v8565 = vunpack.c.l.b16 %v8419
    %v8566 = vpack.c.b16 %v8551, %v8550
    %v8567 = vpack.c.b16 %v8553, %v8552
    %v8568 = vpack.c.b16 %v8555, %v8554
    %v8569 = vpack.c.b16 %v8557, %v8556
    %v8570 = vpack.c.b16 %v8559, %v8558
    %v8571 = vpack.c.b16 %v8561, %v8560
    %v8572 = vpack.c.b16 %v8563, %v8562
    %v8573 = vpack.c.b16 %v8565, %v8564
    %8582 = vmatpush.bf16.msra.mxu0 %v8573
    %8583 = vmatpush.bf16.msra.mxu0 %v8572
    %8584 = vmatpush.bf16.msra.mxu0 %v8571
    %8585 = vmatpush.bf16.msra.mxu0 %v8570
    %8586 = vmatpush.bf16.msra.mxu0 %v8569
    %8587 = vmatpush.bf16.msra.mxu0 %v8568
    %8588 = vmatpush.bf16.msra.mxu0 %v8567
    %8589 = vmatpush.bf16.msra.mxu0 %v8566
    %8590 = vmatmul.bf16.gmra.mxu0 %v8444
    %v8591 = vpop.f32.mrf.mxu0
    %v8592 = vadd.f32 %v8521, %v8591
    %v8593 = vpop.f32.mrf.mxu0
    %v8594 = vadd.f32 %v8523, %v8593
    %8595 = vmatmul.bf16.gmra.mxu0 %v8531
    %v8596 = vpop.f32.mrf.mxu0
    %v8597 = vadd.f32 %v8526, %v8596
    %v8598 = vpop.f32.mrf.mxu0
    %8599 = vdwg.mxu0
    %v8600 = vld [vmem:[#allocation5] sm:$0xe]
    %s8601 = scalar_lea.vmem %s47, 128
    %v8602 = vld [vmem:[%s8601] sm:$0xf]
    %v8603 = vld [vmem:[%s8601 + $0x4] sm:$0xf]
    %v8604 = vld [vmem:[%s8601 + $0x8] sm:$0xf]
    %v8605 = vld [vmem:[%s8601 + $0xc] sm:$0xf]
    %v8606 = vld [vmem:[%s8601 + $0x10] sm:$0xf]
    %v8607 = vld [vmem:[%s8601 + $0x14] sm:$0xf]
    %v8608 = vld [vmem:[%s8601 + $0x18] sm:$0xf]
    %v8609 = vld [vmem:[%s8601 + $0x1c] sm:$0xf]
    %v8610 = vld [vmem:[%s8601 + $0x20] sm:$0xf]
    %v8611 = vld [vmem:[%s8601 + $0x24] sm:$0xf]
    %v8612 = vld [vmem:[%s8601 + $0x28] sm:$0xf]
    %v8613 = vld [vmem:[%s8601 + $0x2c] sm:$0xf]
    %v8614 = vld [vmem:[%s8601 + $0x30] sm:$0xf]
    %v8615 = vld [vmem:[%s8601 + $0x34] sm:$0xf]
    %v8616 = vld [vmem:[%s8601 + $0x38] sm:$0xf]
    %v8617 = vld [vmem:[%s8601 + $0x3c] sm:$0xf]
    %v8619 = vunpack.c.l.b16 %v8600
    %v8620 = vpack.c.b16 %v8442, %v8619
    %v8621 = vrot.slane %v8620, 1
    %v8622 = vrot.slane %v8445, 1
    %v8623 = vsel %vm2024, %v8621, %v8622
    %v8642 = vunpack.c.l.b16 %v8602
    %v8643 = vunpack.c.l.b16 %v8603
    %v8644 = vunpack.c.l.b16 %v8604
    %v8645 = vunpack.c.l.b16 %v8605
    %v8646 = vunpack.c.l.b16 %v8606
    %v8647 = vunpack.c.l.b16 %v8607
    %v8648 = vunpack.c.l.b16 %v8608
    %v8649 = vunpack.c.l.b16 %v8609
    %v8650 = vunpack.c.l.b16 %v8610
    %v8651 = vunpack.c.l.b16 %v8611
    %v8652 = vunpack.c.l.b16 %v8612
    %v8653 = vunpack.c.l.b16 %v8613
    %v8654 = vunpack.c.l.b16 %v8614
    %v8655 = vunpack.c.l.b16 %v8615
    %v8656 = vunpack.c.l.b16 %v8616
    %v8657 = vunpack.c.l.b16 %v8617
    %v8658 = vpack.c.b16 %v8643, %v8642
    %v8659 = vpack.c.b16 %v8645, %v8644
    %v8660 = vpack.c.b16 %v8647, %v8646
    %v8661 = vpack.c.b16 %v8649, %v8648
    %v8662 = vpack.c.b16 %v8651, %v8650
    %v8663 = vpack.c.b16 %v8653, %v8652
    %v8664 = vpack.c.b16 %v8655, %v8654
    %v8665 = vpack.c.b16 %v8657, %v8656
    %8674 = vmatpush.bf16.msra.mxu0 %v8665
    %8675 = vmatpush.bf16.msra.mxu0 %v8664
    %8676 = vmatpush.bf16.msra.mxu0 %v8663
    %8677 = vmatpush.bf16.msra.mxu0 %v8662
    %8678 = vmatpush.bf16.msra.mxu0 %v8661
    %8679 = vmatpush.bf16.msra.mxu0 %v8660
    %8680 = vmatpush.bf16.msra.mxu0 %v8659
    %8681 = vmatpush.bf16.msra.mxu0 %v8658
    %8682 = vmatmul.bf16.gmra.mxu0 %v8623
    %v8683 = vpop.f32.mrf.mxu0
    %v8684 = vadd.f32 0.0, %v8683
    %v8685 = vpop.f32.mrf.mxu0
    %v8686 = vadd.f32 0.0, %v8685
    %8687 = vmatmul.bf16.gmra.mxu0 %v8622
    %v8688 = vpop.f32.mrf.mxu0
    %v8689 = vadd.f32 0.0, %v8688
    %v8690 = vpop.f32.mrf.mxu0
    %8691 = vdwg.mxu0
    %v8692 = vadd.f32 %v8592, %v8684
    %v8693 = vadd.f32 %v8594, %v8686
    %v8694 = vadd.f32 %v8597, %v8689
    %v8695 = vld [vmem:[#allocation5] sm:$0xc]
    %v8696 = vld [vmem:[#allocation5 + $0x4] sm:$0xf]
    %v8697 = vld [vmem:[#allocation5 + $0x8] sm:$0xf]
    %v8698 = vld [vmem:[#allocation5 + $0xc] sm:$0x1]
    %s8699 = scalar_lea.vmem %s47, 192
    %v8700 = vld [vmem:[%s8699] sm:$0xf]
    %v8701 = vld [vmem:[%s8699 + $0x4] sm:$0xf]
    %v8702 = vld [vmem:[%s8699 + $0x8] sm:$0xf]
    %v8703 = vld [vmem:[%s8699 + $0xc] sm:$0xf]
    %v8704 = vld [vmem:[%s8699 + $0x10] sm:$0xf]
    %v8705 = vld [vmem:[%s8699 + $0x14] sm:$0xf]
    %v8706 = vld [vmem:[%s8699 + $0x18] sm:$0xf]
    %v8707 = vld [vmem:[%s8699 + $0x1c] sm:$0xf]
    %v8708 = vld [vmem:[%s8699 + $0x20] sm:$0xf]
    %v8709 = vld [vmem:[%s8699 + $0x24] sm:$0xf]
    %v8710 = vld [vmem:[%s8699 + $0x28] sm:$0xf]
    %v8711 = vld [vmem:[%s8699 + $0x2c] sm:$0xf]
    %v8712 = vld [vmem:[%s8699 + $0x30] sm:$0xf]
    %v8713 = vld [vmem:[%s8699 + $0x34] sm:$0xf]
    %v8714 = vld [vmem:[%s8699 + $0x38] sm:$0xf]
    %v8715 = vld [vmem:[%s8699 + $0x3c] sm:$0xf]
    %v8720 = vunpack.c.l.b16 %v8695
    %v8721 = vunpack.c.l.b16 %v8696
    %v8722 = vunpack.c.l.b16 %v8697
    %v8723 = vunpack.c.l.b16 %v8698
    %v8724 = vpack.c.b16 %v8721, %v8720
    %v8725 = vpack.c.b16 %v8723, %v8722
    %v8726 = vrot.slane %v8724, 2
    %v8727 = vrot.slane %v8725, 2
    %v8728 = vsel %vm2461, %v8726, %v8727
    %v8747 = vunpack.c.l.b16 %v8700
    %v8748 = vunpack.c.l.b16 %v8701
    %v8749 = vunpack.c.l.b16 %v8702
    %v8750 = vunpack.c.l.b16 %v8703
    %v8751 = vunpack.c.l.b16 %v8704
    %v8752 = vunpack.c.l.b16 %v8705
    %v8753 = vunpack.c.l.b16 %v8706
    %v8754 = vunpack.c.l.b16 %v8707
    %v8755 = vunpack.c.l.b16 %v8708
    %v8756 = vunpack.c.l.b16 %v8709
    %v8757 = vunpack.c.l.b16 %v8710
    %v8758 = vunpack.c.l.b16 %v8711
    %v8759 = vunpack.c.l.b16 %v8712
    %v8760 = vunpack.c.l.b16 %v8713
    %v8761 = vunpack.c.l.b16 %v8714
    %v8762 = vunpack.c.l.b16 %v8715
    %v8763 = vpack.c.b16 %v8748, %v8747
    %v8764 = vpack.c.b16 %v8750, %v8749
    %v8765 = vpack.c.b16 %v8752, %v8751
    %v8766 = vpack.c.b16 %v8754, %v8753
    %v8767 = vpack.c.b16 %v8756, %v8755
    %v8768 = vpack.c.b16 %v8758, %v8757
    %v8769 = vpack.c.b16 %v8760, %v8759
    %v8770 = vpack.c.b16 %v8762, %v8761
    %8779 = vmatpush.bf16.msra.mxu0 %v8770
    %8780 = vmatpush.bf16.msra.mxu0 %v8769
    %8781 = vmatpush.bf16.msra.mxu0 %v8768
    %8782 = vmatpush.bf16.msra.mxu0 %v8767
    %8783 = vmatpush.bf16.msra.mxu0 %v8766
    %8784 = vmatpush.bf16.msra.mxu0 %v8765
    %8785 = vmatpush.bf16.msra.mxu0 %v8764
    %8786 = vmatpush.bf16.msra.mxu0 %v8763
    %8787 = vmatmul.bf16.gmra.mxu0 %v8728
    %v8788 = vpop.f32.mrf.mxu0
    %v8789 = vadd.f32 0.0, %v8788
    %v8790 = vpop.f32.mrf.mxu0
    %v8791 = vadd.f32 0.0, %v8790
    %8792 = vmatmul.bf16.gmra.mxu0 %v8727
    %v8793 = vpop.f32.mrf.mxu0
    %v8794 = vadd.f32 0.0, %v8793
    %v8795 = vpop.f32.mrf.mxu0
    %8796 = vdwg.mxu0
    %v8797 = vadd.f32 %v8692, %v8789
    %v8798 = vadd.f32 %v8693, %v8791
    %v8799 = vadd.f32 %v8694, %v8794
    %v8800 = vld [vmem:[#allocation5 + $0xc] sm:$0x3]
    %s8801 = scalar_lea.vmem %s47, 256
    %v8802 = vld [vmem:[%s8801] sm:$0xf]
    %v8803 = vld [vmem:[%s8801 + $0x4] sm:$0xf]
    %v8804 = vld [vmem:[%s8801 + $0x8] sm:$0xf]
    %v8805 = vld [vmem:[%s8801 + $0xc] sm:$0xf]
    %v8806 = vld [vmem:[%s8801 + $0x10] sm:$0xf]
    %v8807 = vld [vmem:[%s8801 + $0x14] sm:$0xf]
    %v8808 = vld [vmem:[%s8801 + $0x18] sm:$0xf]
    %v8809 = vld [vmem:[%s8801 + $0x1c] sm:$0xf]
    %v8810 = vld [vmem:[%s8801 + $0x20] sm:$0xf]
    %v8811 = vld [vmem:[%s8801 + $0x24] sm:$0xf]
    %v8812 = vld [vmem:[%s8801 + $0x28] sm:$0xf]
    %v8813 = vld [vmem:[%s8801 + $0x2c] sm:$0xf]
    %v8814 = vld [vmem:[%s8801 + $0x30] sm:$0xf]
    %v8815 = vld [vmem:[%s8801 + $0x34] sm:$0xf]
    %v8816 = vld [vmem:[%s8801 + $0x38] sm:$0xf]
    %v8817 = vld [vmem:[%s8801 + $0x3c] sm:$0xf]
    %v8819 = vunpack.c.l.b16 %v8800
    %v8820 = vpack.c.b16 %v8819, %v8722
    %v8822 = vshrl.u32 %v8724, 16
    %v8824 = vrot.slane %v8822, 2
    %v8825 = vshll.u32 %v8724, 16
    %v8827 = vrot.slane %v8825, 3
    %v8828 = vor.u32 %v8824, %v8827
    %v8830 = vshrl.u32 %v8820, 16
    %v8832 = vrot.slane %v8830, 2
    %v8833 = vshll.u32 %v8820, 16
    %v8835 = vrot.slane %v8833, 3
    %v8836 = vor.u32 %v8832, %v8835
    %v8837 = vsel %vm2555, %v8828, %v8836
    %v8856 = vunpack.c.l.b16 %v8802
    %v8857 = vunpack.c.l.b16 %v8803
    %v8858 = vunpack.c.l.b16 %v8804
    %v8859 = vunpack.c.l.b16 %v8805
    %v8860 = vunpack.c.l.b16 %v8806
    %v8861 = vunpack.c.l.b16 %v8807
    %v8862 = vunpack.c.l.b16 %v8808
    %v8863 = vunpack.c.l.b16 %v8809
    %v8864 = vunpack.c.l.b16 %v8810
    %v8865 = vunpack.c.l.b16 %v8811
    %v8866 = vunpack.c.l.b16 %v8812
    %v8867 = vunpack.c.l.b16 %v8813
    %v8868 = vunpack.c.l.b16 %v8814
    %v8869 = vunpack.c.l.b16 %v8815
    %v8870 = vunpack.c.l.b16 %v8816
    %v8871 = vunpack.c.l.b16 %v8817
    %v8872 = vpack.c.b16 %v8857, %v8856
    %v8873 = vpack.c.b16 %v8859, %v8858
    %v8874 = vpack.c.b16 %v8861, %v8860
    %v8875 = vpack.c.b16 %v8863, %v8862
    %v8876 = vpack.c.b16 %v8865, %v8864
    %v8877 = vpack.c.b16 %v8867, %v8866
    %v8878 = vpack.c.b16 %v8869, %v8868
    %v8879 = vpack.c.b16 %v8871, %v8870
    %8888 = vmatpush.bf16.msra.mxu0 %v8879
    %8889 = vmatpush.bf16.msra.mxu0 %v8878
    %8890 = vmatpush.bf16.msra.mxu0 %v8877
    %8891 = vmatpush.bf16.msra.mxu0 %v8876
    %8892 = vmatpush.bf16.msra.mxu0 %v8875
    %8893 = vmatpush.bf16.msra.mxu0 %v8874
    %8894 = vmatpush.bf16.msra.mxu0 %v8873
    %8895 = vmatpush.bf16.msra.mxu0 %v8872
    %8896 = vmatmul.bf16.gmra.mxu0 %v8837
    %v8897 = vpop.f32.mrf.mxu0
    %v8898 = vadd.f32 0.0, %v8897
    %v8899 = vpop.f32.mrf.mxu0
    %v8900 = vadd.f32 0.0, %v8899
    %8901 = vmatmul.bf16.gmra.mxu0 %v8836
    %v8902 = vpop.f32.mrf.mxu0
    %v8903 = vadd.f32 0.0, %v8902
    %v8904 = vpop.f32.mrf.mxu0
    %8905 = vdwg.mxu0
    %v8906 = vadd.f32 %v8797, %v8898
    %v8907 = vadd.f32 %v8798, %v8900
    %v8908 = vadd.f32 %v8799, %v8903
    %v8909 = vld [vmem:[#allocation5] sm:$0x8]
    %s8910 = scalar_lea.vmem %s47, 320
    %v8911 = vld [vmem:[%s8910] sm:$0xf]
    %v8912 = vld [vmem:[%s8910 + $0x4] sm:$0xf]
    %v8913 = vld [vmem:[%s8910 + $0x8] sm:$0xf]
    %v8914 = vld [vmem:[%s8910 + $0xc] sm:$0xf]
    %v8915 = vld [vmem:[%s8910 + $0x10] sm:$0xf]
    %v8916 = vld [vmem:[%s8910 + $0x14] sm:$0xf]
    %v8917 = vld [vmem:[%s8910 + $0x18] sm:$0xf]
    %v8918 = vld [vmem:[%s8910 + $0x1c] sm:$0xf]
    %v8919 = vld [vmem:[%s8910 + $0x20] sm:$0xf]
    %v8920 = vld [vmem:[%s8910 + $0x24] sm:$0xf]
    %v8921 = vld [vmem:[%s8910 + $0x28] sm:$0xf]
    %v8922 = vld [vmem:[%s8910 + $0x2c] sm:$0xf]
    %v8923 = vld [vmem:[%s8910 + $0x30] sm:$0xf]
    %v8924 = vld [vmem:[%s8910 + $0x34] sm:$0xf]
    %v8925 = vld [vmem:[%s8910 + $0x38] sm:$0xf]
    %v8926 = vld [vmem:[%s8910 + $0x3c] sm:$0xf]
    %v8928 = vunpack.c.l.b16 %v8909
    %v8929 = vpack.c.b16 %v8721, %v8928
    %v8930 = vrot.slane %v8929, 3
    %v8931 = vrot.slane %v8820, 3
    %v8932 = vsel %vm2122, %v8930, %v8931
    %v8951 = vunpack.c.l.b16 %v8911
    %v8952 = vunpack.c.l.b16 %v8912
    %v8953 = vunpack.c.l.b16 %v8913
    %v8954 = vunpack.c.l.b16 %v8914
    %v8955 = vunpack.c.l.b16 %v8915
    %v8956 = vunpack.c.l.b16 %v8916
    %v8957 = vunpack.c.l.b16 %v8917
    %v8958 = vunpack.c.l.b16 %v8918
    %v8959 = vunpack.c.l.b16 %v8919
    %v8960 = vunpack.c.l.b16 %v8920
    %v8961 = vunpack.c.l.b16 %v8921
    %v8962 = vunpack.c.l.b16 %v8922
    %v8963 = vunpack.c.l.b16 %v8923
    %v8964 = vunpack.c.l.b16 %v8924
    %v8965 = vunpack.c.l.b16 %v8925
    %v8966 = vunpack.c.l.b16 %v8926
    %v8967 = vpack.c.b16 %v8952, %v8951
    %v8968 = vpack.c.b16 %v8954, %v8953
    %v8969 = vpack.c.b16 %v8956, %v8955
    %v8970 = vpack.c.b16 %v8958, %v8957
    %v8971 = vpack.c.b16 %v8960, %v8959
    %v8972 = vpack.c.b16 %v8962, %v8961
    %v8973 = vpack.c.b16 %v8964, %v8963
    %v8974 = vpack.c.b16 %v8966, %v8965
    %8983 = vmatpush.bf16.msra.mxu0 %v8974
    %8984 = vmatpush.bf16.msra.mxu0 %v8973
    %8985 = vmatpush.bf16.msra.mxu0 %v8972
    %8986 = vmatpush.bf16.msra.mxu0 %v8971
    %8987 = vmatpush.bf16.msra.mxu0 %v8970
    %8988 = vmatpush.bf16.msra.mxu0 %v8969
    %8989 = vmatpush.bf16.msra.mxu0 %v8968
    %8990 = vmatpush.bf16.msra.mxu0 %v8967
    %8991 = vmatmul.bf16.gmra.mxu0 %v8932
    %v8992 = vpop.f32.mrf.mxu0
    %v8993 = vadd.f32 0.0, %v8992
    %v8994 = vpop.f32.mrf.mxu0
    %v8995 = vadd.f32 0.0, %v8994
    %8996 = vmatmul.bf16.gmra.mxu0 %v8931
    %v8997 = vpop.f32.mrf.mxu0
    %v8998 = vadd.f32 0.0, %v8997
    %v8999 = vpop.f32.mrf.mxu0
    %9000 = vdwg.mxu0
    %v9001 = vadd.f32 %v8906, %v8993
    %v9002 = vadd.f32 %v8907, %v8995
    %v9003 = vadd.f32 %v8908, %v8998
    %v9004 = vld [vmem:[#allocation5 + $0xc] sm:$0x7]
    %s9005 = scalar_lea.vmem %s47, 384
    %v9006 = vld [vmem:[%s9005] sm:$0xf]
    %v9007 = vld [vmem:[%s9005 + $0x4] sm:$0xf]
    %v9008 = vld [vmem:[%s9005 + $0x8] sm:$0xf]
    %v9009 = vld [vmem:[%s9005 + $0xc] sm:$0xf]
    %v9010 = vld [vmem:[%s9005 + $0x10] sm:$0xf]
    %v9011 = vld [vmem:[%s9005 + $0x14] sm:$0xf]
    %v9012 = vld [vmem:[%s9005 + $0x18] sm:$0xf]
    %v9013 = vld [vmem:[%s9005 + $0x1c] sm:$0xf]
    %v9014 = vld [vmem:[%s9005 + $0x20] sm:$0xf]
    %v9015 = vld [vmem:[%s9005 + $0x24] sm:$0xf]
    %v9016 = vld [vmem:[%s9005 + $0x28] sm:$0xf]
    %v9017 = vld [vmem:[%s9005 + $0x2c] sm:$0xf]
    %v9018 = vld [vmem:[%s9005 + $0x30] sm:$0xf]
    %v9019 = vld [vmem:[%s9005 + $0x34] sm:$0xf]
    %v9020 = vld [vmem:[%s9005 + $0x38] sm:$0xf]
    %v9021 = vld [vmem:[%s9005 + $0x3c] sm:$0xf]
    %v9023 = vunpack.c.l.b16 %v9004
    %v9024 = vpack.c.b16 %v8722, %v8721
    %v9025 = vpack.c.b16 %v9023, %v9023
    %v9044 = vunpack.c.l.b16 %v9006
    %v9045 = vunpack.c.l.b16 %v9007
    %v9046 = vunpack.c.l.b16 %v9008
    %v9047 = vunpack.c.l.b16 %v9009
    %v9048 = vunpack.c.l.b16 %v9010
    %v9049 = vunpack.c.l.b16 %v9011
    %v9050 = vunpack.c.l.b16 %v9012
    %v9051 = vunpack.c.l.b16 %v9013
    %v9052 = vunpack.c.l.b16 %v9014
    %v9053 = vunpack.c.l.b16 %v9015
    %v9054 = vunpack.c.l.b16 %v9016
    %v9055 = vunpack.c.l.b16 %v9017
    %v9056 = vunpack.c.l.b16 %v9018
    %v9057 = vunpack.c.l.b16 %v9019
    %v9058 = vunpack.c.l.b16 %v9020
    %v9059 = vunpack.c.l.b16 %v9021
    %v9060 = vpack.c.b16 %v9045, %v9044
    %v9061 = vpack.c.b16 %v9047, %v9046
    %v9062 = vpack.c.b16 %v9049, %v9048
    %v9063 = vpack.c.b16 %v9051, %v9050
    %v9064 = vpack.c.b16 %v9053, %v9052
    %v9065 = vpack.c.b16 %v9055, %v9054
    %v9066 = vpack.c.b16 %v9057, %v9056
    %v9067 = vpack.c.b16 %v9059, %v9058
    %9076 = vmatpush.bf16.msra.mxu0 %v9067
    %9077 = vmatpush.bf16.msra.mxu0 %v9066
    %9078 = vmatpush.bf16.msra.mxu0 %v9065
    %9079 = vmatpush.bf16.msra.mxu0 %v9064
    %9080 = vmatpush.bf16.msra.mxu0 %v9063
    %9081 = vmatpush.bf16.msra.mxu0 %v9062
    %9082 = vmatpush.bf16.msra.mxu0 %v9061
    %9083 = vmatpush.bf16.msra.mxu0 %v9060
    %9084 = vmatmul.bf16.gmra.mxu0 %v9024
    %v9085 = vpop.f32.mrf.mxu0
    %v9086 = vadd.f32 0.0, %v9085
    %v9087 = vpop.f32.mrf.mxu0
    %v9088 = vadd.f32 0.0, %v9087
    %9089 = vmatmul.bf16.gmra.mxu0 %v9025
    %v9090 = vpop.f32.mrf.mxu0
    %v9091 = vadd.f32 0.0, %v9090
    %v9092 = vpop.f32.mrf.mxu0
    %9093 = vdwg.mxu0
    %v9094 = vadd.f32 %v9001, %v9086
    %v9095 = vadd.f32 %v9002, %v9088
    %v9096 = vadd.f32 %v9003, %v9091
    %v9097 = vld [vmem:[#allocation5 + $0xc] sm:$0xf]
    %s9098 = scalar_lea.vmem %s47, 448
    %v9099 = vld [vmem:[%s9098] sm:$0xf]
    %v9100 = vld [vmem:[%s9098 + $0x4] sm:$0xf]
    %v9101 = vld [vmem:[%s9098 + $0x8] sm:$0xf]
    %v9102 = vld [vmem:[%s9098 + $0xc] sm:$0xf]
    %v9103 = vld [vmem:[%s9098 + $0x10] sm:$0xf]
    %v9104 = vld [vmem:[%s9098 + $0x14] sm:$0xf]
    %v9105 = vld [vmem:[%s9098 + $0x18] sm:$0xf]
    %v9106 = vld [vmem:[%s9098 + $0x1c] sm:$0xf]
    %v9107 = vld [vmem:[%s9098 + $0x20] sm:$0xf]
    %v9108 = vld [vmem:[%s9098 + $0x24] sm:$0xf]
    %v9109 = vld [vmem:[%s9098 + $0x28] sm:$0xf]
    %v9110 = vld [vmem:[%s9098 + $0x2c] sm:$0xf]
    %v9111 = vld [vmem:[%s9098 + $0x30] sm:$0xf]
    %v9112 = vld [vmem:[%s9098 + $0x34] sm:$0xf]
    %v9113 = vld [vmem:[%s9098 + $0x38] sm:$0xf]
    %v9114 = vld [vmem:[%s9098 + $0x3c] sm:$0xf]
    %v9116 = vunpack.c.l.b16 %v9097
    %v9117 = vpack.c.b16 %v9116, %v9116
    %v9119 = vshrl.u32 %v9024, 16
    %v9121 = vshll.u32 %v9024, 16
    %v9123 = vrot.slane %v9121, 1
    %v9124 = vor.u32 %v9119, %v9123
    %v9126 = vshll.u32 %v9117, 16
    %v9128 = vrot.slane %v9126, 1
    %v9129 = vsel %vm1848, %v9124, %v9128
    %v9130 = vshrl.u32 %v9117, 16
    %v9132 = vor.u32 %v9130, %v9128
    %v9151 = vunpack.c.l.b16 %v9099
    %v9152 = vunpack.c.l.b16 %v9100
    %v9153 = vunpack.c.l.b16 %v9101
    %v9154 = vunpack.c.l.b16 %v9102
    %v9155 = vunpack.c.l.b16 %v9103
    %v9156 = vunpack.c.l.b16 %v9104
    %v9157 = vunpack.c.l.b16 %v9105
    %v9158 = vunpack.c.l.b16 %v9106
    %v9159 = vunpack.c.l.b16 %v9107
    %v9160 = vunpack.c.l.b16 %v9108
    %v9161 = vunpack.c.l.b16 %v9109
    %v9162 = vunpack.c.l.b16 %v9110
    %v9163 = vunpack.c.l.b16 %v9111
    %v9164 = vunpack.c.l.b16 %v9112
    %v9165 = vunpack.c.l.b16 %v9113
    %v9166 = vunpack.c.l.b16 %v9114
    %v9167 = vpack.c.b16 %v9152, %v9151
    %v9168 = vpack.c.b16 %v9154, %v9153
    %v9169 = vpack.c.b16 %v9156, %v9155
    %v9170 = vpack.c.b16 %v9158, %v9157
    %v9171 = vpack.c.b16 %v9160, %v9159
    %v9172 = vpack.c.b16 %v9162, %v9161
    %v9173 = vpack.c.b16 %v9164, %v9163
    %v9174 = vpack.c.b16 %v9166, %v9165
    %9183 = vmatpush.bf16.msra.mxu0 %v9174
    %9184 = vmatpush.bf16.msra.mxu0 %v9173
    %9185 = vmatpush.bf16.msra.mxu0 %v9172
    %9186 = vmatpush.bf16.msra.mxu0 %v9171
    %9187 = vmatpush.bf16.msra.mxu0 %v9170
    %9188 = vmatpush.bf16.msra.mxu0 %v9169
    %9189 = vmatpush.bf16.msra.mxu0 %v9168
    %9190 = vmatpush.bf16.msra.mxu0 %v9167
    %9191 = vmatmul.bf16.gmra.mxu0 %v9129
    %v9192 = vpop.f32.mrf.mxu0
    %v9193 = vadd.f32 0.0, %v9192
    %v9194 = vpop.f32.mrf.mxu0
    %v9195 = vadd.f32 0.0, %v9194
    %9196 = vmatmul.bf16.gmra.mxu0 %v9132
    %v9197 = vpop.f32.mrf.mxu0
    %v9198 = vadd.f32 0.0, %v9197
    %v9199 = vpop.f32.mrf.mxu0
    %9200 = vdwg.mxu0
    %v9201 = vadd.f32 %v9094, %v9193
    %v9202 = vadd.f32 %v9095, %v9195
    %v9203 = vadd.f32 %v9096, %v9198
    %v9204 = vld [vmem:[#allocation5 + $0x4] sm:$0xe]
    %s9205 = scalar_lea.vmem %s47, 512
    %v9206 = vld [vmem:[%s9205] sm:$0xf]
    %v9207 = vld [vmem:[%s9205 + $0x4] sm:$0xf]
    %v9208 = vld [vmem:[%s9205 + $0x8] sm:$0xf]
    %v9209 = vld [vmem:[%s9205 + $0xc] sm:$0xf]
    %v9210 = vld [vmem:[%s9205 + $0x10] sm:$0xf]
    %v9211 = vld [vmem:[%s9205 + $0x14] sm:$0xf]
    %v9212 = vld [vmem:[%s9205 + $0x18] sm:$0xf]
    %v9213 = vld [vmem:[%s9205 + $0x1c] sm:$0xf]
    %v9214 = vld [vmem:[%s9205 + $0x20] sm:$0xf]
    %v9215 = vld [vmem:[%s9205 + $0x24] sm:$0xf]
    %v9216 = vld [vmem:[%s9205 + $0x28] sm:$0xf]
    %v9217 = vld [vmem:[%s9205 + $0x2c] sm:$0xf]
    %v9218 = vld [vmem:[%s9205 + $0x30] sm:$0xf]
    %v9219 = vld [vmem:[%s9205 + $0x34] sm:$0xf]
    %v9220 = vld [vmem:[%s9205 + $0x38] sm:$0xf]
    %v9221 = vld [vmem:[%s9205 + $0x3c] sm:$0xf]
    %v9223 = vunpack.c.l.b16 %v9204
    %v9224 = vpack.c.b16 %v8722, %v9223
    %v9225 = vrot.slane %v9224, 1
    %v9226 = vrot.slane %v9117, 1
    %v9227 = vsel %vm2024, %v9225, %v9226
    %v9246 = vunpack.c.l.b16 %v9206
    %v9247 = vunpack.c.l.b16 %v9207
    %v9248 = vunpack.c.l.b16 %v9208
    %v9249 = vunpack.c.l.b16 %v9209
    %v9250 = vunpack.c.l.b16 %v9210
    %v9251 = vunpack.c.l.b16 %v9211
    %v9252 = vunpack.c.l.b16 %v9212
    %v9253 = vunpack.c.l.b16 %v9213
    %v9254 = vunpack.c.l.b16 %v9214
    %v9255 = vunpack.c.l.b16 %v9215
    %v9256 = vunpack.c.l.b16 %v9216
    %v9257 = vunpack.c.l.b16 %v9217
    %v9258 = vunpack.c.l.b16 %v9218
    %v9259 = vunpack.c.l.b16 %v9219
    %v9260 = vunpack.c.l.b16 %v9220
    %v9261 = vunpack.c.l.b16 %v9221
    %v9262 = vpack.c.b16 %v9247, %v9246
    %v9263 = vpack.c.b16 %v9249, %v9248
    %v9264 = vpack.c.b16 %v9251, %v9250
    %v9265 = vpack.c.b16 %v9253, %v9252
    %v9266 = vpack.c.b16 %v9255, %v9254
    %v9267 = vpack.c.b16 %v9257, %v9256
    %v9268 = vpack.c.b16 %v9259, %v9258
    %v9269 = vpack.c.b16 %v9261, %v9260
    %9278 = vmatpush.bf16.msra.mxu0 %v9269
    %9279 = vmatpush.bf16.msra.mxu0 %v9268
    %9280 = vmatpush.bf16.msra.mxu0 %v9267
    %9281 = vmatpush.bf16.msra.mxu0 %v9266
    %9282 = vmatpush.bf16.msra.mxu0 %v9265
    %9283 = vmatpush.bf16.msra.mxu0 %v9264
    %9284 = vmatpush.bf16.msra.mxu0 %v9263
    %9285 = vmatpush.bf16.msra.mxu0 %v9262
    %9286 = vmatmul.bf16.gmra.mxu0 %v9227
    %v9287 = vpop.f32.mrf.mxu0
    %v9288 = vadd.f32 0.0, %v9287
    %v9289 = vpop.f32.mrf.mxu0
    %v9290 = vadd.f32 0.0, %v9289
    %9291 = vmatmul.bf16.gmra.mxu0 %v9226
    %v9292 = vpop.f32.mrf.mxu0
    %v9293 = vadd.f32 0.0, %v9292
    %v9294 = vpop.f32.mrf.mxu0
    %9295 = vdwg.mxu0
    %v9296 = vadd.f32 %v9201, %v9288
    %v9297 = vadd.f32 %v9202, %v9290
    %v9298 = vadd.f32 %v9203, %v9293
    %v9299 = vld [vmem:[%s49] sm:$0x1]
    %v9301 = vperm.slane %v9299, 0
    %v9303 = vadd.f32 %v9296, %v9301
    %v9304 = vadd.f32 %v9297, %v9301
    %v9305 = vadd.f32 %v9298, %v9301
    %v9306 = vmax.f32 %v9303, 0.0
    %v9307 = vmax.f32 %v9304, 0.0
    %v9308 = vmax.f32 %v9305, 0.0
    %v9309 = vld [vmem:[%s9] sm:$0xf]
    %v9310 = vld [vmem:[%s9 + $0x4] sm:$0xf]
    %v9311 = vld [vmem:[%s9 + $0x8] sm:$0xf]
    %v9312 = vld [vmem:[%s9 + $0xc] sm:$0xf]
    %v9313 = vpack.c.bf16 %v9307, %v9306
    %v9314 = vpack.c.bf16 %v9308, %v9308
    %v9319 = vunpack.c.l.b16 %v9309
    %v9320 = vunpack.c.l.b16 %v9310
    %v9321 = vunpack.c.l.b16 %v9311
    %v9322 = vunpack.c.l.b16 %v9312
    %v9323 = vpack.c.b16 %v9320, %v9319
    %v9324 = vpack.c.b16 %v9322, %v9321
    %v9326 = vsel %vm8364, %v9323, 0
    %v9329 = vsel %vm8364, %v9324, 0
    %v9332 = vsel %vm1415, %v9314, 0
    %9334 = vmatpush.bf16.msra.mxu0 0
    %9335 = vmatpush.bf16.msra.mxu0 0
    %9336 = vmatpush.bf16.msra.mxu0 0
    %9337 = vmatpush.bf16.msra.mxu0 0
    %9338 = vmatpush.bf16.msra.mxu0 0
    %9339 = vmatpush.bf16.msra.mxu0 0
    %9340 = vmatpush.bf16.msra.mxu0 %v9332
    %9341 = vmatpush.bf16.msra.mxu0 %v9313
    %9342 = vmatmul.bf16.gmra.mxu0 %v9326
    %v9343 = vpop.f32.mrf.mxu0
    %v9344 = vadd.f32 0.0, %v9343
    %v9345 = vpop.f32.mrf.mxu0
    %v9346 = vadd.f32 0.0, %v9345
    %9347 = vmatmul.bf16.gmra.mxu0 %v9329
    %v9348 = vpop.f32.mrf.mxu0
    %v9349 = vadd.f32 0.0, %v9348
    %v9350 = vpop.f32.mrf.mxu0
    %v9351 = vadd.f32 0.0, %v9350
    %9352 = vdwg.mxu0
    %v9353 = vpack.c.bf16 %v9344, %v9344
    %v9354 = vpack.c.bf16 %v9346, %v9346
    %v9355 = vpack.c.bf16 %v9349, %v9349
    %v9356 = vpack.c.bf16 %v9351, %v9351
    %9357 = vst [vmem:[#allocation6] sm:$0xf] %v9353
    %9358 = vst [vmem:[#allocation6 + $0x4] sm:$0xf] %v9354
    %9359 = vst [vmem:[#allocation6 + $0x8] sm:$0xf] %v9355
    %9360 = vst [vmem:[#allocation6 + $0xc] sm:$0xf] %v9356
    %v9361 = vld [vmem:[#allocation6] sm:$0xf]
    %v9362 = vld [vmem:[#allocation6 + $0x4] sm:$0xf]
    %v9363 = vld [vmem:[#allocation6 + $0x8] sm:$0x7]
    %v9364 = vld [vmem:[%s51] sm:$0xf]
    %v9365 = vld [vmem:[%s51 + $0x4] sm:$0xf]
    %v9366 = vld [vmem:[%s51 + $0x8] sm:$0xf]
    %v9367 = vld [vmem:[%s51 + $0xc] sm:$0xf]
    %v9368 = vld [vmem:[%s51 + $0x10] sm:$0xf]
    %v9369 = vld [vmem:[%s51 + $0x14] sm:$0xf]
    %v9370 = vld [vmem:[%s51 + $0x18] sm:$0xf]
    %v9371 = vld [vmem:[%s51 + $0x1c] sm:$0xf]
    %v9372 = vld [vmem:[%s51 + $0x20] sm:$0xf]
    %v9373 = vld [vmem:[%s51 + $0x24] sm:$0xf]
    %v9374 = vld [vmem:[%s51 + $0x28] sm:$0xf]
    %v9375 = vld [vmem:[%s51 + $0x2c] sm:$0xf]
    %v9376 = vld [vmem:[%s51 + $0x30] sm:$0xf]
    %v9377 = vld [vmem:[%s51 + $0x34] sm:$0xf]
    %v9378 = vld [vmem:[%s51 + $0x38] sm:$0xf]
    %v9379 = vld [vmem:[%s51 + $0x3c] sm:$0xf]
    %v9380 = vld [vmem:[#allocation6 + $0x8] sm:$0xf]
    %s9381 = scalar_lea.vmem %s51, 64
    %v9382 = vld [vmem:[%s9381] sm:$0xf]
    %v9383 = vld [vmem:[%s9381 + $0x4] sm:$0xf]
    %v9384 = vld [vmem:[%s9381 + $0x8] sm:$0xf]
    %v9385 = vld [vmem:[%s9381 + $0xc] sm:$0xf]
    %v9386 = vld [vmem:[%s9381 + $0x10] sm:$0xf]
    %v9387 = vld [vmem:[%s9381 + $0x14] sm:$0xf]
    %v9388 = vld [vmem:[%s9381 + $0x18] sm:$0xf]
    %v9389 = vld [vmem:[%s9381 + $0x1c] sm:$0xf]
    %v9390 = vld [vmem:[%s9381 + $0x20] sm:$0xf]
    %v9391 = vld [vmem:[%s9381 + $0x24] sm:$0xf]
    %v9392 = vld [vmem:[%s9381 + $0x28] sm:$0xf]
    %v9393 = vld [vmem:[%s9381 + $0x2c] sm:$0xf]
    %v9394 = vld [vmem:[%s9381 + $0x30] sm:$0xf]
    %v9395 = vld [vmem:[%s9381 + $0x34] sm:$0xf]
    %v9396 = vld [vmem:[%s9381 + $0x38] sm:$0xf]
    %v9397 = vld [vmem:[%s9381 + $0x3c] sm:$0xf]
    %v9401 = vunpack.c.l.b16 %v9361
    %v9402 = vunpack.c.l.b16 %v9362
    %v9403 = vunpack.c.l.b16 %v9380
    %v9404 = vpack.c.b16 %v9402, %v9401
    %v9405 = vpack.c.b16 %v9403, %v9403
    %v9407 = vshrl.u32 %v9404, 16
    %v9409 = vshll.u32 %v9404, 16
    %v9411 = vrot.slane %v9409, 1
    %v9412 = vor.u32 %v9407, %v9411
    %v9414 = vshll.u32 %v9405, 16
    %v9416 = vrot.slane %v9414, 1
    %v9417 = vsel %vm1848, %v9412, %v9416
    %v9418 = vshrl.u32 %v9405, 16
    %v9420 = vor.u32 %v9418, %v9416
    %v9439 = vunpack.c.l.b16 %v9382
    %v9440 = vunpack.c.l.b16 %v9383
    %v9441 = vunpack.c.l.b16 %v9384
    %v9442 = vunpack.c.l.b16 %v9385
    %v9443 = vunpack.c.l.b16 %v9386
    %v9444 = vunpack.c.l.b16 %v9387
    %v9445 = vunpack.c.l.b16 %v9388
    %v9446 = vunpack.c.l.b16 %v9389
    %v9447 = vunpack.c.l.b16 %v9390
    %v9448 = vunpack.c.l.b16 %v9391
    %v9449 = vunpack.c.l.b16 %v9392
    %v9450 = vunpack.c.l.b16 %v9393
    %v9451 = vunpack.c.l.b16 %v9394
    %v9452 = vunpack.c.l.b16 %v9395
    %v9453 = vunpack.c.l.b16 %v9396
    %v9454 = vunpack.c.l.b16 %v9397
    %v9455 = vpack.c.b16 %v9440, %v9439
    %v9456 = vpack.c.b16 %v9442, %v9441
    %v9457 = vpack.c.b16 %v9444, %v9443
    %v9458 = vpack.c.b16 %v9446, %v9445
    %v9459 = vpack.c.b16 %v9448, %v9447
    %v9460 = vpack.c.b16 %v9450, %v9449
    %v9461 = vpack.c.b16 %v9452, %v9451
    %v9462 = vpack.c.b16 %v9454, %v9453
    %9471 = vmatpush.bf16.msra.mxu0 %v9462
    %9472 = vmatpush.bf16.msra.mxu0 %v9461
    %9473 = vmatpush.bf16.msra.mxu0 %v9460
    %9474 = vmatpush.bf16.msra.mxu0 %v9459
    %9475 = vmatpush.bf16.msra.mxu0 %v9458
    %9476 = vmatpush.bf16.msra.mxu0 %v9457
    %9477 = vmatpush.bf16.msra.mxu0 %v9456
    %9478 = vmatpush.bf16.msra.mxu0 %v9455
    %9479 = vmatmul.bf16.gmra.mxu0 %v9417
    %v9480 = vpop.f32.mrf.mxu0
    %v9481 = vadd.f32 0.0, %v9480
    %v9482 = vpop.f32.mrf.mxu0
    %v9483 = vadd.f32 0.0, %v9482
    %9484 = vmatmul.bf16.gmra.mxu0 %v9420
    %v9485 = vpop.f32.mrf.mxu0
    %v9486 = vadd.f32 0.0, %v9485
    %v9487 = vpop.f32.mrf.mxu0
    %9488 = vdwg.mxu0
    %v9490 = vunpack.c.l.b16 %v9363
    %v9491 = vpack.c.b16 %v9490, %v9490
    %v9510 = vunpack.c.l.b16 %v9364
    %v9511 = vunpack.c.l.b16 %v9365
    %v9512 = vunpack.c.l.b16 %v9366
    %v9513 = vunpack.c.l.b16 %v9367
    %v9514 = vunpack.c.l.b16 %v9368
    %v9515 = vunpack.c.l.b16 %v9369
    %v9516 = vunpack.c.l.b16 %v9370
    %v9517 = vunpack.c.l.b16 %v9371
    %v9518 = vunpack.c.l.b16 %v9372
    %v9519 = vunpack.c.l.b16 %v9373
    %v9520 = vunpack.c.l.b16 %v9374
    %v9521 = vunpack.c.l.b16 %v9375
    %v9522 = vunpack.c.l.b16 %v9376
    %v9523 = vunpack.c.l.b16 %v9377
    %v9524 = vunpack.c.l.b16 %v9378
    %v9525 = vunpack.c.l.b16 %v9379
    %v9526 = vpack.c.b16 %v9511, %v9510
    %v9527 = vpack.c.b16 %v9513, %v9512
    %v9528 = vpack.c.b16 %v9515, %v9514
    %v9529 = vpack.c.b16 %v9517, %v9516
    %v9530 = vpack.c.b16 %v9519, %v9518
    %v9531 = vpack.c.b16 %v9521, %v9520
    %v9532 = vpack.c.b16 %v9523, %v9522
    %v9533 = vpack.c.b16 %v9525, %v9524
    %9542 = vmatpush.bf16.msra.mxu0 %v9533
    %9543 = vmatpush.bf16.msra.mxu0 %v9532
    %9544 = vmatpush.bf16.msra.mxu0 %v9531
    %9545 = vmatpush.bf16.msra.mxu0 %v9530
    %9546 = vmatpush.bf16.msra.mxu0 %v9529
    %9547 = vmatpush.bf16.msra.mxu0 %v9528
    %9548 = vmatpush.bf16.msra.mxu0 %v9527
    %9549 = vmatpush.bf16.msra.mxu0 %v9526
    %9550 = vmatmul.bf16.gmra.mxu0 %v9404
    %v9551 = vpop.f32.mrf.mxu0
    %v9552 = vadd.f32 %v9481, %v9551
    %v9553 = vpop.f32.mrf.mxu0
    %v9554 = vadd.f32 %v9483, %v9553
    %9555 = vmatmul.bf16.gmra.mxu0 %v9491
    %v9556 = vpop.f32.mrf.mxu0
    %v9557 = vadd.f32 %v9486, %v9556
    %v9558 = vpop.f32.mrf.mxu0
    %9559 = vdwg.mxu0
    %v9560 = vld [vmem:[#allocation6] sm:$0xe]
    %s9561 = scalar_lea.vmem %s51, 128
    %v9562 = vld [vmem:[%s9561] sm:$0xf]
    %v9563 = vld [vmem:[%s9561 + $0x4] sm:$0xf]
    %v9564 = vld [vmem:[%s9561 + $0x8] sm:$0xf]
    %v9565 = vld [vmem:[%s9561 + $0xc] sm:$0xf]
    %v9566 = vld [vmem:[%s9561 + $0x10] sm:$0xf]
    %v9567 = vld [vmem:[%s9561 + $0x14] sm:$0xf]
    %v9568 = vld [vmem:[%s9561 + $0x18] sm:$0xf]
    %v9569 = vld [vmem:[%s9561 + $0x1c] sm:$0xf]
    %v9570 = vld [vmem:[%s9561 + $0x20] sm:$0xf]
    %v9571 = vld [vmem:[%s9561 + $0x24] sm:$0xf]
    %v9572 = vld [vmem:[%s9561 + $0x28] sm:$0xf]
    %v9573 = vld [vmem:[%s9561 + $0x2c] sm:$0xf]
    %v9574 = vld [vmem:[%s9561 + $0x30] sm:$0xf]
    %v9575 = vld [vmem:[%s9561 + $0x34] sm:$0xf]
    %v9576 = vld [vmem:[%s9561 + $0x38] sm:$0xf]
    %v9577 = vld [vmem:[%s9561 + $0x3c] sm:$0xf]
    %v9579 = vunpack.c.l.b16 %v9560
    %v9580 = vpack.c.b16 %v9402, %v9579
    %v9581 = vrot.slane %v9580, 1
    %v9582 = vrot.slane %v9405, 1
    %v9583 = vsel %vm2024, %v9581, %v9582
    %v9602 = vunpack.c.l.b16 %v9562
    %v9603 = vunpack.c.l.b16 %v9563
    %v9604 = vunpack.c.l.b16 %v9564
    %v9605 = vunpack.c.l.b16 %v9565
    %v9606 = vunpack.c.l.b16 %v9566
    %v9607 = vunpack.c.l.b16 %v9567
    %v9608 = vunpack.c.l.b16 %v9568
    %v9609 = vunpack.c.l.b16 %v9569
    %v9610 = vunpack.c.l.b16 %v9570
    %v9611 = vunpack.c.l.b16 %v9571
    %v9612 = vunpack.c.l.b16 %v9572
    %v9613 = vunpack.c.l.b16 %v9573
    %v9614 = vunpack.c.l.b16 %v9574
    %v9615 = vunpack.c.l.b16 %v9575
    %v9616 = vunpack.c.l.b16 %v9576
    %v9617 = vunpack.c.l.b16 %v9577
    %v9618 = vpack.c.b16 %v9603, %v9602
    %v9619 = vpack.c.b16 %v9605, %v9604
    %v9620 = vpack.c.b16 %v9607, %v9606
    %v9621 = vpack.c.b16 %v9609, %v9608
    %v9622 = vpack.c.b16 %v9611, %v9610
    %v9623 = vpack.c.b16 %v9613, %v9612
    %v9624 = vpack.c.b16 %v9615, %v9614
    %v9625 = vpack.c.b16 %v9617, %v9616
    %9634 = vmatpush.bf16.msra.mxu0 %v9625
    %9635 = vmatpush.bf16.msra.mxu0 %v9624
    %9636 = vmatpush.bf16.msra.mxu0 %v9623
    %9637 = vmatpush.bf16.msra.mxu0 %v9622
    %9638 = vmatpush.bf16.msra.mxu0 %v9621
    %9639 = vmatpush.bf16.msra.mxu0 %v9620
    %9640 = vmatpush.bf16.msra.mxu0 %v9619
    %9641 = vmatpush.bf16.msra.mxu0 %v9618
    %9642 = vmatmul.bf16.gmra.mxu0 %v9583
    %v9643 = vpop.f32.mrf.mxu0
    %v9644 = vadd.f32 0.0, %v9643
    %v9645 = vpop.f32.mrf.mxu0
    %v9646 = vadd.f32 0.0, %v9645
    %9647 = vmatmul.bf16.gmra.mxu0 %v9582
    %v9648 = vpop.f32.mrf.mxu0
    %v9649 = vadd.f32 0.0, %v9648
    %v9650 = vpop.f32.mrf.mxu0
    %9651 = vdwg.mxu0
    %v9652 = vadd.f32 %v9552, %v9644
    %v9653 = vadd.f32 %v9554, %v9646
    %v9654 = vadd.f32 %v9557, %v9649
    %v9655 = vld [vmem:[#allocation6] sm:$0xc]
    %v9656 = vld [vmem:[#allocation6 + $0x4] sm:$0xf]
    %v9657 = vld [vmem:[#allocation6 + $0x8] sm:$0xf]
    %v9658 = vld [vmem:[#allocation6 + $0xc] sm:$0x1]
    %s9659 = scalar_lea.vmem %s51, 192
    %v9660 = vld [vmem:[%s9659] sm:$0xf]
    %v9661 = vld [vmem:[%s9659 + $0x4] sm:$0xf]
    %v9662 = vld [vmem:[%s9659 + $0x8] sm:$0xf]
    %v9663 = vld [vmem:[%s9659 + $0xc] sm:$0xf]
    %v9664 = vld [vmem:[%s9659 + $0x10] sm:$0xf]
    %v9665 = vld [vmem:[%s9659 + $0x14] sm:$0xf]
    %v9666 = vld [vmem:[%s9659 + $0x18] sm:$0xf]
    %v9667 = vld [vmem:[%s9659 + $0x1c] sm:$0xf]
    %v9668 = vld [vmem:[%s9659 + $0x20] sm:$0xf]
    %v9669 = vld [vmem:[%s9659 + $0x24] sm:$0xf]
    %v9670 = vld [vmem:[%s9659 + $0x28] sm:$0xf]
    %v9671 = vld [vmem:[%s9659 + $0x2c] sm:$0xf]
    %v9672 = vld [vmem:[%s9659 + $0x30] sm:$0xf]
    %v9673 = vld [vmem:[%s9659 + $0x34] sm:$0xf]
    %v9674 = vld [vmem:[%s9659 + $0x38] sm:$0xf]
    %v9675 = vld [vmem:[%s9659 + $0x3c] sm:$0xf]
    %v9680 = vunpack.c.l.b16 %v9655
    %v9681 = vunpack.c.l.b16 %v9656
    %v9682 = vunpack.c.l.b16 %v9657
    %v9683 = vunpack.c.l.b16 %v9658
    %v9684 = vpack.c.b16 %v9681, %v9680
    %v9685 = vpack.c.b16 %v9683, %v9682
    %v9686 = vrot.slane %v9684, 2
    %v9687 = vrot.slane %v9685, 2
    %v9688 = vsel %vm2461, %v9686, %v9687
    %v9707 = vunpack.c.l.b16 %v9660
    %v9708 = vunpack.c.l.b16 %v9661
    %v9709 = vunpack.c.l.b16 %v9662
    %v9710 = vunpack.c.l.b16 %v9663
    %v9711 = vunpack.c.l.b16 %v9664
    %v9712 = vunpack.c.l.b16 %v9665
    %v9713 = vunpack.c.l.b16 %v9666
    %v9714 = vunpack.c.l.b16 %v9667
    %v9715 = vunpack.c.l.b16 %v9668
    %v9716 = vunpack.c.l.b16 %v9669
    %v9717 = vunpack.c.l.b16 %v9670
    %v9718 = vunpack.c.l.b16 %v9671
    %v9719 = vunpack.c.l.b16 %v9672
    %v9720 = vunpack.c.l.b16 %v9673
    %v9721 = vunpack.c.l.b16 %v9674
    %v9722 = vunpack.c.l.b16 %v9675
    %v9723 = vpack.c.b16 %v9708, %v9707
    %v9724 = vpack.c.b16 %v9710, %v9709
    %v9725 = vpack.c.b16 %v9712, %v9711
    %v9726 = vpack.c.b16 %v9714, %v9713
    %v9727 = vpack.c.b16 %v9716, %v9715
    %v9728 = vpack.c.b16 %v9718, %v9717
    %v9729 = vpack.c.b16 %v9720, %v9719
    %v9730 = vpack.c.b16 %v9722, %v9721
    %9739 = vmatpush.bf16.msra.mxu0 %v9730
    %9740 = vmatpush.bf16.msra.mxu0 %v9729
    %9741 = vmatpush.bf16.msra.mxu0 %v9728
    %9742 = vmatpush.bf16.msra.mxu0 %v9727
    %9743 = vmatpush.bf16.msra.mxu0 %v9726
    %9744 = vmatpush.bf16.msra.mxu0 %v9725
    %9745 = vmatpush.bf16.msra.mxu0 %v9724
    %9746 = vmatpush.bf16.msra.mxu0 %v9723
    %9747 = vmatmul.bf16.gmra.mxu0 %v9688
    %v9748 = vpop.f32.mrf.mxu0
    %v9749 = vadd.f32 0.0, %v9748
    %v9750 = vpop.f32.mrf.mxu0
    %v9751 = vadd.f32 0.0, %v9750
    %9752 = vmatmul.bf16.gmra.mxu0 %v9687
    %v9753 = vpop.f32.mrf.mxu0
    %v9754 = vadd.f32 0.0, %v9753
    %v9755 = vpop.f32.mrf.mxu0
    %9756 = vdwg.mxu0
    %v9757 = vadd.f32 %v9652, %v9749
    %v9758 = vadd.f32 %v9653, %v9751
    %v9759 = vadd.f32 %v9654, %v9754
    %v9760 = vld [vmem:[#allocation6 + $0xc] sm:$0x3]
    %s9761 = scalar_lea.vmem %s51, 256
    %v9762 = vld [vmem:[%s9761] sm:$0xf]
    %v9763 = vld [vmem:[%s9761 + $0x4] sm:$0xf]
    %v9764 = vld [vmem:[%s9761 + $0x8] sm:$0xf]
    %v9765 = vld [vmem:[%s9761 + $0xc] sm:$0xf]
    %v9766 = vld [vmem:[%s9761 + $0x10] sm:$0xf]
    %v9767 = vld [vmem:[%s9761 + $0x14] sm:$0xf]
    %v9768 = vld [vmem:[%s9761 + $0x18] sm:$0xf]
    %v9769 = vld [vmem:[%s9761 + $0x1c] sm:$0xf]
    %v9770 = vld [vmem:[%s9761 + $0x20] sm:$0xf]
    %v9771 = vld [vmem:[%s9761 + $0x24] sm:$0xf]
    %v9772 = vld [vmem:[%s9761 + $0x28] sm:$0xf]
    %v9773 = vld [vmem:[%s9761 + $0x2c] sm:$0xf]
    %v9774 = vld [vmem:[%s9761 + $0x30] sm:$0xf]
    %v9775 = vld [vmem:[%s9761 + $0x34] sm:$0xf]
    %v9776 = vld [vmem:[%s9761 + $0x38] sm:$0xf]
    %v9777 = vld [vmem:[%s9761 + $0x3c] sm:$0xf]
    %v9779 = vunpack.c.l.b16 %v9760
    %v9780 = vpack.c.b16 %v9779, %v9682
    %v9782 = vshrl.u32 %v9684, 16
    %v9784 = vrot.slane %v9782, 2
    %v9785 = vshll.u32 %v9684, 16
    %v9787 = vrot.slane %v9785, 3
    %v9788 = vor.u32 %v9784, %v9787
    %v9790 = vshrl.u32 %v9780, 16
    %v9792 = vrot.slane %v9790, 2
    %v9793 = vshll.u32 %v9780, 16
    %v9795 = vrot.slane %v9793, 3
    %v9796 = vor.u32 %v9792, %v9795
    %v9797 = vsel %vm2555, %v9788, %v9796
    %v9816 = vunpack.c.l.b16 %v9762
    %v9817 = vunpack.c.l.b16 %v9763
    %v9818 = vunpack.c.l.b16 %v9764
    %v9819 = vunpack.c.l.b16 %v9765
    %v9820 = vunpack.c.l.b16 %v9766
    %v9821 = vunpack.c.l.b16 %v9767
    %v9822 = vunpack.c.l.b16 %v9768
    %v9823 = vunpack.c.l.b16 %v9769
    %v9824 = vunpack.c.l.b16 %v9770
    %v9825 = vunpack.c.l.b16 %v9771
    %v9826 = vunpack.c.l.b16 %v9772
    %v9827 = vunpack.c.l.b16 %v9773
    %v9828 = vunpack.c.l.b16 %v9774
    %v9829 = vunpack.c.l.b16 %v9775
    %v9830 = vunpack.c.l.b16 %v9776
    %v9831 = vunpack.c.l.b16 %v9777
    %v9832 = vpack.c.b16 %v9817, %v9816
    %v9833 = vpack.c.b16 %v9819, %v9818
    %v9834 = vpack.c.b16 %v9821, %v9820
    %v9835 = vpack.c.b16 %v9823, %v9822
    %v9836 = vpack.c.b16 %v9825, %v9824
    %v9837 = vpack.c.b16 %v9827, %v9826
    %v9838 = vpack.c.b16 %v9829, %v9828
    %v9839 = vpack.c.b16 %v9831, %v9830
    %9848 = vmatpush.bf16.msra.mxu0 %v9839
    %9849 = vmatpush.bf16.msra.mxu0 %v9838
    %9850 = vmatpush.bf16.msra.mxu0 %v9837
    %9851 = vmatpush.bf16.msra.mxu0 %v9836
    %9852 = vmatpush.bf16.msra.mxu0 %v9835
    %9853 = vmatpush.bf16.msra.mxu0 %v9834
    %9854 = vmatpush.bf16.msra.mxu0 %v9833
    %9855 = vmatpush.bf16.msra.mxu0 %v9832
    %9856 = vmatmul.bf16.gmra.mxu0 %v9797
    %v9857 = vpop.f32.mrf.mxu0
    %v9858 = vadd.f32 0.0, %v9857
    %v9859 = vpop.f32.mrf.mxu0
    %v9860 = vadd.f32 0.0, %v9859
    %9861 = vmatmul.bf16.gmra.mxu0 %v9796
    %v9862 = vpop.f32.mrf.mxu0
    %v9863 = vadd.f32 0.0, %v9862
    %v9864 = vpop.f32.mrf.mxu0
    %9865 = vdwg.mxu0
    %v9866 = vadd.f32 %v9757, %v9858
    %v9867 = vadd.f32 %v9758, %v9860
    %v9868 = vadd.f32 %v9759, %v9863
    %v9869 = vld [vmem:[#allocation6] sm:$0x8]
    %s9870 = scalar_lea.vmem %s51, 320
    %v9871 = vld [vmem:[%s9870] sm:$0xf]
    %v9872 = vld [vmem:[%s9870 + $0x4] sm:$0xf]
    %v9873 = vld [vmem:[%s9870 + $0x8] sm:$0xf]
    %v9874 = vld [vmem:[%s9870 + $0xc] sm:$0xf]
    %v9875 = vld [vmem:[%s9870 + $0x10] sm:$0xf]
    %v9876 = vld [vmem:[%s9870 + $0x14] sm:$0xf]
    %v9877 = vld [vmem:[%s9870 + $0x18] sm:$0xf]
    %v9878 = vld [vmem:[%s9870 + $0x1c] sm:$0xf]
    %v9879 = vld [vmem:[%s9870 + $0x20] sm:$0xf]
    %v9880 = vld [vmem:[%s9870 + $0x24] sm:$0xf]
    %v9881 = vld [vmem:[%s9870 + $0x28] sm:$0xf]
    %v9882 = vld [vmem:[%s9870 + $0x2c] sm:$0xf]
    %v9883 = vld [vmem:[%s9870 + $0x30] sm:$0xf]
    %v9884 = vld [vmem:[%s9870 + $0x34] sm:$0xf]
    %v9885 = vld [vmem:[%s9870 + $0x38] sm:$0xf]
    %v9886 = vld [vmem:[%s9870 + $0x3c] sm:$0xf]
    %v9888 = vunpack.c.l.b16 %v9869
    %v9889 = vpack.c.b16 %v9681, %v9888
    %v9890 = vrot.slane %v9889, 3
    %v9891 = vrot.slane %v9780, 3
    %v9892 = vsel %vm2122, %v9890, %v9891
    %v9911 = vunpack.c.l.b16 %v9871
    %v9912 = vunpack.c.l.b16 %v9872
    %v9913 = vunpack.c.l.b16 %v9873
    %v9914 = vunpack.c.l.b16 %v9874
    %v9915 = vunpack.c.l.b16 %v9875
    %v9916 = vunpack.c.l.b16 %v9876
    %v9917 = vunpack.c.l.b16 %v9877
    %v9918 = vunpack.c.l.b16 %v9878
    %v9919 = vunpack.c.l.b16 %v9879
    %v9920 = vunpack.c.l.b16 %v9880
    %v9921 = vunpack.c.l.b16 %v9881
    %v9922 = vunpack.c.l.b16 %v9882
    %v9923 = vunpack.c.l.b16 %v9883
    %v9924 = vunpack.c.l.b16 %v9884
    %v9925 = vunpack.c.l.b16 %v9885
    %v9926 = vunpack.c.l.b16 %v9886
    %v9927 = vpack.c.b16 %v9912, %v9911
    %v9928 = vpack.c.b16 %v9914, %v9913
    %v9929 = vpack.c.b16 %v9916, %v9915
    %v9930 = vpack.c.b16 %v9918, %v9917
    %v9931 = vpack.c.b16 %v9920, %v9919
    %v9932 = vpack.c.b16 %v9922, %v9921
    %v9933 = vpack.c.b16 %v9924, %v9923
    %v9934 = vpack.c.b16 %v9926, %v9925
    %9943 = vmatpush.bf16.msra.mxu0 %v9934
    %9944 = vmatpush.bf16.msra.mxu0 %v9933
    %9945 = vmatpush.bf16.msra.mxu0 %v9932
    %9946 = vmatpush.bf16.msra.mxu0 %v9931
    %9947 = vmatpush.bf16.msra.mxu0 %v9930
    %9948 = vmatpush.bf16.msra.mxu0 %v9929
    %9949 = vmatpush.bf16.msra.mxu0 %v9928
    %9950 = vmatpush.bf16.msra.mxu0 %v9927
    %9951 = vmatmul.bf16.gmra.mxu0 %v9892
    %v9952 = vpop.f32.mrf.mxu0
    %v9953 = vadd.f32 0.0, %v9952
    %v9954 = vpop.f32.mrf.mxu0
    %v9955 = vadd.f32 0.0, %v9954
    %9956 = vmatmul.bf16.gmra.mxu0 %v9891
    %v9957 = vpop.f32.mrf.mxu0
    %v9958 = vadd.f32 0.0, %v9957
    %v9959 = vpop.f32.mrf.mxu0
    %9960 = vdwg.mxu0
    %v9961 = vadd.f32 %v9866, %v9953
    %v9962 = vadd.f32 %v9867, %v9955
    %v9963 = vadd.f32 %v9868, %v9958
    %v9964 = vld [vmem:[#allocation6 + $0xc] sm:$0x7]
    %s9965 = scalar_lea.vmem %s51, 384
    %v9966 = vld [vmem:[%s9965] sm:$0xf]
    %v9967 = vld [vmem:[%s9965 + $0x4] sm:$0xf]
    %v9968 = vld [vmem:[%s9965 + $0x8] sm:$0xf]
    %v9969 = vld [vmem:[%s9965 + $0xc] sm:$0xf]
    %v9970 = vld [vmem:[%s9965 + $0x10] sm:$0xf]
    %v9971 = vld [vmem:[%s9965 + $0x14] sm:$0xf]
    %v9972 = vld [vmem:[%s9965 + $0x18] sm:$0xf]
    %v9973 = vld [vmem:[%s9965 + $0x1c] sm:$0xf]
    %v9974 = vld [vmem:[%s9965 + $0x20] sm:$0xf]
    %v9975 = vld [vmem:[%s9965 + $0x24] sm:$0xf]
    %v9976 = vld [vmem:[%s9965 + $0x28] sm:$0xf]
    %v9977 = vld [vmem:[%s9965 + $0x2c] sm:$0xf]
    %v9978 = vld [vmem:[%s9965 + $0x30] sm:$0xf]
    %v9979 = vld [vmem:[%s9965 + $0x34] sm:$0xf]
    %v9980 = vld [vmem:[%s9965 + $0x38] sm:$0xf]
    %v9981 = vld [vmem:[%s9965 + $0x3c] sm:$0xf]
    %v9983 = vunpack.c.l.b16 %v9964
    %v9984 = vpack.c.b16 %v9682, %v9681
    %v9985 = vpack.c.b16 %v9983, %v9983
    %v10004 = vunpack.c.l.b16 %v9966
    %v10005 = vunpack.c.l.b16 %v9967
    %v10006 = vunpack.c.l.b16 %v9968
    %v10007 = vunpack.c.l.b16 %v9969
    %v10008 = vunpack.c.l.b16 %v9970
    %v10009 = vunpack.c.l.b16 %v9971
    %v10010 = vunpack.c.l.b16 %v9972
    %v10011 = vunpack.c.l.b16 %v9973
    %v10012 = vunpack.c.l.b16 %v9974
    %v10013 = vunpack.c.l.b16 %v9975
    %v10014 = vunpack.c.l.b16 %v9976
    %v10015 = vunpack.c.l.b16 %v9977
    %v10016 = vunpack.c.l.b16 %v9978
    %v10017 = vunpack.c.l.b16 %v9979
    %v10018 = vunpack.c.l.b16 %v9980
    %v10019 = vunpack.c.l.b16 %v9981
    %v10020 = vpack.c.b16 %v10005, %v10004
    %v10021 = vpack.c.b16 %v10007, %v10006
    %v10022 = vpack.c.b16 %v10009, %v10008
    %v10023 = vpack.c.b16 %v10011, %v10010
    %v10024 = vpack.c.b16 %v10013, %v10012
    %v10025 = vpack.c.b16 %v10015, %v10014
    %v10026 = vpack.c.b16 %v10017, %v10016
    %v10027 = vpack.c.b16 %v10019, %v10018
    %10036 = vmatpush.bf16.msra.mxu0 %v10027
    %10037 = vmatpush.bf16.msra.mxu0 %v10026
    %10038 = vmatpush.bf16.msra.mxu0 %v10025
    %10039 = vmatpush.bf16.msra.mxu0 %v10024
    %10040 = vmatpush.bf16.msra.mxu0 %v10023
    %10041 = vmatpush.bf16.msra.mxu0 %v10022
    %10042 = vmatpush.bf16.msra.mxu0 %v10021
    %10043 = vmatpush.bf16.msra.mxu0 %v10020
    %10044 = vmatmul.bf16.gmra.mxu0 %v9984
    %v10045 = vpop.f32.mrf.mxu0
    %v10046 = vadd.f32 0.0, %v10045
    %v10047 = vpop.f32.mrf.mxu0
    %v10048 = vadd.f32 0.0, %v10047
    %10049 = vmatmul.bf16.gmra.mxu0 %v9985
    %v10050 = vpop.f32.mrf.mxu0
    %v10051 = vadd.f32 0.0, %v10050
    %v10052 = vpop.f32.mrf.mxu0
    %10053 = vdwg.mxu0
    %v10054 = vadd.f32 %v9961, %v10046
    %v10055 = vadd.f32 %v9962, %v10048
    %v10056 = vadd.f32 %v9963, %v10051
    %v10057 = vld [vmem:[#allocation6 + $0xc] sm:$0xf]
    %s10058 = scalar_lea.vmem %s51, 448
    %v10059 = vld [vmem:[%s10058] sm:$0xf]
    %v10060 = vld [vmem:[%s10058 + $0x4] sm:$0xf]
    %v10061 = vld [vmem:[%s10058 + $0x8] sm:$0xf]
    %v10062 = vld [vmem:[%s10058 + $0xc] sm:$0xf]
    %v10063 = vld [vmem:[%s10058 + $0x10] sm:$0xf]
    %v10064 = vld [vmem:[%s10058 + $0x14] sm:$0xf]
    %v10065 = vld [vmem:[%s10058 + $0x18] sm:$0xf]
    %v10066 = vld [vmem:[%s10058 + $0x1c] sm:$0xf]
    %v10067 = vld [vmem:[%s10058 + $0x20] sm:$0xf]
    %v10068 = vld [vmem:[%s10058 + $0x24] sm:$0xf]
    %v10069 = vld [vmem:[%s10058 + $0x28] sm:$0xf]
    %v10070 = vld [vmem:[%s10058 + $0x2c] sm:$0xf]
    %v10071 = vld [vmem:[%s10058 + $0x30] sm:$0xf]
    %v10072 = vld [vmem:[%s10058 + $0x34] sm:$0xf]
    %v10073 = vld [vmem:[%s10058 + $0x38] sm:$0xf]
    %v10074 = vld [vmem:[%s10058 + $0x3c] sm:$0xf]
    %v10076 = vunpack.c.l.b16 %v10057
    %v10077 = vpack.c.b16 %v10076, %v10076
    %v10079 = vshrl.u32 %v9984, 16
    %v10081 = vshll.u32 %v9984, 16
    %v10083 = vrot.slane %v10081, 1
    %v10084 = vor.u32 %v10079, %v10083
    %v10086 = vshll.u32 %v10077, 16
    %v10088 = vrot.slane %v10086, 1
    %v10089 = vsel %vm1848, %v10084, %v10088
    %v10090 = vshrl.u32 %v10077, 16
    %v10092 = vor.u32 %v10090, %v10088
    %v10111 = vunpack.c.l.b16 %v10059
    %v10112 = vunpack.c.l.b16 %v10060
    %v10113 = vunpack.c.l.b16 %v10061
    %v10114 = vunpack.c.l.b16 %v10062
    %v10115 = vunpack.c.l.b16 %v10063
    %v10116 = vunpack.c.l.b16 %v10064
    %v10117 = vunpack.c.l.b16 %v10065
    %v10118 = vunpack.c.l.b16 %v10066
    %v10119 = vunpack.c.l.b16 %v10067
    %v10120 = vunpack.c.l.b16 %v10068
    %v10121 = vunpack.c.l.b16 %v10069
    %v10122 = vunpack.c.l.b16 %v10070
    %v10123 = vunpack.c.l.b16 %v10071
    %v10124 = vunpack.c.l.b16 %v10072
    %v10125 = vunpack.c.l.b16 %v10073
    %v10126 = vunpack.c.l.b16 %v10074
    %v10127 = vpack.c.b16 %v10112, %v10111
    %v10128 = vpack.c.b16 %v10114, %v10113
    %v10129 = vpack.c.b16 %v10116, %v10115
    %v10130 = vpack.c.b16 %v10118, %v10117
    %v10131 = vpack.c.b16 %v10120, %v10119
    %v10132 = vpack.c.b16 %v10122, %v10121
    %v10133 = vpack.c.b16 %v10124, %v10123
    %v10134 = vpack.c.b16 %v10126, %v10125
    %10143 = vmatpush.bf16.msra.mxu0 %v10134
    %10144 = vmatpush.bf16.msra.mxu0 %v10133
    %10145 = vmatpush.bf16.msra.mxu0 %v10132
    %10146 = vmatpush.bf16.msra.mxu0 %v10131
    %10147 = vmatpush.bf16.msra.mxu0 %v10130
    %10148 = vmatpush.bf16.msra.mxu0 %v10129
    %10149 = vmatpush.bf16.msra.mxu0 %v10128
    %10150 = vmatpush.bf16.msra.mxu0 %v10127
    %10151 = vmatmul.bf16.gmra.mxu0 %v10089
    %v10152 = vpop.f32.mrf.mxu0
    %v10153 = vadd.f32 0.0, %v10152
    %v10154 = vpop.f32.mrf.mxu0
    %v10155 = vadd.f32 0.0, %v10154
    %10156 = vmatmul.bf16.gmra.mxu0 %v10092
    %v10157 = vpop.f32.mrf.mxu0
    %v10158 = vadd.f32 0.0, %v10157
    %v10159 = vpop.f32.mrf.mxu0
    %10160 = vdwg.mxu0
    %v10161 = vadd.f32 %v10054, %v10153
    %v10162 = vadd.f32 %v10055, %v10155
    %v10163 = vadd.f32 %v10056, %v10158
    %v10164 = vld [vmem:[#allocation6 + $0x4] sm:$0xe]
    %s10165 = scalar_lea.vmem %s51, 512
    %v10166 = vld [vmem:[%s10165] sm:$0xf]
    %v10167 = vld [vmem:[%s10165 + $0x4] sm:$0xf]
    %v10168 = vld [vmem:[%s10165 + $0x8] sm:$0xf]
    %v10169 = vld [vmem:[%s10165 + $0xc] sm:$0xf]
    %v10170 = vld [vmem:[%s10165 + $0x10] sm:$0xf]
    %v10171 = vld [vmem:[%s10165 + $0x14] sm:$0xf]
    %v10172 = vld [vmem:[%s10165 + $0x18] sm:$0xf]
    %v10173 = vld [vmem:[%s10165 + $0x1c] sm:$0xf]
    %v10174 = vld [vmem:[%s10165 + $0x20] sm:$0xf]
    %v10175 = vld [vmem:[%s10165 + $0x24] sm:$0xf]
    %v10176 = vld [vmem:[%s10165 + $0x28] sm:$0xf]
    %v10177 = vld [vmem:[%s10165 + $0x2c] sm:$0xf]
    %v10178 = vld [vmem:[%s10165 + $0x30] sm:$0xf]
    %v10179 = vld [vmem:[%s10165 + $0x34] sm:$0xf]
    %v10180 = vld [vmem:[%s10165 + $0x38] sm:$0xf]
    %v10181 = vld [vmem:[%s10165 + $0x3c] sm:$0xf]
    %v10183 = vunpack.c.l.b16 %v10164
    %v10184 = vpack.c.b16 %v9682, %v10183
    %v10185 = vrot.slane %v10184, 1
    %v10186 = vrot.slane %v10077, 1
    %v10187 = vsel %vm2024, %v10185, %v10186
    %v10206 = vunpack.c.l.b16 %v10166
    %v10207 = vunpack.c.l.b16 %v10167
    %v10208 = vunpack.c.l.b16 %v10168
    %v10209 = vunpack.c.l.b16 %v10169
    %v10210 = vunpack.c.l.b16 %v10170
    %v10211 = vunpack.c.l.b16 %v10171
    %v10212 = vunpack.c.l.b16 %v10172
    %v10213 = vunpack.c.l.b16 %v10173
    %v10214 = vunpack.c.l.b16 %v10174
    %v10215 = vunpack.c.l.b16 %v10175
    %v10216 = vunpack.c.l.b16 %v10176
    %v10217 = vunpack.c.l.b16 %v10177
    %v10218 = vunpack.c.l.b16 %v10178
    %v10219 = vunpack.c.l.b16 %v10179
    %v10220 = vunpack.c.l.b16 %v10180
    %v10221 = vunpack.c.l.b16 %v10181
    %v10222 = vpack.c.b16 %v10207, %v10206
    %v10223 = vpack.c.b16 %v10209, %v10208
    %v10224 = vpack.c.b16 %v10211, %v10210
    %v10225 = vpack.c.b16 %v10213, %v10212
    %v10226 = vpack.c.b16 %v10215, %v10214
    %v10227 = vpack.c.b16 %v10217, %v10216
    %v10228 = vpack.c.b16 %v10219, %v10218
    %v10229 = vpack.c.b16 %v10221, %v10220
    %10238 = vmatpush.bf16.msra.mxu0 %v10229
    %10239 = vmatpush.bf16.msra.mxu0 %v10228
    %10240 = vmatpush.bf16.msra.mxu0 %v10227
    %10241 = vmatpush.bf16.msra.mxu0 %v10226
    %10242 = vmatpush.bf16.msra.mxu0 %v10225
    %10243 = vmatpush.bf16.msra.mxu0 %v10224
    %10244 = vmatpush.bf16.msra.mxu0 %v10223
    %10245 = vmatpush.bf16.msra.mxu0 %v10222
    %10246 = vmatmul.bf16.gmra.mxu0 %v10187
    %v10247 = vpop.f32.mrf.mxu0
    %v10248 = vadd.f32 0.0, %v10247
    %v10249 = vpop.f32.mrf.mxu0
    %v10250 = vadd.f32 0.0, %v10249
    %10251 = vmatmul.bf16.gmra.mxu0 %v10186
    %v10252 = vpop.f32.mrf.mxu0
    %v10253 = vadd.f32 0.0, %v10252
    %v10254 = vpop.f32.mrf.mxu0
    %10255 = vdwg.mxu0
    %v10256 = vadd.f32 %v10161, %v10248
    %v10257 = vadd.f32 %v10162, %v10250
    %v10258 = vadd.f32 %v10163, %v10253
    %v10259 = vld [vmem:[%s53] sm:$0x1]
    %v10261 = vperm.slane %v10259, 0
    %v10263 = vadd.f32 %v10256, %v10261
    %v10264 = vadd.f32 %v10257, %v10261
    %v10265 = vadd.f32 %v10258, %v10261
    %v10266 = vld [vmem:[#allocation5] sm:$0xc]
    %v10267 = vld [vmem:[#allocation5 + $0x4] sm:$0xf]
    %v10268 = vld [vmem:[#allocation5 + $0x8] sm:$0xf]
    %v10269 = vld [vmem:[#allocation5 + $0xc] sm:$0x3]
    %v10270 = vunpack.c.l.bf16 %v10266
    %v10271 = vunpack.c.l.bf16 %v10267
    %v10272 = vunpack.c.l.bf16 %v10268
    %v10273 = vunpack.c.l.bf16 %v10269
    %v10278 = vrot.slane %v10270, 5
    %v10279 = vrot.slane %v10271, 5
    %v10280 = vsel %vm1415, %v10278, %v10279
    %v10281 = vrot.slane %v10272, 5
    %v10282 = vsel %vm1415, %v10279, %v10281
    %v10283 = vrot.slane %v10273, 5
    %v10284 = vsel %vm1415, %v10281, %v10283
    %v10288 = vadd.f32 %v10263, %v10280
    %v10289 = vadd.f32 %v10264, %v10282
    %v10290 = vadd.f32 %v10265, %v10284
    %v10291 = vmax.f32 %v10288, 0.0
    %v10292 = vmax.f32 %v10289, 0.0
    %v10293 = vmax.f32 %v10290, 0.0
    %v10294 = vld [vmem:[%s11] sm:$0x1]
    %v10295 = vpack.c.bf16 %v10292, %v10291
    %v10296 = vpack.c.bf16 %v10293, %v10293
    %v10298 = vsel %vm8364, %v10294, 0
    %v10301 = vsel %vm1415, %v10296, 0
    %10303 = vmatpush.bf16.msra.mxu0 0
    %10304 = vmatpush.bf16.msra.mxu0 0
    %10305 = vmatpush.bf16.msra.mxu0 0
    %10306 = vmatpush.bf16.msra.mxu0 0
    %10307 = vmatpush.bf16.msra.mxu0 0
    %10308 = vmatpush.bf16.msra.mxu0 0
    %10309 = vmatpush.bf16.msra.mxu0 %v10301
    %10310 = vmatpush.bf16.msra.mxu0 %v10295
    %10311 = vmatmul.bf16.gmra.mxu0 %v10298
    %v10312 = vpop.f32.mrf.mxu0
    %v10313 = vadd.f32 0.0, %v10312
    %v10314 = vpop.f32.mrf.mxu0
    %10315 = vdwg.mxu0
    %v10316 = vpack.c.bf16 %v10313, %v10313
    %v10317 = vld [vmem:[%s55] sm:$0xf]
    %v10318 = vld [vmem:[%s55 + $0x4] sm:$0xf]
    %v10319 = vld [vmem:[%s55 + $0x8] sm:$0xf]
    %v10320 = vld [vmem:[%s55 + $0xc] sm:$0xf]
    %v10321 = vld [vmem:[%s55 + $0x10] sm:$0xf]
    %v10322 = vld [vmem:[%s55 + $0x14] sm:$0xf]
    %v10323 = vld [vmem:[%s55 + $0x18] sm:$0xf]
    %v10324 = vld [vmem:[%s55 + $0x1c] sm:$0xf]
    %v10325 = vld [vmem:[%s55 + $0x20] sm:$0xf]
    %v10326 = vld [vmem:[%s55 + $0x24] sm:$0xf]
    %v10327 = vld [vmem:[%s55 + $0x28] sm:$0xf]
    %v10328 = vld [vmem:[%s55 + $0x2c] sm:$0xf]
    %v10329 = vld [vmem:[%s55 + $0x30] sm:$0xf]
    %v10330 = vld [vmem:[%s55 + $0x34] sm:$0xf]
    %v10331 = vld [vmem:[%s55 + $0x38] sm:$0xf]
    %v10332 = vld [vmem:[%s55 + $0x3c] sm:$0xf]
    %v10333 = vld [vmem:[%s57] sm:$0x1]
    %v10335 = vperm.slane %v10333, 0
    %v10353 = vunpack.c.l.b16 %v10317
    %v10354 = vunpack.c.l.b16 %v10318
    %v10355 = vunpack.c.l.b16 %v10319
    %v10356 = vunpack.c.l.b16 %v10320
    %v10357 = vunpack.c.l.b16 %v10321
    %v10358 = vunpack.c.l.b16 %v10322
    %v10359 = vunpack.c.l.b16 %v10323
    %v10360 = vunpack.c.l.b16 %v10324
    %v10361 = vunpack.c.l.b16 %v10325
    %v10362 = vunpack.c.l.b16 %v10326
    %v10363 = vunpack.c.l.b16 %v10327
    %v10364 = vunpack.c.l.b16 %v10328
    %v10365 = vunpack.c.l.b16 %v10329
    %v10366 = vunpack.c.l.b16 %v10330
    %v10367 = vunpack.c.l.b16 %v10331
    %v10368 = vunpack.c.l.b16 %v10332
    %v10369 = vpack.c.b16 %v10354, %v10353
    %v10370 = vpack.c.b16 %v10356, %v10355
    %v10371 = vpack.c.b16 %v10358, %v10357
    %v10372 = vpack.c.b16 %v10360, %v10359
    %v10373 = vpack.c.b16 %v10362, %v10361
    %v10374 = vpack.c.b16 %v10364, %v10363
    %v10375 = vpack.c.b16 %v10366, %v10365
    %v10376 = vpack.c.b16 %v10368, %v10367
    %10385 = vmatpush.bf16.msra.mxu0 %v10376
    %10386 = vmatpush.bf16.msra.mxu0 %v10375
    %10387 = vmatpush.bf16.msra.mxu0 %v10374
    %10388 = vmatpush.bf16.msra.mxu0 %v10373
    %10389 = vmatpush.bf16.msra.mxu0 %v10372
    %10390 = vmatpush.bf16.msra.mxu0 %v10371
    %10391 = vmatpush.bf16.msra.mxu0 %v10370
    %10392 = vmatpush.bf16.msra.mxu0 %v10369
    %10393 = vmatmul.bf16.gmra.mxu0 %v10316
    %v10394 = vpop.f32.mrf.mxu0
    %v10395 = vadd.f32 %v10335, %v10394
    %v10396 = vpop.f32.mrf.mxu0
    %10397 = vdwg.mxu0
    %10398 = vst [vmem:[#allocation7] sm:$0x3] %v10395
    // Predicated region
    $region118: #{resnet_forward.1} parent=1 // pred_check
      _
    $region119: #{resnet_forward.1} parent=1 // pred_check_branch
      %10400 = sbr.rel (0) target = $region121
    $region120: #{resnet_forward.1} parent=1 // pred_region
      %10402 = vsyncadd [#allocation8], 0
      %s10404 = sshll.u32 [#allocation7], 4
      %s10405 = int_to_ptr.vmem [resolvable:$true] %s10404
      %s10406 = sshll.u32 %s59, 4
      %s10407 = int_to_ptr.hbm [resolvable:$true] %s10406
      %10409 = dma.vmem_to_hbm [thread:$0]  %s10405, 32, %s10407, [#allocation8]
    $region121: #{resnet_forward.1} parent=1 // pred_fallthru
      _
    // Predicated region
    $region122: #{resnet_forward.1} parent=1 // pred_check
      _
    $region123: #{resnet_forward.1} parent=1 // pred_check_branch
      %10411 = sbr.rel (0) target = $region125
    $region124: #{resnet_forward.1} parent=1 // pred_region
      %10413 = dma.done [#allocation8], 32
    $region125: #{resnet_forward.1} parent=1 // pred_fallthru
      _
    %10414 = vsyncpa [#allocation8], 1

</llo_original>
